<compile_context>
chip_gen: v7x
topology: tpu7x:2x2x1
jax: 0.10.0
libtpu: 0.0.40
codegen_flags: <defaults>
</compile_context>

<pallas_src>
import functools

import jax
import jax.numpy as jnp
from jax.experimental import pallas as pl
from jax.experimental.pallas import tpu as pltpu


def _tpu_vmem_capacity_bytes():
    """Generation-aware VMEM query (128 MiB on v5e/v6e, 64 MiB on v7x)."""
    try:
        info = pltpu.get_tpu_info()
        cap = getattr(info, "vmem_capacity_bytes", None)
        if cap:
            return int(cap)
    except Exception:
        pass
    return 64 * 1024 * 1024            # conservative default (v7x-sized)


_VMEM_CAP = _tpu_vmem_capacity_bytes()
# Scoped-VMEM budget: ~96 MiB on 128 MiB chips (v5e/v6e), ~48 MiB on v7x.
_VMEM_LIMIT = min(_VMEM_CAP * 3 // 4, 96 * 1024 * 1024)
_TILE_M_CAP = 16384 if _VMEM_CAP > (96 << 20) else 8192


# ----------------------------------------------------------------------------
# Pallas kernels
# ----------------------------------------------------------------------------
def _conv_mm_kernel(at_ref, w_ref, b_ref, o_ref, *, act, pk):
    """Fused conv-as-matmul: (Cout,K) @ (K,TILE_M) + bias + epilogue.

    Output tile is (Cout_out, TILE_M): lane-dense along TILE_M (multiple of
    128), channels on sublanes.  Epilogues:
      relu / sigmoid / channel-softmax, or the full GenKernel normalisation
      (w/(sum|w|+eps), mid = 1-sum, concat(pre, mid, post)) which grows the
      channel count from pk*pk-1 to pk*pk.
    """
    acc = jnp.dot(w_ref[...], at_ref[...], preferred_element_type=jnp.float32)
    acc = acc + b_ref[...]
    if act == "relu":
        acc = jnp.maximum(acc, 0.0)
    elif act == "sigmoid":
        # numerically stable sigmoid; reciprocal arg is in (1, 2] -> approx OK
        z = jnp.exp(-jnp.abs(acc))
        acc = jnp.where(acc >= 0.0, 1.0, z) * pl.reciprocal(1.0 + z, approx=True)
    elif act == "softmax":                       # over the channel (sublane) axis
        m = jnp.max(acc, axis=0, keepdims=True)
        e = jnp.exp(acc - m)
        acc = e * pl.reciprocal(jnp.sum(e, axis=0, keepdims=True), approx=True)
    elif act == "genkernel":                     # GenKernel normalisation epilogue
        g = pk * pk - 1
        half = g // 2
        inv = pl.reciprocal(jnp.sum(jnp.abs(acc), axis=0, keepdims=True) + 1e-6,
                            approx=True)
        wn = acc * inv
        mid = 1.0 - jnp.sum(wn, axis=0, keepdims=True)
        acc = jnp.concatenate([wn[:half], mid, wn[half:]], axis=0)
    o_ref[...] = acc.astype(o_ref.dtype)


def _cspn_step_kernel(hn3_ref, hn5_ref, hn7_ref, w3_ref, w5_ref, w7_ref,
                      m_ref, h0_ref, o_ref, *, tile_h, width):
    """One fused CSPN propagation step for 3x3 / 5x5 / 7x7.

    hnK_ref : (1, H+2*haloK, W+2*haloK) padded 1-channel maps (VMEM-resident).
    wK_ref  : (pk*pk, 1, TH, W) bf16 per-pixel kernels (streamed per stripe).
    m_ref   : (3, 1, TH, W) masks;  h0_ref: (1, TH, W) sparse depth.
    o_ref   : (3, 1, TH, W) -> channel k = (1-mask_k)*localconv_k(hn_k) + mask_k*h0
    """
    t = pl.program_id(1)
    row0 = t * tile_h
    if tile_h % 8 == 0:
        row0 = pl.multiple_of(row0, 8)
    h0v = h0_ref[0]                                               # (TH, W)

    def local_conv(hn_ref, w_ref, pk):
        acc = None
        j = 0
        for dy in range(pk):
            for dx in range(pk):
                patch = hn_ref[0, pl.ds(row0 + dy, tile_h), pl.ds(dx, width)]
                term = w_ref[j, 0].astype(jnp.float32) * patch
                acc = term if acc is None else acc + term
                j += 1
        return acc

    r3 = local_conv(hn3_ref, w3_ref, 3)
    r5 = local_conv(hn5_ref, w5_ref, 5)
    r7 = local_conv(hn7_ref, w7_ref, 7)

    m3 = m_ref[0, 0]
    m5 = m_ref[1, 0]
    m7 = m_ref[2, 0]
    o_ref[0, 0] = (1.0 - m3) * r3 + m3 * h0v
    o_ref[1, 0] = (1.0 - m5) * r5 + m5 * h0v
    o_ref[2, 0] = (1.0 - m7) * r7 + m7 * h0v


# ----------------------------------------------------------------------------
# Wrappers
# ----------------------------------------------------------------------------
def _round_up(a, b):
    return (a + b - 1) // b * b


def _choose_tile_h(h, w):
    """Largest row-stripe (mult. of 16, dividing H) whose streamed tiles fit VMEM.

    Falls back to the SMALLEST dividing stripe when nothing fits the budget,
    and to the full height (full-dim exemption) when no multiple of 16 divides H.
    """
    budget = max(8 << 20, _VMEM_LIMIT * 6 // 10)
    resident = 3 * (h + 6) * (w + 6) * 4 * 2          # padded hn maps, dbl-buffered
    divisors = [th for th in (64, 32, 16) if h % th == 0]
    for th in divisors:                                # largest first
        streamed = ((9 + 25 + 49) * 2 + (3 + 1 + 3) * 4) * th * w * 2
        if streamed + resident <= budget:
            return th
    if divisors:
        return divisors[-1]
    return h


def _im2col_cm(x_cm, k=3, pad=1):
    """(C, N, H, W) -> (C*k*k, N*H*W), rows ordered (ci, ky, kx). Keeps dtype."""
    c, n, h, w = x_cm.shape
    xp = jnp.pad(x_cm, ((0, 0), (0, 0), (pad, pad), (pad, pad)))
    rows = []
    for ci in range(c):
        for ky in range(k):
            for kx in range(k):
                rows.append(xp[ci, :, ky:ky + h, kx:kx + w].reshape(-1))
    return jnp.stack(rows, axis=0)


def _conv_mm(at, wmat, bias, act, pk=None, out_dtype=jnp.float32):
    """Conv-as-matmul Pallas call.  at: (K, M) bf16, wmat: (Cout, K) bf16."""
    k, m = at.shape
    cout = wmat.shape[0]
    cout_out = pk * pk if act == "genkernel" else cout
    tile_m = min(_TILE_M_CAP, _round_up(m, 128))       # lane-dense M tiles
    mp = _round_up(m, tile_m)
    if mp != m:
        at = jnp.pad(at, ((0, 0), (0, mp - m)))
    b2 = bias.reshape(cout, 1).astype(jnp.float32)

    out = pl.pallas_call(
        functools.partial(_conv_mm_kernel, act=act, pk=pk),
        grid=(mp // tile_m,),
        out_shape=jax.ShapeDtypeStruct((cout_out, mp), out_dtype),
        in_specs=[
            pl.BlockSpec((k, tile_m), lambda i: (0, i)),
            pl.BlockSpec((cout, k), lambda i: (0, 0)),
            pl.BlockSpec((cout, 1), lambda i: (0, 0)),
        ],
        out_specs=pl.BlockSpec((cout_out, tile_m), lambda i: (0, i)),
        compiler_params=pltpu.CompilerParams(
            dimension_semantics=("parallel",),
            vmem_limit_bytes=_VMEM_LIMIT),
    )(at, wmat, b2)
    return out[:, :m]


def cspn_step(hn3, hn5, hn7, w3, w5, w7, masks, h0s, tile_h):
    """One propagation step.  Channel-major w/masks: (C, N, H, W)."""
    n, h, w = hn3.shape
    hn3p = jnp.pad(hn3, ((0, 0), (1, 1), (1, 1)))
    hn5p = jnp.pad(hn5, ((0, 0), (2, 2), (2, 2)))
    hn7p = jnp.pad(hn7, ((0, 0), (3, 3), (3, 3)))
    return pl.pallas_call(
        functools.partial(_cspn_step_kernel, tile_h=tile_h, width=w),
        grid=(n, h // tile_h),
        out_shape=jax.ShapeDtypeStruct((3, n, h, w), jnp.float32),
        in_specs=[
            pl.BlockSpec((1, h + 2, w + 2), lambda i, t: (i, 0, 0)),
            pl.BlockSpec((1, h + 4, w + 4), lambda i, t: (i, 0, 0)),
            pl.BlockSpec((1, h + 6, w + 6), lambda i, t: (i, 0, 0)),
            pl.BlockSpec((9, 1, tile_h, w), lambda i, t: (0, i, t, 0)),
            pl.BlockSpec((25, 1, tile_h, w), lambda i, t: (0, i, t, 0)),
            pl.BlockSpec((49, 1, tile_h, w), lambda i, t: (0, i, t, 0)),
            pl.BlockSpec((3, 1, tile_h, w), lambda i, t: (0, i, t, 0)),
            pl.BlockSpec((1, tile_h, w), lambda i, t: (i, t, 0)),
        ],
        out_specs=pl.BlockSpec((3, 1, tile_h, w), lambda i, t: (0, i, t, 0)),
        compiler_params=pltpu.CompilerParams(
            dimension_semantics=("parallel", "parallel"),
            vmem_limit_bytes=_VMEM_LIMIT),
    )(hn3p, hn5p, hn7p, w3, w5, w7, masks, h0s)


# ----------------------------------------------------------------------------
# CSPN forward
# ----------------------------------------------------------------------------
_FOUT_HEADS = ("weight3x3", "weight5x5", "weight7x7", "convmask", "convck")


def cspn_forward(params, fout, hn, h0, *, pt):
    n, c, h, w = fout.shape
    m = n * h * w
    tile_h = _choose_tile_h(h, w)

    # channel-major bf16 features (one tiny transpose of the C-channel input)
    fout_cm = jnp.transpose(fout, (1, 0, 2, 3)).astype(jnp.bfloat16)   # (C,N,H,W)
    at0 = _im2col_cm(fout_cm)                                          # (C*9, M)

    # --- fused layer-0 of the five fout-consuming heads (shared A^T read) ---
    w0 = jnp.concatenate(
        [params[nm][0]["w"].reshape(c, -1) for nm in _FOUT_HEADS], axis=0
    ).astype(jnp.bfloat16)                                             # (5C, C*9)
    b0 = jnp.concatenate([params[nm][0]["b"] for nm in _FOUT_HEADS], axis=0)
    y0 = _conv_mm(at0, w0, b0, "relu", out_dtype=jnp.bfloat16)          # (5C, M)

    def head_l1(slot, name, act, pk=None, out_dtype=jnp.float32):
        x = y0[slot * c:(slot + 1) * c].reshape(c, n, h, w)
        at = _im2col_cm(x)
        wm = params[name][1]["w"].reshape(-1, c * 9).astype(jnp.bfloat16)
        return _conv_mm(at, wm, params[name][1]["b"], act, pk=pk,
                        out_dtype=out_dtype)

    # GenKernel heads: matmul + normalisation fused in one kernel, bf16 maps.
    w3 = head_l1(0, "weight3x3", "genkernel", 3, jnp.bfloat16).reshape(9, n, h, w)
    w5 = head_l1(1, "weight5x5", "genkernel", 5, jnp.bfloat16).reshape(25, n, h, w)
    w7 = head_l1(2, "weight7x7", "genkernel", 7, jnp.bfloat16).reshape(49, n, h, w)
    mk = head_l1(3, "convmask", "sigmoid").reshape(3, n, h, w)           # f32
    cf = head_l1(4, "convck", "softmax").reshape(3, n, h, w)             # f32

    h0s = h0[:, 0]                                                      # (N,H,W)
    masks = mk * (h0s > 0.001).astype(jnp.float32)[None]                # (3,N,H,W)

    hn3 = hn5 = hn7 = hn[:, 0]                                          # (N,H,W)
    hns = [hn[:, 0]]
    for i in range(pt):
        out = cspn_step(hn3, hn5, hn7, w3, w5, w7, masks, h0s, tile_h)
        hn3, hn5, hn7 = out[0], out[1], out[2]
        if i == pt // 2 - 1:
            hns.append(cf[0] * hn3 + cf[1] * hn5 + cf[2] * hn7)
    hns.append(cf[0] * hn3 + cf[1] * hn5 + cf[2] * hn7)
    hns_cm = jnp.stack(hns, axis=0)                                     # (3,N,H,W)

    # convct: depends on hns, so its two layers stay separate matmuls.
    ct_in = jnp.concatenate([fout_cm, hns_cm.astype(jnp.bfloat16)], axis=0)
    at_ct0 = _im2col_cm(ct_in)                                          # ((C+3)*9, M)
    w_ct0 = params["convct"][0]["w"].reshape(c, -1).astype(jnp.bfloat16)
    y_ct0 = _conv_mm(at_ct0, w_ct0, params["convct"][0]["b"], "relu",
                     out_dtype=jnp.bfloat16)
    at_ct1 = _im2col_cm(y_ct0.reshape(c, n, h, w))
    w_ct1 = params["convct"][1]["w"].reshape(3, -1).astype(jnp.bfloat16)
    wt = _conv_mm(at_ct1, w_ct1, params["convct"][1]["b"],
                  "softmax").reshape(3, n, h, w)

    return jnp.sum(wt * hns_cm, axis=0)[:, None, :, :]                  # (N,1,H,W)


def init_params(key, c):
    def conv_p(k, cout, cin):
        k1, k2 = jax.random.split(k)
        return {"w": 0.1 * jax.random.normal(k1, (cout, cin, 3, 3), jnp.float32),
                "b": 0.01 * jax.random.normal(k2, (cout,), jnp.float32)}

    specs = {
        "weight3x3": [(c, c), (3 * 3 - 1, c)],
        "weight5x5": [(c, c), (5 * 5 - 1, c)],
        "weight7x7": [(c, c), (7 * 7 - 1, c)],
        "convmask":  [(c, c), (3, c)],
        "convck":    [(c, c), (3, c)],
        "convct":    [(c, c + 3), (3, c)],
    }
    params = {}
    for name, layers in specs.items():
        key, *ks = jax.random.split(key, len(layers) + 1)
        params[name] = [conv_p(kk, co, ci) for kk, (co, ci) in zip(ks, layers)]
    return params


# ----------------------------------------------------------------------------
if __name__ == "__main__":
    C, N, H, W, PT = 8, 2, 16, 16, 6
    root = jax.random.PRNGKey(0)
    kp, kf, khn, kh0, km = jax.random.split(root, 5)
    params = init_params(kp, C)

    fout = jax.random.normal(kf, (N, C, H, W), jnp.float32)                  # guidance features
    hn = 2.0 * jax.random.uniform(khn, (N, 1, H, W), jnp.float32)            # initial depth
    h0_dense = 2.0 * jax.random.uniform(kh0, (N, 1, H, W), jnp.float32)
    h0 = jnp.where(jax.random.uniform(km, (N, 1, H, W)) > 0.5, h0_dense, 0.0)  # sparse depth

    fwd = jax.jit(functools.partial(cspn_forward, pt=PT))
    out = jax.block_until_ready(fwd(params, fout, hn, h0))

    assert out.shape == (N, 1, H, W), out.shape
    assert bool(jnp.all(jnp.isfinite(out)))
    print("KERNEL_OK")
</pallas_src>

<mosaic_0001>
module attributes {stable_mosaic.version = 11 : i64} {
  func.func @_conv_mm_kernel(%arg0: i32, %arg1: memref<72x512xbf16, #tpu.memory_space<vmem>>, %arg2: memref<40x72xbf16, #tpu.memory_space<vmem>>, %arg3: memref<40x1xf32, #tpu.memory_space<vmem>>, %arg4: memref<40x512xbf16, #tpu.memory_space<vmem>>) attributes {dimension_semantics = [#tpu.dimension_semantics<parallel>], iteration_bounds = array<i64: 1>, scalar_prefetch = 0 : i64, scratch_operands = 0 : i64, tpu.core_type = #tpu.core_type<tc>, window_params = [{transform_indices = @transform_0, window_bounds = array<i64: 72, 512>}, {pipeline_mode = #tpu.pipeline_mode<synchronous>, transform_indices = @transform_1, window_bounds = array<i64: 40, 72>}, {pipeline_mode = #tpu.pipeline_mode<synchronous>, transform_indices = @transform_2, window_bounds = array<i64: 40, 1>}, {transform_indices = @transform_3, window_bounds = array<i64: 40, 512>}]} {
    %c0 = arith.constant 0 : index
    %c0_0 = arith.constant 0 : index
    %0 = vector.load %arg2[%c0, %c0_0] : memref<40x72xbf16, #tpu.memory_space<vmem>>, vector<40x72xbf16>
    %c0_1 = arith.constant 0 : index
    %c0_2 = arith.constant 0 : index
    %1 = vector.load %arg1[%c0_1, %c0_2] : memref<72x512xbf16, #tpu.memory_space<vmem>>, vector<72x512xbf16>
    %cst = arith.constant dense<0.000000e+00> : vector<40x512xf32>
    %2 = tpu.matmul %0, %1, %cst {dimension_numbers = #tpu.dot_dimension_numbers<[1], [0], [0], [1], [0, 0, 1, 1], [], []>} : vector<40x72xbf16>, vector<72x512xbf16>, vector<40x512xf32> -> vector<40x512xf32>
    %c0_3 = arith.constant 0 : index
    %c0_4 = arith.constant 0 : index
    %3 = vector.load %arg3[%c0_3, %c0_4] : memref<40x1xf32, #tpu.memory_space<vmem>>, vector<40x1xf32>
    %4 = vector.broadcast %3 : vector<40x1xf32> to vector<40x512xf32>
    %5 = arith.addf %2, %4 : vector<40x512xf32>
    %cst_5 = arith.constant 0.000000e+00 : f32
    %6 = vector.broadcast %cst_5 : f32 to vector<40x512xf32>
    %7 = arith.maximumf %5, %6 : vector<40x512xf32>
    %8 = arith.truncf %7 : vector<40x512xf32> to vector<40x512xbf16>
    %c0_6 = arith.constant 0 : index
    %c0_7 = arith.constant 0 : index
    %9 = vector.load %arg4[%c0_6, %c0_7] : memref<40x512xbf16, #tpu.memory_space<vmem>>, vector<40x512xbf16>
    tpu.vector_store %arg4[%c0_6, %c0_7], %8 {strides = array<i32>} : memref<40x512xbf16, #tpu.memory_space<vmem>>, vector<40x512xbf16>,
    return
  }
  func.func @transform_0(%arg0: i32) -> (i32, i32) {
    %c0_i32 = arith.constant 0 : i32
    %c0_i32_0 = arith.constant 0 : i32
    return %c0_i32, %arg0 : i32, i32
  }
  func.func @transform_1(%arg0: i32) -> (i32, i32) {
    %c0_i32 = arith.constant 0 : i32
    %c0_i32_0 = arith.constant 0 : i32
    %c0_i32_1 = arith.constant 0 : i32
    return %c0_i32, %c0_i32_0 : i32, i32
  }
  func.func @transform_2(%arg0: i32) -> (i32, i32) {
    %c0_i32 = arith.constant 0 : i32
    %c0_i32_0 = arith.constant 0 : i32
    %c0_i32_1 = arith.constant 0 : i32
    return %c0_i32, %c0_i32_0 : i32, i32
  }
  func.func @transform_3(%arg0: i32) -> (i32, i32) {
    %c0_i32 = arith.constant 0 : i32
    %c0_i32_0 = arith.constant 0 : i32
    return %c0_i32, %arg0 : i32, i32
  }
}

module attributes {stable_mosaic.version = 11 : i64} {
  func.func @_conv_mm_kernel(%arg0: i32, %arg1: memref<72x512xbf16, #tpu.memory_space<vmem>>, %arg2: memref<3x72xbf16, #tpu.memory_space<vmem>>, %arg3: memref<3x1xf32, #tpu.memory_space<vmem>>, %arg4: memref<3x512xf32, #tpu.memory_space<vmem>>) attributes {dimension_semantics = [#tpu.dimension_semantics<parallel>], iteration_bounds = array<i64: 1>, scalar_prefetch = 0 : i64, scratch_operands = 0 : i64, tpu.core_type = #tpu.core_type<tc>, window_params = [{transform_indices = @transform_0, window_bounds = array<i64: 72, 512>}, {pipeline_mode = #tpu.pipeline_mode<synchronous>, transform_indices = @transform_1, window_bounds = array<i64: 3, 72>}, {pipeline_mode = #tpu.pipeline_mode<synchronous>, transform_indices = @transform_2, window_bounds = array<i64: 3, 1>}, {transform_indices = @transform_3, window_bounds = array<i64: 3, 512>}]} {
    %c0 = arith.constant 0 : index
    %c0_0 = arith.constant 0 : index
    %0 = vector.load %arg2[%c0, %c0_0] : memref<3x72xbf16, #tpu.memory_space<vmem>>, vector<3x72xbf16>
    %c0_1 = arith.constant 0 : index
    %c0_2 = arith.constant 0 : index
    %1 = vector.load %arg1[%c0_1, %c0_2] : memref<72x512xbf16, #tpu.memory_space<vmem>>, vector<72x512xbf16>
    %cst = arith.constant dense<0.000000e+00> : vector<3x512xf32>
    %2 = tpu.matmul %0, %1, %cst {dimension_numbers = #tpu.dot_dimension_numbers<[1], [0], [0], [1], [0, 0, 1, 1], [], []>} : vector<3x72xbf16>, vector<72x512xbf16>, vector<3x512xf32> -> vector<3x512xf32>
    %c0_3 = arith.constant 0 : index
    %c0_4 = arith.constant 0 : index
    %3 = vector.load %arg3[%c0_3, %c0_4] : memref<3x1xf32, #tpu.memory_space<vmem>>, vector<3x1xf32>
    %4 = vector.broadcast %3 : vector<3x1xf32> to vector<3x512xf32>
    %5 = arith.addf %2, %4 : vector<3x512xf32>
    %6 = math.absf %5 : vector<3x512xf32>
    %cst_5 = arith.constant 0.000000e+00 : f32
    %7 = vector.broadcast %cst_5 : f32 to vector<3x512xf32>
    %8 = arith.subf %7, %6 : vector<3x512xf32>
    %9 = math.exp %8 : vector<3x512xf32>
    %cst_6 = arith.constant 0.000000e+00 : f32
    %10 = vector.broadcast %cst_6 : f32 to vector<3x512xf32>
    %11 = arith.cmpf oge, %5, %10 : vector<3x512xf32>
    %cst_7 = arith.constant 1.000000e+00 : f32
    %12 = vector.broadcast %cst_7 : f32 to vector<3x512xf32>
    %13 = arith.select %11, %12, %9 : vector<3x512xi1>, vector<3x512xf32>
    %cst_8 = arith.constant 1.000000e+00 : f32
    %14 = vector.broadcast %cst_8 : f32 to vector<3x512xf32>
    %15 = arith.addf %14, %9 : vector<3x512xf32>
    %16 = tpu.reciprocal %15 {approx = true} : vector<3x512xf32> -> vector<3x512xf32>
    %17 = arith.mulf %13, %16 : vector<3x512xf32>
    %c0_9 = arith.constant 0 : index
    %c0_10 = arith.constant 0 : index
    %18 = vector.load %arg4[%c0_9, %c0_10] : memref<3x512xf32, #tpu.memory_space<vmem>>, vector<3x512xf32>
    tpu.vector_store %arg4[%c0_9, %c0_10], %17 {strides = array<i32>} : memref<3x512xf32, #tpu.memory_space<vmem>>, vector<3x512xf32>,
    return
  }
  func.func @transform_0(%arg0: i32) -> (i32, i32) {
    %c0_i32 = arith.constant 0 : i32
    %c0_i32_0 = arith.constant 0 : i32
    return %c0_i32, %arg0 : i32, i32
  }
  func.func @transform_1(%arg0: i32) -> (i32, i32) {
    %c0_i32 = arith.constant 0 : i32
    %c0_i32_0 = arith.constant 0 : i32
    %c0_i32_1 = arith.constant 0 : i32
    return %c0_i32, %c0_i32_0 : i32, i32
  }
  func.func @transform_2(%arg0: i32) -> (i32, i32) {
    %c0_i32 = arith.constant 0 : i32
    %c0_i32_0 = arith.constant 0 : i32
    %c0_i32_1 = arith.constant 0 : i32
    return %c0_i32, %c0_i32_0 : i32, i32
  }
  func.func @transform_3(%arg0: i32) -> (i32, i32) {
    %c0_i32 = arith.constant 0 : i32
    %c0_i32_0 = arith.constant 0 : i32
    return %c0_i32, %arg0 : i32, i32
  }
}

module attributes {stable_mosaic.version = 11 : i64} {
  func.func @_conv_mm_kernel(%arg0: i32, %arg1: memref<72x512xbf16, #tpu.memory_space<vmem>>, %arg2: memref<48x72xbf16, #tpu.memory_space<vmem>>, %arg3: memref<48x1xf32, #tpu.memory_space<vmem>>, %arg4: memref<49x512xbf16, #tpu.memory_space<vmem>>) attributes {dimension_semantics = [#tpu.dimension_semantics<parallel>], iteration_bounds = array<i64: 1>, scalar_prefetch = 0 : i64, scratch_operands = 0 : i64, tpu.core_type = #tpu.core_type<tc>, window_params = [{transform_indices = @transform_0, window_bounds = array<i64: 72, 512>}, {pipeline_mode = #tpu.pipeline_mode<synchronous>, transform_indices = @transform_1, window_bounds = array<i64: 48, 72>}, {pipeline_mode = #tpu.pipeline_mode<synchronous>, transform_indices = @transform_2, window_bounds = array<i64: 48, 1>}, {transform_indices = @transform_3, window_bounds = array<i64: 49, 512>}]} {
    %c0 = arith.constant 0 : index
    %c0_0 = arith.constant 0 : index
    %0 = vector.load %arg2[%c0, %c0_0] : memref<48x72xbf16, #tpu.memory_space<vmem>>, vector<48x72xbf16>
    %c0_1 = arith.constant 0 : index
    %c0_2 = arith.constant 0 : index
    %1 = vector.load %arg1[%c0_1, %c0_2] : memref<72x512xbf16, #tpu.memory_space<vmem>>, vector<72x512xbf16>
    %cst = arith.constant dense<0.000000e+00> : vector<48x512xf32>
    %2 = tpu.matmul %0, %1, %cst {dimension_numbers = #tpu.dot_dimension_numbers<[1], [0], [0], [1], [0, 0, 1, 1], [], []>} : vector<48x72xbf16>, vector<72x512xbf16>, vector<48x512xf32> -> vector<48x512xf32>
    %c0_3 = arith.constant 0 : index
    %c0_4 = arith.constant 0 : index
    %3 = vector.load %arg3[%c0_3, %c0_4] : memref<48x1xf32, #tpu.memory_space<vmem>>, vector<48x1xf32>
    %4 = vector.broadcast %3 : vector<48x1xf32> to vector<48x512xf32>
    %5 = arith.addf %2, %4 : vector<48x512xf32>
    %6 = math.absf %5 : vector<48x512xf32>
    %cst_5 = arith.constant dense<0.000000e+00> : vector<512xf32>
    %7 = vector.multi_reduction <add>, %6, %cst_5 [0] : vector<48x512xf32> to vector<512xf32>
    %8 = vector.shape_cast %7 : vector<512xf32> to vector<1x512xf32>
    %cst_6 = arith.constant 9.99999997E-7 : f32
    %9 = vector.broadcast %cst_6 : f32 to vector<1x512xf32>
    %10 = arith.addf %8, %9 : vector<1x512xf32>
    %11 = tpu.reciprocal %10 {approx = true} : vector<1x512xf32> -> vector<1x512xf32>
    %12 = vector.broadcast %11 : vector<1x512xf32> to vector<48x512xf32>
    %13 = arith.mulf %5, %12 : vector<48x512xf32>
    %cst_7 = arith.constant dense<0.000000e+00> : vector<512xf32>
    %14 = vector.multi_reduction <add>, %13, %cst_7 [0] : vector<48x512xf32> to vector<512xf32>
    %15 = vector.shape_cast %14 : vector<512xf32> to vector<1x512xf32>
    %cst_8 = arith.constant 1.000000e+00 : f32
    %16 = vector.broadcast %cst_8 : f32 to vector<1x512xf32>
    %17 = arith.subf %16, %15 : vector<1x512xf32>
    %18 = vector.extract_strided_slice %13 {offsets = [0, 0], sizes = [24, 512], strides = [1, 1]} : vector<48x512xf32> to vector<24x512xf32>
    %19 = vector.extract_strided_slice %13 {offsets = [24, 0], sizes = [24, 512], strides = [1, 1]} : vector<48x512xf32> to vector<24x512xf32>
    %20 = tpu.concatenate %18, %17, %19 in 0 : vector<24x512xf32>, vector<1x512xf32>, vector<24x512xf32> -> vector<49x512xf32>
    %21 = arith.truncf %20 : vector<49x512xf32> to vector<49x512xbf16>
    %c0_9 = arith.constant 0 : index
    %c0_10 = arith.constant 0 : index
    %22 = vector.load %arg4[%c0_9, %c0_10] : memref<49x512xbf16, #tpu.memory_space<vmem>>, vector<49x512xbf16>
    tpu.vector_store %arg4[%c0_9, %c0_10], %21 {strides = array<i32>} : memref<49x512xbf16, #tpu.memory_space<vmem>>, vector<49x512xbf16>,
    return
  }
  func.func @transform_0(%arg0: i32) -> (i32, i32) {
    %c0_i32 = arith.constant 0 : i32
    %c0_i32_0 = arith.constant 0 : i32
    return %c0_i32, %arg0 : i32, i32
  }
  func.func @transform_1(%arg0: i32) -> (i32, i32) {
    %c0_i32 = arith.constant 0 : i32
    %c0_i32_0 = arith.constant 0 : i32
    %c0_i32_1 = arith.constant 0 : i32
    return %c0_i32, %c0_i32_0 : i32, i32
  }
  func.func @transform_2(%arg0: i32) -> (i32, i32) {
    %c0_i32 = arith.constant 0 : i32
    %c0_i32_0 = arith.constant 0 : i32
    %c0_i32_1 = arith.constant 0 : i32
    return %c0_i32, %c0_i32_0 : i32, i32
  }
  func.func @transform_3(%arg0: i32) -> (i32, i32) {
    %c0_i32 = arith.constant 0 : i32
    %c0_i32_0 = arith.constant 0 : i32
    return %c0_i32, %arg0 : i32, i32
  }
}

module attributes {stable_mosaic.version = 11 : i64} {
  func.func @_conv_mm_kernel(%arg0: i32, %arg1: memref<72x512xbf16, #tpu.memory_space<vmem>>, %arg2: memref<24x72xbf16, #tpu.memory_space<vmem>>, %arg3: memref<24x1xf32, #tpu.memory_space<vmem>>, %arg4: memref<25x512xbf16, #tpu.memory_space<vmem>>) attributes {dimension_semantics = [#tpu.dimension_semantics<parallel>], iteration_bounds = array<i64: 1>, scalar_prefetch = 0 : i64, scratch_operands = 0 : i64, tpu.core_type = #tpu.core_type<tc>, window_params = [{transform_indices = @transform_0, window_bounds = array<i64: 72, 512>}, {pipeline_mode = #tpu.pipeline_mode<synchronous>, transform_indices = @transform_1, window_bounds = array<i64: 24, 72>}, {pipeline_mode = #tpu.pipeline_mode<synchronous>, transform_indices = @transform_2, window_bounds = array<i64: 24, 1>}, {transform_indices = @transform_3, window_bounds = array<i64: 25, 512>}]} {
    %c0 = arith.constant 0 : index
    %c0_0 = arith.constant 0 : index
    %0 = vector.load %arg2[%c0, %c0_0] : memref<24x72xbf16, #tpu.memory_space<vmem>>, vector<24x72xbf16>
    %c0_1 = arith.constant 0 : index
    %c0_2 = arith.constant 0 : index
    %1 = vector.load %arg1[%c0_1, %c0_2] : memref<72x512xbf16, #tpu.memory_space<vmem>>, vector<72x512xbf16>
    %cst = arith.constant dense<0.000000e+00> : vector<24x512xf32>
    %2 = tpu.matmul %0, %1, %cst {dimension_numbers = #tpu.dot_dimension_numbers<[1], [0], [0], [1], [0, 0, 1, 1], [], []>} : vector<24x72xbf16>, vector<72x512xbf16>, vector<24x512xf32> -> vector<24x512xf32>
    %c0_3 = arith.constant 0 : index
    %c0_4 = arith.constant 0 : index
    %3 = vector.load %arg3[%c0_3, %c0_4] : memref<24x1xf32, #tpu.memory_space<vmem>>, vector<24x1xf32>
    %4 = vector.broadcast %3 : vector<24x1xf32> to vector<24x512xf32>
    %5 = arith.addf %2, %4 : vector<24x512xf32>
    %6 = math.absf %5 : vector<24x512xf32>
    %cst_5 = arith.constant dense<0.000000e+00> : vector<512xf32>
    %7 = vector.multi_reduction <add>, %6, %cst_5 [0] : vector<24x512xf32> to vector<512xf32>
    %8 = vector.shape_cast %7 : vector<512xf32> to vector<1x512xf32>
    %cst_6 = arith.constant 9.99999997E-7 : f32
    %9 = vector.broadcast %cst_6 : f32 to vector<1x512xf32>
    %10 = arith.addf %8, %9 : vector<1x512xf32>
    %11 = tpu.reciprocal %10 {approx = true} : vector<1x512xf32> -> vector<1x512xf32>
    %12 = vector.broadcast %11 : vector<1x512xf32> to vector<24x512xf32>
    %13 = arith.mulf %5, %12 : vector<24x512xf32>
    %cst_7 = arith.constant dense<0.000000e+00> : vector<512xf32>
    %14 = vector.multi_reduction <add>, %13, %cst_7 [0] : vector<24x512xf32> to vector<512xf32>
    %15 = vector.shape_cast %14 : vector<512xf32> to vector<1x512xf32>
    %cst_8 = arith.constant 1.000000e+00 : f32
    %16 = vector.broadcast %cst_8 : f32 to vector<1x512xf32>
    %17 = arith.subf %16, %15 : vector<1x512xf32>
    %18 = vector.extract_strided_slice %13 {offsets = [0, 0], sizes = [12, 512], strides = [1, 1]} : vector<24x512xf32> to vector<12x512xf32>
    %19 = vector.extract_strided_slice %13 {offsets = [12, 0], sizes = [12, 512], strides = [1, 1]} : vector<24x512xf32> to vector<12x512xf32>
    %20 = tpu.concatenate %18, %17, %19 in 0 : vector<12x512xf32>, vector<1x512xf32>, vector<12x512xf32> -> vector<25x512xf32>
    %21 = arith.truncf %20 : vector<25x512xf32> to vector<25x512xbf16>
    %c0_9 = arith.constant 0 : index
    %c0_10 = arith.constant 0 : index
    %22 = vector.load %arg4[%c0_9, %c0_10] : memref<25x512xbf16, #tpu.memory_space<vmem>>, vector<25x512xbf16>
    tpu.vector_store %arg4[%c0_9, %c0_10], %21 {strides = array<i32>} : memref<25x512xbf16, #tpu.memory_space<vmem>>, vector<25x512xbf16>,
    return
  }
  func.func @transform_0(%arg0: i32) -> (i32, i32) {
    %c0_i32 = arith.constant 0 : i32
    %c0_i32_0 = arith.constant 0 : i32
    return %c0_i32, %arg0 : i32, i32
  }
  func.func @transform_1(%arg0: i32) -> (i32, i32) {
    %c0_i32 = arith.constant 0 : i32
    %c0_i32_0 = arith.constant 0 : i32
    %c0_i32_1 = arith.constant 0 : i32
    return %c0_i32, %c0_i32_0 : i32, i32
  }
  func.func @transform_2(%arg0: i32) -> (i32, i32) {
    %c0_i32 = arith.constant 0 : i32
    %c0_i32_0 = arith.constant 0 : i32
    %c0_i32_1 = arith.constant 0 : i32
    return %c0_i32, %c0_i32_0 : i32, i32
  }
  func.func @transform_3(%arg0: i32) -> (i32, i32) {
    %c0_i32 = arith.constant 0 : i32
    %c0_i32_0 = arith.constant 0 : i32
    return %c0_i32, %arg0 : i32, i32
  }
}

module attributes {stable_mosaic.version = 11 : i64} {
  func.func @_conv_mm_kernel(%arg0: i32, %arg1: memref<72x512xbf16, #tpu.memory_space<vmem>>, %arg2: memref<8x72xbf16, #tpu.memory_space<vmem>>, %arg3: memref<8x1xf32, #tpu.memory_space<vmem>>, %arg4: memref<9x512xbf16, #tpu.memory_space<vmem>>) attributes {dimension_semantics = [#tpu.dimension_semantics<parallel>], iteration_bounds = array<i64: 1>, scalar_prefetch = 0 : i64, scratch_operands = 0 : i64, tpu.core_type = #tpu.core_type<tc>, window_params = [{transform_indices = @transform_0, window_bounds = array<i64: 72, 512>}, {pipeline_mode = #tpu.pipeline_mode<synchronous>, transform_indices = @transform_1, window_bounds = array<i64: 8, 72>}, {pipeline_mode = #tpu.pipeline_mode<synchronous>, transform_indices = @transform_2, window_bounds = array<i64: 8, 1>}, {transform_indices = @transform_3, window_bounds = array<i64: 9, 512>}]} {
    %c0 = arith.constant 0 : index
    %c0_0 = arith.constant 0 : index
    %0 = vector.load %arg2[%c0, %c0_0] : memref<8x72xbf16, #tpu.memory_space<vmem>>, vector<8x72xbf16>
    %c0_1 = arith.constant 0 : index
    %c0_2 = arith.constant 0 : index
    %1 = vector.load %arg1[%c0_1, %c0_2] : memref<72x512xbf16, #tpu.memory_space<vmem>>, vector<72x512xbf16>
    %cst = arith.constant dense<0.000000e+00> : vector<8x512xf32>
    %2 = tpu.matmul %0, %1, %cst {dimension_numbers = #tpu.dot_dimension_numbers<[1], [0], [0], [1], [0, 0, 1, 1], [], []>} : vector<8x72xbf16>, vector<72x512xbf16>, vector<8x512xf32> -> vector<8x512xf32>
    %c0_3 = arith.constant 0 : index
    %c0_4 = arith.constant 0 : index
    %3 = vector.load %arg3[%c0_3, %c0_4] : memref<8x1xf32, #tpu.memory_space<vmem>>, vector<8x1xf32>
    %4 = vector.broadcast %3 : vector<8x1xf32> to vector<8x512xf32>
    %5 = arith.addf %2, %4 : vector<8x512xf32>
    %6 = math.absf %5 : vector<8x512xf32>
    %cst_5 = arith.constant dense<0.000000e+00> : vector<512xf32>
    %7 = vector.multi_reduction <add>, %6, %cst_5 [0] : vector<8x512xf32> to vector<512xf32>
    %8 = vector.shape_cast %7 : vector<512xf32> to vector<1x512xf32>
    %cst_6 = arith.constant 9.99999997E-7 : f32
    %9 = vector.broadcast %cst_6 : f32 to vector<1x512xf32>
    %10 = arith.addf %8, %9 : vector<1x512xf32>
    %11 = tpu.reciprocal %10 {approx = true} : vector<1x512xf32> -> vector<1x512xf32>
    %12 = vector.broadcast %11 : vector<1x512xf32> to vector<8x512xf32>
    %13 = arith.mulf %5, %12 : vector<8x512xf32>
    %cst_7 = arith.constant dense<0.000000e+00> : vector<512xf32>
    %14 = vector.multi_reduction <add>, %13, %cst_7 [0] : vector<8x512xf32> to vector<512xf32>
    %15 = vector.shape_cast %14 : vector<512xf32> to vector<1x512xf32>
    %cst_8 = arith.constant 1.000000e+00 : f32
    %16 = vector.broadcast %cst_8 : f32 to vector<1x512xf32>
    %17 = arith.subf %16, %15 : vector<1x512xf32>
    %18 = vector.extract_strided_slice %13 {offsets = [0, 0], sizes = [4, 512], strides = [1, 1]} : vector<8x512xf32> to vector<4x512xf32>
    %19 = vector.extract_strided_slice %13 {offsets = [4, 0], sizes = [4, 512], strides = [1, 1]} : vector<8x512xf32> to vector<4x512xf32>
    %20 = tpu.concatenate %18, %17, %19 in 0 : vector<4x512xf32>, vector<1x512xf32>, vector<4x512xf32> -> vector<9x512xf32>
    %21 = arith.truncf %20 : vector<9x512xf32> to vector<9x512xbf16>
    %c0_9 = arith.constant 0 : index
    %c0_10 = arith.constant 0 : index
    %22 = vector.load %arg4[%c0_9, %c0_10] : memref<9x512xbf16, #tpu.memory_space<vmem>>, vector<9x512xbf16>
    tpu.vector_store %arg4[%c0_9, %c0_10], %21 {strides = array<i32>} : memref<9x512xbf16, #tpu.memory_space<vmem>>, vector<9x512xbf16>,
    return
  }
  func.func @transform_0(%arg0: i32) -> (i32, i32) {
    %c0_i32 = arith.constant 0 : i32
    %c0_i32_0 = arith.constant 0 : i32
    return %c0_i32, %arg0 : i32, i32
  }
  func.func @transform_1(%arg0: i32) -> (i32, i32) {
    %c0_i32 = arith.constant 0 : i32
    %c0_i32_0 = arith.constant 0 : i32
    %c0_i32_1 = arith.constant 0 : i32
    return %c0_i32, %c0_i32_0 : i32, i32
  }
  func.func @transform_2(%arg0: i32) -> (i32, i32) {
    %c0_i32 = arith.constant 0 : i32
    %c0_i32_0 = arith.constant 0 : i32
    %c0_i32_1 = arith.constant 0 : i32
    return %c0_i32, %c0_i32_0 : i32, i32
  }
  func.func @transform_3(%arg0: i32) -> (i32, i32) {
    %c0_i32 = arith.constant 0 : i32
    %c0_i32_0 = arith.constant 0 : i32
    return %c0_i32, %arg0 : i32, i32
  }
}

module attributes {stable_mosaic.version = 11 : i64} {
  func.func @_cspn_step_kernel(%arg0: i32, %arg1: i32, %arg2: memref<1x18x18xf32, #tpu.memory_space<vmem>>, %arg3: memref<1x20x20xf32, #tpu.memory_space<vmem>>, %arg4: memref<1x22x22xf32, #tpu.memory_space<vmem>>, %arg5: memref<9x1x16x16xbf16, #tpu.memory_space<vmem>>, %arg6: memref<25x1x16x16xbf16, #tpu.memory_space<vmem>>, %arg7: memref<49x1x16x16xbf16, #tpu.memory_space<vmem>>, %arg8: memref<3x1x16x16xf32, #tpu.memory_space<vmem>>, %arg9: memref<1x16x16xf32, #tpu.memory_space<vmem>>, %arg10: memref<3x1x16x16xf32, #tpu.memory_space<vmem>>) attributes {dimension_semantics = [#tpu.dimension_semantics<parallel>, #tpu.dimension_semantics<parallel>], iteration_bounds = array<i64: 2, 1>, scalar_prefetch = 0 : i64, scratch_operands = 0 : i64, tpu.core_type = #tpu.core_type<tc>, window_params = [{transform_indices = @transform_0, window_bounds = array<i64: 1, 18, 18>}, {transform_indices = @transform_1, window_bounds = array<i64: 1, 20, 20>}, {transform_indices = @transform_2, window_bounds = array<i64: 1, 22, 22>}, {transform_indices = @transform_3, window_bounds = array<i64: 9, 1, 16, 16>}, {transform_indices = @transform_4, window_bounds = array<i64: 25, 1, 16, 16>}, {transform_indices = @transform_5, window_bounds = array<i64: 49, 1, 16, 16>}, {transform_indices = @transform_6, window_bounds = array<i64: 3, 1, 16, 16>}, {transform_indices = @transform_7, window_bounds = array<i64: 1, 16, 16>}, {transform_indices = @transform_8, window_bounds = array<i64: 3, 1, 16, 16>}]} {
    %c16_i32 = arith.constant 16 : i32
    %0 = arith.muli %arg1, %c16_i32 : i32
    %1 = tpu.assume_multiple %0, 8 : i32
    %c0 = arith.constant 0 : index
    %c0_0 = arith.constant 0 : index
    %c0_1 = arith.constant 0 : index
    %2 = vector.load %arg9[%c0, %c0_0, %c0_1] : memref<1x16x16xf32, #tpu.memory_space<vmem>>, vector<1x16x16xf32>
    %3 = vector.shape_cast %2 : vector<1x16x16xf32> to vector<16x16xf32>
    %c0_i32 = arith.constant 0 : i32
    %4 = arith.addi %1, %c0_i32 : i32
    %c0_2 = arith.constant 0 : index
    %5 = arith.index_cast %4 : i32 to index
    %c0_3 = arith.constant 0 : index
    %6 = vector.load %arg2[%c0_2, %5, %c0_3] : memref<1x18x18xf32, #tpu.memory_space<vmem>>, vector<1x16x16xf32>
    %7 = vector.shape_cast %6 : vector<1x16x16xf32> to vector<16x16xf32>
    %c0_4 = arith.constant 0 : index
    %c0_5 = arith.constant 0 : index
    %c0_6 = arith.constant 0 : index
    %c0_7 = arith.constant 0 : index
    %8 = vector.load %arg5[%c0_4, %c0_5, %c0_6, %c0_7] : memref<9x1x16x16xbf16, #tpu.memory_space<vmem>>, vector<1x1x16x16xbf16>
    %9 = vector.shape_cast %8 : vector<1x1x16x16xbf16> to vector<16x16xbf16>
    %10 = arith.extf %9 : vector<16x16xbf16> to vector<16x16xf32>
    %11 = arith.mulf %10, %7 : vector<16x16xf32>
    %c0_i32_8 = arith.constant 0 : i32
    %12 = arith.addi %1, %c0_i32_8 : i32
    %c0_9 = arith.constant 0 : index
    %13 = arith.index_cast %12 : i32 to index
    %c1 = arith.constant 1 : index
    %14 = vector.load %arg2[%c0_9, %13, %c1] : memref<1x18x18xf32, #tpu.memory_space<vmem>>, vector<1x16x16xf32>
    %15 = vector.shape_cast %14 : vector<1x16x16xf32> to vector<16x16xf32>
    %c1_10 = arith.constant 1 : index
    %c0_11 = arith.constant 0 : index
    %c0_12 = arith.constant 0 : index
    %c0_13 = arith.constant 0 : index
    %16 = vector.load %arg5[%c1_10, %c0_11, %c0_12, %c0_13] : memref<9x1x16x16xbf16, #tpu.memory_space<vmem>>, vector<1x1x16x16xbf16>
    %17 = vector.shape_cast %16 : vector<1x1x16x16xbf16> to vector<16x16xbf16>
    %18 = arith.extf %17 : vector<16x16xbf16> to vector<16x16xf32>
    %19 = arith.mulf %18, %15 : vector<16x16xf32>
    %20 = arith.addf %11, %19 : vector<16x16xf32>
    %c0_i32_14 = arith.constant 0 : i32
    %21 = arith.addi %1, %c0_i32_14 : i32
    %c0_15 = arith.constant 0 : index
    %22 = arith.index_cast %21 : i32 to index
    %c2 = arith.constant 2 : index
    %23 = vector.load %arg2[%c0_15, %22, %c2] : memref<1x18x18xf32, #tpu.memory_space<vmem>>, vector<1x16x16xf32>
    %24 = vector.shape_cast %23 : vector<1x16x16xf32> to vector<16x16xf32>
    %c2_16 = arith.constant 2 : index
    %c0_17 = arith.constant 0 : index
    %c0_18 = arith.constant 0 : index
    %c0_19 = arith.constant 0 : index
    %25 = vector.load %arg5[%c2_16, %c0_17, %c0_18, %c0_19] : memref<9x1x16x16xbf16, #tpu.memory_space<vmem>>, vector<1x1x16x16xbf16>
    %26 = vector.shape_cast %25 : vector<1x1x16x16xbf16> to vector<16x16xbf16>
    %27 = arith.extf %26 : vector<16x16xbf16> to vector<16x16xf32>
    %28 = arith.mulf %27, %24 : vector<16x16xf32>
    %29 = arith.addf %20, %28 : vector<16x16xf32>
    %c1_i32 = arith.constant 1 : i32
    %30 = arith.addi %1, %c1_i32 : i32
    %c0_20 = arith.constant 0 : index
    %31 = arith.index_cast %30 : i32 to index
    %c0_21 = arith.constant 0 : index
    %32 = vector.load %arg2[%c0_20, %31, %c0_21] : memref<1x18x18xf32, #tpu.memory_space<vmem>>, vector<1x16x16xf32>
    %33 = vector.shape_cast %32 : vector<1x16x16xf32> to vector<16x16xf32>
    %c3 = arith.constant 3 : index
    %c0_22 = arith.constant 0 : index
    %c0_23 = arith.constant 0 : index
    %c0_24 = arith.constant 0 : index
    %34 = vector.load %arg5[%c3, %c0_22, %c0_23, %c0_24] : memref<9x1x16x16xbf16, #tpu.memory_space<vmem>>, vector<1x1x16x16xbf16>
    %35 = vector.shape_cast %34 : vector<1x1x16x16xbf16> to vector<16x16xbf16>
    %36 = arith.extf %35 : vector<16x16xbf16> to vector<16x16xf32>
    %37 = arith.mulf %36, %33 : vector<16x16xf32>
    %38 = arith.addf %29, %37 : vector<16x16xf32>
    %c1_i32_25 = arith.constant 1 : i32
    %39 = arith.addi %1, %c1_i32_25 : i32
    %c0_26 = arith.constant 0 : index
    %40 = arith.index_cast %39 : i32 to index
    %c1_27 = arith.constant 1 : index
    %41 = vector.load %arg2[%c0_26, %40, %c1_27] : memref<1x18x18xf32, #tpu.memory_space<vmem>>, vector<1x16x16xf32>
    %42 = vector.shape_cast %41 : vector<1x16x16xf32> to vector<16x16xf32>
    %c4 = arith.constant 4 : index
    %c0_28 = arith.constant 0 : index
    %c0_29 = arith.constant 0 : index
    %c0_30 = arith.constant 0 : index
    %43 = vector.load %arg5[%c4, %c0_28, %c0_29, %c0_30] : memref<9x1x16x16xbf16, #tpu.memory_space<vmem>>, vector<1x1x16x16xbf16>
    %44 = vector.shape_cast %43 : vector<1x1x16x16xbf16> to vector<16x16xbf16>
    %45 = arith.extf %44 : vector<16x16xbf16> to vector<16x16xf32>
    %46 = arith.mulf %45, %42 : vector<16x16xf32>
    %47 = arith.addf %38, %46 : vector<16x16xf32>
    %c1_i32_31 = arith.constant 1 : i32
    %48 = arith.addi %1, %c1_i32_31 : i32
    %c0_32 = arith.constant 0 : index
    %49 = arith.index_cast %48 : i32 to index
    %c2_33 = arith.constant 2 : index
    %50 = vector.load %arg2[%c0_32, %49, %c2_33] : memref<1x18x18xf32, #tpu.memory_space<vmem>>, vector<1x16x16xf32>
    %51 = vector.shape_cast %50 : vector<1x16x16xf32> to vector<16x16xf32>
    %c5 = arith.constant 5 : index
    %c0_34 = arith.constant 0 : index
    %c0_35 = arith.constant 0 : index
    %c0_36 = arith.constant 0 : index
    %52 = vector.load %arg5[%c5, %c0_34, %c0_35, %c0_36] : memref<9x1x16x16xbf16, #tpu.memory_space<vmem>>, vector<1x1x16x16xbf16>
    %53 = vector.shape_cast %52 : vector<1x1x16x16xbf16> to vector<16x16xbf16>
    %54 = arith.extf %53 : vector<16x16xbf16> to vector<16x16xf32>
    %55 = arith.mulf %54, %51 : vector<16x16xf32>
    %56 = arith.addf %47, %55 : vector<16x16xf32>
    %c2_i32 = arith.constant 2 : i32
    %57 = arith.addi %1, %c2_i32 : i32
    %c0_37 = arith.constant 0 : index
    %58 = arith.index_cast %57 : i32 to index
    %c0_38 = arith.constant 0 : index
    %59 = vector.load %arg2[%c0_37, %58, %c0_38] : memref<1x18x18xf32, #tpu.memory_space<vmem>>, vector<1x16x16xf32>
    %60 = vector.shape_cast %59 : vector<1x16x16xf32> to vector<16x16xf32>
    %c6 = arith.constant 6 : index
    %c0_39 = arith.constant 0 : index
    %c0_40 = arith.constant 0 : index
    %c0_41 = arith.constant 0 : index
    %61 = vector.load %arg5[%c6, %c0_39, %c0_40, %c0_41] : memref<9x1x16x16xbf16, #tpu.memory_space<vmem>>, vector<1x1x16x16xbf16>
    %62 = vector.shape_cast %61 : vector<1x1x16x16xbf16> to vector<16x16xbf16>
    %63 = arith.extf %62 : vector<16x16xbf16> to vector<16x16xf32>
    %64 = arith.mulf %63, %60 : vector<16x16xf32>
    %65 = arith.addf %56, %64 : vector<16x16xf32>
    %c2_i32_42 = arith.constant 2 : i32
    %66 = arith.addi %1, %c2_i32_42 : i32
    %c0_43 = arith.constant 0 : index
    %67 = arith.index_cast %66 : i32 to index
    %c1_44 = arith.constant 1 : index
    %68 = vector.load %arg2[%c0_43, %67, %c1_44] : memref<1x18x18xf32, #tpu.memory_space<vmem>>, vector<1x16x16xf32>
    %69 = vector.shape_cast %68 : vector<1x16x16xf32> to vector<16x16xf32>
    %c7 = arith.constant 7 : index
    %c0_45 = arith.constant 0 : index
    %c0_46 = arith.constant 0 : index
    %c0_47 = arith.constant 0 : index
    %70 = vector.load %arg5[%c7, %c0_45, %c0_46, %c0_47] : memref<9x1x16x16xbf16, #tpu.memory_space<vmem>>, vector<1x1x16x16xbf16>
    %71 = vector.shape_cast %70 : vector<1x1x16x16xbf16> to vector<16x16xbf16>
    %72 = arith.extf %71 : vector<16x16xbf16> to vector<16x16xf32>
    %73 = arith.mulf %72, %69 : vector<16x16xf32>
    %74 = arith.addf %65, %73 : vector<16x16xf32>
    %c2_i32_48 = arith.constant 2 : i32
    %75 = arith.addi %1, %c2_i32_48 : i32
    %c0_49 = arith.constant 0 : index
    %76 = arith.index_cast %75 : i32 to index
    %c2_50 = arith.constant 2 : index
    %77 = vector.load %arg2[%c0_49, %76, %c2_50] : memref<1x18x18xf32, #tpu.memory_space<vmem>>, vector<1x16x16xf32>
    %78 = vector.shape_cast %77 : vector<1x16x16xf32> to vector<16x16xf32>
    %c8 = arith.constant 8 : index
    %c0_51 = arith.constant 0 : index
    %c0_52 = arith.constant 0 : index
    %c0_53 = arith.constant 0 : index
    %79 = vector.load %arg5[%c8, %c0_51, %c0_52, %c0_53] : memref<9x1x16x16xbf16, #tpu.memory_space<vmem>>, vector<1x1x16x16xbf16>
    %80 = vector.shape_cast %79 : vector<1x1x16x16xbf16> to vector<16x16xbf16>
    %81 = arith.extf %80 : vector<16x16xbf16> to vector<16x16xf32>
    %82 = arith.mulf %81, %78 : vector<16x16xf32>
    %83 = arith.addf %74, %82 : vector<16x16xf32>
    %c0_i32_54 = arith.constant 0 : i32
    %84 = arith.addi %1, %c0_i32_54 : i32
    %c0_55 = arith.constant 0 : index
    %85 = arith.index_cast %84 : i32 to index
    %c0_56 = arith.constant 0 : index
    %86 = vector.load %arg3[%c0_55, %85, %c0_56] : memref<1x20x20xf32, #tpu.memory_space<vmem>>, vector<1x16x16xf32>
    %87 = vector.shape_cast %86 : vector<1x16x16xf32> to vector<16x16xf32>
    %c0_57 = arith.constant 0 : index
    %c0_58 = arith.constant 0 : index
    %c0_59 = arith.constant 0 : index
    %c0_60 = arith.constant 0 : index
    %88 = vector.load %arg6[%c0_57, %c0_58, %c0_59, %c0_60] : memref<25x1x16x16xbf16, #tpu.memory_space<vmem>>, vector<1x1x16x16xbf16>
    %89 = vector.shape_cast %88 : vector<1x1x16x16xbf16> to vector<16x16xbf16>
    %90 = arith.extf %89 : vector<16x16xbf16> to vector<16x16xf32>
    %91 = arith.mulf %90, %87 : vector<16x16xf32>
    %c0_i32_61 = arith.constant 0 : i32
    %92 = arith.addi %1, %c0_i32_61 : i32
    %c0_62 = arith.constant 0 : index
    %93 = arith.index_cast %92 : i32 to index
    %c1_63 = arith.constant 1 : index
    %94 = vector.load %arg3[%c0_62, %93, %c1_63] : memref<1x20x20xf32, #tpu.memory_space<vmem>>, vector<1x16x16xf32>
    %95 = vector.shape_cast %94 : vector<1x16x16xf32> to vector<16x16xf32>
    %c1_64 = arith.constant 1 : index
    %c0_65 = arith.constant 0 : index
    %c0_66 = arith.constant 0 : index
    %c0_67 = arith.constant 0 : index
    %96 = vector.load %arg6[%c1_64, %c0_65, %c0_66, %c0_67] : memref<25x1x16x16xbf16, #tpu.memory_space<vmem>>, vector<1x1x16x16xbf16>
    %97 = vector.shape_cast %96 : vector<1x1x16x16xbf16> to vector<16x16xbf16>
    %98 = arith.extf %97 : vector<16x16xbf16> to vector<16x16xf32>
    %99 = arith.mulf %98, %95 : vector<16x16xf32>
    %100 = arith.addf %91, %99 : vector<16x16xf32>
    %c0_i32_68 = arith.constant 0 : i32
    %101 = arith.addi %1, %c0_i32_68 : i32
    %c0_69 = arith.constant 0 : index
    %102 = arith.index_cast %101 : i32 to index
    %c2_70 = arith.constant 2 : index
    %103 = vector.load %arg3[%c0_69, %102, %c2_70] : memref<1x20x20xf32, #tpu.memory_space<vmem>>, vector<1x16x16xf32>
    %104 = vector.shape_cast %103 : vector<1x16x16xf32> to vector<16x16xf32>
    %c2_71 = arith.constant 2 : index
    %c0_72 = arith.constant 0 : index
    %c0_73 = arith.constant 0 : index
    %c0_74 = arith.constant 0 : index
    %105 = vector.load %arg6[%c2_71, %c0_72, %c0_73, %c0_74] : memref<25x1x16x16xbf16, #tpu.memory_space<vmem>>, vector<1x1x16x16xbf16>
    %106 = vector.shape_cast %105 : vector<1x1x16x16xbf16> to vector<16x16xbf16>
    %107 = arith.extf %106 : vector<16x16xbf16> to vector<16x16xf32>
    %108 = arith.mulf %107, %104 : vector<16x16xf32>
    %109 = arith.addf %100, %108 : vector<16x16xf32>
    %c0_i32_75 = arith.constant 0 : i32
    %110 = arith.addi %1, %c0_i32_75 : i32
    %c0_76 = arith.constant 0 : index
    %111 = arith.index_cast %110 : i32 to index
    %c3_77 = arith.constant 3 : index
    %112 = vector.load %arg3[%c0_76, %111, %c3_77] : memref<1x20x20xf32, #tpu.memory_space<vmem>>, vector<1x16x16xf32>
    %113 = vector.shape_cast %112 : vector<1x16x16xf32> to vector<16x16xf32>
    %c3_78 = arith.constant 3 : index
    %c0_79 = arith.constant 0 : index
    %c0_80 = arith.constant 0 : index
    %c0_81 = arith.constant 0 : index
    %114 = vector.load %arg6[%c3_78, %c0_79, %c0_80, %c0_81] : memref<25x1x16x16xbf16, #tpu.memory_space<vmem>>, vector<1x1x16x16xbf16>
    %115 = vector.shape_cast %114 : vector<1x1x16x16xbf16> to vector<16x16xbf16>
    %116 = arith.extf %115 : vector<16x16xbf16> to vector<16x16xf32>
    %117 = arith.mulf %116, %113 : vector<16x16xf32>
    %118 = arith.addf %109, %117 : vector<16x16xf32>
    %c0_i32_82 = arith.constant 0 : i32
    %119 = arith.addi %1, %c0_i32_82 : i32
    %c0_83 = arith.constant 0 : index
    %120 = arith.index_cast %119 : i32 to index
    %c4_84 = arith.constant 4 : index
    %121 = vector.load %arg3[%c0_83, %120, %c4_84] : memref<1x20x20xf32, #tpu.memory_space<vmem>>, vector<1x16x16xf32>
    %122 = vector.shape_cast %121 : vector<1x16x16xf32> to vector<16x16xf32>
    %c4_85 = arith.constant 4 : index
    %c0_86 = arith.constant 0 : index
    %c0_87 = arith.constant 0 : index
    %c0_88 = arith.constant 0 : index
    %123 = vector.load %arg6[%c4_85, %c0_86, %c0_87, %c0_88] : memref<25x1x16x16xbf16, #tpu.memory_space<vmem>>, vector<1x1x16x16xbf16>
    %124 = vector.shape_cast %123 : vector<1x1x16x16xbf16> to vector<16x16xbf16>
    %125 = arith.extf %124 : vector<16x16xbf16> to vector<16x16xf32>
    %126 = arith.mulf %125, %122 : vector<16x16xf32>
    %127 = arith.addf %118, %126 : vector<16x16xf32>
    %c1_i32_89 = arith.constant 1 : i32
    %128 = arith.addi %1, %c1_i32_89 : i32
    %c0_90 = arith.constant 0 : index
    %129 = arith.index_cast %128 : i32 to index
    %c0_91 = arith.constant 0 : index
    %130 = vector.load %arg3[%c0_90, %129, %c0_91] : memref<1x20x20xf32, #tpu.memory_space<vmem>>, vector<1x16x16xf32>
    %131 = vector.shape_cast %130 : vector<1x16x16xf32> to vector<16x16xf32>
    %c5_92 = arith.constant 5 : index
    %c0_93 = arith.constant 0 : index
    %c0_94 = arith.constant 0 : index
    %c0_95 = arith.constant 0 : index
    %132 = vector.load %arg6[%c5_92, %c0_93, %c0_94, %c0_95] : memref<25x1x16x16xbf16, #tpu.memory_space<vmem>>, vector<1x1x16x16xbf16>
    %133 = vector.shape_cast %132 : vector<1x1x16x16xbf16> to vector<16x16xbf16>
    %134 = arith.extf %133 : vector<16x16xbf16> to vector<16x16xf32>
    %135 = arith.mulf %134, %131 : vector<16x16xf32>
    %136 = arith.addf %127, %135 : vector<16x16xf32>
    %c1_i32_96 = arith.constant 1 : i32
    %137 = arith.addi %1, %c1_i32_96 : i32
    %c0_97 = arith.constant 0 : index
    %138 = arith.index_cast %137 : i32 to index
    %c1_98 = arith.constant 1 : index
    %139 = vector.load %arg3[%c0_97, %138, %c1_98] : memref<1x20x20xf32, #tpu.memory_space<vmem>>, vector<1x16x16xf32>
    %140 = vector.shape_cast %139 : vector<1x16x16xf32> to vector<16x16xf32>
    %c6_99 = arith.constant 6 : index
    %c0_100 = arith.constant 0 : index
    %c0_101 = arith.constant 0 : index
    %c0_102 = arith.constant 0 : index
    %141 = vector.load %arg6[%c6_99, %c0_100, %c0_101, %c0_102] : memref<25x1x16x16xbf16, #tpu.memory_space<vmem>>, vector<1x1x16x16xbf16>
    %142 = vector.shape_cast %141 : vector<1x1x16x16xbf16> to vector<16x16xbf16>
    %143 = arith.extf %142 : vector<16x16xbf16> to vector<16x16xf32>
    %144 = arith.mulf %143, %140 : vector<16x16xf32>
    %145 = arith.addf %136, %144 : vector<16x16xf32>
    %c1_i32_103 = arith.constant 1 : i32
    %146 = arith.addi %1, %c1_i32_103 : i32
    %c0_104 = arith.constant 0 : index
    %147 = arith.index_cast %146 : i32 to index
    %c2_105 = arith.constant 2 : index
    %148 = vector.load %arg3[%c0_104, %147, %c2_105] : memref<1x20x20xf32, #tpu.memory_space<vmem>>, vector<1x16x16xf32>
    %149 = vector.shape_cast %148 : vector<1x16x16xf32> to vector<16x16xf32>
    %c7_106 = arith.constant 7 : index
    %c0_107 = arith.constant 0 : index
    %c0_108 = arith.constant 0 : index
    %c0_109 = arith.constant 0 : index
    %150 = vector.load %arg6[%c7_106, %c0_107, %c0_108, %c0_109] : memref<25x1x16x16xbf16, #tpu.memory_space<vmem>>, vector<1x1x16x16xbf16>
    %151 = vector.shape_cast %150 : vector<1x1x16x16xbf16> to vector<16x16xbf16>
    %152 = arith.extf %151 : vector<16x16xbf16> to vector<16x16xf32>
    %153 = arith.mulf %152, %149 : vector<16x16xf32>
    %154 = arith.addf %145, %153 : vector<16x16xf32>
    %c1_i32_110 = arith.constant 1 : i32
    %155 = arith.addi %1, %c1_i32_110 : i32
    %c0_111 = arith.constant 0 : index
    %156 = arith.index_cast %155 : i32 to index
    %c3_112 = arith.constant 3 : index
    %157 = vector.load %arg3[%c0_111, %156, %c3_112] : memref<1x20x20xf32, #tpu.memory_space<vmem>>, vector<1x16x16xf32>
    %158 = vector.shape_cast %157 : vector<1x16x16xf32> to vector<16x16xf32>
    %c8_113 = arith.constant 8 : index
    %c0_114 = arith.constant 0 : index
    %c0_115 = arith.constant 0 : index
    %c0_116 = arith.constant 0 : index
    %159 = vector.load %arg6[%c8_113, %c0_114, %c0_115, %c0_116] : memref<25x1x16x16xbf16, #tpu.memory_space<vmem>>, vector<1x1x16x16xbf16>
    %160 = vector.shape_cast %159 : vector<1x1x16x16xbf16> to vector<16x16xbf16>
    %161 = arith.extf %160 : vector<16x16xbf16> to vector<16x16xf32>
    %162 = arith.mulf %161, %158 : vector<16x16xf32>
    %163 = arith.addf %154, %162 : vector<16x16xf32>
    %c1_i32_117 = arith.constant 1 : i32
    %164 = arith.addi %1, %c1_i32_117 : i32
    %c0_118 = arith.constant 0 : index
    %165 = arith.index_cast %164 : i32 to index
    %c4_119 = arith.constant 4 : index
    %166 = vector.load %arg3[%c0_118, %165, %c4_119] : memref<1x20x20xf32, #tpu.memory_space<vmem>>, vector<1x16x16xf32>
    %167 = vector.shape_cast %166 : vector<1x16x16xf32> to vector<16x16xf32>
    %c9 = arith.constant 9 : index
    %c0_120 = arith.constant 0 : index
    %c0_121 = arith.constant 0 : index
    %c0_122 = arith.constant 0 : index
    %168 = vector.load %arg6[%c9, %c0_120, %c0_121, %c0_122] : memref<25x1x16x16xbf16, #tpu.memory_space<vmem>>, vector<1x1x16x16xbf16>
    %169 = vector.shape_cast %168 : vector<1x1x16x16xbf16> to vector<16x16xbf16>
    %170 = arith.extf %169 : vector<16x16xbf16> to vector<16x16xf32>
    %171 = arith.mulf %170, %167 : vector<16x16xf32>
    %172 = arith.addf %163, %171 : vector<16x16xf32>
    %c2_i32_123 = arith.constant 2 : i32
    %173 = arith.addi %1, %c2_i32_123 : i32
    %c0_124 = arith.constant 0 : index
    %174 = arith.index_cast %173 : i32 to index
    %c0_125 = arith.constant 0 : index
    %175 = vector.load %arg3[%c0_124, %174, %c0_125] : memref<1x20x20xf32, #tpu.memory_space<vmem>>, vector<1x16x16xf32>
    %176 = vector.shape_cast %175 : vector<1x16x16xf32> to vector<16x16xf32>
    %c10 = arith.constant 10 : index
    %c0_126 = arith.constant 0 : index
    %c0_127 = arith.constant 0 : index
    %c0_128 = arith.constant 0 : index
    %177 = vector.load %arg6[%c10, %c0_126, %c0_127, %c0_128] : memref<25x1x16x16xbf16, #tpu.memory_space<vmem>>, vector<1x1x16x16xbf16>
    %178 = vector.shape_cast %177 : vector<1x1x16x16xbf16> to vector<16x16xbf16>
    %179 = arith.extf %178 : vector<16x16xbf16> to vector<16x16xf32>
    %180 = arith.mulf %179, %176 : vector<16x16xf32>
    %181 = arith.addf %172, %180 : vector<16x16xf32>
    %c2_i32_129 = arith.constant 2 : i32
    %182 = arith.addi %1, %c2_i32_129 : i32
    %c0_130 = arith.constant 0 : index
    %183 = arith.index_cast %182 : i32 to index
    %c1_131 = arith.constant 1 : index
    %184 = vector.load %arg3[%c0_130, %183, %c1_131] : memref<1x20x20xf32, #tpu.memory_space<vmem>>, vector<1x16x16xf32>
    %185 = vector.shape_cast %184 : vector<1x16x16xf32> to vector<16x16xf32>
    %c11 = arith.constant 11 : index
    %c0_132 = arith.constant 0 : index
    %c0_133 = arith.constant 0 : index
    %c0_134 = arith.constant 0 : index
    %186 = vector.load %arg6[%c11, %c0_132, %c0_133, %c0_134] : memref<25x1x16x16xbf16, #tpu.memory_space<vmem>>, vector<1x1x16x16xbf16>
    %187 = vector.shape_cast %186 : vector<1x1x16x16xbf16> to vector<16x16xbf16>
    %188 = arith.extf %187 : vector<16x16xbf16> to vector<16x16xf32>
    %189 = arith.mulf %188, %185 : vector<16x16xf32>
    %190 = arith.addf %181, %189 : vector<16x16xf32>
    %c2_i32_135 = arith.constant 2 : i32
    %191 = arith.addi %1, %c2_i32_135 : i32
    %c0_136 = arith.constant 0 : index
    %192 = arith.index_cast %191 : i32 to index
    %c2_137 = arith.constant 2 : index
    %193 = vector.load %arg3[%c0_136, %192, %c2_137] : memref<1x20x20xf32, #tpu.memory_space<vmem>>, vector<1x16x16xf32>
    %194 = vector.shape_cast %193 : vector<1x16x16xf32> to vector<16x16xf32>
    %c12 = arith.constant 12 : index
    %c0_138 = arith.constant 0 : index
    %c0_139 = arith.constant 0 : index
    %c0_140 = arith.constant 0 : index
    %195 = vector.load %arg6[%c12, %c0_138, %c0_139, %c0_140] : memref<25x1x16x16xbf16, #tpu.memory_space<vmem>>, vector<1x1x16x16xbf16>
    %196 = vector.shape_cast %195 : vector<1x1x16x16xbf16> to vector<16x16xbf16>
    %197 = arith.extf %196 : vector<16x16xbf16> to vector<16x16xf32>
    %198 = arith.mulf %197, %194 : vector<16x16xf32>
    %199 = arith.addf %190, %198 : vector<16x16xf32>
    %c2_i32_141 = arith.constant 2 : i32
    %200 = arith.addi %1, %c2_i32_141 : i32
    %c0_142 = arith.constant 0 : index
    %201 = arith.index_cast %200 : i32 to index
    %c3_143 = arith.constant 3 : index
    %202 = vector.load %arg3[%c0_142, %201, %c3_143] : memref<1x20x20xf32, #tpu.memory_space<vmem>>, vector<1x16x16xf32>
    %203 = vector.shape_cast %202 : vector<1x16x16xf32> to vector<16x16xf32>
    %c13 = arith.constant 13 : index
    %c0_144 = arith.constant 0 : index
    %c0_145 = arith.constant 0 : index
    %c0_146 = arith.constant 0 : index
    %204 = vector.load %arg6[%c13, %c0_144, %c0_145, %c0_146] : memref<25x1x16x16xbf16, #tpu.memory_space<vmem>>, vector<1x1x16x16xbf16>
    %205 = vector.shape_cast %204 : vector<1x1x16x16xbf16> to vector<16x16xbf16>
    %206 = arith.extf %205 : vector<16x16xbf16> to vector<16x16xf32>
    %207 = arith.mulf %206, %203 : vector<16x16xf32>
    %208 = arith.addf %199, %207 : vector<16x16xf32>
    %c2_i32_147 = arith.constant 2 : i32
    %209 = arith.addi %1, %c2_i32_147 : i32
    %c0_148 = arith.constant 0 : index
    %210 = arith.index_cast %209 : i32 to index
    %c4_149 = arith.constant 4 : index
    %211 = vector.load %arg3[%c0_148, %210, %c4_149] : memref<1x20x20xf32, #tpu.memory_space<vmem>>, vector<1x16x16xf32>
    %212 = vector.shape_cast %211 : vector<1x16x16xf32> to vector<16x16xf32>
    %c14 = arith.constant 14 : index
    %c0_150 = arith.constant 0 : index
    %c0_151 = arith.constant 0 : index
    %c0_152 = arith.constant 0 : index
    %213 = vector.load %arg6[%c14, %c0_150, %c0_151, %c0_152] : memref<25x1x16x16xbf16, #tpu.memory_space<vmem>>, vector<1x1x16x16xbf16>
    %214 = vector.shape_cast %213 : vector<1x1x16x16xbf16> to vector<16x16xbf16>
    %215 = arith.extf %214 : vector<16x16xbf16> to vector<16x16xf32>
    %216 = arith.mulf %215, %212 : vector<16x16xf32>
    %217 = arith.addf %208, %216 : vector<16x16xf32>
    %c3_i32 = arith.constant 3 : i32
    %218 = arith.addi %1, %c3_i32 : i32
    %c0_153 = arith.constant 0 : index
    %219 = arith.index_cast %218 : i32 to index
    %c0_154 = arith.constant 0 : index
    %220 = vector.load %arg3[%c0_153, %219, %c0_154] : memref<1x20x20xf32, #tpu.memory_space<vmem>>, vector<1x16x16xf32>
    %221 = vector.shape_cast %220 : vector<1x16x16xf32> to vector<16x16xf32>
    %c15 = arith.constant 15 : index
    %c0_155 = arith.constant 0 : index
    %c0_156 = arith.constant 0 : index
    %c0_157 = arith.constant 0 : index
    %222 = vector.load %arg6[%c15, %c0_155, %c0_156, %c0_157] : memref<25x1x16x16xbf16, #tpu.memory_space<vmem>>, vector<1x1x16x16xbf16>
    %223 = vector.shape_cast %222 : vector<1x1x16x16xbf16> to vector<16x16xbf16>
    %224 = arith.extf %223 : vector<16x16xbf16> to vector<16x16xf32>
    %225 = arith.mulf %224, %221 : vector<16x16xf32>
    %226 = arith.addf %217, %225 : vector<16x16xf32>
    %c3_i32_158 = arith.constant 3 : i32
    %227 = arith.addi %1, %c3_i32_158 : i32
    %c0_159 = arith.constant 0 : index
    %228 = arith.index_cast %227 : i32 to index
    %c1_160 = arith.constant 1 : index
    %229 = vector.load %arg3[%c0_159, %228, %c1_160] : memref<1x20x20xf32, #tpu.memory_space<vmem>>, vector<1x16x16xf32>
    %230 = vector.shape_cast %229 : vector<1x16x16xf32> to vector<16x16xf32>
    %c16 = arith.constant 16 : index
    %c0_161 = arith.constant 0 : index
    %c0_162 = arith.constant 0 : index
    %c0_163 = arith.constant 0 : index
    %231 = vector.load %arg6[%c16, %c0_161, %c0_162, %c0_163] : memref<25x1x16x16xbf16, #tpu.memory_space<vmem>>, vector<1x1x16x16xbf16>
    %232 = vector.shape_cast %231 : vector<1x1x16x16xbf16> to vector<16x16xbf16>
    %233 = arith.extf %232 : vector<16x16xbf16> to vector<16x16xf32>
    %234 = arith.mulf %233, %230 : vector<16x16xf32>
    %235 = arith.addf %226, %234 : vector<16x16xf32>
    %c3_i32_164 = arith.constant 3 : i32
    %236 = arith.addi %1, %c3_i32_164 : i32
    %c0_165 = arith.constant 0 : index
    %237 = arith.index_cast %236 : i32 to index
    %c2_166 = arith.constant 2 : index
    %238 = vector.load %arg3[%c0_165, %237, %c2_166] : memref<1x20x20xf32, #tpu.memory_space<vmem>>, vector<1x16x16xf32>
    %239 = vector.shape_cast %238 : vector<1x16x16xf32> to vector<16x16xf32>
    %c17 = arith.constant 17 : index
    %c0_167 = arith.constant 0 : index
    %c0_168 = arith.constant 0 : index
    %c0_169 = arith.constant 0 : index
    %240 = vector.load %arg6[%c17, %c0_167, %c0_168, %c0_169] : memref<25x1x16x16xbf16, #tpu.memory_space<vmem>>, vector<1x1x16x16xbf16>
    %241 = vector.shape_cast %240 : vector<1x1x16x16xbf16> to vector<16x16xbf16>
    %242 = arith.extf %241 : vector<16x16xbf16> to vector<16x16xf32>
    %243 = arith.mulf %242, %239 : vector<16x16xf32>
    %244 = arith.addf %235, %243 : vector<16x16xf32>
    %c3_i32_170 = arith.constant 3 : i32
    %245 = arith.addi %1, %c3_i32_170 : i32
    %c0_171 = arith.constant 0 : index
    %246 = arith.index_cast %245 : i32 to index
    %c3_172 = arith.constant 3 : index
    %247 = vector.load %arg3[%c0_171, %246, %c3_172] : memref<1x20x20xf32, #tpu.memory_space<vmem>>, vector<1x16x16xf32>
    %248 = vector.shape_cast %247 : vector<1x16x16xf32> to vector<16x16xf32>
    %c18 = arith.constant 18 : index
    %c0_173 = arith.constant 0 : index
    %c0_174 = arith.constant 0 : index
    %c0_175 = arith.constant 0 : index
    %249 = vector.load %arg6[%c18, %c0_173, %c0_174, %c0_175] : memref<25x1x16x16xbf16, #tpu.memory_space<vmem>>, vector<1x1x16x16xbf16>
    %250 = vector.shape_cast %249 : vector<1x1x16x16xbf16> to vector<16x16xbf16>
    %251 = arith.extf %250 : vector<16x16xbf16> to vector<16x16xf32>
    %252 = arith.mulf %251, %248 : vector<16x16xf32>
    %253 = arith.addf %244, %252 : vector<16x16xf32>
    %c3_i32_176 = arith.constant 3 : i32
    %254 = arith.addi %1, %c3_i32_176 : i32
    %c0_177 = arith.constant 0 : index
    %255 = arith.index_cast %254 : i32 to index
    %c4_178 = arith.constant 4 : index
    %256 = vector.load %arg3[%c0_177, %255, %c4_178] : memref<1x20x20xf32, #tpu.memory_space<vmem>>, vector<1x16x16xf32>
    %257 = vector.shape_cast %256 : vector<1x16x16xf32> to vector<16x16xf32>
    %c19 = arith.constant 19 : index
    %c0_179 = arith.constant 0 : index
    %c0_180 = arith.constant 0 : index
    %c0_181 = arith.constant 0 : index
    %258 = vector.load %arg6[%c19, %c0_179, %c0_180, %c0_181] : memref<25x1x16x16xbf16, #tpu.memory_space<vmem>>, vector<1x1x16x16xbf16>
    %259 = vector.shape_cast %258 : vector<1x1x16x16xbf16> to vector<16x16xbf16>
    %260 = arith.extf %259 : vector<16x16xbf16> to vector<16x16xf32>
    %261 = arith.mulf %260, %257 : vector<16x16xf32>
    %262 = arith.addf %253, %261 : vector<16x16xf32>
    %c4_i32 = arith.constant 4 : i32
    %263 = arith.addi %1, %c4_i32 : i32
    %c0_182 = arith.constant 0 : index
    %264 = arith.index_cast %263 : i32 to index
    %c0_183 = arith.constant 0 : index
    %265 = vector.load %arg3[%c0_182, %264, %c0_183] : memref<1x20x20xf32, #tpu.memory_space<vmem>>, vector<1x16x16xf32>
    %266 = vector.shape_cast %265 : vector<1x16x16xf32> to vector<16x16xf32>
    %c20 = arith.constant 20 : index
    %c0_184 = arith.constant 0 : index
    %c0_185 = arith.constant 0 : index
    %c0_186 = arith.constant 0 : index
    %267 = vector.load %arg6[%c20, %c0_184, %c0_185, %c0_186] : memref<25x1x16x16xbf16, #tpu.memory_space<vmem>>, vector<1x1x16x16xbf16>
    %268 = vector.shape_cast %267 : vector<1x1x16x16xbf16> to vector<16x16xbf16>
    %269 = arith.extf %268 : vector<16x16xbf16> to vector<16x16xf32>
    %270 = arith.mulf %269, %266 : vector<16x16xf32>
    %271 = arith.addf %262, %270 : vector<16x16xf32>
    %c4_i32_187 = arith.constant 4 : i32
    %272 = arith.addi %1, %c4_i32_187 : i32
    %c0_188 = arith.constant 0 : index
    %273 = arith.index_cast %272 : i32 to index
    %c1_189 = arith.constant 1 : index
    %274 = vector.load %arg3[%c0_188, %273, %c1_189] : memref<1x20x20xf32, #tpu.memory_space<vmem>>, vector<1x16x16xf32>
    %275 = vector.shape_cast %274 : vector<1x16x16xf32> to vector<16x16xf32>
    %c21 = arith.constant 21 : index
    %c0_190 = arith.constant 0 : index
    %c0_191 = arith.constant 0 : index
    %c0_192 = arith.constant 0 : index
    %276 = vector.load %arg6[%c21, %c0_190, %c0_191, %c0_192] : memref<25x1x16x16xbf16, #tpu.memory_space<vmem>>, vector<1x1x16x16xbf16>
    %277 = vector.shape_cast %276 : vector<1x1x16x16xbf16> to vector<16x16xbf16>
    %278 = arith.extf %277 : vector<16x16xbf16> to vector<16x16xf32>
    %279 = arith.mulf %278, %275 : vector<16x16xf32>
    %280 = arith.addf %271, %279 : vector<16x16xf32>
    %c4_i32_193 = arith.constant 4 : i32
    %281 = arith.addi %1, %c4_i32_193 : i32
    %c0_194 = arith.constant 0 : index
    %282 = arith.index_cast %281 : i32 to index
    %c2_195 = arith.constant 2 : index
    %283 = vector.load %arg3[%c0_194, %282, %c2_195] : memref<1x20x20xf32, #tpu.memory_space<vmem>>, vector<1x16x16xf32>
    %284 = vector.shape_cast %283 : vector<1x16x16xf32> to vector<16x16xf32>
    %c22 = arith.constant 22 : index
    %c0_196 = arith.constant 0 : index
    %c0_197 = arith.constant 0 : index
    %c0_198 = arith.constant 0 : index
    %285 = vector.load %arg6[%c22, %c0_196, %c0_197, %c0_198] : memref<25x1x16x16xbf16, #tpu.memory_space<vmem>>, vector<1x1x16x16xbf16>
    %286 = vector.shape_cast %285 : vector<1x1x16x16xbf16> to vector<16x16xbf16>
    %287 = arith.extf %286 : vector<16x16xbf16> to vector<16x16xf32>
    %288 = arith.mulf %287, %284 : vector<16x16xf32>
    %289 = arith.addf %280, %288 : vector<16x16xf32>
    %c4_i32_199 = arith.constant 4 : i32
    %290 = arith.addi %1, %c4_i32_199 : i32
    %c0_200 = arith.constant 0 : index
    %291 = arith.index_cast %290 : i32 to index
    %c3_201 = arith.constant 3 : index
    %292 = vector.load %arg3[%c0_200, %291, %c3_201] : memref<1x20x20xf32, #tpu.memory_space<vmem>>, vector<1x16x16xf32>
    %293 = vector.shape_cast %292 : vector<1x16x16xf32> to vector<16x16xf32>
    %c23 = arith.constant 23 : index
    %c0_202 = arith.constant 0 : index
    %c0_203 = arith.constant 0 : index
    %c0_204 = arith.constant 0 : index
    %294 = vector.load %arg6[%c23, %c0_202, %c0_203, %c0_204] : memref<25x1x16x16xbf16, #tpu.memory_space<vmem>>, vector<1x1x16x16xbf16>
    %295 = vector.shape_cast %294 : vector<1x1x16x16xbf16> to vector<16x16xbf16>
    %296 = arith.extf %295 : vector<16x16xbf16> to vector<16x16xf32>
    %297 = arith.mulf %296, %293 : vector<16x16xf32>
    %298 = arith.addf %289, %297 : vector<16x16xf32>
    %c4_i32_205 = arith.constant 4 : i32
    %299 = arith.addi %1, %c4_i32_205 : i32
    %c0_206 = arith.constant 0 : index
    %300 = arith.index_cast %299 : i32 to index
    %c4_207 = arith.constant 4 : index
    %301 = vector.load %arg3[%c0_206, %300, %c4_207] : memref<1x20x20xf32, #tpu.memory_space<vmem>>, vector<1x16x16xf32>
    %302 = vector.shape_cast %301 : vector<1x16x16xf32> to vector<16x16xf32>
    %c24 = arith.constant 24 : index
    %c0_208 = arith.constant 0 : index
    %c0_209 = arith.constant 0 : index
    %c0_210 = arith.constant 0 : index
    %303 = vector.load %arg6[%c24, %c0_208, %c0_209, %c0_210] : memref<25x1x16x16xbf16, #tpu.memory_space<vmem>>, vector<1x1x16x16xbf16>
    %304 = vector.shape_cast %303 : vector<1x1x16x16xbf16> to vector<16x16xbf16>
    %305 = arith.extf %304 : vector<16x16xbf16> to vector<16x16xf32>
    %306 = arith.mulf %305, %302 : vector<16x16xf32>
    %307 = arith.addf %298, %306 : vector<16x16xf32>
    %c0_i32_211 = arith.constant 0 : i32
    %308 = arith.addi %1, %c0_i32_211 : i32
    %c0_212 = arith.constant 0 : index
    %309 = arith.index_cast %308 : i32 to index
    %c0_213 = arith.constant 0 : index
    %310 = vector.load %arg4[%c0_212, %309, %c0_213] : memref<1x22x22xf32, #tpu.memory_space<vmem>>, vector<1x16x16xf32>
    %311 = vector.shape_cast %310 : vector<1x16x16xf32> to vector<16x16xf32>
    %c0_214 = arith.constant 0 : index
    %c0_215 = arith.constant 0 : index
    %c0_216 = arith.constant 0 : index
    %c0_217 = arith.constant 0 : index
    %312 = vector.load %arg7[%c0_214, %c0_215, %c0_216, %c0_217] : memref<49x1x16x16xbf16, #tpu.memory_space<vmem>>, vector<1x1x16x16xbf16>
    %313 = vector.shape_cast %312 : vector<1x1x16x16xbf16> to vector<16x16xbf16>
    %314 = arith.extf %313 : vector<16x16xbf16> to vector<16x16xf32>
    %315 = arith.mulf %314, %311 : vector<16x16xf32>
    %c0_i32_218 = arith.constant 0 : i32
    %316 = arith.addi %1, %c0_i32_218 : i32
    %c0_219 = arith.constant 0 : index
    %317 = arith.index_cast %316 : i32 to index
    %c1_220 = arith.constant 1 : index
    %318 = vector.load %arg4[%c0_219, %317, %c1_220] : memref<1x22x22xf32, #tpu.memory_space<vmem>>, vector<1x16x16xf32>
    %319 = vector.shape_cast %318 : vector<1x16x16xf32> to vector<16x16xf32>
    %c1_221 = arith.constant 1 : index
    %c0_222 = arith.constant 0 : index
    %c0_223 = arith.constant 0 : index
    %c0_224 = arith.constant 0 : index
    %320 = vector.load %arg7[%c1_221, %c0_222, %c0_223, %c0_224] : memref<49x1x16x16xbf16, #tpu.memory_space<vmem>>, vector<1x1x16x16xbf16>
    %321 = vector.shape_cast %320 : vector<1x1x16x16xbf16> to vector<16x16xbf16>
    %322 = arith.extf %321 : vector<16x16xbf16> to vector<16x16xf32>
    %323 = arith.mulf %322, %319 : vector<16x16xf32>
    %324 = arith.addf %315, %323 : vector<16x16xf32>
    %c0_i32_225 = arith.constant 0 : i32
    %325 = arith.addi %1, %c0_i32_225 : i32
    %c0_226 = arith.constant 0 : index
    %326 = arith.index_cast %325 : i32 to index
    %c2_227 = arith.constant 2 : index
    %327 = vector.load %arg4[%c0_226, %326, %c2_227] : memref<1x22x22xf32, #tpu.memory_space<vmem>>, vector<1x16x16xf32>
    %328 = vector.shape_cast %327 : vector<1x16x16xf32> to vector<16x16xf32>
    %c2_228 = arith.constant 2 : index
    %c0_229 = arith.constant 0 : index
    %c0_230 = arith.constant 0 : index
    %c0_231 = arith.constant 0 : index
    %329 = vector.load %arg7[%c2_228, %c0_229, %c0_230, %c0_231] : memref<49x1x16x16xbf16, #tpu.memory_space<vmem>>, vector<1x1x16x16xbf16>
    %330 = vector.shape_cast %329 : vector<1x1x16x16xbf16> to vector<16x16xbf16>
    %331 = arith.extf %330 : vector<16x16xbf16> to vector<16x16xf32>
    %332 = arith.mulf %331, %328 : vector<16x16xf32>
    %333 = arith.addf %324, %332 : vector<16x16xf32>
    %c0_i32_232 = arith.constant 0 : i32
    %334 = arith.addi %1, %c0_i32_232 : i32
    %c0_233 = arith.constant 0 : index
    %335 = arith.index_cast %334 : i32 to index
    %c3_234 = arith.constant 3 : index
    %336 = vector.load %arg4[%c0_233, %335, %c3_234] : memref<1x22x22xf32, #tpu.memory_space<vmem>>, vector<1x16x16xf32>
    %337 = vector.shape_cast %336 : vector<1x16x16xf32> to vector<16x16xf32>
    %c3_235 = arith.constant 3 : index
    %c0_236 = arith.constant 0 : index
    %c0_237 = arith.constant 0 : index
    %c0_238 = arith.constant 0 : index
    %338 = vector.load %arg7[%c3_235, %c0_236, %c0_237, %c0_238] : memref<49x1x16x16xbf16, #tpu.memory_space<vmem>>, vector<1x1x16x16xbf16>
    %339 = vector.shape_cast %338 : vector<1x1x16x16xbf16> to vector<16x16xbf16>
    %340 = arith.extf %339 : vector<16x16xbf16> to vector<16x16xf32>
    %341 = arith.mulf %340, %337 : vector<16x16xf32>
    %342 = arith.addf %333, %341 : vector<16x16xf32>
    %c0_i32_239 = arith.constant 0 : i32
    %343 = arith.addi %1, %c0_i32_239 : i32
    %c0_240 = arith.constant 0 : index
    %344 = arith.index_cast %343 : i32 to index
    %c4_241 = arith.constant 4 : index
    %345 = vector.load %arg4[%c0_240, %344, %c4_241] : memref<1x22x22xf32, #tpu.memory_space<vmem>>, vector<1x16x16xf32>
    %346 = vector.shape_cast %345 : vector<1x16x16xf32> to vector<16x16xf32>
    %c4_242 = arith.constant 4 : index
    %c0_243 = arith.constant 0 : index
    %c0_244 = arith.constant 0 : index
    %c0_245 = arith.constant 0 : index
    %347 = vector.load %arg7[%c4_242, %c0_243, %c0_244, %c0_245] : memref<49x1x16x16xbf16, #tpu.memory_space<vmem>>, vector<1x1x16x16xbf16>
    %348 = vector.shape_cast %347 : vector<1x1x16x16xbf16> to vector<16x16xbf16>
    %349 = arith.extf %348 : vector<16x16xbf16> to vector<16x16xf32>
    %350 = arith.mulf %349, %346 : vector<16x16xf32>
    %351 = arith.addf %342, %350 : vector<16x16xf32>
    %c0_i32_246 = arith.constant 0 : i32
    %352 = arith.addi %1, %c0_i32_246 : i32
    %c0_247 = arith.constant 0 : index
    %353 = arith.index_cast %352 : i32 to index
    %c5_248 = arith.constant 5 : index
    %354 = vector.load %arg4[%c0_247, %353, %c5_248] : memref<1x22x22xf32, #tpu.memory_space<vmem>>, vector<1x16x16xf32>
    %355 = vector.shape_cast %354 : vector<1x16x16xf32> to vector<16x16xf32>
    %c5_249 = arith.constant 5 : index
    %c0_250 = arith.constant 0 : index
    %c0_251 = arith.constant 0 : index
    %c0_252 = arith.constant 0 : index
    %356 = vector.load %arg7[%c5_249, %c0_250, %c0_251, %c0_252] : memref<49x1x16x16xbf16, #tpu.memory_space<vmem>>, vector<1x1x16x16xbf16>
    %357 = vector.shape_cast %356 : vector<1x1x16x16xbf16> to vector<16x16xbf16>
    %358 = arith.extf %357 : vector<16x16xbf16> to vector<16x16xf32>
    %359 = arith.mulf %358, %355 : vector<16x16xf32>
    %360 = arith.addf %351, %359 : vector<16x16xf32>
    %c0_i32_253 = arith.constant 0 : i32
    %361 = arith.addi %1, %c0_i32_253 : i32
    %c0_254 = arith.constant 0 : index
    %362 = arith.index_cast %361 : i32 to index
    %c6_255 = arith.constant 6 : index
    %363 = vector.load %arg4[%c0_254, %362, %c6_255] : memref<1x22x22xf32, #tpu.memory_space<vmem>>, vector<1x16x16xf32>
    %364 = vector.shape_cast %363 : vector<1x16x16xf32> to vector<16x16xf32>
    %c6_256 = arith.constant 6 : index
    %c0_257 = arith.constant 0 : index
    %c0_258 = arith.constant 0 : index
    %c0_259 = arith.constant 0 : index
    %365 = vector.load %arg7[%c6_256, %c0_257, %c0_258, %c0_259] : memref<49x1x16x16xbf16, #tpu.memory_space<vmem>>, vector<1x1x16x16xbf16>
    %366 = vector.shape_cast %365 : vector<1x1x16x16xbf16> to vector<16x16xbf16>
    %367 = arith.extf %366 : vector<16x16xbf16> to vector<16x16xf32>
    %368 = arith.mulf %367, %364 : vector<16x16xf32>
    %369 = arith.addf %360, %368 : vector<16x16xf32>
    %c1_i32_260 = arith.constant 1 : i32
    %370 = arith.addi %1, %c1_i32_260 : i32
    %c0_261 = arith.constant 0 : index
    %371 = arith.index_cast %370 : i32 to index
    %c0_262 = arith.constant 0 : index
    %372 = vector.load %arg4[%c0_261, %371, %c0_262] : memref<1x22x22xf32, #tpu.memory_space<vmem>>, vector<1x16x16xf32>
    %373 = vector.shape_cast %372 : vector<1x16x16xf32> to vector<16x16xf32>
    %c7_263 = arith.constant 7 : index
    %c0_264 = arith.constant 0 : index
    %c0_265 = arith.constant 0 : index
    %c0_266 = arith.constant 0 : index
    %374 = vector.load %arg7[%c7_263, %c0_264, %c0_265, %c0_266] : memref<49x1x16x16xbf16, #tpu.memory_space<vmem>>, vector<1x1x16x16xbf16>
    %375 = vector.shape_cast %374 : vector<1x1x16x16xbf16> to vector<16x16xbf16>
    %376 = arith.extf %375 : vector<16x16xbf16> to vector<16x16xf32>
    %377 = arith.mulf %376, %373 : vector<16x16xf32>
    %378 = arith.addf %369, %377 : vector<16x16xf32>
    %c1_i32_267 = arith.constant 1 : i32
    %379 = arith.addi %1, %c1_i32_267 : i32
    %c0_268 = arith.constant 0 : index
    %380 = arith.index_cast %379 : i32 to index
    %c1_269 = arith.constant 1 : index
    %381 = vector.load %arg4[%c0_268, %380, %c1_269] : memref<1x22x22xf32, #tpu.memory_space<vmem>>, vector<1x16x16xf32>
    %382 = vector.shape_cast %381 : vector<1x16x16xf32> to vector<16x16xf32>
    %c8_270 = arith.constant 8 : index
    %c0_271 = arith.constant 0 : index
    %c0_272 = arith.constant 0 : index
    %c0_273 = arith.constant 0 : index
    %383 = vector.load %arg7[%c8_270, %c0_271, %c0_272, %c0_273] : memref<49x1x16x16xbf16, #tpu.memory_space<vmem>>, vector<1x1x16x16xbf16>
    %384 = vector.shape_cast %383 : vector<1x1x16x16xbf16> to vector<16x16xbf16>
    %385 = arith.extf %384 : vector<16x16xbf16> to vector<16x16xf32>
    %386 = arith.mulf %385, %382 : vector<16x16xf32>
    %387 = arith.addf %378, %386 : vector<16x16xf32>
    %c1_i32_274 = arith.constant 1 : i32
    %388 = arith.addi %1, %c1_i32_274 : i32
    %c0_275 = arith.constant 0 : index
    %389 = arith.index_cast %388 : i32 to index
    %c2_276 = arith.constant 2 : index
    %390 = vector.load %arg4[%c0_275, %389, %c2_276] : memref<1x22x22xf32, #tpu.memory_space<vmem>>, vector<1x16x16xf32>
    %391 = vector.shape_cast %390 : vector<1x16x16xf32> to vector<16x16xf32>
    %c9_277 = arith.constant 9 : index
    %c0_278 = arith.constant 0 : index
    %c0_279 = arith.constant 0 : index
    %c0_280 = arith.constant 0 : index
    %392 = vector.load %arg7[%c9_277, %c0_278, %c0_279, %c0_280] : memref<49x1x16x16xbf16, #tpu.memory_space<vmem>>, vector<1x1x16x16xbf16>
    %393 = vector.shape_cast %392 : vector<1x1x16x16xbf16> to vector<16x16xbf16>
    %394 = arith.extf %393 : vector<16x16xbf16> to vector<16x16xf32>
    %395 = arith.mulf %394, %391 : vector<16x16xf32>
    %396 = arith.addf %387, %395 : vector<16x16xf32>
    %c1_i32_281 = arith.constant 1 : i32
    %397 = arith.addi %1, %c1_i32_281 : i32
    %c0_282 = arith.constant 0 : index
    %398 = arith.index_cast %397 : i32 to index
    %c3_283 = arith.constant 3 : index
    %399 = vector.load %arg4[%c0_282, %398, %c3_283] : memref<1x22x22xf32, #tpu.memory_space<vmem>>, vector<1x16x16xf32>
    %400 = vector.shape_cast %399 : vector<1x16x16xf32> to vector<16x16xf32>
    %c10_284 = arith.constant 10 : index
    %c0_285 = arith.constant 0 : index
    %c0_286 = arith.constant 0 : index
    %c0_287 = arith.constant 0 : index
    %401 = vector.load %arg7[%c10_284, %c0_285, %c0_286, %c0_287] : memref<49x1x16x16xbf16, #tpu.memory_space<vmem>>, vector<1x1x16x16xbf16>
    %402 = vector.shape_cast %401 : vector<1x1x16x16xbf16> to vector<16x16xbf16>
    %403 = arith.extf %402 : vector<16x16xbf16> to vector<16x16xf32>
    %404 = arith.mulf %403, %400 : vector<16x16xf32>
    %405 = arith.addf %396, %404 : vector<16x16xf32>
    %c1_i32_288 = arith.constant 1 : i32
    %406 = arith.addi %1, %c1_i32_288 : i32
    %c0_289 = arith.constant 0 : index
    %407 = arith.index_cast %406 : i32 to index
    %c4_290 = arith.constant 4 : index
    %408 = vector.load %arg4[%c0_289, %407, %c4_290] : memref<1x22x22xf32, #tpu.memory_space<vmem>>, vector<1x16x16xf32>
    %409 = vector.shape_cast %408 : vector<1x16x16xf32> to vector<16x16xf32>
    %c11_291 = arith.constant 11 : index
    %c0_292 = arith.constant 0 : index
    %c0_293 = arith.constant 0 : index
    %c0_294 = arith.constant 0 : index
    %410 = vector.load %arg7[%c11_291, %c0_292, %c0_293, %c0_294] : memref<49x1x16x16xbf16, #tpu.memory_space<vmem>>, vector<1x1x16x16xbf16>
    %411 = vector.shape_cast %410 : vector<1x1x16x16xbf16> to vector<16x16xbf16>
    %412 = arith.extf %411 : vector<16x16xbf16> to vector<16x16xf32>
    %413 = arith.mulf %412, %409 : vector<16x16xf32>
    %414 = arith.addf %405, %413 : vector<16x16xf32>
    %c1_i32_295 = arith.constant 1 : i32
    %415 = arith.addi %1, %c1_i32_295 : i32
    %c0_296 = arith.constant 0 : index
    %416 = arith.index_cast %415 : i32 to index
    %c5_297 = arith.constant 5 : index
    %417 = vector.load %arg4[%c0_296, %416, %c5_297] : memref<1x22x22xf32, #tpu.memory_space<vmem>>, vector<1x16x16xf32>
    %418 = vector.shape_cast %417 : vector<1x16x16xf32> to vector<16x16xf32>
    %c12_298 = arith.constant 12 : index
    %c0_299 = arith.constant 0 : index
    %c0_300 = arith.constant 0 : index
    %c0_301 = arith.constant 0 : index
    %419 = vector.load %arg7[%c12_298, %c0_299, %c0_300, %c0_301] : memref<49x1x16x16xbf16, #tpu.memory_space<vmem>>, vector<1x1x16x16xbf16>
    %420 = vector.shape_cast %419 : vector<1x1x16x16xbf16> to vector<16x16xbf16>
    %421 = arith.extf %420 : vector<16x16xbf16> to vector<16x16xf32>
    %422 = arith.mulf %421, %418 : vector<16x16xf32>
    %423 = arith.addf %414, %422 : vector<16x16xf32>
    %c1_i32_302 = arith.constant 1 : i32
    %424 = arith.addi %1, %c1_i32_302 : i32
    %c0_303 = arith.constant 0 : index
    %425 = arith.index_cast %424 : i32 to index
    %c6_304 = arith.constant 6 : index
    %426 = vector.load %arg4[%c0_303, %425, %c6_304] : memref<1x22x22xf32, #tpu.memory_space<vmem>>, vector<1x16x16xf32>
    %427 = vector.shape_cast %426 : vector<1x16x16xf32> to vector<16x16xf32>
    %c13_305 = arith.constant 13 : index
    %c0_306 = arith.constant 0 : index
    %c0_307 = arith.constant 0 : index
    %c0_308 = arith.constant 0 : index
    %428 = vector.load %arg7[%c13_305, %c0_306, %c0_307, %c0_308] : memref<49x1x16x16xbf16, #tpu.memory_space<vmem>>, vector<1x1x16x16xbf16>
    %429 = vector.shape_cast %428 : vector<1x1x16x16xbf16> to vector<16x16xbf16>
    %430 = arith.extf %429 : vector<16x16xbf16> to vector<16x16xf32>
    %431 = arith.mulf %430, %427 : vector<16x16xf32>
    %432 = arith.addf %423, %431 : vector<16x16xf32>
    %c2_i32_309 = arith.constant 2 : i32
    %433 = arith.addi %1, %c2_i32_309 : i32
    %c0_310 = arith.constant 0 : index
    %434 = arith.index_cast %433 : i32 to index
    %c0_311 = arith.constant 0 : index
    %435 = vector.load %arg4[%c0_310, %434, %c0_311] : memref<1x22x22xf32, #tpu.memory_space<vmem>>, vector<1x16x16xf32>
    %436 = vector.shape_cast %435 : vector<1x16x16xf32> to vector<16x16xf32>
    %c14_312 = arith.constant 14 : index
    %c0_313 = arith.constant 0 : index
    %c0_314 = arith.constant 0 : index
    %c0_315 = arith.constant 0 : index
    %437 = vector.load %arg7[%c14_312, %c0_313, %c0_314, %c0_315] : memref<49x1x16x16xbf16, #tpu.memory_space<vmem>>, vector<1x1x16x16xbf16>
    %438 = vector.shape_cast %437 : vector<1x1x16x16xbf16> to vector<16x16xbf16>
    %439 = arith.extf %438 : vector<16x16xbf16> to vector<16x16xf32>
    %440 = arith.mulf %439, %436 : vector<16x16xf32>
    %441 = arith.addf %432, %440 : vector<16x16xf32>
    %c2_i32_316 = arith.constant 2 : i32
    %442 = arith.addi %1, %c2_i32_316 : i32
    %c0_317 = arith.constant 0 : index
    %443 = arith.index_cast %442 : i32 to index
    %c1_318 = arith.constant 1 : index
    %444 = vector.load %arg4[%c0_317, %443, %c1_318] : memref<1x22x22xf32, #tpu.memory_space<vmem>>, vector<1x16x16xf32>
    %445 = vector.shape_cast %444 : vector<1x16x16xf32> to vector<16x16xf32>
    %c15_319 = arith.constant 15 : index
    %c0_320 = arith.constant 0 : index
    %c0_321 = arith.constant 0 : index
    %c0_322 = arith.constant 0 : index
    %446 = vector.load %arg7[%c15_319, %c0_320, %c0_321, %c0_322] : memref<49x1x16x16xbf16, #tpu.memory_space<vmem>>, vector<1x1x16x16xbf16>
    %447 = vector.shape_cast %446 : vector<1x1x16x16xbf16> to vector<16x16xbf16>
    %448 = arith.extf %447 : vector<16x16xbf16> to vector<16x16xf32>
    %449 = arith.mulf %448, %445 : vector<16x16xf32>
    %450 = arith.addf %441, %449 : vector<16x16xf32>
    %c2_i32_323 = arith.constant 2 : i32
    %451 = arith.addi %1, %c2_i32_323 : i32
    %c0_324 = arith.constant 0 : index
    %452 = arith.index_cast %451 : i32 to index
    %c2_325 = arith.constant 2 : index
    %453 = vector.load %arg4[%c0_324, %452, %c2_325] : memref<1x22x22xf32, #tpu.memory_space<vmem>>, vector<1x16x16xf32>
    %454 = vector.shape_cast %453 : vector<1x16x16xf32> to vector<16x16xf32>
    %c16_326 = arith.constant 16 : index
    %c0_327 = arith.constant 0 : index
    %c0_328 = arith.constant 0 : index
    %c0_329 = arith.constant 0 : index
    %455 = vector.load %arg7[%c16_326, %c0_327, %c0_328, %c0_329] : memref<49x1x16x16xbf16, #tpu.memory_space<vmem>>, vector<1x1x16x16xbf16>
    %456 = vector.shape_cast %455 : vector<1x1x16x16xbf16> to vector<16x16xbf16>
    %457 = arith.extf %456 : vector<16x16xbf16> to vector<16x16xf32>
    %458 = arith.mulf %457, %454 : vector<16x16xf32>
    %459 = arith.addf %450, %458 : vector<16x16xf32>
    %c2_i32_330 = arith.constant 2 : i32
    %460 = arith.addi %1, %c2_i32_330 : i32
    %c0_331 = arith.constant 0 : index
    %461 = arith.index_cast %460 : i32 to index
    %c3_332 = arith.constant 3 : index
    %462 = vector.load %arg4[%c0_331, %461, %c3_332] : memref<1x22x22xf32, #tpu.memory_space<vmem>>, vector<1x16x16xf32>
    %463 = vector.shape_cast %462 : vector<1x16x16xf32> to vector<16x16xf32>
    %c17_333 = arith.constant 17 : index
    %c0_334 = arith.constant 0 : index
    %c0_335 = arith.constant 0 : index
    %c0_336 = arith.constant 0 : index
    %464 = vector.load %arg7[%c17_333, %c0_334, %c0_335, %c0_336] : memref<49x1x16x16xbf16, #tpu.memory_space<vmem>>, vector<1x1x16x16xbf16>
    %465 = vector.shape_cast %464 : vector<1x1x16x16xbf16> to vector<16x16xbf16>
    %466 = arith.extf %465 : vector<16x16xbf16> to vector<16x16xf32>
    %467 = arith.mulf %466, %463 : vector<16x16xf32>
    %468 = arith.addf %459, %467 : vector<16x16xf32>
    %c2_i32_337 = arith.constant 2 : i32
    %469 = arith.addi %1, %c2_i32_337 : i32
    %c0_338 = arith.constant 0 : index
    %470 = arith.index_cast %469 : i32 to index
    %c4_339 = arith.constant 4 : index
    %471 = vector.load %arg4[%c0_338, %470, %c4_339] : memref<1x22x22xf32, #tpu.memory_space<vmem>>, vector<1x16x16xf32>
    %472 = vector.shape_cast %471 : vector<1x16x16xf32> to vector<16x16xf32>
    %c18_340 = arith.constant 18 : index
    %c0_341 = arith.constant 0 : index
    %c0_342 = arith.constant 0 : index
    %c0_343 = arith.constant 0 : index
    %473 = vector.load %arg7[%c18_340, %c0_341, %c0_342, %c0_343] : memref<49x1x16x16xbf16, #tpu.memory_space<vmem>>, vector<1x1x16x16xbf16>
    %474 = vector.shape_cast %473 : vector<1x1x16x16xbf16> to vector<16x16xbf16>
    %475 = arith.extf %474 : vector<16x16xbf16> to vector<16x16xf32>
    %476 = arith.mulf %475, %472 : vector<16x16xf32>
    %477 = arith.addf %468, %476 : vector<16x16xf32>
    %c2_i32_344 = arith.constant 2 : i32
    %478 = arith.addi %1, %c2_i32_344 : i32
    %c0_345 = arith.constant 0 : index
    %479 = arith.index_cast %478 : i32 to index
    %c5_346 = arith.constant 5 : index
    %480 = vector.load %arg4[%c0_345, %479, %c5_346] : memref<1x22x22xf32, #tpu.memory_space<vmem>>, vector<1x16x16xf32>
    %481 = vector.shape_cast %480 : vector<1x16x16xf32> to vector<16x16xf32>
    %c19_347 = arith.constant 19 : index
    %c0_348 = arith.constant 0 : index
    %c0_349 = arith.constant 0 : index
    %c0_350 = arith.constant 0 : index
    %482 = vector.load %arg7[%c19_347, %c0_348, %c0_349, %c0_350] : memref<49x1x16x16xbf16, #tpu.memory_space<vmem>>, vector<1x1x16x16xbf16>
    %483 = vector.shape_cast %482 : vector<1x1x16x16xbf16> to vector<16x16xbf16>
    %484 = arith.extf %483 : vector<16x16xbf16> to vector<16x16xf32>
    %485 = arith.mulf %484, %481 : vector<16x16xf32>
    %486 = arith.addf %477, %485 : vector<16x16xf32>
    %c2_i32_351 = arith.constant 2 : i32
    %487 = arith.addi %1, %c2_i32_351 : i32
    %c0_352 = arith.constant 0 : index
    %488 = arith.index_cast %487 : i32 to index
    %c6_353 = arith.constant 6 : index
    %489 = vector.load %arg4[%c0_352, %488, %c6_353] : memref<1x22x22xf32, #tpu.memory_space<vmem>>, vector<1x16x16xf32>
    %490 = vector.shape_cast %489 : vector<1x16x16xf32> to vector<16x16xf32>
    %c20_354 = arith.constant 20 : index
    %c0_355 = arith.constant 0 : index
    %c0_356 = arith.constant 0 : index
    %c0_357 = arith.constant 0 : index
    %491 = vector.load %arg7[%c20_354, %c0_355, %c0_356, %c0_357] : memref<49x1x16x16xbf16, #tpu.memory_space<vmem>>, vector<1x1x16x16xbf16>
    %492 = vector.shape_cast %491 : vector<1x1x16x16xbf16> to vector<16x16xbf16>
    %493 = arith.extf %492 : vector<16x16xbf16> to vector<16x16xf32>
    %494 = arith.mulf %493, %490 : vector<16x16xf32>
    %495 = arith.addf %486, %494 : vector<16x16xf32>
    %c3_i32_358 = arith.constant 3 : i32
    %496 = arith.addi %1, %c3_i32_358 : i32
    %c0_359 = arith.constant 0 : index
    %497 = arith.index_cast %496 : i32 to index
    %c0_360 = arith.constant 0 : index
    %498 = vector.load %arg4[%c0_359, %497, %c0_360] : memref<1x22x22xf32, #tpu.memory_space<vmem>>, vector<1x16x16xf32>
    %499 = vector.shape_cast %498 : vector<1x16x16xf32> to vector<16x16xf32>
    %c21_361 = arith.constant 21 : index
    %c0_362 = arith.constant 0 : index
    %c0_363 = arith.constant 0 : index
    %c0_364 = arith.constant 0 : index
    %500 = vector.load %arg7[%c21_361, %c0_362, %c0_363, %c0_364] : memref<49x1x16x16xbf16, #tpu.memory_space<vmem>>, vector<1x1x16x16xbf16>
    %501 = vector.shape_cast %500 : vector<1x1x16x16xbf16> to vector<16x16xbf16>
    %502 = arith.extf %501 : vector<16x16xbf16> to vector<16x16xf32>
    %503 = arith.mulf %502, %499 : vector<16x16xf32>
    %504 = arith.addf %495, %503 : vector<16x16xf32>
    %c3_i32_365 = arith.constant 3 : i32
    %505 = arith.addi %1, %c3_i32_365 : i32
    %c0_366 = arith.constant 0 : index
    %506 = arith.index_cast %505 : i32 to index
    %c1_367 = arith.constant 1 : index
    %507 = vector.load %arg4[%c0_366, %506, %c1_367] : memref<1x22x22xf32, #tpu.memory_space<vmem>>, vector<1x16x16xf32>
    %508 = vector.shape_cast %507 : vector<1x16x16xf32> to vector<16x16xf32>
    %c22_368 = arith.constant 22 : index
    %c0_369 = arith.constant 0 : index
    %c0_370 = arith.constant 0 : index
    %c0_371 = arith.constant 0 : index
    %509 = vector.load %arg7[%c22_368, %c0_369, %c0_370, %c0_371] : memref<49x1x16x16xbf16, #tpu.memory_space<vmem>>, vector<1x1x16x16xbf16>
    %510 = vector.shape_cast %509 : vector<1x1x16x16xbf16> to vector<16x16xbf16>
    %511 = arith.extf %510 : vector<16x16xbf16> to vector<16x16xf32>
    %512 = arith.mulf %511, %508 : vector<16x16xf32>
    %513 = arith.addf %504, %512 : vector<16x16xf32>
    %c3_i32_372 = arith.constant 3 : i32
    %514 = arith.addi %1, %c3_i32_372 : i32
    %c0_373 = arith.constant 0 : index
    %515 = arith.index_cast %514 : i32 to index
    %c2_374 = arith.constant 2 : index
    %516 = vector.load %arg4[%c0_373, %515, %c2_374] : memref<1x22x22xf32, #tpu.memory_space<vmem>>, vector<1x16x16xf32>
    %517 = vector.shape_cast %516 : vector<1x16x16xf32> to vector<16x16xf32>
    %c23_375 = arith.constant 23 : index
    %c0_376 = arith.constant 0 : index
    %c0_377 = arith.constant 0 : index
    %c0_378 = arith.constant 0 : index
    %518 = vector.load %arg7[%c23_375, %c0_376, %c0_377, %c0_378] : memref<49x1x16x16xbf16, #tpu.memory_space<vmem>>, vector<1x1x16x16xbf16>
    %519 = vector.shape_cast %518 : vector<1x1x16x16xbf16> to vector<16x16xbf16>
    %520 = arith.extf %519 : vector<16x16xbf16> to vector<16x16xf32>
    %521 = arith.mulf %520, %517 : vector<16x16xf32>
    %522 = arith.addf %513, %521 : vector<16x16xf32>
    %c3_i32_379 = arith.constant 3 : i32
    %523 = arith.addi %1, %c3_i32_379 : i32
    %c0_380 = arith.constant 0 : index
    %524 = arith.index_cast %523 : i32 to index
    %c3_381 = arith.constant 3 : index
    %525 = vector.load %arg4[%c0_380, %524, %c3_381] : memref<1x22x22xf32, #tpu.memory_space<vmem>>, vector<1x16x16xf32>
    %526 = vector.shape_cast %525 : vector<1x16x16xf32> to vector<16x16xf32>
    %c24_382 = arith.constant 24 : index
    %c0_383 = arith.constant 0 : index
    %c0_384 = arith.constant 0 : index
    %c0_385 = arith.constant 0 : index
    %527 = vector.load %arg7[%c24_382, %c0_383, %c0_384, %c0_385] : memref<49x1x16x16xbf16, #tpu.memory_space<vmem>>, vector<1x1x16x16xbf16>
    %528 = vector.shape_cast %527 : vector<1x1x16x16xbf16> to vector<16x16xbf16>
    %529 = arith.extf %528 : vector<16x16xbf16> to vector<16x16xf32>
    %530 = arith.mulf %529, %526 : vector<16x16xf32>
    %531 = arith.addf %522, %530 : vector<16x16xf32>
    %c3_i32_386 = arith.constant 3 : i32
    %532 = arith.addi %1, %c3_i32_386 : i32
    %c0_387 = arith.constant 0 : index
    %533 = arith.index_cast %532 : i32 to index
    %c4_388 = arith.constant 4 : index
    %534 = vector.load %arg4[%c0_387, %533, %c4_388] : memref<1x22x22xf32, #tpu.memory_space<vmem>>, vector<1x16x16xf32>
    %535 = vector.shape_cast %534 : vector<1x16x16xf32> to vector<16x16xf32>
    %c25 = arith.constant 25 : index
    %c0_389 = arith.constant 0 : index
    %c0_390 = arith.constant 0 : index
    %c0_391 = arith.constant 0 : index
    %536 = vector.load %arg7[%c25, %c0_389, %c0_390, %c0_391] : memref<49x1x16x16xbf16, #tpu.memory_space<vmem>>, vector<1x1x16x16xbf16>
    %537 = vector.shape_cast %536 : vector<1x1x16x16xbf16> to vector<16x16xbf16>
    %538 = arith.extf %537 : vector<16x16xbf16> to vector<16x16xf32>
    %539 = arith.mulf %538, %535 : vector<16x16xf32>
    %540 = arith.addf %531, %539 : vector<16x16xf32>
    %c3_i32_392 = arith.constant 3 : i32
    %541 = arith.addi %1, %c3_i32_392 : i32
    %c0_393 = arith.constant 0 : index
    %542 = arith.index_cast %541 : i32 to index
    %c5_394 = arith.constant 5 : index
    %543 = vector.load %arg4[%c0_393, %542, %c5_394] : memref<1x22x22xf32, #tpu.memory_space<vmem>>, vector<1x16x16xf32>
    %544 = vector.shape_cast %543 : vector<1x16x16xf32> to vector<16x16xf32>
    %c26 = arith.constant 26 : index
    %c0_395 = arith.constant 0 : index
    %c0_396 = arith.constant 0 : index
    %c0_397 = arith.constant 0 : index
    %545 = vector.load %arg7[%c26, %c0_395, %c0_396, %c0_397] : memref<49x1x16x16xbf16, #tpu.memory_space<vmem>>, vector<1x1x16x16xbf16>
    %546 = vector.shape_cast %545 : vector<1x1x16x16xbf16> to vector<16x16xbf16>
    %547 = arith.extf %546 : vector<16x16xbf16> to vector<16x16xf32>
    %548 = arith.mulf %547, %544 : vector<16x16xf32>
    %549 = arith.addf %540, %548 : vector<16x16xf32>
    %c3_i32_398 = arith.constant 3 : i32
    %550 = arith.addi %1, %c3_i32_398 : i32
    %c0_399 = arith.constant 0 : index
    %551 = arith.index_cast %550 : i32 to index
    %c6_400 = arith.constant 6 : index
    %552 = vector.load %arg4[%c0_399, %551, %c6_400] : memref<1x22x22xf32, #tpu.memory_space<vmem>>, vector<1x16x16xf32>
    %553 = vector.shape_cast %552 : vector<1x16x16xf32> to vector<16x16xf32>
    %c27 = arith.constant 27 : index
    %c0_401 = arith.constant 0 : index
    %c0_402 = arith.constant 0 : index
    %c0_403 = arith.constant 0 : index
    %554 = vector.load %arg7[%c27, %c0_401, %c0_402, %c0_403] : memref<49x1x16x16xbf16, #tpu.memory_space<vmem>>, vector<1x1x16x16xbf16>
    %555 = vector.shape_cast %554 : vector<1x1x16x16xbf16> to vector<16x16xbf16>
    %556 = arith.extf %555 : vector<16x16xbf16> to vector<16x16xf32>
    %557 = arith.mulf %556, %553 : vector<16x16xf32>
    %558 = arith.addf %549, %557 : vector<16x16xf32>
    %c4_i32_404 = arith.constant 4 : i32
    %559 = arith.addi %1, %c4_i32_404 : i32
    %c0_405 = arith.constant 0 : index
    %560 = arith.index_cast %559 : i32 to index
    %c0_406 = arith.constant 0 : index
    %561 = vector.load %arg4[%c0_405, %560, %c0_406] : memref<1x22x22xf32, #tpu.memory_space<vmem>>, vector<1x16x16xf32>
    %562 = vector.shape_cast %561 : vector<1x16x16xf32> to vector<16x16xf32>
    %c28 = arith.constant 28 : index
    %c0_407 = arith.constant 0 : index
    %c0_408 = arith.constant 0 : index
    %c0_409 = arith.constant 0 : index
    %563 = vector.load %arg7[%c28, %c0_407, %c0_408, %c0_409] : memref<49x1x16x16xbf16, #tpu.memory_space<vmem>>, vector<1x1x16x16xbf16>
    %564 = vector.shape_cast %563 : vector<1x1x16x16xbf16> to vector<16x16xbf16>
    %565 = arith.extf %564 : vector<16x16xbf16> to vector<16x16xf32>
    %566 = arith.mulf %565, %562 : vector<16x16xf32>
    %567 = arith.addf %558, %566 : vector<16x16xf32>
    %c4_i32_410 = arith.constant 4 : i32
    %568 = arith.addi %1, %c4_i32_410 : i32
    %c0_411 = arith.constant 0 : index
    %569 = arith.index_cast %568 : i32 to index
    %c1_412 = arith.constant 1 : index
    %570 = vector.load %arg4[%c0_411, %569, %c1_412] : memref<1x22x22xf32, #tpu.memory_space<vmem>>, vector<1x16x16xf32>
    %571 = vector.shape_cast %570 : vector<1x16x16xf32> to vector<16x16xf32>
    %c29 = arith.constant 29 : index
    %c0_413 = arith.constant 0 : index
    %c0_414 = arith.constant 0 : index
    %c0_415 = arith.constant 0 : index
    %572 = vector.load %arg7[%c29, %c0_413, %c0_414, %c0_415] : memref<49x1x16x16xbf16, #tpu.memory_space<vmem>>, vector<1x1x16x16xbf16>
    %573 = vector.shape_cast %572 : vector<1x1x16x16xbf16> to vector<16x16xbf16>
    %574 = arith.extf %573 : vector<16x16xbf16> to vector<16x16xf32>
    %575 = arith.mulf %574, %571 : vector<16x16xf32>
    %576 = arith.addf %567, %575 : vector<16x16xf32>
    %c4_i32_416 = arith.constant 4 : i32
    %577 = arith.addi %1, %c4_i32_416 : i32
    %c0_417 = arith.constant 0 : index
    %578 = arith.index_cast %577 : i32 to index
    %c2_418 = arith.constant 2 : index
    %579 = vector.load %arg4[%c0_417, %578, %c2_418] : memref<1x22x22xf32, #tpu.memory_space<vmem>>, vector<1x16x16xf32>
    %580 = vector.shape_cast %579 : vector<1x16x16xf32> to vector<16x16xf32>
    %c30 = arith.constant 30 : index
    %c0_419 = arith.constant 0 : index
    %c0_420 = arith.constant 0 : index
    %c0_421 = arith.constant 0 : index
    %581 = vector.load %arg7[%c30, %c0_419, %c0_420, %c0_421] : memref<49x1x16x16xbf16, #tpu.memory_space<vmem>>, vector<1x1x16x16xbf16>
    %582 = vector.shape_cast %581 : vector<1x1x16x16xbf16> to vector<16x16xbf16>
    %583 = arith.extf %582 : vector<16x16xbf16> to vector<16x16xf32>
    %584 = arith.mulf %583, %580 : vector<16x16xf32>
    %585 = arith.addf %576, %584 : vector<16x16xf32>
    %c4_i32_422 = arith.constant 4 : i32
    %586 = arith.addi %1, %c4_i32_422 : i32
    %c0_423 = arith.constant 0 : index
    %587 = arith.index_cast %586 : i32 to index
    %c3_424 = arith.constant 3 : index
    %588 = vector.load %arg4[%c0_423, %587, %c3_424] : memref<1x22x22xf32, #tpu.memory_space<vmem>>, vector<1x16x16xf32>
    %589 = vector.shape_cast %588 : vector<1x16x16xf32> to vector<16x16xf32>
    %c31 = arith.constant 31 : index
    %c0_425 = arith.constant 0 : index
    %c0_426 = arith.constant 0 : index
    %c0_427 = arith.constant 0 : index
    %590 = vector.load %arg7[%c31, %c0_425, %c0_426, %c0_427] : memref<49x1x16x16xbf16, #tpu.memory_space<vmem>>, vector<1x1x16x16xbf16>
    %591 = vector.shape_cast %590 : vector<1x1x16x16xbf16> to vector<16x16xbf16>
    %592 = arith.extf %591 : vector<16x16xbf16> to vector<16x16xf32>
    %593 = arith.mulf %592, %589 : vector<16x16xf32>
    %594 = arith.addf %585, %593 : vector<16x16xf32>
    %c4_i32_428 = arith.constant 4 : i32
    %595 = arith.addi %1, %c4_i32_428 : i32
    %c0_429 = arith.constant 0 : index
    %596 = arith.index_cast %595 : i32 to index
    %c4_430 = arith.constant 4 : index
    %597 = vector.load %arg4[%c0_429, %596, %c4_430] : memref<1x22x22xf32, #tpu.memory_space<vmem>>, vector<1x16x16xf32>
    %598 = vector.shape_cast %597 : vector<1x16x16xf32> to vector<16x16xf32>
    %c32 = arith.constant 32 : index
    %c0_431 = arith.constant 0 : index
    %c0_432 = arith.constant 0 : index
    %c0_433 = arith.constant 0 : index
    %599 = vector.load %arg7[%c32, %c0_431, %c0_432, %c0_433] : memref<49x1x16x16xbf16, #tpu.memory_space<vmem>>, vector<1x1x16x16xbf16>
    %600 = vector.shape_cast %599 : vector<1x1x16x16xbf16> to vector<16x16xbf16>
    %601 = arith.extf %600 : vector<16x16xbf16> to vector<16x16xf32>
    %602 = arith.mulf %601, %598 : vector<16x16xf32>
    %603 = arith.addf %594, %602 : vector<16x16xf32>
    %c4_i32_434 = arith.constant 4 : i32
    %604 = arith.addi %1, %c4_i32_434 : i32
    %c0_435 = arith.constant 0 : index
    %605 = arith.index_cast %604 : i32 to index
    %c5_436 = arith.constant 5 : index
    %606 = vector.load %arg4[%c0_435, %605, %c5_436] : memref<1x22x22xf32, #tpu.memory_space<vmem>>, vector<1x16x16xf32>
    %607 = vector.shape_cast %606 : vector<1x16x16xf32> to vector<16x16xf32>
    %c33 = arith.constant 33 : index
    %c0_437 = arith.constant 0 : index
    %c0_438 = arith.constant 0 : index
    %c0_439 = arith.constant 0 : index
    %608 = vector.load %arg7[%c33, %c0_437, %c0_438, %c0_439] : memref<49x1x16x16xbf16, #tpu.memory_space<vmem>>, vector<1x1x16x16xbf16>
    %609 = vector.shape_cast %608 : vector<1x1x16x16xbf16> to vector<16x16xbf16>
    %610 = arith.extf %609 : vector<16x16xbf16> to vector<16x16xf32>
    %611 = arith.mulf %610, %607 : vector<16x16xf32>
    %612 = arith.addf %603, %611 : vector<16x16xf32>
    %c4_i32_440 = arith.constant 4 : i32
    %613 = arith.addi %1, %c4_i32_440 : i32
    %c0_441 = arith.constant 0 : index
    %614 = arith.index_cast %613 : i32 to index
    %c6_442 = arith.constant 6 : index
    %615 = vector.load %arg4[%c0_441, %614, %c6_442] : memref<1x22x22xf32, #tpu.memory_space<vmem>>, vector<1x16x16xf32>
    %616 = vector.shape_cast %615 : vector<1x16x16xf32> to vector<16x16xf32>
    %c34 = arith.constant 34 : index
    %c0_443 = arith.constant 0 : index
    %c0_444 = arith.constant 0 : index
    %c0_445 = arith.constant 0 : index
    %617 = vector.load %arg7[%c34, %c0_443, %c0_444, %c0_445] : memref<49x1x16x16xbf16, #tpu.memory_space<vmem>>, vector<1x1x16x16xbf16>
    %618 = vector.shape_cast %617 : vector<1x1x16x16xbf16> to vector<16x16xbf16>
    %619 = arith.extf %618 : vector<16x16xbf16> to vector<16x16xf32>
    %620 = arith.mulf %619, %616 : vector<16x16xf32>
    %621 = arith.addf %612, %620 : vector<16x16xf32>
    %c5_i32 = arith.constant 5 : i32
    %622 = arith.addi %1, %c5_i32 : i32
    %c0_446 = arith.constant 0 : index
    %623 = arith.index_cast %622 : i32 to index
    %c0_447 = arith.constant 0 : index
    %624 = vector.load %arg4[%c0_446, %623, %c0_447] : memref<1x22x22xf32, #tpu.memory_space<vmem>>, vector<1x16x16xf32>
    %625 = vector.shape_cast %624 : vector<1x16x16xf32> to vector<16x16xf32>
    %c35 = arith.constant 35 : index
    %c0_448 = arith.constant 0 : index
    %c0_449 = arith.constant 0 : index
    %c0_450 = arith.constant 0 : index
    %626 = vector.load %arg7[%c35, %c0_448, %c0_449, %c0_450] : memref<49x1x16x16xbf16, #tpu.memory_space<vmem>>, vector<1x1x16x16xbf16>
    %627 = vector.shape_cast %626 : vector<1x1x16x16xbf16> to vector<16x16xbf16>
    %628 = arith.extf %627 : vector<16x16xbf16> to vector<16x16xf32>
    %629 = arith.mulf %628, %625 : vector<16x16xf32>
    %630 = arith.addf %621, %629 : vector<16x16xf32>
    %c5_i32_451 = arith.constant 5 : i32
    %631 = arith.addi %1, %c5_i32_451 : i32
    %c0_452 = arith.constant 0 : index
    %632 = arith.index_cast %631 : i32 to index
    %c1_453 = arith.constant 1 : index
    %633 = vector.load %arg4[%c0_452, %632, %c1_453] : memref<1x22x22xf32, #tpu.memory_space<vmem>>, vector<1x16x16xf32>
    %634 = vector.shape_cast %633 : vector<1x16x16xf32> to vector<16x16xf32>
    %c36 = arith.constant 36 : index
    %c0_454 = arith.constant 0 : index
    %c0_455 = arith.constant 0 : index
    %c0_456 = arith.constant 0 : index
    %635 = vector.load %arg7[%c36, %c0_454, %c0_455, %c0_456] : memref<49x1x16x16xbf16, #tpu.memory_space<vmem>>, vector<1x1x16x16xbf16>
    %636 = vector.shape_cast %635 : vector<1x1x16x16xbf16> to vector<16x16xbf16>
    %637 = arith.extf %636 : vector<16x16xbf16> to vector<16x16xf32>
    %638 = arith.mulf %637, %634 : vector<16x16xf32>
    %639 = arith.addf %630, %638 : vector<16x16xf32>
    %c5_i32_457 = arith.constant 5 : i32
    %640 = arith.addi %1, %c5_i32_457 : i32
    %c0_458 = arith.constant 0 : index
    %641 = arith.index_cast %640 : i32 to index
    %c2_459 = arith.constant 2 : index
    %642 = vector.load %arg4[%c0_458, %641, %c2_459] : memref<1x22x22xf32, #tpu.memory_space<vmem>>, vector<1x16x16xf32>
    %643 = vector.shape_cast %642 : vector<1x16x16xf32> to vector<16x16xf32>
    %c37 = arith.constant 37 : index
    %c0_460 = arith.constant 0 : index
    %c0_461 = arith.constant 0 : index
    %c0_462 = arith.constant 0 : index
    %644 = vector.load %arg7[%c37, %c0_460, %c0_461, %c0_462] : memref<49x1x16x16xbf16, #tpu.memory_space<vmem>>, vector<1x1x16x16xbf16>
    %645 = vector.shape_cast %644 : vector<1x1x16x16xbf16> to vector<16x16xbf16>
    %646 = arith.extf %645 : vector<16x16xbf16> to vector<16x16xf32>
    %647 = arith.mulf %646, %643 : vector<16x16xf32>
    %648 = arith.addf %639, %647 : vector<16x16xf32>
    %c5_i32_463 = arith.constant 5 : i32
    %649 = arith.addi %1, %c5_i32_463 : i32
    %c0_464 = arith.constant 0 : index
    %650 = arith.index_cast %649 : i32 to index
    %c3_465 = arith.constant 3 : index
    %651 = vector.load %arg4[%c0_464, %650, %c3_465] : memref<1x22x22xf32, #tpu.memory_space<vmem>>, vector<1x16x16xf32>
    %652 = vector.shape_cast %651 : vector<1x16x16xf32> to vector<16x16xf32>
    %c38 = arith.constant 38 : index
    %c0_466 = arith.constant 0 : index
    %c0_467 = arith.constant 0 : index
    %c0_468 = arith.constant 0 : index
    %653 = vector.load %arg7[%c38, %c0_466, %c0_467, %c0_468] : memref<49x1x16x16xbf16, #tpu.memory_space<vmem>>, vector<1x1x16x16xbf16>
    %654 = vector.shape_cast %653 : vector<1x1x16x16xbf16> to vector<16x16xbf16>
    %655 = arith.extf %654 : vector<16x16xbf16> to vector<16x16xf32>
    %656 = arith.mulf %655, %652 : vector<16x16xf32>
    %657 = arith.addf %648, %656 : vector<16x16xf32>
    %c5_i32_469 = arith.constant 5 : i32
    %658 = arith.addi %1, %c5_i32_469 : i32
    %c0_470 = arith.constant 0 : index
    %659 = arith.index_cast %658 : i32 to index
    %c4_471 = arith.constant 4 : index
    %660 = vector.load %arg4[%c0_470, %659, %c4_471] : memref<1x22x22xf32, #tpu.memory_space<vmem>>, vector<1x16x16xf32>
    %661 = vector.shape_cast %660 : vector<1x16x16xf32> to vector<16x16xf32>
    %c39 = arith.constant 39 : index
    %c0_472 = arith.constant 0 : index
    %c0_473 = arith.constant 0 : index
    %c0_474 = arith.constant 0 : index
    %662 = vector.load %arg7[%c39, %c0_472, %c0_473, %c0_474] : memref<49x1x16x16xbf16, #tpu.memory_space<vmem>>, vector<1x1x16x16xbf16>
    %663 = vector.shape_cast %662 : vector<1x1x16x16xbf16> to vector<16x16xbf16>
    %664 = arith.extf %663 : vector<16x16xbf16> to vector<16x16xf32>
    %665 = arith.mulf %664, %661 : vector<16x16xf32>
    %666 = arith.addf %657, %665 : vector<16x16xf32>
    %c5_i32_475 = arith.constant 5 : i32
    %667 = arith.addi %1, %c5_i32_475 : i32
    %c0_476 = arith.constant 0 : index
    %668 = arith.index_cast %667 : i32 to index
    %c5_477 = arith.constant 5 : index
    %669 = vector.load %arg4[%c0_476, %668, %c5_477] : memref<1x22x22xf32, #tpu.memory_space<vmem>>, vector<1x16x16xf32>
    %670 = vector.shape_cast %669 : vector<1x16x16xf32> to vector<16x16xf32>
    %c40 = arith.constant 40 : index
    %c0_478 = arith.constant 0 : index
    %c0_479 = arith.constant 0 : index
    %c0_480 = arith.constant 0 : index
    %671 = vector.load %arg7[%c40, %c0_478, %c0_479, %c0_480] : memref<49x1x16x16xbf16, #tpu.memory_space<vmem>>, vector<1x1x16x16xbf16>
    %672 = vector.shape_cast %671 : vector<1x1x16x16xbf16> to vector<16x16xbf16>
    %673 = arith.extf %672 : vector<16x16xbf16> to vector<16x16xf32>
    %674 = arith.mulf %673, %670 : vector<16x16xf32>
    %675 = arith.addf %666, %674 : vector<16x16xf32>
    %c5_i32_481 = arith.constant 5 : i32
    %676 = arith.addi %1, %c5_i32_481 : i32
    %c0_482 = arith.constant 0 : index
    %677 = arith.index_cast %676 : i32 to index
    %c6_483 = arith.constant 6 : index
    %678 = vector.load %arg4[%c0_482, %677, %c6_483] : memref<1x22x22xf32, #tpu.memory_space<vmem>>, vector<1x16x16xf32>
    %679 = vector.shape_cast %678 : vector<1x16x16xf32> to vector<16x16xf32>
    %c41 = arith.constant 41 : index
    %c0_484 = arith.constant 0 : index
    %c0_485 = arith.constant 0 : index
    %c0_486 = arith.constant 0 : index
    %680 = vector.load %arg7[%c41, %c0_484, %c0_485, %c0_486] : memref<49x1x16x16xbf16, #tpu.memory_space<vmem>>, vector<1x1x16x16xbf16>
    %681 = vector.shape_cast %680 : vector<1x1x16x16xbf16> to vector<16x16xbf16>
    %682 = arith.extf %681 : vector<16x16xbf16> to vector<16x16xf32>
    %683 = arith.mulf %682, %679 : vector<16x16xf32>
    %684 = arith.addf %675, %683 : vector<16x16xf32>
    %c6_i32 = arith.constant 6 : i32
    %685 = arith.addi %1, %c6_i32 : i32
    %c0_487 = arith.constant 0 : index
    %686 = arith.index_cast %685 : i32 to index
    %c0_488 = arith.constant 0 : index
    %687 = vector.load %arg4[%c0_487, %686, %c0_488] : memref<1x22x22xf32, #tpu.memory_space<vmem>>, vector<1x16x16xf32>
    %688 = vector.shape_cast %687 : vector<1x16x16xf32> to vector<16x16xf32>
    %c42 = arith.constant 42 : index
    %c0_489 = arith.constant 0 : index
    %c0_490 = arith.constant 0 : index
    %c0_491 = arith.constant 0 : index
    %689 = vector.load %arg7[%c42, %c0_489, %c0_490, %c0_491] : memref<49x1x16x16xbf16, #tpu.memory_space<vmem>>, vector<1x1x16x16xbf16>
    %690 = vector.shape_cast %689 : vector<1x1x16x16xbf16> to vector<16x16xbf16>
    %691 = arith.extf %690 : vector<16x16xbf16> to vector<16x16xf32>
    %692 = arith.mulf %691, %688 : vector<16x16xf32>
    %693 = arith.addf %684, %692 : vector<16x16xf32>
    %c6_i32_492 = arith.constant 6 : i32
    %694 = arith.addi %1, %c6_i32_492 : i32
    %c0_493 = arith.constant 0 : index
    %695 = arith.index_cast %694 : i32 to index
    %c1_494 = arith.constant 1 : index
    %696 = vector.load %arg4[%c0_493, %695, %c1_494] : memref<1x22x22xf32, #tpu.memory_space<vmem>>, vector<1x16x16xf32>
    %697 = vector.shape_cast %696 : vector<1x16x16xf32> to vector<16x16xf32>
    %c43 = arith.constant 43 : index
    %c0_495 = arith.constant 0 : index
    %c0_496 = arith.constant 0 : index
    %c0_497 = arith.constant 0 : index
    %698 = vector.load %arg7[%c43, %c0_495, %c0_496, %c0_497] : memref<49x1x16x16xbf16, #tpu.memory_space<vmem>>, vector<1x1x16x16xbf16>
    %699 = vector.shape_cast %698 : vector<1x1x16x16xbf16> to vector<16x16xbf16>
    %700 = arith.extf %699 : vector<16x16xbf16> to vector<16x16xf32>
    %701 = arith.mulf %700, %697 : vector<16x16xf32>
    %702 = arith.addf %693, %701 : vector<16x16xf32>
    %c6_i32_498 = arith.constant 6 : i32
    %703 = arith.addi %1, %c6_i32_498 : i32
    %c0_499 = arith.constant 0 : index
    %704 = arith.index_cast %703 : i32 to index
    %c2_500 = arith.constant 2 : index
    %705 = vector.load %arg4[%c0_499, %704, %c2_500] : memref<1x22x22xf32, #tpu.memory_space<vmem>>, vector<1x16x16xf32>
    %706 = vector.shape_cast %705 : vector<1x16x16xf32> to vector<16x16xf32>
    %c44 = arith.constant 44 : index
    %c0_501 = arith.constant 0 : index
    %c0_502 = arith.constant 0 : index
    %c0_503 = arith.constant 0 : index
    %707 = vector.load %arg7[%c44, %c0_501, %c0_502, %c0_503] : memref<49x1x16x16xbf16, #tpu.memory_space<vmem>>, vector<1x1x16x16xbf16>
    %708 = vector.shape_cast %707 : vector<1x1x16x16xbf16> to vector<16x16xbf16>
    %709 = arith.extf %708 : vector<16x16xbf16> to vector<16x16xf32>
    %710 = arith.mulf %709, %706 : vector<16x16xf32>
    %711 = arith.addf %702, %710 : vector<16x16xf32>
    %c6_i32_504 = arith.constant 6 : i32
    %712 = arith.addi %1, %c6_i32_504 : i32
    %c0_505 = arith.constant 0 : index
    %713 = arith.index_cast %712 : i32 to index
    %c3_506 = arith.constant 3 : index
    %714 = vector.load %arg4[%c0_505, %713, %c3_506] : memref<1x22x22xf32, #tpu.memory_space<vmem>>, vector<1x16x16xf32>
    %715 = vector.shape_cast %714 : vector<1x16x16xf32> to vector<16x16xf32>
    %c45 = arith.constant 45 : index
    %c0_507 = arith.constant 0 : index
    %c0_508 = arith.constant 0 : index
    %c0_509 = arith.constant 0 : index
    %716 = vector.load %arg7[%c45, %c0_507, %c0_508, %c0_509] : memref<49x1x16x16xbf16, #tpu.memory_space<vmem>>, vector<1x1x16x16xbf16>
    %717 = vector.shape_cast %716 : vector<1x1x16x16xbf16> to vector<16x16xbf16>
    %718 = arith.extf %717 : vector<16x16xbf16> to vector<16x16xf32>
    %719 = arith.mulf %718, %715 : vector<16x16xf32>
    %720 = arith.addf %711, %719 : vector<16x16xf32>
    %c6_i32_510 = arith.constant 6 : i32
    %721 = arith.addi %1, %c6_i32_510 : i32
    %c0_511 = arith.constant 0 : index
    %722 = arith.index_cast %721 : i32 to index
    %c4_512 = arith.constant 4 : index
    %723 = vector.load %arg4[%c0_511, %722, %c4_512] : memref<1x22x22xf32, #tpu.memory_space<vmem>>, vector<1x16x16xf32>
    %724 = vector.shape_cast %723 : vector<1x16x16xf32> to vector<16x16xf32>
    %c46 = arith.constant 46 : index
    %c0_513 = arith.constant 0 : index
    %c0_514 = arith.constant 0 : index
    %c0_515 = arith.constant 0 : index
    %725 = vector.load %arg7[%c46, %c0_513, %c0_514, %c0_515] : memref<49x1x16x16xbf16, #tpu.memory_space<vmem>>, vector<1x1x16x16xbf16>
    %726 = vector.shape_cast %725 : vector<1x1x16x16xbf16> to vector<16x16xbf16>
    %727 = arith.extf %726 : vector<16x16xbf16> to vector<16x16xf32>
    %728 = arith.mulf %727, %724 : vector<16x16xf32>
    %729 = arith.addf %720, %728 : vector<16x16xf32>
    %c6_i32_516 = arith.constant 6 : i32
    %730 = arith.addi %1, %c6_i32_516 : i32
    %c0_517 = arith.constant 0 : index
    %731 = arith.index_cast %730 : i32 to index
    %c5_518 = arith.constant 5 : index
    %732 = vector.load %arg4[%c0_517, %731, %c5_518] : memref<1x22x22xf32, #tpu.memory_space<vmem>>, vector<1x16x16xf32>
    %733 = vector.shape_cast %732 : vector<1x16x16xf32> to vector<16x16xf32>
    %c47 = arith.constant 47 : index
    %c0_519 = arith.constant 0 : index
    %c0_520 = arith.constant 0 : index
    %c0_521 = arith.constant 0 : index
    %734 = vector.load %arg7[%c47, %c0_519, %c0_520, %c0_521] : memref<49x1x16x16xbf16, #tpu.memory_space<vmem>>, vector<1x1x16x16xbf16>
    %735 = vector.shape_cast %734 : vector<1x1x16x16xbf16> to vector<16x16xbf16>
    %736 = arith.extf %735 : vector<16x16xbf16> to vector<16x16xf32>
    %737 = arith.mulf %736, %733 : vector<16x16xf32>
    %738 = arith.addf %729, %737 : vector<16x16xf32>
    %c6_i32_522 = arith.constant 6 : i32
    %739 = arith.addi %1, %c6_i32_522 : i32
    %c0_523 = arith.constant 0 : index
    %740 = arith.index_cast %739 : i32 to index
    %c6_524 = arith.constant 6 : index
    %741 = vector.load %arg4[%c0_523, %740, %c6_524] : memref<1x22x22xf32, #tpu.memory_space<vmem>>, vector<1x16x16xf32>
    %742 = vector.shape_cast %741 : vector<1x16x16xf32> to vector<16x16xf32>
    %c48 = arith.constant 48 : index
    %c0_525 = arith.constant 0 : index
    %c0_526 = arith.constant 0 : index
    %c0_527 = arith.constant 0 : index
    %743 = vector.load %arg7[%c48, %c0_525, %c0_526, %c0_527] : memref<49x1x16x16xbf16, #tpu.memory_space<vmem>>, vector<1x1x16x16xbf16>
    %744 = vector.shape_cast %743 : vector<1x1x16x16xbf16> to vector<16x16xbf16>
    %745 = arith.extf %744 : vector<16x16xbf16> to vector<16x16xf32>
    %746 = arith.mulf %745, %742 : vector<16x16xf32>
    %747 = arith.addf %738, %746 : vector<16x16xf32>
    %c0_528 = arith.constant 0 : index
    %c0_529 = arith.constant 0 : index
    %c0_530 = arith.constant 0 : index
    %c0_531 = arith.constant 0 : index
    %748 = vector.load %arg8[%c0_528, %c0_529, %c0_530, %c0_531] : memref<3x1x16x16xf32, #tpu.memory_space<vmem>>, vector<1x1x16x16xf32>
    %749 = vector.shape_cast %748 : vector<1x1x16x16xf32> to vector<16x16xf32>
    %c1_532 = arith.constant 1 : index
    %c0_533 = arith.constant 0 : index
    %c0_534 = arith.constant 0 : index
    %c0_535 = arith.constant 0 : index
    %750 = vector.load %arg8[%c1_532, %c0_533, %c0_534, %c0_535] : memref<3x1x16x16xf32, #tpu.memory_space<vmem>>, vector<1x1x16x16xf32>
    %751 = vector.shape_cast %750 : vector<1x1x16x16xf32> to vector<16x16xf32>
    %c2_536 = arith.constant 2 : index
    %c0_537 = arith.constant 0 : index
    %c0_538 = arith.constant 0 : index
    %c0_539 = arith.constant 0 : index
    %752 = vector.load %arg8[%c2_536, %c0_537, %c0_538, %c0_539] : memref<3x1x16x16xf32, #tpu.memory_space<vmem>>, vector<1x1x16x16xf32>
    %753 = vector.shape_cast %752 : vector<1x1x16x16xf32> to vector<16x16xf32>
    %cst = arith.constant 1.000000e+00 : f32
    %754 = vector.broadcast %cst : f32 to vector<16x16xf32>
    %755 = arith.subf %754, %749 : vector<16x16xf32>
    %756 = arith.mulf %755, %83 : vector<16x16xf32>
    %757 = arith.mulf %749, %3 : vector<16x16xf32>
    %758 = arith.addf %756, %757 : vector<16x16xf32>
    %c0_540 = arith.constant 0 : index
    %c0_541 = arith.constant 0 : index
    %c0_542 = arith.constant 0 : index
    %c0_543 = arith.constant 0 : index
    %759 = vector.load %arg10[%c0_540, %c0_541, %c0_542, %c0_543] : memref<3x1x16x16xf32, #tpu.memory_space<vmem>>, vector<1x1x16x16xf32>
    %760 = vector.shape_cast %759 : vector<1x1x16x16xf32> to vector<16x16xf32>
    %761 = vector.shape_cast %758 : vector<16x16xf32> to vector<1x1x16x16xf32>
    tpu.vector_store %arg10[%c0_540, %c0_541, %c0_542, %c0_543], %761 {strides = array<i32>} : memref<3x1x16x16xf32, #tpu.memory_space<vmem>>, vector<1x1x16x16xf32>,
    %cst_544 = arith.constant 1.000000e+00 : f32
    %762 = vector.broadcast %cst_544 : f32 to vector<16x16xf32>
    %763 = arith.subf %762, %751 : vector<16x16xf32>
    %764 = arith.mulf %763, %307 : vector<16x16xf32>
    %765 = arith.mulf %751, %3 : vector<16x16xf32>
    %766 = arith.addf %764, %765 : vector<16x16xf32>
    %c1_545 = arith.constant 1 : index
    %c0_546 = arith.constant 0 : index
    %c0_547 = arith.constant 0 : index
    %c0_548 = arith.constant 0 : index
    %767 = vector.load %arg10[%c1_545, %c0_546, %c0_547, %c0_548] : memref<3x1x16x16xf32, #tpu.memory_space<vmem>>, vector<1x1x16x16xf32>
    %768 = vector.shape_cast %767 : vector<1x1x16x16xf32> to vector<16x16xf32>
    %769 = vector.shape_cast %766 : vector<16x16xf32> to vector<1x1x16x16xf32>
    tpu.vector_store %arg10[%c1_545, %c0_546, %c0_547, %c0_548], %769 {strides = array<i32>} : memref<3x1x16x16xf32, #tpu.memory_space<vmem>>, vector<1x1x16x16xf32>,
    %cst_549 = arith.constant 1.000000e+00 : f32
    %770 = vector.broadcast %cst_549 : f32 to vector<16x16xf32>
    %771 = arith.subf %770, %753 : vector<16x16xf32>
    %772 = arith.mulf %771, %747 : vector<16x16xf32>
    %773 = arith.mulf %753, %3 : vector<16x16xf32>
    %774 = arith.addf %772, %773 : vector<16x16xf32>
    %c2_550 = arith.constant 2 : index
    %c0_551 = arith.constant 0 : index
    %c0_552 = arith.constant 0 : index
    %c0_553 = arith.constant 0 : index
    %775 = vector.load %arg10[%c2_550, %c0_551, %c0_552, %c0_553] : memref<3x1x16x16xf32, #tpu.memory_space<vmem>>, vector<1x1x16x16xf32>
    %776 = vector.shape_cast %775 : vector<1x1x16x16xf32> to vector<16x16xf32>
    %777 = vector.shape_cast %774 : vector<16x16xf32> to vector<1x1x16x16xf32>
    tpu.vector_store %arg10[%c2_550, %c0_551, %c0_552, %c0_553], %777 {strides = array<i32>} : memref<3x1x16x16xf32, #tpu.memory_space<vmem>>, vector<1x1x16x16xf32>,
    return
  }
  func.func @transform_0(%arg0: i32, %arg1: i32) -> (i32, i32, i32) {
    %c0_i32 = arith.constant 0 : i32
    %c0_i32_0 = arith.constant 0 : i32
    %c0_i32_1 = arith.constant 0 : i32
    return %arg0, %c0_i32, %c0_i32_0 : i32, i32, i32
  }
  func.func @transform_1(%arg0: i32, %arg1: i32) -> (i32, i32, i32) {
    %c0_i32 = arith.constant 0 : i32
    %c0_i32_0 = arith.constant 0 : i32
    %c0_i32_1 = arith.constant 0 : i32
    return %arg0, %c0_i32, %c0_i32_0 : i32, i32, i32
  }
  func.func @transform_2(%arg0: i32, %arg1: i32) -> (i32, i32, i32) {
    %c0_i32 = arith.constant 0 : i32
    %c0_i32_0 = arith.constant 0 : i32
    %c0_i32_1 = arith.constant 0 : i32
    return %arg0, %c0_i32, %c0_i32_0 : i32, i32, i32
  }
  func.func @transform_3(%arg0: i32, %arg1: i32) -> (i32, i32, i32, i32) {
    %c0_i32 = arith.constant 0 : i32
    %c0_i32_0 = arith.constant 0 : i32
    %c0_i32_1 = arith.constant 0 : i32
    return %c0_i32, %arg0, %arg1, %c0_i32_0 : i32, i32, i32, i32
  }
  func.func @transform_4(%arg0: i32, %arg1: i32) -> (i32, i32, i32, i32) {
    %c0_i32 = arith.constant 0 : i32
    %c0_i32_0 = arith.constant 0 : i32
    %c0_i32_1 = arith.constant 0 : i32
    return %c0_i32, %arg0, %arg1, %c0_i32_0 : i32, i32, i32, i32
  }
  func.func @transform_5(%arg0: i32, %arg1: i32) -> (i32, i32, i32, i32) {
    %c0_i32 = arith.constant 0 : i32
    %c0_i32_0 = arith.constant 0 : i32
    %c0_i32_1 = arith.constant 0 : i32
    return %c0_i32, %arg0, %arg1, %c0_i32_0 : i32, i32, i32, i32
  }
  func.func @transform_6(%arg0: i32, %arg1: i32) -> (i32, i32, i32, i32) {
    %c0_i32 = arith.constant 0 : i32
    %c0_i32_0 = arith.constant 0 : i32
    %c0_i32_1 = arith.constant 0 : i32
    return %c0_i32, %arg0, %arg1, %c0_i32_0 : i32, i32, i32, i32
  }
  func.func @transform_7(%arg0: i32, %arg1: i32) -> (i32, i32, i32) {
    %c0_i32 = arith.constant 0 : i32
    %c0_i32_0 = arith.constant 0 : i32
    return %arg0, %arg1, %c0_i32 : i32, i32, i32
  }
  func.func @transform_8(%arg0: i32, %arg1: i32) -> (i32, i32, i32, i32) {
    %c0_i32 = arith.constant 0 : i32
    %c0_i32_0 = arith.constant 0 : i32
    %c0_i32_1 = arith.constant 0 : i32
    return %c0_i32, %arg0, %arg1, %c0_i32_0 : i32, i32, i32, i32
  }
}

module attributes {stable_mosaic.version = 11 : i64} {
  func.func @_conv_mm_kernel(%arg0: i32, %arg1: memref<72x512xbf16, #tpu.memory_space<vmem>>, %arg2: memref<3x72xbf16, #tpu.memory_space<vmem>>, %arg3: memref<3x1xf32, #tpu.memory_space<vmem>>, %arg4: memref<3x512xf32, #tpu.memory_space<vmem>>) attributes {dimension_semantics = [#tpu.dimension_semantics<parallel>], iteration_bounds = array<i64: 1>, scalar_prefetch = 0 : i64, scratch_operands = 0 : i64, tpu.core_type = #tpu.core_type<tc>, window_params = [{transform_indices = @transform_0, window_bounds = array<i64: 72, 512>}, {pipeline_mode = #tpu.pipeline_mode<synchronous>, transform_indices = @transform_1, window_bounds = array<i64: 3, 72>}, {pipeline_mode = #tpu.pipeline_mode<synchronous>, transform_indices = @transform_2, window_bounds = array<i64: 3, 1>}, {transform_indices = @transform_3, window_bounds = array<i64: 3, 512>}]} {
    %c0 = arith.constant 0 : index
    %c0_0 = arith.constant 0 : index
    %0 = vector.load %arg2[%c0, %c0_0] : memref<3x72xbf16, #tpu.memory_space<vmem>>, vector<3x72xbf16>
    %c0_1 = arith.constant 0 : index
    %c0_2 = arith.constant 0 : index
    %1 = vector.load %arg1[%c0_1, %c0_2] : memref<72x512xbf16, #tpu.memory_space<vmem>>, vector<72x512xbf16>
    %cst = arith.constant dense<0.000000e+00> : vector<3x512xf32>
    %2 = tpu.matmul %0, %1, %cst {dimension_numbers = #tpu.dot_dimension_numbers<[1], [0], [0], [1], [0, 0, 1, 1], [], []>} : vector<3x72xbf16>, vector<72x512xbf16>, vector<3x512xf32> -> vector<3x512xf32>
    %c0_3 = arith.constant 0 : index
    %c0_4 = arith.constant 0 : index
    %3 = vector.load %arg3[%c0_3, %c0_4] : memref<3x1xf32, #tpu.memory_space<vmem>>, vector<3x1xf32>
    %4 = vector.broadcast %3 : vector<3x1xf32> to vector<3x512xf32>
    %5 = arith.addf %2, %4 : vector<3x512xf32>
    %cst_5 = arith.constant dense<0xFF800000> : vector<512xf32>
    %6 = vector.multi_reduction <maximumf>, %5, %cst_5 [0] : vector<3x512xf32> to vector<512xf32>
    %7 = vector.shape_cast %6 : vector<512xf32> to vector<1x512xf32>
    %8 = vector.broadcast %7 : vector<1x512xf32> to vector<3x512xf32>
    %9 = arith.subf %5, %8 : vector<3x512xf32>
    %10 = math.exp %9 : vector<3x512xf32>
    %cst_6 = arith.constant dense<0.000000e+00> : vector<512xf32>
    %11 = vector.multi_reduction <add>, %10, %cst_6 [0] : vector<3x512xf32> to vector<512xf32>
    %12 = vector.shape_cast %11 : vector<512xf32> to vector<1x512xf32>
    %13 = tpu.reciprocal %12 {approx = true} : vector<1x512xf32> -> vector<1x512xf32>
    %14 = vector.broadcast %13 : vector<1x512xf32> to vector<3x512xf32>
    %15 = arith.mulf %10, %14 : vector<3x512xf32>
    %c0_7 = arith.constant 0 : index
    %c0_8 = arith.constant 0 : index
    %16 = vector.load %arg4[%c0_7, %c0_8] : memref<3x512xf32, #tpu.memory_space<vmem>>, vector<3x512xf32>
    tpu.vector_store %arg4[%c0_7, %c0_8], %15 {strides = array<i32>} : memref<3x512xf32, #tpu.memory_space<vmem>>, vector<3x512xf32>,
    return
  }
  func.func @transform_0(%arg0: i32) -> (i32, i32) {
    %c0_i32 = arith.constant 0 : i32
    %c0_i32_0 = arith.constant 0 : i32
    return %c0_i32, %arg0 : i32, i32
  }
  func.func @transform_1(%arg0: i32) -> (i32, i32) {
    %c0_i32 = arith.constant 0 : i32
    %c0_i32_0 = arith.constant 0 : i32
    %c0_i32_1 = arith.constant 0 : i32
    return %c0_i32, %c0_i32_0 : i32, i32
  }
  func.func @transform_2(%arg0: i32) -> (i32, i32) {
    %c0_i32 = arith.constant 0 : i32
    %c0_i32_0 = arith.constant 0 : i32
    %c0_i32_1 = arith.constant 0 : i32
    return %c0_i32, %c0_i32_0 : i32, i32
  }
  func.func @transform_3(%arg0: i32) -> (i32, i32) {
    %c0_i32 = arith.constant 0 : i32
    %c0_i32_0 = arith.constant 0 : i32
    return %c0_i32, %arg0 : i32, i32
  }
}

module attributes {stable_mosaic.version = 11 : i64} {
  func.func @_conv_mm_kernel(%arg0: i32, %arg1: memref<99x512xbf16, #tpu.memory_space<vmem>>, %arg2: memref<8x99xbf16, #tpu.memory_space<vmem>>, %arg3: memref<8x1xf32, #tpu.memory_space<vmem>>, %arg4: memref<8x512xbf16, #tpu.memory_space<vmem>>) attributes {dimension_semantics = [#tpu.dimension_semantics<parallel>], iteration_bounds = array<i64: 1>, scalar_prefetch = 0 : i64, scratch_operands = 0 : i64, tpu.core_type = #tpu.core_type<tc>, window_params = [{transform_indices = @transform_0, window_bounds = array<i64: 99, 512>}, {pipeline_mode = #tpu.pipeline_mode<synchronous>, transform_indices = @transform_1, window_bounds = array<i64: 8, 99>}, {pipeline_mode = #tpu.pipeline_mode<synchronous>, transform_indices = @transform_2, window_bounds = array<i64: 8, 1>}, {transform_indices = @transform_3, window_bounds = array<i64: 8, 512>}]} {
    %c0 = arith.constant 0 : index
    %c0_0 = arith.constant 0 : index
    %0 = vector.load %arg2[%c0, %c0_0] : memref<8x99xbf16, #tpu.memory_space<vmem>>, vector<8x99xbf16>
    %c0_1 = arith.constant 0 : index
    %c0_2 = arith.constant 0 : index
    %1 = vector.load %arg1[%c0_1, %c0_2] : memref<99x512xbf16, #tpu.memory_space<vmem>>, vector<99x512xbf16>
    %cst = arith.constant dense<0.000000e+00> : vector<8x512xf32>
    %2 = tpu.matmul %0, %1, %cst {dimension_numbers = #tpu.dot_dimension_numbers<[1], [0], [0], [1], [0, 0, 1, 1], [], []>} : vector<8x99xbf16>, vector<99x512xbf16>, vector<8x512xf32> -> vector<8x512xf32>
    %c0_3 = arith.constant 0 : index
    %c0_4 = arith.constant 0 : index
    %3 = vector.load %arg3[%c0_3, %c0_4] : memref<8x1xf32, #tpu.memory_space<vmem>>, vector<8x1xf32>
    %4 = vector.broadcast %3 : vector<8x1xf32> to vector<8x512xf32>
    %5 = arith.addf %2, %4 : vector<8x512xf32>
    %cst_5 = arith.constant 0.000000e+00 : f32
    %6 = vector.broadcast %cst_5 : f32 to vector<8x512xf32>
    %7 = arith.maximumf %5, %6 : vector<8x512xf32>
    %8 = arith.truncf %7 : vector<8x512xf32> to vector<8x512xbf16>
    %c0_6 = arith.constant 0 : index
    %c0_7 = arith.constant 0 : index
    %9 = vector.load %arg4[%c0_6, %c0_7] : memref<8x512xbf16, #tpu.memory_space<vmem>>, vector<8x512xbf16>
    tpu.vector_store %arg4[%c0_6, %c0_7], %8 {strides = array<i32>} : memref<8x512xbf16, #tpu.memory_space<vmem>>, vector<8x512xbf16>,
    return
  }
  func.func @transform_0(%arg0: i32) -> (i32, i32) {
    %c0_i32 = arith.constant 0 : i32
    %c0_i32_0 = arith.constant 0 : i32
    return %c0_i32, %arg0 : i32, i32
  }
  func.func @transform_1(%arg0: i32) -> (i32, i32) {
    %c0_i32 = arith.constant 0 : i32
    %c0_i32_0 = arith.constant 0 : i32
    %c0_i32_1 = arith.constant 0 : i32
    return %c0_i32, %c0_i32_0 : i32, i32
  }
  func.func @transform_2(%arg0: i32) -> (i32, i32) {
    %c0_i32 = arith.constant 0 : i32
    %c0_i32_0 = arith.constant 0 : i32
    %c0_i32_1 = arith.constant 0 : i32
    return %c0_i32, %c0_i32_0 : i32, i32
  }
  func.func @transform_3(%arg0: i32) -> (i32, i32) {
    %c0_i32 = arith.constant 0 : i32
    %c0_i32_0 = arith.constant 0 : i32
    return %c0_i32, %arg0 : i32, i32
  }
}

</mosaic_0001>

<llo_original>
// kernel: squeeze.697
$region0: #{squeeze.697}
  %s0 = inlined_call_operand.vmem [shape: bf16[1,2,16,16], index: 0, kind: input, shape index: {}]
  %s1 = inlined_call_operand.vmem [shape: bf16[1,512], index: 1, kind: output, shape index: {}]
  $region1: #{squeeze.697} parent=0
    #allocation0 [shape = 'u8[16384]{0}', space=vmem, size = 0x4000, scoped, tag = 'scoped mem for output reshape']
    #allocation1 [shape = 'u8[16384]{0}', space=vmem, size = 0x4000, scoped, tag = 'scoped mem for input reshape']
    %s3 = smul.u32 4, 2
    %s4 = sshllo.u32 0, %s3
    %s5 = smul.addr 4, 3
    %s6 = scalar_lea.vmem %s0, %s5
    %s7 = sshrl.u32 %s4, 1
    %s8 = sor.u32 %s4, %s7
    %s9 = sand.u32 %s8, 85
    %s10 = sshrl.u32 %s9, 1
    %s11 = sor.u32 %s9, %s10
    %s12 = sand.u32 51, %s11
    %s13 = sshrl.u32 %s12, 2
    %s14 = sor.u32 %s12, %s13
    %s15 = sand.u32 15, %s14
    %v16 = vld [vmem:[%s6] sm:%s15]
    %v17 = vunpack.c.l.bf16 %v16
    %v18 = vunpack.c.h.bf16 %v16
    %s19 = scalar_lea.vmem [#allocation1], 24
    %20 = vst [vmem:[%s19] sm:%s4] %v17
    %s21 = smul.addr 4, 2
    %s22 = scalar_lea.vmem %s0, %s21
    %s23 = sshrl.u32 %s4, 1
    %s24 = sor.u32 %s4, %s23
    %s25 = sand.u32 %s24, 85
    %s26 = sshrl.u32 %s25, 1
    %s27 = sor.u32 %s25, %s26
    %s28 = sand.u32 51, %s27
    %s29 = sshrl.u32 %s28, 2
    %s30 = sor.u32 %s28, %s29
    %s31 = sand.u32 15, %s30
    %v32 = vld [vmem:[%s22] sm:%s31]
    %v33 = vunpack.c.l.bf16 %v32
    %v34 = vunpack.c.h.bf16 %v32
    %s35 = scalar_lea.vmem [#allocation1], 16
    %36 = vst [vmem:[%s35] sm:%s4] %v33
    %s37 = scalar_lea.vmem %s0, 4
    %s38 = sshrl.u32 %s4, 1
    %s39 = sor.u32 %s4, %s38
    %s40 = sand.u32 %s39, 85
    %s41 = sshrl.u32 %s40, 1
    %s42 = sor.u32 %s40, %s41
    %s43 = sand.u32 51, %s42
    %s44 = sshrl.u32 %s43, 2
    %s45 = sor.u32 %s43, %s44
    %s46 = sand.u32 15, %s45
    %v47 = vld [vmem:[%s37] sm:%s46]
    %v48 = vunpack.c.l.bf16 %v47
    %v49 = vunpack.c.h.bf16 %v47
    %s50 = scalar_lea.vmem [#allocation1], 8
    %51 = vst [vmem:[%s50] sm:%s4] %v48
    %s52 = sshrl.u32 %s4, 1
    %s53 = sor.u32 %s4, %s52
    %s54 = sand.u32 %s53, 85
    %s55 = sshrl.u32 %s54, 1
    %s56 = sor.u32 %s54, %s55
    %s57 = sand.u32 51, %s56
    %s58 = sshrl.u32 %s57, 2
    %s59 = sor.u32 %s57, %s58
    %s60 = sand.u32 15, %s59
    %v61 = vld [vmem:[%s0] sm:%s60]
    %v62 = vunpack.c.l.bf16 %v61
    %v63 = vunpack.c.h.bf16 %v61
    %64 = vst [vmem:[#allocation1] sm:%s4] %v62
    %v65 = vld [vmem:[#allocation1] ss:$8 sm:$0xf]
    %vm66 = vcmask 130048
    %67 = vst.msk [vmem:[#allocation0] ss:$8 sm:$0xf] %vm66, %v65
    %s68 = scalar_lea.vmem [#allocation1], 7
    %v69 = vld [vmem:[%s68] ss:$8 sm:$0xf]
    %70 = vrot.lane.b32.xlu0 %v69, 112
    %v71 = vpop.permute.xlu0 %70
    %vm72 = vcmask 1048448
    %73 = vst.msk [vmem:[#allocation0] ss:$8 sm:$0xf] %vm72, %v71
    %s74 = scalar_lea.vmem [#allocation1], 6
    %v75 = vld [vmem:[%s74] ss:$8 sm:$0xf]
    %76 = vrot.lane.b32.xlu0 %v75, 96
    %v77 = vpop.permute.xlu0 %76
    %vm78 = vcmask 917248
    %79 = vst.msk [vmem:[#allocation0] ss:$8 sm:$0xf] %vm78, %v77
    %s80 = scalar_lea.vmem [#allocation1], 5
    %v81 = vld [vmem:[%s80] ss:$8 sm:$0xf]
    %82 = vrot.lane.b32.xlu0 %v81, 80
    %v83 = vpop.permute.xlu0 %82
    %vm84 = vcmask 786048
    %85 = vst.msk [vmem:[#allocation0] ss:$8 sm:$0xf] %vm84, %v83
    %s86 = scalar_lea.vmem [#allocation1], 4
    %v87 = vld [vmem:[%s86] ss:$8 sm:$0xf]
    %88 = vrot.lane.b32.xlu0 %v87, 64
    %v89 = vpop.permute.xlu0 %88
    %vm90 = vcmask 654848
    %91 = vst.msk [vmem:[#allocation0] ss:$8 sm:$0xf] %vm90, %v89
    %s92 = scalar_lea.vmem [#allocation1], 3
    %v93 = vld [vmem:[%s92] ss:$8 sm:$0xf]
    %94 = vrot.lane.b32.xlu0 %v93, 48
    %v95 = vpop.permute.xlu0 %94
    %vm96 = vcmask 523648
    %97 = vst.msk [vmem:[#allocation0] ss:$8 sm:$0xf] %vm96, %v95
    %s98 = scalar_lea.vmem [#allocation1], 2
    %v99 = vld [vmem:[%s98] ss:$8 sm:$0xf]
    %100 = vrot.lane.b32.xlu0 %v99, 32
    %v101 = vpop.permute.xlu0 %100
    %vm102 = vcmask 392448
    %103 = vst.msk [vmem:[#allocation0] ss:$8 sm:$0xf] %vm102, %v101
    %s104 = scalar_lea.vmem [#allocation1], 1
    %v105 = vld [vmem:[%s104] ss:$8 sm:$0xf]
    %106 = vrot.lane.b32.xlu0 %v105, 16
    %v107 = vpop.permute.xlu0 %106
    %vm108 = vcmask 261248
    %109 = vst.msk [vmem:[#allocation0] ss:$8 sm:$0xf] %vm108, %v107
    %s111 = smul.u32 1, 2
    %s112 = sshllo.u32 0, %s111
    %s113 = sshrl.u32 %s111, 1
    %v114 = vld [vmem:[#allocation0] sm:%s112]
    %v115 = vpack.c.bf16 0.0, %v114
    %s116 = sshllo.u32 0, %s113
    %117 = vst [vmem:[%s1] sm:%s116] %v115
    %s118 = scalar_lea.vmem [#allocation0], 8
    %v119 = vld [vmem:[%s118] sm:%s112]
    %v120 = vpack.c.bf16 0.0, %v119
    %s121 = sshllo.u32 0, %s113
    %s122 = scalar_lea.vmem %s1, 1
    %123 = vst [vmem:[%s122] sm:%s121] %v120
    %s124 = scalar_lea.vmem [#allocation0], 16
    %v125 = vld [vmem:[%s124] sm:%s112]
    %v126 = vpack.c.bf16 0.0, %v125
    %s127 = sshllo.u32 0, %s113
    %s128 = smul.addr 1, 2
    %s129 = scalar_lea.vmem %s1, %s128
    %130 = vst [vmem:[%s129] sm:%s127] %v126
    %s131 = scalar_lea.vmem [#allocation0], 24
    %v132 = vld [vmem:[%s131] sm:%s112]
    %v133 = vpack.c.bf16 0.0, %v132
    %s134 = sshllo.u32 0, %s113
    %s135 = smul.addr 1, 3
    %s136 = scalar_lea.vmem %s1, %s135
    %137 = vst [vmem:[%s136] sm:%s134] %v133

// kernel: squeeze.919
$region0: #{squeeze.919}
  %s0 = inlined_call_operand.vmem [shape: bf16[1,2,16,16], index: 0, kind: input, shape index: {}]
  %s1 = inlined_call_operand.vmem [shape: bf16[1,512], index: 1, kind: output, shape index: {}]
  $region1: #{squeeze.919} parent=0
    #allocation0 [shape = 'u8[16384]{0}', space=vmem, size = 0x4000, scoped, tag = 'scoped mem for output reshape']
    #allocation1 [shape = 'u8[16384]{0}', space=vmem, size = 0x4000, scoped, tag = 'scoped mem for input reshape']
    %s3 = smul.u32 4, 2
    %s4 = sshllo.u32 0, %s3
    %s5 = smul.addr 4, 3
    %s6 = scalar_lea.vmem %s0, %s5
    %s7 = sshrl.u32 %s4, 1
    %s8 = sor.u32 %s4, %s7
    %s9 = sand.u32 %s8, 85
    %s10 = sshrl.u32 %s9, 1
    %s11 = sor.u32 %s9, %s10
    %s12 = sand.u32 51, %s11
    %s13 = sshrl.u32 %s12, 2
    %s14 = sor.u32 %s12, %s13
    %s15 = sand.u32 15, %s14
    %v16 = vld [vmem:[%s6] sm:%s15]
    %v17 = vunpack.c.l.bf16 %v16
    %v18 = vunpack.c.h.bf16 %v16
    %s19 = scalar_lea.vmem [#allocation1], 24
    %20 = vst [vmem:[%s19] sm:%s4] %v17
    %s21 = smul.addr 4, 2
    %s22 = scalar_lea.vmem %s0, %s21
    %s23 = sshrl.u32 %s4, 1
    %s24 = sor.u32 %s4, %s23
    %s25 = sand.u32 %s24, 85
    %s26 = sshrl.u32 %s25, 1
    %s27 = sor.u32 %s25, %s26
    %s28 = sand.u32 51, %s27
    %s29 = sshrl.u32 %s28, 2
    %s30 = sor.u32 %s28, %s29
    %s31 = sand.u32 15, %s30
    %v32 = vld [vmem:[%s22] sm:%s31]
    %v33 = vunpack.c.l.bf16 %v32
    %v34 = vunpack.c.h.bf16 %v32
    %s35 = scalar_lea.vmem [#allocation1], 16
    %36 = vst [vmem:[%s35] sm:%s4] %v33
    %s37 = scalar_lea.vmem %s0, 4
    %s38 = sshrl.u32 %s4, 1
    %s39 = sor.u32 %s4, %s38
    %s40 = sand.u32 %s39, 85
    %s41 = sshrl.u32 %s40, 1
    %s42 = sor.u32 %s40, %s41
    %s43 = sand.u32 51, %s42
    %s44 = sshrl.u32 %s43, 2
    %s45 = sor.u32 %s43, %s44
    %s46 = sand.u32 15, %s45
    %v47 = vld [vmem:[%s37] sm:%s46]
    %v48 = vunpack.c.l.bf16 %v47
    %v49 = vunpack.c.h.bf16 %v47
    %s50 = scalar_lea.vmem [#allocation1], 8
    %51 = vst [vmem:[%s50] sm:%s4] %v48
    %s52 = sshrl.u32 %s4, 1
    %s53 = sor.u32 %s4, %s52
    %s54 = sand.u32 %s53, 85
    %s55 = sshrl.u32 %s54, 1
    %s56 = sor.u32 %s54, %s55
    %s57 = sand.u32 51, %s56
    %s58 = sshrl.u32 %s57, 2
    %s59 = sor.u32 %s57, %s58
    %s60 = sand.u32 15, %s59
    %v61 = vld [vmem:[%s0] sm:%s60]
    %v62 = vunpack.c.l.bf16 %v61
    %v63 = vunpack.c.h.bf16 %v61
    %64 = vst [vmem:[#allocation1] sm:%s4] %v62
    %v65 = vld [vmem:[#allocation1] ss:$8 sm:$0xf]
    %vm66 = vcmask 130048
    %67 = vst.msk [vmem:[#allocation0] ss:$8 sm:$0xf] %vm66, %v65
    %s68 = scalar_lea.vmem [#allocation1], 7
    %v69 = vld [vmem:[%s68] ss:$8 sm:$0xf]
    %70 = vrot.lane.b32.xlu0 %v69, 112
    %v71 = vpop.permute.xlu0 %70
    %vm72 = vcmask 1048448
    %73 = vst.msk [vmem:[#allocation0] ss:$8 sm:$0xf] %vm72, %v71
    %s74 = scalar_lea.vmem [#allocation1], 6
    %v75 = vld [vmem:[%s74] ss:$8 sm:$0xf]
    %76 = vrot.lane.b32.xlu0 %v75, 96
    %v77 = vpop.permute.xlu0 %76
    %vm78 = vcmask 917248
    %79 = vst.msk [vmem:[#allocation0] ss:$8 sm:$0xf] %vm78, %v77
    %s80 = scalar_lea.vmem [#allocation1], 5
    %v81 = vld [vmem:[%s80] ss:$8 sm:$0xf]
    %82 = vrot.lane.b32.xlu0 %v81, 80
    %v83 = vpop.permute.xlu0 %82
    %vm84 = vcmask 786048
    %85 = vst.msk [vmem:[#allocation0] ss:$8 sm:$0xf] %vm84, %v83
    %s86 = scalar_lea.vmem [#allocation1], 4
    %v87 = vld [vmem:[%s86] ss:$8 sm:$0xf]
    %88 = vrot.lane.b32.xlu0 %v87, 64
    %v89 = vpop.permute.xlu0 %88
    %vm90 = vcmask 654848
    %91 = vst.msk [vmem:[#allocation0] ss:$8 sm:$0xf] %vm90, %v89
    %s92 = scalar_lea.vmem [#allocation1], 3
    %v93 = vld [vmem:[%s92] ss:$8 sm:$0xf]
    %94 = vrot.lane.b32.xlu0 %v93, 48
    %v95 = vpop.permute.xlu0 %94
    %vm96 = vcmask 523648
    %97 = vst.msk [vmem:[#allocation0] ss:$8 sm:$0xf] %vm96, %v95
    %s98 = scalar_lea.vmem [#allocation1], 2
    %v99 = vld [vmem:[%s98] ss:$8 sm:$0xf]
    %100 = vrot.lane.b32.xlu0 %v99, 32
    %v101 = vpop.permute.xlu0 %100
    %vm102 = vcmask 392448
    %103 = vst.msk [vmem:[#allocation0] ss:$8 sm:$0xf] %vm102, %v101
    %s104 = scalar_lea.vmem [#allocation1], 1
    %v105 = vld [vmem:[%s104] ss:$8 sm:$0xf]
    %106 = vrot.lane.b32.xlu0 %v105, 16
    %v107 = vpop.permute.xlu0 %106
    %vm108 = vcmask 261248
    %109 = vst.msk [vmem:[#allocation0] ss:$8 sm:$0xf] %vm108, %v107
    %s111 = smul.u32 1, 2
    %s112 = sshllo.u32 0, %s111
    %s113 = sshrl.u32 %s111, 1
    %v114 = vld [vmem:[#allocation0] sm:%s112]
    %v115 = vpack.c.bf16 0.0, %v114
    %s116 = sshllo.u32 0, %s113
    %117 = vst [vmem:[%s1] sm:%s116] %v115
    %s118 = scalar_lea.vmem [#allocation0], 8
    %v119 = vld [vmem:[%s118] sm:%s112]
    %v120 = vpack.c.bf16 0.0, %v119
    %s121 = sshllo.u32 0, %s113
    %s122 = scalar_lea.vmem %s1, 1
    %123 = vst [vmem:[%s122] sm:%s121] %v120
    %s124 = scalar_lea.vmem [#allocation0], 16
    %v125 = vld [vmem:[%s124] sm:%s112]
    %v126 = vpack.c.bf16 0.0, %v125
    %s127 = sshllo.u32 0, %s113
    %s128 = smul.addr 1, 2
    %s129 = scalar_lea.vmem %s1, %s128
    %130 = vst [vmem:[%s129] sm:%s127] %v126
    %s131 = scalar_lea.vmem [#allocation0], 24
    %v132 = vld [vmem:[%s131] sm:%s112]
    %v133 = vpack.c.bf16 0.0, %v132
    %s134 = sshllo.u32 0, %s113
    %s135 = smul.addr 1, 3
    %s136 = scalar_lea.vmem %s1, %s135
    %137 = vst [vmem:[%s136] sm:%s134] %v133

// kernel: cspn_forward.14
$region0: #{cspn_forward.14}
  #allocation0 [shape = 'u32[]', space=smem, size = 0x4, offset = 0x4, fixed_abs, tag = 'smem constant byte address 0x4 - core index']
  #allocation1 [shape = 'u32[144,128]{1,0:T(1,128)}', space=vmem, size = 0x12000, scoped, tag = 'internal scratch']
  %s0 = inlined_call_operand.vmem [shape: bf16[72,512], index: 0, kind: input, shape index: {}]
  %s1 = inlined_call_operand.vmem [shape: bf16[40,72], index: 1, kind: input, shape index: {}]
  %s2 = inlined_call_operand.vmem [shape: f32[40,1], index: 2, kind: input, shape index: {}]
  %s3 = inlined_call_operand.vmem [shape: bf16[40,512], index: 3, kind: output, shape index: {}]
  %s4 = sld [smem:[#allocation0]]
  $region22: #{cspn_forward.14} parent=0
    _
  %s6 = ssub.s32 1, %s4
  %s7 = scalar_select 0, %s6, %s4
  // Predicated region
  $region2: #{cspn_forward.14} parent=0 // pred_check
    _
  $region3: #{cspn_forward.14} parent=0 // pred_check_branch
    %9 = sbr.rel (0) target = $region5
  $region4: #{cspn_forward.14} parent=0 // pred_region
    _
  $region5: #{cspn_forward.14} parent=0 // pred_fallthru
    _
  // Predicated region
  $region6: #{cspn_forward.14} parent=0 // pred_check
    _
  $region7: #{cspn_forward.14} parent=0 // pred_check_branch
    %11 = sbr.rel (0) target = $region9
  $region8: #{cspn_forward.14} parent=0 // pred_region
    _
  $region9: #{cspn_forward.14} parent=0 // pred_fallthru
    _
  // Predicated region
  $region10: #{cspn_forward.14} parent=0 // pred_check
    _
  $region11: #{cspn_forward.14} parent=0 // pred_check_branch
    %13 = sbr.rel (0) target = $region13
  $region12: #{cspn_forward.14} parent=0 // pred_region
    _
  $region13: #{cspn_forward.14} parent=0 // pred_fallthru
    _
  %v15 = vld [vmem:[%s1] sm:$0xf]
  %v16 = vld [vmem:[%s1 + $0x4] sm:$0xf]
  %v17 = vld [vmem:[%s1 + $0x8] sm:$0xf]
  %v18 = vld [vmem:[%s1 + $0xc] sm:$0xf]
  %v19 = vld [vmem:[%s1 + $0x10] sm:$0xf]
  %v20 = vld [vmem:[%s0] sm:$0xff]
  %v21 = vld [vmem:[%s0 + $0x8] sm:$0xff]
  %v22 = vld [vmem:[%s0 + $0x10] sm:$0xff]
  %v23 = vld [vmem:[%s0 + $0x18] sm:$0xff]
  %v24 = vld [vmem:[%s0 + $0x20] sm:$0xff]
  %v25 = vld [vmem:[%s0 + $0x28] sm:$0xff]
  %v26 = vld [vmem:[%s0 + $0x30] sm:$0xff]
  %v27 = vld [vmem:[%s0 + $0x38] sm:$0xff]
  %v28 = vld [vmem:[%s0 + $0x40] sm:$0xff]
  %v29 = vld [vmem:[%s0 + $0x48] sm:$0xff]
  %v30 = vld [vmem:[%s0 + $0x50] sm:$0xff]
  %v31 = vld [vmem:[%s0 + $0x58] sm:$0xff]
  %v32 = vld [vmem:[%s0 + $0x60] sm:$0xff]
  %v33 = vld [vmem:[%s0 + $0x68] sm:$0xff]
  %v34 = vld [vmem:[%s0 + $0x70] sm:$0xff]
  %v35 = vld [vmem:[%s0 + $0x78] sm:$0xff]
  %v36 = vld [vmem:[%s0 + $0x80] sm:$0xff]
  %v37 = vld [vmem:[%s0 + $0x88] sm:$0xff]
  %v38 = vld [vmem:[%s2] sm:$0xff]
  %v39 = vld [vmem:[%s2 + $0x8] sm:$0xff]
  %v40 = vld [vmem:[%s2 + $0x10] sm:$0xff]
  %v41 = vld [vmem:[%s2 + $0x18] sm:$0xff]
  %v42 = vld [vmem:[%s2 + $0x20] sm:$0xff]
  %44 = vset.pattern.permute.xlu0 0
  %45 = vperm.xlu0 %44, %v38
  %v46 = vpop.permute.xlu0 %45
  %49 = vset.pattern.permute.xlu0 0
  %50 = vperm.xlu0 %49, %v39
  %v51 = vpop.permute.xlu0 %50
  %54 = vset.pattern.permute.xlu0 0
  %55 = vperm.xlu0 %54, %v40
  %v56 = vpop.permute.xlu0 %55
  %59 = vset.pattern.permute.xlu0 0
  %60 = vperm.xlu0 %59, %v41
  %v61 = vpop.permute.xlu0 %60
  %64 = vset.pattern.permute.xlu0 0
  %65 = vperm.xlu0 %64, %v42
  %v66 = vpop.permute.xlu0 %65
  %v73 = vunpack.c.l.b16 %v15
  %v74 = vunpack.c.l.b16 %v16
  %v75 = vunpack.c.l.b16 %v17
  %v76 = vunpack.c.l.b16 %v18
  %v77 = vunpack.c.l.b16 %v19
  %v78 = vpack.c.b16 %v74, %v73
  %v79 = vpack.c.b16 %v76, %v75
  %v80 = vpack.c.b16 %v77, %v77
  %v99 = vunpack.c.l.b16 %v20
  %v100 = vunpack.c.h.b16 %v20
  %v101 = vunpack.c.l.b16 %v21
  %v102 = vunpack.c.h.b16 %v21
  %v103 = vunpack.c.l.b16 %v22
  %v104 = vunpack.c.h.b16 %v22
  %v105 = vunpack.c.l.b16 %v23
  %v106 = vunpack.c.h.b16 %v23
  %v107 = vunpack.c.l.b16 %v24
  %v108 = vunpack.c.h.b16 %v24
  %v109 = vunpack.c.l.b16 %v25
  %v110 = vunpack.c.h.b16 %v25
  %v111 = vunpack.c.l.b16 %v26
  %v112 = vunpack.c.h.b16 %v26
  %v113 = vunpack.c.l.b16 %v27
  %v114 = vunpack.c.h.b16 %v27
  %v115 = vunpack.c.l.b16 %v28
  %v116 = vunpack.c.h.b16 %v28
  %v117 = vunpack.c.l.b16 %v29
  %v118 = vunpack.c.h.b16 %v29
  %v119 = vunpack.c.l.b16 %v30
  %v120 = vunpack.c.h.b16 %v30
  %v121 = vunpack.c.l.b16 %v31
  %v122 = vunpack.c.h.b16 %v31
  %v123 = vunpack.c.l.b16 %v32
  %v124 = vunpack.c.h.b16 %v32
  %v125 = vunpack.c.l.b16 %v33
  %v126 = vunpack.c.h.b16 %v33
  %v127 = vunpack.c.l.b16 %v34
  %v128 = vunpack.c.h.b16 %v34
  %v129 = vunpack.c.l.b16 %v35
  %v130 = vunpack.c.h.b16 %v35
  %v131 = vunpack.c.l.b16 %v36
  %v132 = vunpack.c.h.b16 %v36
  %v133 = vunpack.c.l.b16 %v37
  %v134 = vunpack.c.h.b16 %v37
  %v135 = vpack.c.b16 %v103, %v99
  %v136 = vpack.c.b16 %v104, %v100
  %v137 = vpack.c.b16 %v105, %v101
  %v138 = vpack.c.b16 %v106, %v102
  %v139 = vpack.c.b16 %v111, %v107
  %v140 = vpack.c.b16 %v112, %v108
  %v141 = vpack.c.b16 %v113, %v109
  %v142 = vpack.c.b16 %v114, %v110
  %v143 = vpack.c.b16 %v119, %v115
  %v144 = vpack.c.b16 %v120, %v116
  %v145 = vpack.c.b16 %v121, %v117
  %v146 = vpack.c.b16 %v122, %v118
  %v147 = vpack.c.b16 %v127, %v123
  %v148 = vpack.c.b16 %v128, %v124
  %v149 = vpack.c.b16 %v129, %v125
  %v150 = vpack.c.b16 %v130, %v126
  %v151 = vpack.c.b16 %v131, %v131
  %v152 = vpack.c.b16 %v132, %v132
  %v153 = vpack.c.b16 %v133, %v133
  %v154 = vpack.c.b16 %v134, %v134
  %vm171 = vcmask 588800
  %v173 = vsel %vm171, %v78, 0
  %v176 = vsel %vm171, %v79, 0
  %v179 = vsel %vm171, %v80, 0
  %vm181 = vcmask 1043456
  %v183 = vsel %vm181, %v151, 0
  %v186 = vsel %vm181, %v152, 0
  %v189 = vsel %vm181, %v153, 0
  %v192 = vsel %vm181, %v154, 0
  %194 = vmatprep.subr.bf16.mxu0 %v136
  %195 = vmatpush1.bf16.msra.mxu0 %v135
  %196 = vmatprep.subr.bf16.mxu0 %v140
  %197 = vmatpush1.bf16.msra.mxu0 %v139
  %198 = vmatprep.subr.bf16.mxu0 %v144
  %199 = vmatpush1.bf16.msra.mxu0 %v143
  %200 = vmatprep.subr.bf16.mxu0 %v148
  %201 = vmatpush1.bf16.msra.mxu0 %v147
  %202 = vmatprep.subr.bf16.mxu0 %v186
  %203 = vmatpush1.bf16.msra.mxu0 %v183
  %204 = vmatprep.subr.bf16.mxu0 0
  %205 = vmatpush1.bf16.msra.mxu0 0
  %206 = vmatprep.subr.bf16.mxu0 0
  %207 = vmatpush1.bf16.msra.mxu0 0
  %208 = vmatprep.subr.bf16.mxu0 0
  %209 = vmatpush1.bf16.msra.mxu0 0
  %210 = vmatprep.subr.bf16.mxu0 0
  %211 = vmatpush1.bf16.msra.mxu0 0
  %212 = vmatprep.subr.bf16.mxu0 0
  %213 = vmatpush1.bf16.msra.mxu0 0
  %214 = vmatprep.subr.bf16.mxu0 0
  %215 = vmatpush1.bf16.msra.mxu0 0
  %216 = vmatprep.subr.bf16.mxu0 0
  %217 = vmatpush1.bf16.msra.mxu0 0
  %218 = vmatprep.subr.bf16.mxu0 0
  %219 = vmatpush1.bf16.msra.mxu0 0
  %220 = vmatprep.subr.bf16.mxu0 0
  %221 = vmatpush1.bf16.msra.mxu0 0
  %222 = vmatprep.subr.bf16.mxu0 0
  %223 = vmatpush1.bf16.msra.mxu0 0
  %224 = vmatprep.subr.bf16.mxu0 0
  %225 = vmatpush1.bf16.msra.mxu0 0
  %226 = vmatprep.mubr.bf16.mxu0 0
  %227 = vmatmul.mubr.bf16.gmra.mrb[0].mxu0 %v173
  %v228 = vpop.f32.mrb[0].mxu0
  %v229 = vadd.f32 %v46, %v228
  %v230 = vpop.f32.mrb[0].mxu0
  %v231 = vadd.f32 %v46, %v230
  %v232 = vpop.f32.mrb[0].mxu0
  %v233 = vadd.f32 %v51, %v232
  %v234 = vpop.f32.mrb[0].mxu0
  %v235 = vadd.f32 %v51, %v234
  %236 = vmatprep.mubr.bf16.mxu0 0
  %237 = vmatmul.mubr.bf16.gmra.mrb[0].mxu0 %v176
  %v238 = vpop.f32.mrb[0].mxu0
  %v239 = vadd.f32 %v56, %v238
  %v240 = vpop.f32.mrb[0].mxu0
  %v241 = vadd.f32 %v56, %v240
  %v242 = vpop.f32.mrb[0].mxu0
  %v243 = vadd.f32 %v61, %v242
  %v244 = vpop.f32.mrb[0].mxu0
  %v245 = vadd.f32 %v61, %v244
  %246 = vmatprep.mubr.bf16.mxu0 0
  %247 = vmatmul.mubr.bf16.gmra.mrb[0].mxu0 %v179
  %v248 = vpop.f32.mrb[0].mxu0
  %v249 = vadd.f32 %v66, %v248
  %v250 = vpop.f32.mrb[0].mxu0
  %v251 = vadd.f32 %v66, %v250
  %v252 = vpop.f32.mrb[0].mxu0
  %v253 = vpop.f32.mrb[0].mxu0
  %254 = vdwg.mxu0
  %255 = vmatprep.subr.bf16.mxu0 %v138
  %256 = vmatpush1.bf16.msra.mxu0 %v137
  %257 = vmatprep.subr.bf16.mxu0 %v142
  %258 = vmatpush1.bf16.msra.mxu0 %v141
  %259 = vmatprep.subr.bf16.mxu0 %v146
  %260 = vmatpush1.bf16.msra.mxu0 %v145
  %261 = vmatprep.subr.bf16.mxu0 %v150
  %262 = vmatpush1.bf16.msra.mxu0 %v149
  %263 = vmatprep.subr.bf16.mxu0 %v192
  %264 = vmatpush1.bf16.msra.mxu0 %v189
  %265 = vmatprep.subr.bf16.mxu0 0
  %266 = vmatpush1.bf16.msra.mxu0 0
  %267 = vmatprep.subr.bf16.mxu0 0
  %268 = vmatpush1.bf16.msra.mxu0 0
  %269 = vmatprep.subr.bf16.mxu0 0
  %270 = vmatpush1.bf16.msra.mxu0 0
  %271 = vmatprep.subr.bf16.mxu0 0
  %272 = vmatpush1.bf16.msra.mxu0 0
  %273 = vmatprep.subr.bf16.mxu0 0
  %274 = vmatpush1.bf16.msra.mxu0 0
  %275 = vmatprep.subr.bf16.mxu0 0
  %276 = vmatpush1.bf16.msra.mxu0 0
  %277 = vmatprep.subr.bf16.mxu0 0
  %278 = vmatpush1.bf16.msra.mxu0 0
  %279 = vmatprep.subr.bf16.mxu0 0
  %280 = vmatpush1.bf16.msra.mxu0 0
  %281 = vmatprep.subr.bf16.mxu0 0
  %282 = vmatpush1.bf16.msra.mxu0 0
  %283 = vmatprep.subr.bf16.mxu0 0
  %284 = vmatpush1.bf16.msra.mxu0 0
  %285 = vmatprep.subr.bf16.mxu0 0
  %286 = vmatpush1.bf16.msra.mxu0 0
  %287 = vmatprep.mubr.bf16.mxu0 0
  %288 = vmatmul.mubr.bf16.gmra.mrb[0].mxu0 %v173
  %v289 = vpop.f32.mrb[0].mxu0
  %v290 = vadd.f32 %v46, %v289
  %v291 = vpop.f32.mrb[0].mxu0
  %v292 = vadd.f32 %v46, %v291
  %v293 = vpop.f32.mrb[0].mxu0
  %v294 = vadd.f32 %v51, %v293
  %v295 = vpop.f32.mrb[0].mxu0
  %v296 = vadd.f32 %v51, %v295
  %297 = vmatprep.mubr.bf16.mxu0 0
  %298 = vmatmul.mubr.bf16.gmra.mrb[0].mxu0 %v176
  %v299 = vpop.f32.mrb[0].mxu0
  %v300 = vadd.f32 %v56, %v299
  %v301 = vpop.f32.mrb[0].mxu0
  %v302 = vadd.f32 %v56, %v301
  %v303 = vpop.f32.mrb[0].mxu0
  %v304 = vadd.f32 %v61, %v303
  %v305 = vpop.f32.mrb[0].mxu0
  %v306 = vadd.f32 %v61, %v305
  %307 = vmatprep.mubr.bf16.mxu0 0
  %308 = vmatmul.mubr.bf16.gmra.mrb[0].mxu0 %v179
  %v309 = vpop.f32.mrb[0].mxu0
  %v310 = vadd.f32 %v66, %v309
  %v311 = vpop.f32.mrb[0].mxu0
  %v312 = vadd.f32 %v66, %v311
  %v313 = vpop.f32.mrb[0].mxu0
  %v314 = vpop.f32.mrb[0].mxu0
  %315 = vdwg.mxu0
  %v316 = vmax.f32 %v229, 0.0
  %v317 = vmax.f32 %v231, 0.0
  %v318 = vmax.f32 %v290, 0.0
  %v319 = vmax.f32 %v292, 0.0
  %v320 = vmax.f32 %v233, 0.0
  %v321 = vmax.f32 %v235, 0.0
  %v322 = vmax.f32 %v294, 0.0
  %v323 = vmax.f32 %v296, 0.0
  %v324 = vmax.f32 %v239, 0.0
  %v325 = vmax.f32 %v241, 0.0
  %v326 = vmax.f32 %v300, 0.0
  %v327 = vmax.f32 %v302, 0.0
  %v328 = vmax.f32 %v243, 0.0
  %v329 = vmax.f32 %v245, 0.0
  %v330 = vmax.f32 %v304, 0.0
  %v331 = vmax.f32 %v306, 0.0
  %v332 = vmax.f32 %v249, 0.0
  %v333 = vmax.f32 %v251, 0.0
  %v334 = vmax.f32 %v310, 0.0
  %v335 = vmax.f32 %v312, 0.0
  %v336 = vpack.c.bf16 %v320, %v316
  %v337 = vpack.c.bf16 %v321, %v317
  %v338 = vpack.c.bf16 %v322, %v318
  %v339 = vpack.c.bf16 %v323, %v319
  %v340 = vpack.c.bf16 %v328, %v324
  %v341 = vpack.c.bf16 %v329, %v325
  %v342 = vpack.c.bf16 %v330, %v326
  %v343 = vpack.c.bf16 %v331, %v327
  %v344 = vpack.c.bf16 %v332, %v332
  %v345 = vpack.c.bf16 %v333, %v333
  %v346 = vpack.c.bf16 %v334, %v334
  %v347 = vpack.c.bf16 %v335, %v335
  %v360 = vunpack.c.l.b16 %v336
  %v361 = vunpack.c.l.b16 %v337
  %v362 = vunpack.c.l.b16 %v338
  %v363 = vunpack.c.l.b16 %v339
  %v364 = vunpack.c.h.b16 %v336
  %v365 = vunpack.c.h.b16 %v337
  %v366 = vunpack.c.h.b16 %v338
  %v367 = vunpack.c.h.b16 %v339
  %v368 = vunpack.c.l.b16 %v340
  %v369 = vunpack.c.l.b16 %v341
  %v370 = vunpack.c.l.b16 %v342
  %v371 = vunpack.c.l.b16 %v343
  %v372 = vunpack.c.h.b16 %v340
  %v373 = vunpack.c.h.b16 %v341
  %v374 = vunpack.c.h.b16 %v342
  %v375 = vunpack.c.h.b16 %v343
  %v376 = vunpack.c.l.b16 %v344
  %v377 = vunpack.c.l.b16 %v345
  %v378 = vunpack.c.l.b16 %v346
  %v379 = vunpack.c.l.b16 %v347
  %v380 = vpack.c.b16 %v361, %v360
  %v381 = vpack.c.b16 %v363, %v362
  %v382 = vpack.c.b16 %v365, %v364
  %v383 = vpack.c.b16 %v367, %v366
  %v384 = vpack.c.b16 %v369, %v368
  %v385 = vpack.c.b16 %v371, %v370
  %v386 = vpack.c.b16 %v373, %v372
  %v387 = vpack.c.b16 %v375, %v374
  %v388 = vpack.c.b16 %v377, %v376
  %v389 = vpack.c.b16 %v379, %v378
  %400 = vst [vmem:[%s3] sm:$0xff] %v380
  %401 = vst [vmem:[%s3 + $0x8] sm:$0xff] %v381
  %402 = vst [vmem:[%s3 + $0x10] sm:$0xff] %v382
  %403 = vst [vmem:[%s3 + $0x18] sm:$0xff] %v383
  %404 = vst [vmem:[%s3 + $0x20] sm:$0xff] %v384
  %405 = vst [vmem:[%s3 + $0x28] sm:$0xff] %v385
  %406 = vst [vmem:[%s3 + $0x30] sm:$0xff] %v386
  %407 = vst [vmem:[%s3 + $0x38] sm:$0xff] %v387
  %408 = vst [vmem:[%s3 + $0x40] sm:$0xff] %v388
  %409 = vst [vmem:[%s3 + $0x48] sm:$0xff] %v389
  // Predicated region
  $region14: #{cspn_forward.14} parent=0 // pred_check
    _
  $region15: #{cspn_forward.14} parent=0 // pred_check_branch
    %411 = sbr.rel (0) target = $region17
  $region16: #{cspn_forward.14} parent=0 // pred_region
    _
  $region17: #{cspn_forward.14} parent=0 // pred_fallthru
    _
  // Predicated region
  $region18: #{cspn_forward.14} parent=0 // pred_check
    _
  $region19: #{cspn_forward.14} parent=0 // pred_check_branch
    %413 = sbr.rel (0) target = $region21
  $region20: #{cspn_forward.14} parent=0 // pred_region
    _
  $region21: #{cspn_forward.14} parent=0 // pred_fallthru
    _

// kernel: cspn_forward.18
$region0: #{cspn_forward.18}
  #allocation0 [shape = 'u32[]', space=smem, size = 0x4, offset = 0x4, fixed_abs, tag = 'smem constant byte address 0x4 - core index']
  #allocation1 [shape = 'u32[144,128]{1,0:T(1,128)}', space=vmem, size = 0x12000, scoped, tag = 'internal scratch']
  %s0 = inlined_call_operand.vmem [shape: bf16[72,512], index: 0, kind: input, shape index: {}]
  %s1 = inlined_call_operand.vmem [shape: bf16[3,72], index: 1, kind: input, shape index: {}]
  %s2 = inlined_call_operand.vmem [shape: f32[3,1], index: 2, kind: input, shape index: {}]
  %s3 = inlined_call_operand.vmem [shape: f32[3,512], index: 3, kind: output, shape index: {}]
  %s4 = sld [smem:[#allocation0]]
  $region22: #{cspn_forward.18} parent=0
    _
  %s6 = ssub.s32 1, %s4
  %s7 = scalar_select 0, %s6, %s4
  // Predicated region
  $region2: #{cspn_forward.18} parent=0 // pred_check
    _
  $region3: #{cspn_forward.18} parent=0 // pred_check_branch
    %9 = sbr.rel (0) target = $region5
  $region4: #{cspn_forward.18} parent=0 // pred_region
    _
  $region5: #{cspn_forward.18} parent=0 // pred_fallthru
    _
  // Predicated region
  $region6: #{cspn_forward.18} parent=0 // pred_check
    _
  $region7: #{cspn_forward.18} parent=0 // pred_check_branch
    %11 = sbr.rel (0) target = $region9
  $region8: #{cspn_forward.18} parent=0 // pred_region
    _
  $region9: #{cspn_forward.18} parent=0 // pred_fallthru
    _
  // Predicated region
  $region10: #{cspn_forward.18} parent=0 // pred_check
    _
  $region11: #{cspn_forward.18} parent=0 // pred_check_branch
    %13 = sbr.rel (0) target = $region13
  $region12: #{cspn_forward.18} parent=0 // pred_region
    _
  $region13: #{cspn_forward.18} parent=0 // pred_fallthru
    _
  %v15 = vld [vmem:[%s1] sm:$0x3]
  %v16 = vld [vmem:[%s0] sm:$0xff]
  %v17 = vld [vmem:[%s0 + $0x8] sm:$0xff]
  %v18 = vld [vmem:[%s0 + $0x10] sm:$0xff]
  %v19 = vld [vmem:[%s0 + $0x18] sm:$0xff]
  %v20 = vld [vmem:[%s0 + $0x20] sm:$0xff]
  %v21 = vld [vmem:[%s0 + $0x28] sm:$0xff]
  %v22 = vld [vmem:[%s0 + $0x30] sm:$0xff]
  %v23 = vld [vmem:[%s0 + $0x38] sm:$0xff]
  %v24 = vld [vmem:[%s0 + $0x40] sm:$0xff]
  %v25 = vld [vmem:[%s0 + $0x48] sm:$0xff]
  %v26 = vld [vmem:[%s0 + $0x50] sm:$0xff]
  %v27 = vld [vmem:[%s0 + $0x58] sm:$0xff]
  %v28 = vld [vmem:[%s0 + $0x60] sm:$0xff]
  %v29 = vld [vmem:[%s0 + $0x68] sm:$0xff]
  %v30 = vld [vmem:[%s0 + $0x70] sm:$0xff]
  %v31 = vld [vmem:[%s0 + $0x78] sm:$0xff]
  %v32 = vld [vmem:[%s0 + $0x80] sm:$0xff]
  %v33 = vld [vmem:[%s0 + $0x88] sm:$0xff]
  %v34 = vld [vmem:[%s2] sm:$0x7]
  %36 = vset.pattern.permute.xlu0 0
  %37 = vperm.xlu0 %36, %v34
  %v38 = vpop.permute.xlu0 %37
  %v58 = vunpack.c.l.b16 %v16
  %v59 = vunpack.c.h.b16 %v16
  %v60 = vunpack.c.l.b16 %v17
  %v61 = vunpack.c.h.b16 %v17
  %v62 = vunpack.c.l.b16 %v18
  %v63 = vunpack.c.h.b16 %v18
  %v64 = vunpack.c.l.b16 %v19
  %v65 = vunpack.c.h.b16 %v19
  %v66 = vunpack.c.l.b16 %v20
  %v67 = vunpack.c.h.b16 %v20
  %v68 = vunpack.c.l.b16 %v21
  %v69 = vunpack.c.h.b16 %v21
  %v70 = vunpack.c.l.b16 %v22
  %v71 = vunpack.c.h.b16 %v22
  %v72 = vunpack.c.l.b16 %v23
  %v73 = vunpack.c.h.b16 %v23
  %v74 = vunpack.c.l.b16 %v24
  %v75 = vunpack.c.h.b16 %v24
  %v76 = vunpack.c.l.b16 %v25
  %v77 = vunpack.c.h.b16 %v25
  %v78 = vunpack.c.l.b16 %v26
  %v79 = vunpack.c.h.b16 %v26
  %v80 = vunpack.c.l.b16 %v27
  %v81 = vunpack.c.h.b16 %v27
  %v82 = vunpack.c.l.b16 %v28
  %v83 = vunpack.c.h.b16 %v28
  %v84 = vunpack.c.l.b16 %v29
  %v85 = vunpack.c.h.b16 %v29
  %v86 = vunpack.c.l.b16 %v30
  %v87 = vunpack.c.h.b16 %v30
  %v88 = vunpack.c.l.b16 %v31
  %v89 = vunpack.c.h.b16 %v31
  %v90 = vunpack.c.l.b16 %v32
  %v91 = vunpack.c.h.b16 %v32
  %v92 = vunpack.c.l.b16 %v33
  %v93 = vunpack.c.h.b16 %v33
  %v94 = vpack.c.b16 %v62, %v58
  %v95 = vpack.c.b16 %v63, %v59
  %v96 = vpack.c.b16 %v64, %v60
  %v97 = vpack.c.b16 %v65, %v61
  %v98 = vpack.c.b16 %v70, %v66
  %v99 = vpack.c.b16 %v71, %v67
  %v100 = vpack.c.b16 %v72, %v68
  %v101 = vpack.c.b16 %v73, %v69
  %v102 = vpack.c.b16 %v78, %v74
  %v103 = vpack.c.b16 %v79, %v75
  %v104 = vpack.c.b16 %v80, %v76
  %v105 = vpack.c.b16 %v81, %v77
  %v106 = vpack.c.b16 %v86, %v82
  %v107 = vpack.c.b16 %v87, %v83
  %v108 = vpack.c.b16 %v88, %v84
  %v109 = vpack.c.b16 %v89, %v85
  %v110 = vpack.c.b16 %v90, %v90
  %v111 = vpack.c.b16 %v91, %v91
  %v112 = vpack.c.b16 %v92, %v92
  %v113 = vpack.c.b16 %v93, %v93
  %vm130 = vcmask 588800
  %v132 = vsel %vm130, %v15, 0
  %vm134 = vcmask 1043456
  %v136 = vsel %vm134, %v110, 0
  %v139 = vsel %vm134, %v111, 0
  %v142 = vsel %vm134, %v112, 0
  %v145 = vsel %vm134, %v113, 0
  %147 = vmatprep.subr.bf16.mxu0 %v95
  %148 = vmatpush1.bf16.msra.mxu0 %v94
  %149 = vmatprep.subr.bf16.mxu0 %v99
  %150 = vmatpush1.bf16.msra.mxu0 %v98
  %151 = vmatprep.subr.bf16.mxu0 %v103
  %152 = vmatpush1.bf16.msra.mxu0 %v102
  %153 = vmatprep.subr.bf16.mxu0 %v107
  %154 = vmatpush1.bf16.msra.mxu0 %v106
  %155 = vmatprep.subr.bf16.mxu0 %v139
  %156 = vmatpush1.bf16.msra.mxu0 %v136
  %157 = vmatprep.subr.bf16.mxu0 0
  %158 = vmatpush1.bf16.msra.mxu0 0
  %159 = vmatprep.subr.bf16.mxu0 0
  %160 = vmatpush1.bf16.msra.mxu0 0
  %161 = vmatprep.subr.bf16.mxu0 0
  %162 = vmatpush1.bf16.msra.mxu0 0
  %163 = vmatprep.subr.bf16.mxu0 0
  %164 = vmatpush1.bf16.msra.mxu0 0
  %165 = vmatprep.subr.bf16.mxu0 0
  %166 = vmatpush1.bf16.msra.mxu0 0
  %167 = vmatprep.subr.bf16.mxu0 0
  %168 = vmatpush1.bf16.msra.mxu0 0
  %169 = vmatprep.subr.bf16.mxu0 0
  %170 = vmatpush1.bf16.msra.mxu0 0
  %171 = vmatprep.subr.bf16.mxu0 0
  %172 = vmatpush1.bf16.msra.mxu0 0
  %173 = vmatprep.subr.bf16.mxu0 0
  %174 = vmatpush1.bf16.msra.mxu0 0
  %175 = vmatprep.subr.bf16.mxu0 0
  %176 = vmatpush1.bf16.msra.mxu0 0
  %177 = vmatprep.subr.bf16.mxu0 0
  %178 = vmatpush1.bf16.msra.mxu0 0
  %179 = vmatprep.mubr.bf16.mxu0 0
  %180 = vmatmul.mubr.bf16.gmra.mrb[0].mxu0 %v132
  %v181 = vpop.f32.mrb[0].mxu0
  %v182 = vadd.f32 %v38, %v181
  %v183 = vpop.f32.mrb[0].mxu0
  %v184 = vadd.f32 %v38, %v183
  %v185 = vpop.f32.mrb[0].mxu0
  %v186 = vpop.f32.mrb[0].mxu0
  %187 = vdwg.mxu0
  %188 = vmatprep.subr.bf16.mxu0 %v97
  %189 = vmatpush1.bf16.msra.mxu0 %v96
  %190 = vmatprep.subr.bf16.mxu0 %v101
  %191 = vmatpush1.bf16.msra.mxu0 %v100
  %192 = vmatprep.subr.bf16.mxu0 %v105
  %193 = vmatpush1.bf16.msra.mxu0 %v104
  %194 = vmatprep.subr.bf16.mxu0 %v109
  %195 = vmatpush1.bf16.msra.mxu0 %v108
  %196 = vmatprep.subr.bf16.mxu0 %v145
  %197 = vmatpush1.bf16.msra.mxu0 %v142
  %198 = vmatprep.subr.bf16.mxu0 0
  %199 = vmatpush1.bf16.msra.mxu0 0
  %200 = vmatprep.subr.bf16.mxu0 0
  %201 = vmatpush1.bf16.msra.mxu0 0
  %202 = vmatprep.subr.bf16.mxu0 0
  %203 = vmatpush1.bf16.msra.mxu0 0
  %204 = vmatprep.subr.bf16.mxu0 0
  %205 = vmatpush1.bf16.msra.mxu0 0
  %206 = vmatprep.subr.bf16.mxu0 0
  %207 = vmatpush1.bf16.msra.mxu0 0
  %208 = vmatprep.subr.bf16.mxu0 0
  %209 = vmatpush1.bf16.msra.mxu0 0
  %210 = vmatprep.subr.bf16.mxu0 0
  %211 = vmatpush1.bf16.msra.mxu0 0
  %212 = vmatprep.subr.bf16.mxu0 0
  %213 = vmatpush1.bf16.msra.mxu0 0
  %214 = vmatprep.subr.bf16.mxu0 0
  %215 = vmatpush1.bf16.msra.mxu0 0
  %216 = vmatprep.subr.bf16.mxu0 0
  %217 = vmatpush1.bf16.msra.mxu0 0
  %218 = vmatprep.subr.bf16.mxu0 0
  %219 = vmatpush1.bf16.msra.mxu0 0
  %220 = vmatprep.mubr.bf16.mxu0 0
  %221 = vmatmul.mubr.bf16.gmra.mrb[0].mxu0 %v132
  %v222 = vpop.f32.mrb[0].mxu0
  %v223 = vadd.f32 %v38, %v222
  %v224 = vpop.f32.mrb[0].mxu0
  %v225 = vadd.f32 %v38, %v224
  %v226 = vpop.f32.mrb[0].mxu0
  %v227 = vpop.f32.mrb[0].mxu0
  %228 = vdwg.mxu0
  %v229 = vand.u32 2147483647, %v182
  %v230 = vand.u32 2147483647, %v184
  %v231 = vand.u32 2147483647, %v223
  %v232 = vand.u32 2147483647, %v225
  %v233 = vsub.f32 0.0, %v229
  %v234 = vsub.f32 0.0, %v230
  %v235 = vsub.f32 0.0, %v231
  %v236 = vsub.f32 0.0, %v232
  %v237 = vmul.f32 %v233, 1.442695
  %v238 = vpow.pop %v237
  %v239 = vmul.f32 %v234, 1.442695
  %v240 = vpow.pop %v239
  %v241 = vmul.f32 %v235, 1.442695
  %v242 = vpow.pop %v241
  %v243 = vmul.f32 %v236, 1.442695
  %v244 = vpow.pop %v243
  %vm245 = vcmp.ge.f32.partialorder %v182, 0.0
  %vm246 = vcmp.ge.f32.partialorder %v184, 0.0
  %vm247 = vcmp.ge.f32.partialorder %v223, 0.0
  %vm248 = vcmp.ge.f32.partialorder %v225, 0.0
  %v249 = vsel %vm245, 1.0, %v238
  %v250 = vsel %vm246, 1.0, %v240
  %v251 = vsel %vm247, 1.0, %v242
  %v252 = vsel %vm248, 1.0, %v244
  %v253 = vadd.f32 %v238, 1.0
  %v254 = vadd.f32 %v240, 1.0
  %v255 = vadd.f32 %v242, 1.0
  %v256 = vadd.f32 %v244, 1.0
  %v257 = vrcp.pop %v253
  %v258 = vrcp.pop %v254
  %v259 = vrcp.pop %v255
  %v260 = vrcp.pop %v256
  %v261 = vmul.f32 %v249, %v257
  %v262 = vmul.f32 %v250, %v258
  %v263 = vmul.f32 %v251, %v259
  %v264 = vmul.f32 %v252, %v260
  %v269 = vcombine.low %v261, %v262
  %v270 = vcombine.low %v263, %v264
  %273 = vst [vmem:[%s3] sm:$0x77] %v269
  %274 = vst [vmem:[%s3 + $0x8] sm:$0x77] %v270
  // Predicated region
  $region14: #{cspn_forward.18} parent=0 // pred_check
    _
  $region15: #{cspn_forward.18} parent=0 // pred_check_branch
    %276 = sbr.rel (0) target = $region17
  $region16: #{cspn_forward.18} parent=0 // pred_region
    _
  $region17: #{cspn_forward.18} parent=0 // pred_fallthru
    _
  // Predicated region
  $region18: #{cspn_forward.18} parent=0 // pred_check
    _
  $region19: #{cspn_forward.18} parent=0 // pred_check_branch
    %278 = sbr.rel (0) target = $region21
  $region20: #{cspn_forward.18} parent=0 // pred_region
    _
  $region21: #{cspn_forward.18} parent=0 // pred_fallthru
    _

// kernel: cspn_forward.17
$region0: #{cspn_forward.17}
  #allocation0 [shape = 'u32[]', space=smem, size = 0x4, offset = 0x4, fixed_abs, tag = 'smem constant byte address 0x4 - core index']
  #allocation1 [shape = 'u32[144,128]{1,0:T(1,128)}', space=vmem, size = 0x12000, scoped, tag = 'internal scratch']
  %s0 = inlined_call_operand.vmem [shape: bf16[72,512], index: 0, kind: input, shape index: {}]
  %s1 = inlined_call_operand.vmem [shape: bf16[48,72], index: 1, kind: input, shape index: {}]
  %s2 = inlined_call_operand.vmem [shape: f32[48,1], index: 2, kind: input, shape index: {}]
  %s3 = inlined_call_operand.vmem [shape: bf16[49,512], index: 3, kind: output, shape index: {}]
  %s4 = sld [smem:[#allocation0]]
  $region22: #{cspn_forward.17} parent=0
    _
  %s6 = ssub.s32 1, %s4
  %s7 = scalar_select 0, %s6, %s4
  // Predicated region
  $region2: #{cspn_forward.17} parent=0 // pred_check
    _
  $region3: #{cspn_forward.17} parent=0 // pred_check_branch
    %9 = sbr.rel (0) target = $region5
  $region4: #{cspn_forward.17} parent=0 // pred_region
    _
  $region5: #{cspn_forward.17} parent=0 // pred_fallthru
    _
  // Predicated region
  $region6: #{cspn_forward.17} parent=0 // pred_check
    _
  $region7: #{cspn_forward.17} parent=0 // pred_check_branch
    %11 = sbr.rel (0) target = $region9
  $region8: #{cspn_forward.17} parent=0 // pred_region
    _
  $region9: #{cspn_forward.17} parent=0 // pred_fallthru
    _
  // Predicated region
  $region10: #{cspn_forward.17} parent=0 // pred_check
    _
  $region11: #{cspn_forward.17} parent=0 // pred_check_branch
    %13 = sbr.rel (0) target = $region13
  $region12: #{cspn_forward.17} parent=0 // pred_region
    _
  $region13: #{cspn_forward.17} parent=0 // pred_fallthru
    _
  %v15 = vld [vmem:[%s1] sm:$0xf]
  %v16 = vld [vmem:[%s1 + $0x4] sm:$0xf]
  %v17 = vld [vmem:[%s1 + $0x8] sm:$0xf]
  %v18 = vld [vmem:[%s1 + $0xc] sm:$0xf]
  %v19 = vld [vmem:[%s1 + $0x10] sm:$0xf]
  %v20 = vld [vmem:[%s1 + $0x14] sm:$0xf]
  %v21 = vld [vmem:[%s0] sm:$0xff]
  %v22 = vld [vmem:[%s0 + $0x8] sm:$0xff]
  %v23 = vld [vmem:[%s0 + $0x10] sm:$0xff]
  %v24 = vld [vmem:[%s0 + $0x18] sm:$0xff]
  %v25 = vld [vmem:[%s0 + $0x20] sm:$0xff]
  %v26 = vld [vmem:[%s0 + $0x28] sm:$0xff]
  %v27 = vld [vmem:[%s0 + $0x30] sm:$0xff]
  %v28 = vld [vmem:[%s0 + $0x38] sm:$0xff]
  %v29 = vld [vmem:[%s0 + $0x40] sm:$0xff]
  %v30 = vld [vmem:[%s0 + $0x48] sm:$0xff]
  %v31 = vld [vmem:[%s0 + $0x50] sm:$0xff]
  %v32 = vld [vmem:[%s0 + $0x58] sm:$0xff]
  %v33 = vld [vmem:[%s0 + $0x60] sm:$0xff]
  %v34 = vld [vmem:[%s0 + $0x68] sm:$0xff]
  %v35 = vld [vmem:[%s0 + $0x70] sm:$0xff]
  %v36 = vld [vmem:[%s0 + $0x78] sm:$0xff]
  %v37 = vld [vmem:[%s0 + $0x80] sm:$0xff]
  %v38 = vld [vmem:[%s0 + $0x88] sm:$0xff]
  %v39 = vld [vmem:[%s2] sm:$0xff]
  %v40 = vld [vmem:[%s2 + $0x8] sm:$0xff]
  %v41 = vld [vmem:[%s2 + $0x10] sm:$0xff]
  %v42 = vld [vmem:[%s2 + $0x18] sm:$0xff]
  %v43 = vld [vmem:[%s2 + $0x20] sm:$0xff]
  %v44 = vld [vmem:[%s2 + $0x28] sm:$0xff]
  %46 = vset.pattern.permute.xlu0 0
  %47 = vperm.xlu0 %46, %v39
  %v48 = vpop.permute.xlu0 %47
  %51 = vset.pattern.permute.xlu0 0
  %52 = vperm.xlu0 %51, %v40
  %v53 = vpop.permute.xlu0 %52
  %56 = vset.pattern.permute.xlu0 0
  %57 = vperm.xlu0 %56, %v41
  %v58 = vpop.permute.xlu0 %57
  %61 = vset.pattern.permute.xlu0 0
  %62 = vperm.xlu0 %61, %v42
  %v63 = vpop.permute.xlu0 %62
  %66 = vset.pattern.permute.xlu0 0
  %67 = vperm.xlu0 %66, %v43
  %v68 = vpop.permute.xlu0 %67
  %71 = vset.pattern.permute.xlu0 0
  %72 = vperm.xlu0 %71, %v44
  %v73 = vpop.permute.xlu0 %72
  %v81 = vunpack.c.l.b16 %v15
  %v82 = vunpack.c.l.b16 %v16
  %v83 = vunpack.c.l.b16 %v17
  %v84 = vunpack.c.l.b16 %v18
  %v85 = vunpack.c.l.b16 %v19
  %v86 = vunpack.c.l.b16 %v20
  %v87 = vpack.c.b16 %v82, %v81
  %v88 = vpack.c.b16 %v84, %v83
  %v89 = vpack.c.b16 %v86, %v85
  %v108 = vunpack.c.l.b16 %v21
  %v109 = vunpack.c.h.b16 %v21
  %v110 = vunpack.c.l.b16 %v22
  %v111 = vunpack.c.h.b16 %v22
  %v112 = vunpack.c.l.b16 %v23
  %v113 = vunpack.c.h.b16 %v23
  %v114 = vunpack.c.l.b16 %v24
  %v115 = vunpack.c.h.b16 %v24
  %v116 = vunpack.c.l.b16 %v25
  %v117 = vunpack.c.h.b16 %v25
  %v118 = vunpack.c.l.b16 %v26
  %v119 = vunpack.c.h.b16 %v26
  %v120 = vunpack.c.l.b16 %v27
  %v121 = vunpack.c.h.b16 %v27
  %v122 = vunpack.c.l.b16 %v28
  %v123 = vunpack.c.h.b16 %v28
  %v124 = vunpack.c.l.b16 %v29
  %v125 = vunpack.c.h.b16 %v29
  %v126 = vunpack.c.l.b16 %v30
  %v127 = vunpack.c.h.b16 %v30
  %v128 = vunpack.c.l.b16 %v31
  %v129 = vunpack.c.h.b16 %v31
  %v130 = vunpack.c.l.b16 %v32
  %v131 = vunpack.c.h.b16 %v32
  %v132 = vunpack.c.l.b16 %v33
  %v133 = vunpack.c.h.b16 %v33
  %v134 = vunpack.c.l.b16 %v34
  %v135 = vunpack.c.h.b16 %v34
  %v136 = vunpack.c.l.b16 %v35
  %v137 = vunpack.c.h.b16 %v35
  %v138 = vunpack.c.l.b16 %v36
  %v139 = vunpack.c.h.b16 %v36
  %v140 = vunpack.c.l.b16 %v37
  %v141 = vunpack.c.h.b16 %v37
  %v142 = vunpack.c.l.b16 %v38
  %v143 = vunpack.c.h.b16 %v38
  %v144 = vpack.c.b16 %v112, %v108
  %v145 = vpack.c.b16 %v113, %v109
  %v146 = vpack.c.b16 %v114, %v110
  %v147 = vpack.c.b16 %v115, %v111
  %v148 = vpack.c.b16 %v120, %v116
  %v149 = vpack.c.b16 %v121, %v117
  %v150 = vpack.c.b16 %v122, %v118
  %v151 = vpack.c.b16 %v123, %v119
  %v152 = vpack.c.b16 %v128, %v124
  %v153 = vpack.c.b16 %v129, %v125
  %v154 = vpack.c.b16 %v130, %v126
  %v155 = vpack.c.b16 %v131, %v127
  %v156 = vpack.c.b16 %v136, %v132
  %v157 = vpack.c.b16 %v137, %v133
  %v158 = vpack.c.b16 %v138, %v134
  %v159 = vpack.c.b16 %v139, %v135
  %v160 = vpack.c.b16 %v140, %v140
  %v161 = vpack.c.b16 %v141, %v141
  %v162 = vpack.c.b16 %v142, %v142
  %v163 = vpack.c.b16 %v143, %v143
  %vm180 = vcmask 588800
  %v182 = vsel %vm180, %v87, 0
  %v185 = vsel %vm180, %v88, 0
  %v188 = vsel %vm180, %v89, 0
  %vm190 = vcmask 1043456
  %v192 = vsel %vm190, %v160, 0
  %v195 = vsel %vm190, %v161, 0
  %v198 = vsel %vm190, %v162, 0
  %v201 = vsel %vm190, %v163, 0
  %203 = vmatprep.subr.bf16.mxu0 %v145
  %204 = vmatpush1.bf16.msra.mxu0 %v144
  %205 = vmatprep.subr.bf16.mxu0 %v149
  %206 = vmatpush1.bf16.msra.mxu0 %v148
  %207 = vmatprep.subr.bf16.mxu0 %v153
  %208 = vmatpush1.bf16.msra.mxu0 %v152
  %209 = vmatprep.subr.bf16.mxu0 %v157
  %210 = vmatpush1.bf16.msra.mxu0 %v156
  %211 = vmatprep.subr.bf16.mxu0 %v195
  %212 = vmatpush1.bf16.msra.mxu0 %v192
  %213 = vmatprep.subr.bf16.mxu0 0
  %214 = vmatpush1.bf16.msra.mxu0 0
  %215 = vmatprep.subr.bf16.mxu0 0
  %216 = vmatpush1.bf16.msra.mxu0 0
  %217 = vmatprep.subr.bf16.mxu0 0
  %218 = vmatpush1.bf16.msra.mxu0 0
  %219 = vmatprep.subr.bf16.mxu0 0
  %220 = vmatpush1.bf16.msra.mxu0 0
  %221 = vmatprep.subr.bf16.mxu0 0
  %222 = vmatpush1.bf16.msra.mxu0 0
  %223 = vmatprep.subr.bf16.mxu0 0
  %224 = vmatpush1.bf16.msra.mxu0 0
  %225 = vmatprep.subr.bf16.mxu0 0
  %226 = vmatpush1.bf16.msra.mxu0 0
  %227 = vmatprep.subr.bf16.mxu0 0
  %228 = vmatpush1.bf16.msra.mxu0 0
  %229 = vmatprep.subr.bf16.mxu0 0
  %230 = vmatpush1.bf16.msra.mxu0 0
  %231 = vmatprep.subr.bf16.mxu0 0
  %232 = vmatpush1.bf16.msra.mxu0 0
  %233 = vmatprep.subr.bf16.mxu0 0
  %234 = vmatpush1.bf16.msra.mxu0 0
  %235 = vmatprep.mubr.bf16.mxu0 0
  %236 = vmatmul.mubr.bf16.gmra.mrb[0].mxu0 %v182
  %v237 = vpop.f32.mrb[0].mxu0
  %v238 = vadd.f32 %v48, %v237
  %v239 = vpop.f32.mrb[0].mxu0
  %v240 = vadd.f32 %v48, %v239
  %v241 = vpop.f32.mrb[0].mxu0
  %v242 = vadd.f32 %v53, %v241
  %v243 = vpop.f32.mrb[0].mxu0
  %v244 = vadd.f32 %v53, %v243
  %245 = vmatprep.mubr.bf16.mxu0 0
  %246 = vmatmul.mubr.bf16.gmra.mrb[0].mxu0 %v185
  %v247 = vpop.f32.mrb[0].mxu0
  %v248 = vadd.f32 %v58, %v247
  %v249 = vpop.f32.mrb[0].mxu0
  %v250 = vadd.f32 %v58, %v249
  %v251 = vpop.f32.mrb[0].mxu0
  %v252 = vadd.f32 %v63, %v251
  %v253 = vpop.f32.mrb[0].mxu0
  %v254 = vadd.f32 %v63, %v253
  %255 = vmatprep.mubr.bf16.mxu0 0
  %256 = vmatmul.mubr.bf16.gmra.mrb[0].mxu0 %v188
  %v257 = vpop.f32.mrb[0].mxu0
  %v258 = vadd.f32 %v68, %v257
  %v259 = vpop.f32.mrb[0].mxu0
  %v260 = vadd.f32 %v68, %v259
  %v261 = vpop.f32.mrb[0].mxu0
  %v262 = vadd.f32 %v73, %v261
  %v263 = vpop.f32.mrb[0].mxu0
  %v264 = vadd.f32 %v73, %v263
  %265 = vdwg.mxu0
  %266 = vmatprep.subr.bf16.mxu0 %v147
  %267 = vmatpush1.bf16.msra.mxu0 %v146
  %268 = vmatprep.subr.bf16.mxu0 %v151
  %269 = vmatpush1.bf16.msra.mxu0 %v150
  %270 = vmatprep.subr.bf16.mxu0 %v155
  %271 = vmatpush1.bf16.msra.mxu0 %v154
  %272 = vmatprep.subr.bf16.mxu0 %v159
  %273 = vmatpush1.bf16.msra.mxu0 %v158
  %274 = vmatprep.subr.bf16.mxu0 %v201
  %275 = vmatpush1.bf16.msra.mxu0 %v198
  %276 = vmatprep.subr.bf16.mxu0 0
  %277 = vmatpush1.bf16.msra.mxu0 0
  %278 = vmatprep.subr.bf16.mxu0 0
  %279 = vmatpush1.bf16.msra.mxu0 0
  %280 = vmatprep.subr.bf16.mxu0 0
  %281 = vmatpush1.bf16.msra.mxu0 0
  %282 = vmatprep.subr.bf16.mxu0 0
  %283 = vmatpush1.bf16.msra.mxu0 0
  %284 = vmatprep.subr.bf16.mxu0 0
  %285 = vmatpush1.bf16.msra.mxu0 0
  %286 = vmatprep.subr.bf16.mxu0 0
  %287 = vmatpush1.bf16.msra.mxu0 0
  %288 = vmatprep.subr.bf16.mxu0 0
  %289 = vmatpush1.bf16.msra.mxu0 0
  %290 = vmatprep.subr.bf16.mxu0 0
  %291 = vmatpush1.bf16.msra.mxu0 0
  %292 = vmatprep.subr.bf16.mxu0 0
  %293 = vmatpush1.bf16.msra.mxu0 0
  %294 = vmatprep.subr.bf16.mxu0 0
  %295 = vmatpush1.bf16.msra.mxu0 0
  %296 = vmatprep.subr.bf16.mxu0 0
  %297 = vmatpush1.bf16.msra.mxu0 0
  %298 = vmatprep.mubr.bf16.mxu0 0
  %299 = vmatmul.mubr.bf16.gmra.mrb[0].mxu0 %v182
  %v300 = vpop.f32.mrb[0].mxu0
  %v301 = vadd.f32 %v48, %v300
  %v302 = vpop.f32.mrb[0].mxu0
  %v303 = vadd.f32 %v48, %v302
  %v304 = vpop.f32.mrb[0].mxu0
  %v305 = vadd.f32 %v53, %v304
  %v306 = vpop.f32.mrb[0].mxu0
  %v307 = vadd.f32 %v53, %v306
  %308 = vmatprep.mubr.bf16.mxu0 0
  %309 = vmatmul.mubr.bf16.gmra.mrb[0].mxu0 %v185
  %v310 = vpop.f32.mrb[0].mxu0
  %v311 = vadd.f32 %v58, %v310
  %v312 = vpop.f32.mrb[0].mxu0
  %v313 = vadd.f32 %v58, %v312
  %v314 = vpop.f32.mrb[0].mxu0
  %v315 = vadd.f32 %v63, %v314
  %v316 = vpop.f32.mrb[0].mxu0
  %v317 = vadd.f32 %v63, %v316
  %318 = vmatprep.mubr.bf16.mxu0 0
  %319 = vmatmul.mubr.bf16.gmra.mrb[0].mxu0 %v188
  %v320 = vpop.f32.mrb[0].mxu0
  %v321 = vadd.f32 %v68, %v320
  %v322 = vpop.f32.mrb[0].mxu0
  %v323 = vadd.f32 %v68, %v322
  %v324 = vpop.f32.mrb[0].mxu0
  %v325 = vadd.f32 %v73, %v324
  %v326 = vpop.f32.mrb[0].mxu0
  %v327 = vadd.f32 %v73, %v326
  %328 = vdwg.mxu0
  %v329 = vand.u32 2147483647, %v238
  %v330 = vand.u32 2147483647, %v240
  %v331 = vand.u32 2147483647, %v301
  %v332 = vand.u32 2147483647, %v303
  %v333 = vand.u32 2147483647, %v242
  %v334 = vand.u32 2147483647, %v244
  %v335 = vand.u32 2147483647, %v305
  %v336 = vand.u32 2147483647, %v307
  %v337 = vand.u32 2147483647, %v248
  %v338 = vand.u32 2147483647, %v250
  %v339 = vand.u32 2147483647, %v311
  %v340 = vand.u32 2147483647, %v313
  %v341 = vand.u32 2147483647, %v252
  %v342 = vand.u32 2147483647, %v254
  %v343 = vand.u32 2147483647, %v315
  %v344 = vand.u32 2147483647, %v317
  %v345 = vand.u32 2147483647, %v258
  %v346 = vand.u32 2147483647, %v260
  %v347 = vand.u32 2147483647, %v321
  %v348 = vand.u32 2147483647, %v323
  %v349 = vand.u32 2147483647, %v262
  %v350 = vand.u32 2147483647, %v264
  %v351 = vand.u32 2147483647, %v325
  %v352 = vand.u32 2147483647, %v327
  %v353 = vadd.f32 %v329, %v333
  %v354 = vadd.f32 %v353, %v337
  %v355 = vadd.f32 %v354, %v341
  %v356 = vadd.f32 %v355, %v345
  %v357 = vadd.f32 %v356, %v349
  %v358 = vrot.slane %v357, 4
  %v359 = vadd.f32 %v357, %v358
  %v360 = vrot.slane %v359, 2
  %v361 = vadd.f32 %v359, %v360
  %v362 = vrot.slane %v361, 1
  %v363 = vadd.f32 %v361, %v362
  %v364 = vadd.f32 %v330, %v334
  %v365 = vadd.f32 %v364, %v338
  %v366 = vadd.f32 %v365, %v342
  %v367 = vadd.f32 %v366, %v346
  %v368 = vadd.f32 %v367, %v350
  %v369 = vrot.slane %v368, 4
  %v370 = vadd.f32 %v368, %v369
  %v371 = vrot.slane %v370, 2
  %v372 = vadd.f32 %v370, %v371
  %v373 = vrot.slane %v372, 1
  %v374 = vadd.f32 %v372, %v373
  %v375 = vadd.f32 %v331, %v335
  %v376 = vadd.f32 %v375, %v339
  %v377 = vadd.f32 %v376, %v343
  %v378 = vadd.f32 %v377, %v347
  %v379 = vadd.f32 %v378, %v351
  %v380 = vrot.slane %v379, 4
  %v381 = vadd.f32 %v379, %v380
  %v382 = vrot.slane %v381, 2
  %v383 = vadd.f32 %v381, %v382
  %v384 = vrot.slane %v383, 1
  %v385 = vadd.f32 %v383, %v384
  %v386 = vadd.f32 %v332, %v336
  %v387 = vadd.f32 %v386, %v340
  %v388 = vadd.f32 %v387, %v344
  %v389 = vadd.f32 %v388, %v348
  %v390 = vadd.f32 %v389, %v352
  %v391 = vrot.slane %v390, 4
  %v392 = vadd.f32 %v390, %v391
  %v393 = vrot.slane %v392, 2
  %v394 = vadd.f32 %v392, %v393
  %v395 = vrot.slane %v394, 1
  %v396 = vadd.f32 %v394, %v395
  %v397 = vadd.f32 %v363, 1e-06
  %v398 = vadd.f32 %v374, 1e-06
  %v399 = vadd.f32 %v385, 1e-06
  %v400 = vadd.f32 %v396, 1e-06
  %v401 = vrcp.pop %v397
  %v402 = vrcp.pop %v398
  %v403 = vrcp.pop %v399
  %v404 = vrcp.pop %v400
  %v405 = vmul.f32 %v238, %v401
  %v406 = vmul.f32 %v240, %v402
  %v407 = vmul.f32 %v301, %v403
  %v408 = vmul.f32 %v303, %v404
  %v409 = vmul.f32 %v242, %v401
  %v410 = vmul.f32 %v244, %v402
  %v411 = vmul.f32 %v305, %v403
  %v412 = vmul.f32 %v307, %v404
  %v413 = vmul.f32 %v248, %v401
  %v414 = vmul.f32 %v250, %v402
  %v415 = vmul.f32 %v311, %v403
  %v416 = vmul.f32 %v313, %v404
  %v417 = vmul.f32 %v252, %v401
  %v418 = vmul.f32 %v254, %v402
  %v419 = vmul.f32 %v315, %v403
  %v420 = vmul.f32 %v317, %v404
  %v421 = vmul.f32 %v258, %v401
  %v422 = vmul.f32 %v260, %v402
  %v423 = vmul.f32 %v321, %v403
  %v424 = vmul.f32 %v323, %v404
  %v425 = vmul.f32 %v262, %v401
  %v426 = vmul.f32 %v264, %v402
  %v427 = vmul.f32 %v325, %v403
  %v428 = vmul.f32 %v327, %v404
  %v429 = vadd.f32 %v405, %v409
  %v430 = vadd.f32 %v429, %v413
  %v431 = vadd.f32 %v430, %v417
  %v432 = vadd.f32 %v431, %v421
  %v433 = vadd.f32 %v432, %v425
  %v434 = vrot.slane %v433, 4
  %v435 = vadd.f32 %v433, %v434
  %v436 = vrot.slane %v435, 2
  %v437 = vadd.f32 %v435, %v436
  %v438 = vrot.slane %v437, 1
  %v439 = vadd.f32 %v437, %v438
  %v440 = vadd.f32 %v406, %v410
  %v441 = vadd.f32 %v440, %v414
  %v442 = vadd.f32 %v441, %v418
  %v443 = vadd.f32 %v442, %v422
  %v444 = vadd.f32 %v443, %v426
  %v445 = vrot.slane %v444, 4
  %v446 = vadd.f32 %v444, %v445
  %v447 = vrot.slane %v446, 2
  %v448 = vadd.f32 %v446, %v447
  %v449 = vrot.slane %v448, 1
  %v450 = vadd.f32 %v448, %v449
  %v451 = vadd.f32 %v407, %v411
  %v452 = vadd.f32 %v451, %v415
  %v453 = vadd.f32 %v452, %v419
  %v454 = vadd.f32 %v453, %v423
  %v455 = vadd.f32 %v454, %v427
  %v456 = vrot.slane %v455, 4
  %v457 = vadd.f32 %v455, %v456
  %v458 = vrot.slane %v457, 2
  %v459 = vadd.f32 %v457, %v458
  %v460 = vrot.slane %v459, 1
  %v461 = vadd.f32 %v459, %v460
  %v462 = vadd.f32 %v408, %v412
  %v463 = vadd.f32 %v462, %v416
  %v464 = vadd.f32 %v463, %v420
  %v465 = vadd.f32 %v464, %v424
  %v466 = vadd.f32 %v465, %v428
  %v467 = vrot.slane %v466, 4
  %v468 = vadd.f32 %v466, %v467
  %v469 = vrot.slane %v468, 2
  %v470 = vadd.f32 %v468, %v469
  %v471 = vrot.slane %v470, 1
  %v472 = vadd.f32 %v470, %v471
  %v473 = vsub.f32 1.0, %v439
  %v474 = vsub.f32 1.0, %v450
  %v475 = vsub.f32 1.0, %v461
  %v476 = vsub.f32 1.0, %v472
  %vm489 = vcmask 1040384
  %v490 = vrot.slane %v417, 7
  %v491 = vrot.slane %v418, 7
  %v492 = vrot.slane %v419, 7
  %v493 = vrot.slane %v420, 7
  %v494 = vrot.slane %v421, 7
  %v495 = vsel %vm489, %v490, %v494
  %v496 = vrot.slane %v422, 7
  %v497 = vsel %vm489, %v491, %v496
  %v498 = vrot.slane %v423, 7
  %v499 = vsel %vm489, %v492, %v498
  %v500 = vrot.slane %v424, 7
  %v501 = vsel %vm489, %v493, %v500
  %v502 = vrot.slane %v425, 7
  %v503 = vsel %vm489, %v494, %v502
  %v504 = vrot.slane %v426, 7
  %v505 = vsel %vm489, %v496, %v504
  %v506 = vrot.slane %v427, 7
  %v507 = vsel %vm489, %v498, %v506
  %v508 = vrot.slane %v428, 7
  %v509 = vsel %vm489, %v500, %v508
  %v526 = vsel %vm489, %v473, %v490
  %v527 = vsel %vm489, %v474, %v491
  %v528 = vsel %vm489, %v475, %v492
  %v529 = vsel %vm489, %v476, %v493
  %v530 = vpack.c.bf16 %v409, %v405
  %v531 = vpack.c.bf16 %v410, %v406
  %v532 = vpack.c.bf16 %v411, %v407
  %v533 = vpack.c.bf16 %v412, %v408
  %v534 = vpack.c.bf16 %v526, %v413
  %v535 = vpack.c.bf16 %v527, %v414
  %v536 = vpack.c.bf16 %v528, %v415
  %v537 = vpack.c.bf16 %v529, %v416
  %v538 = vpack.c.bf16 %v503, %v495
  %v539 = vpack.c.bf16 %v505, %v497
  %v540 = vpack.c.bf16 %v507, %v499
  %v541 = vpack.c.bf16 %v509, %v501
  %v542 = vpack.c.bf16 %v502, %v502
  %v543 = vpack.c.bf16 %v504, %v504
  %v544 = vpack.c.bf16 %v506, %v506
  %v545 = vpack.c.bf16 %v508, %v508
  %v562 = vunpack.c.l.b16 %v530
  %v563 = vunpack.c.l.b16 %v531
  %v564 = vunpack.c.l.b16 %v532
  %v565 = vunpack.c.l.b16 %v533
  %v566 = vunpack.c.h.b16 %v530
  %v567 = vunpack.c.h.b16 %v531
  %v568 = vunpack.c.h.b16 %v532
  %v569 = vunpack.c.h.b16 %v533
  %v570 = vunpack.c.l.b16 %v534
  %v571 = vunpack.c.l.b16 %v535
  %v572 = vunpack.c.l.b16 %v536
  %v573 = vunpack.c.l.b16 %v537
  %v574 = vunpack.c.h.b16 %v534
  %v575 = vunpack.c.h.b16 %v535
  %v576 = vunpack.c.h.b16 %v536
  %v577 = vunpack.c.h.b16 %v537
  %v578 = vunpack.c.l.b16 %v538
  %v579 = vunpack.c.l.b16 %v539
  %v580 = vunpack.c.l.b16 %v540
  %v581 = vunpack.c.l.b16 %v541
  %v582 = vunpack.c.h.b16 %v538
  %v583 = vunpack.c.h.b16 %v539
  %v584 = vunpack.c.h.b16 %v540
  %v585 = vunpack.c.h.b16 %v541
  %v586 = vunpack.c.l.b16 %v542
  %v587 = vunpack.c.l.b16 %v543
  %v588 = vunpack.c.l.b16 %v544
  %v589 = vunpack.c.l.b16 %v545
  %v590 = vpack.c.b16 %v563, %v562
  %v591 = vpack.c.b16 %v565, %v564
  %v592 = vpack.c.b16 %v567, %v566
  %v593 = vpack.c.b16 %v569, %v568
  %v594 = vpack.c.b16 %v571, %v570
  %v595 = vpack.c.b16 %v573, %v572
  %v596 = vpack.c.b16 %v575, %v574
  %v597 = vpack.c.b16 %v577, %v576
  %v598 = vpack.c.b16 %v579, %v578
  %v599 = vpack.c.b16 %v581, %v580
  %v600 = vpack.c.b16 %v583, %v582
  %v601 = vpack.c.b16 %v585, %v584
  %v602 = vpack.c.b16 %v587, %v586
  %v603 = vpack.c.b16 %v589, %v588
  %618 = vst [vmem:[%s3] sm:$0xff] %v590
  %619 = vst [vmem:[%s3 + $0x8] sm:$0xff] %v591
  %620 = vst [vmem:[%s3 + $0x10] sm:$0xff] %v592
  %621 = vst [vmem:[%s3 + $0x18] sm:$0xff] %v593
  %622 = vst [vmem:[%s3 + $0x20] sm:$0xff] %v594
  %623 = vst [vmem:[%s3 + $0x28] sm:$0xff] %v595
  %624 = vst [vmem:[%s3 + $0x30] sm:$0xff] %v596
  %625 = vst [vmem:[%s3 + $0x38] sm:$0xff] %v597
  %626 = vst [vmem:[%s3 + $0x40] sm:$0xff] %v598
  %627 = vst [vmem:[%s3 + $0x48] sm:$0xff] %v599
  %628 = vst [vmem:[%s3 + $0x50] sm:$0xff] %v600
  %629 = vst [vmem:[%s3 + $0x58] sm:$0xff] %v601
  %vm630 = vcmask 1040384
  %vm631 = vsmask.f32 256
  %vm632 = vmand %vm630, %vm631
  %vm633 = vcmask 1044484
  %vm634 = vsmask.f32 4352
  %vm635 = vmand %vm633, %vm634
  %vm636 = vmor %vm635, %vm632
  %v637 = vld [vmem:[%s3 + $0x60] sm:$0x11]
  %v638 = vsel %vm636, %v602, %v637
  %639 = vst [vmem:[%s3 + $0x60] sm:$0x11] %v638
  %v640 = vld [vmem:[%s3 + $0x68] sm:$0x11]
  %v641 = vsel %vm636, %v603, %v640
  %642 = vst [vmem:[%s3 + $0x68] sm:$0x11] %v641
  // Predicated region
  $region14: #{cspn_forward.17} parent=0 // pred_check
    _
  $region15: #{cspn_forward.17} parent=0 // pred_check_branch
    %644 = sbr.rel (0) target = $region17
  $region16: #{cspn_forward.17} parent=0 // pred_region
    _
  $region17: #{cspn_forward.17} parent=0 // pred_fallthru
    _
  // Predicated region
  $region18: #{cspn_forward.17} parent=0 // pred_check
    _
  $region19: #{cspn_forward.17} parent=0 // pred_check_branch
    %646 = sbr.rel (0) target = $region21
  $region20: #{cspn_forward.17} parent=0 // pred_region
    _
  $region21: #{cspn_forward.17} parent=0 // pred_fallthru
    _

// kernel: cspn_forward.16
$region0: #{cspn_forward.16}
  #allocation0 [shape = 'u32[]', space=smem, size = 0x4, offset = 0x4, fixed_abs, tag = 'smem constant byte address 0x4 - core index']
  #allocation1 [shape = 'u32[144,128]{1,0:T(1,128)}', space=vmem, size = 0x12000, scoped, tag = 'internal scratch']
  %s0 = inlined_call_operand.vmem [shape: bf16[72,512], index: 0, kind: input, shape index: {}]
  %s1 = inlined_call_operand.vmem [shape: bf16[24,72], index: 1, kind: input, shape index: {}]
  %s2 = inlined_call_operand.vmem [shape: f32[24,1], index: 2, kind: input, shape index: {}]
  %s3 = inlined_call_operand.vmem [shape: bf16[25,512], index: 3, kind: output, shape index: {}]
  %s4 = sld [smem:[#allocation0]]
  $region22: #{cspn_forward.16} parent=0
    _
  %s6 = ssub.s32 1, %s4
  %s7 = scalar_select 0, %s6, %s4
  // Predicated region
  $region2: #{cspn_forward.16} parent=0 // pred_check
    _
  $region3: #{cspn_forward.16} parent=0 // pred_check_branch
    %9 = sbr.rel (0) target = $region5
  $region4: #{cspn_forward.16} parent=0 // pred_region
    _
  $region5: #{cspn_forward.16} parent=0 // pred_fallthru
    _
  // Predicated region
  $region6: #{cspn_forward.16} parent=0 // pred_check
    _
  $region7: #{cspn_forward.16} parent=0 // pred_check_branch
    %11 = sbr.rel (0) target = $region9
  $region8: #{cspn_forward.16} parent=0 // pred_region
    _
  $region9: #{cspn_forward.16} parent=0 // pred_fallthru
    _
  // Predicated region
  $region10: #{cspn_forward.16} parent=0 // pred_check
    _
  $region11: #{cspn_forward.16} parent=0 // pred_check_branch
    %13 = sbr.rel (0) target = $region13
  $region12: #{cspn_forward.16} parent=0 // pred_region
    _
  $region13: #{cspn_forward.16} parent=0 // pred_fallthru
    _
  %v15 = vld [vmem:[%s1] sm:$0xf]
  %v16 = vld [vmem:[%s1 + $0x4] sm:$0xf]
  %v17 = vld [vmem:[%s1 + $0x8] sm:$0xf]
  %v18 = vld [vmem:[%s0] sm:$0xff]
  %v19 = vld [vmem:[%s0 + $0x8] sm:$0xff]
  %v20 = vld [vmem:[%s0 + $0x10] sm:$0xff]
  %v21 = vld [vmem:[%s0 + $0x18] sm:$0xff]
  %v22 = vld [vmem:[%s0 + $0x20] sm:$0xff]
  %v23 = vld [vmem:[%s0 + $0x28] sm:$0xff]
  %v24 = vld [vmem:[%s0 + $0x30] sm:$0xff]
  %v25 = vld [vmem:[%s0 + $0x38] sm:$0xff]
  %v26 = vld [vmem:[%s0 + $0x40] sm:$0xff]
  %v27 = vld [vmem:[%s0 + $0x48] sm:$0xff]
  %v28 = vld [vmem:[%s0 + $0x50] sm:$0xff]
  %v29 = vld [vmem:[%s0 + $0x58] sm:$0xff]
  %v30 = vld [vmem:[%s0 + $0x60] sm:$0xff]
  %v31 = vld [vmem:[%s0 + $0x68] sm:$0xff]
  %v32 = vld [vmem:[%s0 + $0x70] sm:$0xff]
  %v33 = vld [vmem:[%s0 + $0x78] sm:$0xff]
  %v34 = vld [vmem:[%s0 + $0x80] sm:$0xff]
  %v35 = vld [vmem:[%s0 + $0x88] sm:$0xff]
  %v36 = vld [vmem:[%s2] sm:$0xff]
  %v37 = vld [vmem:[%s2 + $0x8] sm:$0xff]
  %v38 = vld [vmem:[%s2 + $0x10] sm:$0xff]
  %40 = vset.pattern.permute.xlu0 0
  %41 = vperm.xlu0 %40, %v36
  %v42 = vpop.permute.xlu0 %41
  %45 = vset.pattern.permute.xlu0 0
  %46 = vperm.xlu0 %45, %v37
  %v47 = vpop.permute.xlu0 %46
  %50 = vset.pattern.permute.xlu0 0
  %51 = vperm.xlu0 %50, %v38
  %v52 = vpop.permute.xlu0 %51
  %v57 = vunpack.c.l.b16 %v15
  %v58 = vunpack.c.l.b16 %v16
  %v59 = vunpack.c.l.b16 %v17
  %v60 = vpack.c.b16 %v58, %v57
  %v61 = vpack.c.b16 %v59, %v59
  %v80 = vunpack.c.l.b16 %v18
  %v81 = vunpack.c.h.b16 %v18
  %v82 = vunpack.c.l.b16 %v19
  %v83 = vunpack.c.h.b16 %v19
  %v84 = vunpack.c.l.b16 %v20
  %v85 = vunpack.c.h.b16 %v20
  %v86 = vunpack.c.l.b16 %v21
  %v87 = vunpack.c.h.b16 %v21
  %v88 = vunpack.c.l.b16 %v22
  %v89 = vunpack.c.h.b16 %v22
  %v90 = vunpack.c.l.b16 %v23
  %v91 = vunpack.c.h.b16 %v23
  %v92 = vunpack.c.l.b16 %v24
  %v93 = vunpack.c.h.b16 %v24
  %v94 = vunpack.c.l.b16 %v25
  %v95 = vunpack.c.h.b16 %v25
  %v96 = vunpack.c.l.b16 %v26
  %v97 = vunpack.c.h.b16 %v26
  %v98 = vunpack.c.l.b16 %v27
  %v99 = vunpack.c.h.b16 %v27
  %v100 = vunpack.c.l.b16 %v28
  %v101 = vunpack.c.h.b16 %v28
  %v102 = vunpack.c.l.b16 %v29
  %v103 = vunpack.c.h.b16 %v29
  %v104 = vunpack.c.l.b16 %v30
  %v105 = vunpack.c.h.b16 %v30
  %v106 = vunpack.c.l.b16 %v31
  %v107 = vunpack.c.h.b16 %v31
  %v108 = vunpack.c.l.b16 %v32
  %v109 = vunpack.c.h.b16 %v32
  %v110 = vunpack.c.l.b16 %v33
  %v111 = vunpack.c.h.b16 %v33
  %v112 = vunpack.c.l.b16 %v34
  %v113 = vunpack.c.h.b16 %v34
  %v114 = vunpack.c.l.b16 %v35
  %v115 = vunpack.c.h.b16 %v35
  %v116 = vpack.c.b16 %v84, %v80
  %v117 = vpack.c.b16 %v85, %v81
  %v118 = vpack.c.b16 %v86, %v82
  %v119 = vpack.c.b16 %v87, %v83
  %v120 = vpack.c.b16 %v92, %v88
  %v121 = vpack.c.b16 %v93, %v89
  %v122 = vpack.c.b16 %v94, %v90
  %v123 = vpack.c.b16 %v95, %v91
  %v124 = vpack.c.b16 %v100, %v96
  %v125 = vpack.c.b16 %v101, %v97
  %v126 = vpack.c.b16 %v102, %v98
  %v127 = vpack.c.b16 %v103, %v99
  %v128 = vpack.c.b16 %v108, %v104
  %v129 = vpack.c.b16 %v109, %v105
  %v130 = vpack.c.b16 %v110, %v106
  %v131 = vpack.c.b16 %v111, %v107
  %v132 = vpack.c.b16 %v112, %v112
  %v133 = vpack.c.b16 %v113, %v113
  %v134 = vpack.c.b16 %v114, %v114
  %v135 = vpack.c.b16 %v115, %v115
  %vm152 = vcmask 588800
  %v154 = vsel %vm152, %v60, 0
  %v157 = vsel %vm152, %v61, 0
  %vm159 = vcmask 1043456
  %v161 = vsel %vm159, %v132, 0
  %v164 = vsel %vm159, %v133, 0
  %v167 = vsel %vm159, %v134, 0
  %v170 = vsel %vm159, %v135, 0
  %172 = vmatprep.subr.bf16.mxu0 %v117
  %173 = vmatpush1.bf16.msra.mxu0 %v116
  %174 = vmatprep.subr.bf16.mxu0 %v121
  %175 = vmatpush1.bf16.msra.mxu0 %v120
  %176 = vmatprep.subr.bf16.mxu0 %v125
  %177 = vmatpush1.bf16.msra.mxu0 %v124
  %178 = vmatprep.subr.bf16.mxu0 %v129
  %179 = vmatpush1.bf16.msra.mxu0 %v128
  %180 = vmatprep.subr.bf16.mxu0 %v164
  %181 = vmatpush1.bf16.msra.mxu0 %v161
  %182 = vmatprep.subr.bf16.mxu0 0
  %183 = vmatpush1.bf16.msra.mxu0 0
  %184 = vmatprep.subr.bf16.mxu0 0
  %185 = vmatpush1.bf16.msra.mxu0 0
  %186 = vmatprep.subr.bf16.mxu0 0
  %187 = vmatpush1.bf16.msra.mxu0 0
  %188 = vmatprep.subr.bf16.mxu0 0
  %189 = vmatpush1.bf16.msra.mxu0 0
  %190 = vmatprep.subr.bf16.mxu0 0
  %191 = vmatpush1.bf16.msra.mxu0 0
  %192 = vmatprep.subr.bf16.mxu0 0
  %193 = vmatpush1.bf16.msra.mxu0 0
  %194 = vmatprep.subr.bf16.mxu0 0
  %195 = vmatpush1.bf16.msra.mxu0 0
  %196 = vmatprep.subr.bf16.mxu0 0
  %197 = vmatpush1.bf16.msra.mxu0 0
  %198 = vmatprep.subr.bf16.mxu0 0
  %199 = vmatpush1.bf16.msra.mxu0 0
  %200 = vmatprep.subr.bf16.mxu0 0
  %201 = vmatpush1.bf16.msra.mxu0 0
  %202 = vmatprep.subr.bf16.mxu0 0
  %203 = vmatpush1.bf16.msra.mxu0 0
  %204 = vmatprep.mubr.bf16.mxu0 0
  %205 = vmatmul.mubr.bf16.gmra.mrb[0].mxu0 %v154
  %v206 = vpop.f32.mrb[0].mxu0
  %v207 = vadd.f32 %v42, %v206
  %v208 = vpop.f32.mrb[0].mxu0
  %v209 = vadd.f32 %v42, %v208
  %v210 = vpop.f32.mrb[0].mxu0
  %v211 = vadd.f32 %v47, %v210
  %v212 = vpop.f32.mrb[0].mxu0
  %v213 = vadd.f32 %v47, %v212
  %214 = vmatprep.mubr.bf16.mxu0 0
  %215 = vmatmul.mubr.bf16.gmra.mrb[0].mxu0 %v157
  %v216 = vpop.f32.mrb[0].mxu0
  %v217 = vadd.f32 %v52, %v216
  %v218 = vpop.f32.mrb[0].mxu0
  %v219 = vadd.f32 %v52, %v218
  %v220 = vpop.f32.mrb[0].mxu0
  %v221 = vpop.f32.mrb[0].mxu0
  %222 = vdwg.mxu0
  %223 = vmatprep.subr.bf16.mxu0 %v119
  %224 = vmatpush1.bf16.msra.mxu0 %v118
  %225 = vmatprep.subr.bf16.mxu0 %v123
  %226 = vmatpush1.bf16.msra.mxu0 %v122
  %227 = vmatprep.subr.bf16.mxu0 %v127
  %228 = vmatpush1.bf16.msra.mxu0 %v126
  %229 = vmatprep.subr.bf16.mxu0 %v131
  %230 = vmatpush1.bf16.msra.mxu0 %v130
  %231 = vmatprep.subr.bf16.mxu0 %v170
  %232 = vmatpush1.bf16.msra.mxu0 %v167
  %233 = vmatprep.subr.bf16.mxu0 0
  %234 = vmatpush1.bf16.msra.mxu0 0
  %235 = vmatprep.subr.bf16.mxu0 0
  %236 = vmatpush1.bf16.msra.mxu0 0
  %237 = vmatprep.subr.bf16.mxu0 0
  %238 = vmatpush1.bf16.msra.mxu0 0
  %239 = vmatprep.subr.bf16.mxu0 0
  %240 = vmatpush1.bf16.msra.mxu0 0
  %241 = vmatprep.subr.bf16.mxu0 0
  %242 = vmatpush1.bf16.msra.mxu0 0
  %243 = vmatprep.subr.bf16.mxu0 0
  %244 = vmatpush1.bf16.msra.mxu0 0
  %245 = vmatprep.subr.bf16.mxu0 0
  %246 = vmatpush1.bf16.msra.mxu0 0
  %247 = vmatprep.subr.bf16.mxu0 0
  %248 = vmatpush1.bf16.msra.mxu0 0
  %249 = vmatprep.subr.bf16.mxu0 0
  %250 = vmatpush1.bf16.msra.mxu0 0
  %251 = vmatprep.subr.bf16.mxu0 0
  %252 = vmatpush1.bf16.msra.mxu0 0
  %253 = vmatprep.subr.bf16.mxu0 0
  %254 = vmatpush1.bf16.msra.mxu0 0
  %255 = vmatprep.mubr.bf16.mxu0 0
  %256 = vmatmul.mubr.bf16.gmra.mrb[0].mxu0 %v154
  %v257 = vpop.f32.mrb[0].mxu0
  %v258 = vadd.f32 %v42, %v257
  %v259 = vpop.f32.mrb[0].mxu0
  %v260 = vadd.f32 %v42, %v259
  %v261 = vpop.f32.mrb[0].mxu0
  %v262 = vadd.f32 %v47, %v261
  %v263 = vpop.f32.mrb[0].mxu0
  %v264 = vadd.f32 %v47, %v263
  %265 = vmatprep.mubr.bf16.mxu0 0
  %266 = vmatmul.mubr.bf16.gmra.mrb[0].mxu0 %v157
  %v267 = vpop.f32.mrb[0].mxu0
  %v268 = vadd.f32 %v52, %v267
  %v269 = vpop.f32.mrb[0].mxu0
  %v270 = vadd.f32 %v52, %v269
  %v271 = vpop.f32.mrb[0].mxu0
  %v272 = vpop.f32.mrb[0].mxu0
  %273 = vdwg.mxu0
  %v274 = vand.u32 2147483647, %v207
  %v275 = vand.u32 2147483647, %v209
  %v276 = vand.u32 2147483647, %v258
  %v277 = vand.u32 2147483647, %v260
  %v278 = vand.u32 2147483647, %v211
  %v279 = vand.u32 2147483647, %v213
  %v280 = vand.u32 2147483647, %v262
  %v281 = vand.u32 2147483647, %v264
  %v282 = vand.u32 2147483647, %v217
  %v283 = vand.u32 2147483647, %v219
  %v284 = vand.u32 2147483647, %v268
  %v285 = vand.u32 2147483647, %v270
  %v286 = vadd.f32 %v274, %v278
  %v287 = vadd.f32 %v286, %v282
  %v288 = vrot.slane %v287, 4
  %v289 = vadd.f32 %v287, %v288
  %v290 = vrot.slane %v289, 2
  %v291 = vadd.f32 %v289, %v290
  %v292 = vrot.slane %v291, 1
  %v293 = vadd.f32 %v291, %v292
  %v294 = vadd.f32 %v275, %v279
  %v295 = vadd.f32 %v294, %v283
  %v296 = vrot.slane %v295, 4
  %v297 = vadd.f32 %v295, %v296
  %v298 = vrot.slane %v297, 2
  %v299 = vadd.f32 %v297, %v298
  %v300 = vrot.slane %v299, 1
  %v301 = vadd.f32 %v299, %v300
  %v302 = vadd.f32 %v276, %v280
  %v303 = vadd.f32 %v302, %v284
  %v304 = vrot.slane %v303, 4
  %v305 = vadd.f32 %v303, %v304
  %v306 = vrot.slane %v305, 2
  %v307 = vadd.f32 %v305, %v306
  %v308 = vrot.slane %v307, 1
  %v309 = vadd.f32 %v307, %v308
  %v310 = vadd.f32 %v277, %v281
  %v311 = vadd.f32 %v310, %v285
  %v312 = vrot.slane %v311, 4
  %v313 = vadd.f32 %v311, %v312
  %v314 = vrot.slane %v313, 2
  %v315 = vadd.f32 %v313, %v314
  %v316 = vrot.slane %v315, 1
  %v317 = vadd.f32 %v315, %v316
  %v318 = vadd.f32 %v293, 1e-06
  %v319 = vadd.f32 %v301, 1e-06
  %v320 = vadd.f32 %v309, 1e-06
  %v321 = vadd.f32 %v317, 1e-06
  %v322 = vrcp.pop %v318
  %v323 = vrcp.pop %v319
  %v324 = vrcp.pop %v320
  %v325 = vrcp.pop %v321
  %v326 = vmul.f32 %v207, %v322
  %v327 = vmul.f32 %v209, %v323
  %v328 = vmul.f32 %v258, %v324
  %v329 = vmul.f32 %v260, %v325
  %v330 = vmul.f32 %v211, %v322
  %v331 = vmul.f32 %v213, %v323
  %v332 = vmul.f32 %v262, %v324
  %v333 = vmul.f32 %v264, %v325
  %v334 = vmul.f32 %v217, %v322
  %v335 = vmul.f32 %v219, %v323
  %v336 = vmul.f32 %v268, %v324
  %v337 = vmul.f32 %v270, %v325
  %v338 = vadd.f32 %v326, %v330
  %v339 = vadd.f32 %v338, %v334
  %v340 = vrot.slane %v339, 4
  %v341 = vadd.f32 %v339, %v340
  %v342 = vrot.slane %v341, 2
  %v343 = vadd.f32 %v341, %v342
  %v344 = vrot.slane %v343, 1
  %v345 = vadd.f32 %v343, %v344
  %v346 = vadd.f32 %v327, %v331
  %v347 = vadd.f32 %v346, %v335
  %v348 = vrot.slane %v347, 4
  %v349 = vadd.f32 %v347, %v348
  %v350 = vrot.slane %v349, 2
  %v351 = vadd.f32 %v349, %v350
  %v352 = vrot.slane %v351, 1
  %v353 = vadd.f32 %v351, %v352
  %v354 = vadd.f32 %v328, %v332
  %v355 = vadd.f32 %v354, %v336
  %v356 = vrot.slane %v355, 4
  %v357 = vadd.f32 %v355, %v356
  %v358 = vrot.slane %v357, 2
  %v359 = vadd.f32 %v357, %v358
  %v360 = vrot.slane %v359, 1
  %v361 = vadd.f32 %v359, %v360
  %v362 = vadd.f32 %v329, %v333
  %v363 = vadd.f32 %v362, %v337
  %v364 = vrot.slane %v363, 4
  %v365 = vadd.f32 %v363, %v364
  %v366 = vrot.slane %v365, 2
  %v367 = vadd.f32 %v365, %v366
  %v368 = vrot.slane %v367, 1
  %v369 = vadd.f32 %v367, %v368
  %v370 = vsub.f32 1.0, %v345
  %v371 = vsub.f32 1.0, %v353
  %v372 = vsub.f32 1.0, %v361
  %v373 = vsub.f32 1.0, %v369
  %vm382 = vcmask 1040384
  %v383 = vrot.slane %v330, 7
  %v384 = vrot.slane %v331, 7
  %v385 = vrot.slane %v332, 7
  %v386 = vrot.slane %v333, 7
  %v387 = vrot.slane %v334, 7
  %v388 = vsel %vm382, %v383, %v387
  %v389 = vrot.slane %v335, 7
  %v390 = vsel %vm382, %v384, %v389
  %v391 = vrot.slane %v336, 7
  %v392 = vsel %vm382, %v385, %v391
  %v393 = vrot.slane %v337, 7
  %v394 = vsel %vm382, %v386, %v393
  %v407 = vsel %vm159, %v330, %v370
  %v408 = vsel %vm159, %v331, %v371
  %v409 = vsel %vm159, %v332, %v372
  %v410 = vsel %vm159, %v333, %v373
  %vm411 = vcmask 1044480
  %v412 = vsel %vm411, %v407, %v383
  %v413 = vsel %vm411, %v408, %v384
  %v414 = vsel %vm411, %v409, %v385
  %v415 = vsel %vm411, %v410, %v386
  %v416 = vpack.c.bf16 %v412, %v326
  %v417 = vpack.c.bf16 %v413, %v327
  %v418 = vpack.c.bf16 %v414, %v328
  %v419 = vpack.c.bf16 %v415, %v329
  %v420 = vpack.c.bf16 %v387, %v388
  %v421 = vpack.c.bf16 %v389, %v390
  %v422 = vpack.c.bf16 %v391, %v392
  %v423 = vpack.c.bf16 %v393, %v394
  %v432 = vunpack.c.l.b16 %v416
  %v433 = vunpack.c.l.b16 %v417
  %v434 = vunpack.c.l.b16 %v418
  %v435 = vunpack.c.l.b16 %v419
  %v436 = vunpack.c.h.b16 %v416
  %v437 = vunpack.c.h.b16 %v417
  %v438 = vunpack.c.h.b16 %v418
  %v439 = vunpack.c.h.b16 %v419
  %v440 = vunpack.c.l.b16 %v420
  %v441 = vunpack.c.l.b16 %v421
  %v442 = vunpack.c.l.b16 %v422
  %v443 = vunpack.c.l.b16 %v423
  %v444 = vunpack.c.h.b16 %v420
  %v445 = vunpack.c.h.b16 %v421
  %v446 = vunpack.c.h.b16 %v422
  %v447 = vunpack.c.h.b16 %v423
  %v448 = vpack.c.b16 %v433, %v432
  %v449 = vpack.c.b16 %v435, %v434
  %v450 = vpack.c.b16 %v437, %v436
  %v451 = vpack.c.b16 %v439, %v438
  %v452 = vpack.c.b16 %v441, %v440
  %v453 = vpack.c.b16 %v443, %v442
  %v454 = vpack.c.b16 %v445, %v444
  %v455 = vpack.c.b16 %v447, %v446
  %464 = vst [vmem:[%s3] sm:$0xff] %v448
  %465 = vst [vmem:[%s3 + $0x8] sm:$0xff] %v449
  %466 = vst [vmem:[%s3 + $0x10] sm:$0xff] %v450
  %467 = vst [vmem:[%s3 + $0x18] sm:$0xff] %v451
  %468 = vst [vmem:[%s3 + $0x20] sm:$0xff] %v452
  %469 = vst [vmem:[%s3 + $0x28] sm:$0xff] %v453
  %vm470 = vcmask 1040384
  %vm471 = vsmask.f32 256
  %vm472 = vmand %vm470, %vm471
  %vm473 = vcmask 1044484
  %vm474 = vsmask.f32 4352
  %vm475 = vmand %vm473, %vm474
  %vm476 = vmor %vm475, %vm472
  %v477 = vld [vmem:[%s3 + $0x30] sm:$0x11]
  %v478 = vsel %vm476, %v454, %v477
  %479 = vst [vmem:[%s3 + $0x30] sm:$0x11] %v478
  %v480 = vld [vmem:[%s3 + $0x38] sm:$0x11]
  %v481 = vsel %vm476, %v455, %v480
  %482 = vst [vmem:[%s3 + $0x38] sm:$0x11] %v481
  // Predicated region
  $region14: #{cspn_forward.16} parent=0 // pred_check
    _
  $region15: #{cspn_forward.16} parent=0 // pred_check_branch
    %484 = sbr.rel (0) target = $region17
  $region16: #{cspn_forward.16} parent=0 // pred_region
    _
  $region17: #{cspn_forward.16} parent=0 // pred_fallthru
    _
  // Predicated region
  $region18: #{cspn_forward.16} parent=0 // pred_check
    _
  $region19: #{cspn_forward.16} parent=0 // pred_check_branch
    %486 = sbr.rel (0) target = $region21
  $region20: #{cspn_forward.16} parent=0 // pred_region
    _
  $region21: #{cspn_forward.16} parent=0 // pred_fallthru
    _

// kernel: cspn_forward.15
$region0: #{cspn_forward.15}
  #allocation0 [shape = 'u32[]', space=smem, size = 0x4, offset = 0x4, fixed_abs, tag = 'smem constant byte address 0x4 - core index']
  #allocation1 [shape = 'u32[144,128]{1,0:T(1,128)}', space=vmem, size = 0x12000, scoped, tag = 'internal scratch']
  %s0 = inlined_call_operand.vmem [shape: bf16[72,512], index: 0, kind: input, shape index: {}]
  %s1 = inlined_call_operand.vmem [shape: bf16[8,72], index: 1, kind: input, shape index: {}]
  %s2 = inlined_call_operand.vmem [shape: f32[8,1], index: 2, kind: input, shape index: {}]
  %s3 = inlined_call_operand.vmem [shape: bf16[9,512], index: 3, kind: output, shape index: {}]
  %s4 = sld [smem:[#allocation0]]
  $region22: #{cspn_forward.15} parent=0
    _
  %s6 = ssub.s32 1, %s4
  %s7 = scalar_select 0, %s6, %s4
  // Predicated region
  $region2: #{cspn_forward.15} parent=0 // pred_check
    _
  $region3: #{cspn_forward.15} parent=0 // pred_check_branch
    %9 = sbr.rel (0) target = $region5
  $region4: #{cspn_forward.15} parent=0 // pred_region
    _
  $region5: #{cspn_forward.15} parent=0 // pred_fallthru
    _
  // Predicated region
  $region6: #{cspn_forward.15} parent=0 // pred_check
    _
  $region7: #{cspn_forward.15} parent=0 // pred_check_branch
    %11 = sbr.rel (0) target = $region9
  $region8: #{cspn_forward.15} parent=0 // pred_region
    _
  $region9: #{cspn_forward.15} parent=0 // pred_fallthru
    _
  // Predicated region
  $region10: #{cspn_forward.15} parent=0 // pred_check
    _
  $region11: #{cspn_forward.15} parent=0 // pred_check_branch
    %13 = sbr.rel (0) target = $region13
  $region12: #{cspn_forward.15} parent=0 // pred_region
    _
  $region13: #{cspn_forward.15} parent=0 // pred_fallthru
    _
  %v15 = vld [vmem:[%s1] sm:$0xf]
  %v16 = vld [vmem:[%s0] sm:$0xff]
  %v17 = vld [vmem:[%s0 + $0x8] sm:$0xff]
  %v18 = vld [vmem:[%s0 + $0x10] sm:$0xff]
  %v19 = vld [vmem:[%s0 + $0x18] sm:$0xff]
  %v20 = vld [vmem:[%s0 + $0x20] sm:$0xff]
  %v21 = vld [vmem:[%s0 + $0x28] sm:$0xff]
  %v22 = vld [vmem:[%s0 + $0x30] sm:$0xff]
  %v23 = vld [vmem:[%s0 + $0x38] sm:$0xff]
  %v24 = vld [vmem:[%s0 + $0x40] sm:$0xff]
  %v25 = vld [vmem:[%s0 + $0x48] sm:$0xff]
  %v26 = vld [vmem:[%s0 + $0x50] sm:$0xff]
  %v27 = vld [vmem:[%s0 + $0x58] sm:$0xff]
  %v28 = vld [vmem:[%s0 + $0x60] sm:$0xff]
  %v29 = vld [vmem:[%s0 + $0x68] sm:$0xff]
  %v30 = vld [vmem:[%s0 + $0x70] sm:$0xff]
  %v31 = vld [vmem:[%s0 + $0x78] sm:$0xff]
  %v32 = vld [vmem:[%s0 + $0x80] sm:$0xff]
  %v33 = vld [vmem:[%s0 + $0x88] sm:$0xff]
  %v34 = vld [vmem:[%s2] sm:$0xff]
  %36 = vset.pattern.permute.xlu0 0
  %37 = vperm.xlu0 %36, %v34
  %v38 = vpop.permute.xlu0 %37
  %v58 = vunpack.c.l.b16 %v16
  %v59 = vunpack.c.h.b16 %v16
  %v60 = vunpack.c.l.b16 %v17
  %v61 = vunpack.c.h.b16 %v17
  %v62 = vunpack.c.l.b16 %v18
  %v63 = vunpack.c.h.b16 %v18
  %v64 = vunpack.c.l.b16 %v19
  %v65 = vunpack.c.h.b16 %v19
  %v66 = vunpack.c.l.b16 %v20
  %v67 = vunpack.c.h.b16 %v20
  %v68 = vunpack.c.l.b16 %v21
  %v69 = vunpack.c.h.b16 %v21
  %v70 = vunpack.c.l.b16 %v22
  %v71 = vunpack.c.h.b16 %v22
  %v72 = vunpack.c.l.b16 %v23
  %v73 = vunpack.c.h.b16 %v23
  %v74 = vunpack.c.l.b16 %v24
  %v75 = vunpack.c.h.b16 %v24
  %v76 = vunpack.c.l.b16 %v25
  %v77 = vunpack.c.h.b16 %v25
  %v78 = vunpack.c.l.b16 %v26
  %v79 = vunpack.c.h.b16 %v26
  %v80 = vunpack.c.l.b16 %v27
  %v81 = vunpack.c.h.b16 %v27
  %v82 = vunpack.c.l.b16 %v28
  %v83 = vunpack.c.h.b16 %v28
  %v84 = vunpack.c.l.b16 %v29
  %v85 = vunpack.c.h.b16 %v29
  %v86 = vunpack.c.l.b16 %v30
  %v87 = vunpack.c.h.b16 %v30
  %v88 = vunpack.c.l.b16 %v31
  %v89 = vunpack.c.h.b16 %v31
  %v90 = vunpack.c.l.b16 %v32
  %v91 = vunpack.c.h.b16 %v32
  %v92 = vunpack.c.l.b16 %v33
  %v93 = vunpack.c.h.b16 %v33
  %v94 = vpack.c.b16 %v62, %v58
  %v95 = vpack.c.b16 %v63, %v59
  %v96 = vpack.c.b16 %v64, %v60
  %v97 = vpack.c.b16 %v65, %v61
  %v98 = vpack.c.b16 %v70, %v66
  %v99 = vpack.c.b16 %v71, %v67
  %v100 = vpack.c.b16 %v72, %v68
  %v101 = vpack.c.b16 %v73, %v69
  %v102 = vpack.c.b16 %v78, %v74
  %v103 = vpack.c.b16 %v79, %v75
  %v104 = vpack.c.b16 %v80, %v76
  %v105 = vpack.c.b16 %v81, %v77
  %v106 = vpack.c.b16 %v86, %v82
  %v107 = vpack.c.b16 %v87, %v83
  %v108 = vpack.c.b16 %v88, %v84
  %v109 = vpack.c.b16 %v89, %v85
  %v110 = vpack.c.b16 %v90, %v90
  %v111 = vpack.c.b16 %v91, %v91
  %v112 = vpack.c.b16 %v92, %v92
  %v113 = vpack.c.b16 %v93, %v93
  %vm130 = vcmask 588800
  %v132 = vsel %vm130, %v15, 0
  %vm134 = vcmask 1043456
  %v136 = vsel %vm134, %v110, 0
  %v139 = vsel %vm134, %v111, 0
  %v142 = vsel %vm134, %v112, 0
  %v145 = vsel %vm134, %v113, 0
  %147 = vmatprep.subr.bf16.mxu0 %v95
  %148 = vmatpush1.bf16.msra.mxu0 %v94
  %149 = vmatprep.subr.bf16.mxu0 %v99
  %150 = vmatpush1.bf16.msra.mxu0 %v98
  %151 = vmatprep.subr.bf16.mxu0 %v103
  %152 = vmatpush1.bf16.msra.mxu0 %v102
  %153 = vmatprep.subr.bf16.mxu0 %v107
  %154 = vmatpush1.bf16.msra.mxu0 %v106
  %155 = vmatprep.subr.bf16.mxu0 %v139
  %156 = vmatpush1.bf16.msra.mxu0 %v136
  %157 = vmatprep.subr.bf16.mxu0 0
  %158 = vmatpush1.bf16.msra.mxu0 0
  %159 = vmatprep.subr.bf16.mxu0 0
  %160 = vmatpush1.bf16.msra.mxu0 0
  %161 = vmatprep.subr.bf16.mxu0 0
  %162 = vmatpush1.bf16.msra.mxu0 0
  %163 = vmatprep.subr.bf16.mxu0 0
  %164 = vmatpush1.bf16.msra.mxu0 0
  %165 = vmatprep.subr.bf16.mxu0 0
  %166 = vmatpush1.bf16.msra.mxu0 0
  %167 = vmatprep.subr.bf16.mxu0 0
  %168 = vmatpush1.bf16.msra.mxu0 0
  %169 = vmatprep.subr.bf16.mxu0 0
  %170 = vmatpush1.bf16.msra.mxu0 0
  %171 = vmatprep.subr.bf16.mxu0 0
  %172 = vmatpush1.bf16.msra.mxu0 0
  %173 = vmatprep.subr.bf16.mxu0 0
  %174 = vmatpush1.bf16.msra.mxu0 0
  %175 = vmatprep.subr.bf16.mxu0 0
  %176 = vmatpush1.bf16.msra.mxu0 0
  %177 = vmatprep.subr.bf16.mxu0 0
  %178 = vmatpush1.bf16.msra.mxu0 0
  %179 = vmatprep.mubr.bf16.mxu0 0
  %180 = vmatmul.mubr.bf16.gmra.mrb[0].mxu0 %v132
  %v181 = vpop.f32.mrb[0].mxu0
  %v182 = vadd.f32 %v38, %v181
  %v183 = vpop.f32.mrb[0].mxu0
  %v184 = vadd.f32 %v38, %v183
  %v185 = vpop.f32.mrb[0].mxu0
  %v186 = vpop.f32.mrb[0].mxu0
  %187 = vdwg.mxu0
  %188 = vmatprep.subr.bf16.mxu0 %v97
  %189 = vmatpush1.bf16.msra.mxu0 %v96
  %190 = vmatprep.subr.bf16.mxu0 %v101
  %191 = vmatpush1.bf16.msra.mxu0 %v100
  %192 = vmatprep.subr.bf16.mxu0 %v105
  %193 = vmatpush1.bf16.msra.mxu0 %v104
  %194 = vmatprep.subr.bf16.mxu0 %v109
  %195 = vmatpush1.bf16.msra.mxu0 %v108
  %196 = vmatprep.subr.bf16.mxu0 %v145
  %197 = vmatpush1.bf16.msra.mxu0 %v142
  %198 = vmatprep.subr.bf16.mxu0 0
  %199 = vmatpush1.bf16.msra.mxu0 0
  %200 = vmatprep.subr.bf16.mxu0 0
  %201 = vmatpush1.bf16.msra.mxu0 0
  %202 = vmatprep.subr.bf16.mxu0 0
  %203 = vmatpush1.bf16.msra.mxu0 0
  %204 = vmatprep.subr.bf16.mxu0 0
  %205 = vmatpush1.bf16.msra.mxu0 0
  %206 = vmatprep.subr.bf16.mxu0 0
  %207 = vmatpush1.bf16.msra.mxu0 0
  %208 = vmatprep.subr.bf16.mxu0 0
  %209 = vmatpush1.bf16.msra.mxu0 0
  %210 = vmatprep.subr.bf16.mxu0 0
  %211 = vmatpush1.bf16.msra.mxu0 0
  %212 = vmatprep.subr.bf16.mxu0 0
  %213 = vmatpush1.bf16.msra.mxu0 0
  %214 = vmatprep.subr.bf16.mxu0 0
  %215 = vmatpush1.bf16.msra.mxu0 0
  %216 = vmatprep.subr.bf16.mxu0 0
  %217 = vmatpush1.bf16.msra.mxu0 0
  %218 = vmatprep.subr.bf16.mxu0 0
  %219 = vmatpush1.bf16.msra.mxu0 0
  %220 = vmatprep.mubr.bf16.mxu0 0
  %221 = vmatmul.mubr.bf16.gmra.mrb[0].mxu0 %v132
  %v222 = vpop.f32.mrb[0].mxu0
  %v223 = vadd.f32 %v38, %v222
  %v224 = vpop.f32.mrb[0].mxu0
  %v225 = vadd.f32 %v38, %v224
  %v226 = vpop.f32.mrb[0].mxu0
  %v227 = vpop.f32.mrb[0].mxu0
  %228 = vdwg.mxu0
  %v229 = vand.u32 2147483647, %v182
  %v230 = vand.u32 2147483647, %v184
  %v231 = vand.u32 2147483647, %v223
  %v232 = vand.u32 2147483647, %v225
  %v233 = vrot.slane %v229, 4
  %v234 = vadd.f32 %v229, %v233
  %v235 = vrot.slane %v234, 2
  %v236 = vadd.f32 %v234, %v235
  %v237 = vrot.slane %v236, 1
  %v238 = vadd.f32 %v236, %v237
  %v239 = vrot.slane %v230, 4
  %v240 = vadd.f32 %v230, %v239
  %v241 = vrot.slane %v240, 2
  %v242 = vadd.f32 %v240, %v241
  %v243 = vrot.slane %v242, 1
  %v244 = vadd.f32 %v242, %v243
  %v245 = vrot.slane %v231, 4
  %v246 = vadd.f32 %v231, %v245
  %v247 = vrot.slane %v246, 2
  %v248 = vadd.f32 %v246, %v247
  %v249 = vrot.slane %v248, 1
  %v250 = vadd.f32 %v248, %v249
  %v251 = vrot.slane %v232, 4
  %v252 = vadd.f32 %v232, %v251
  %v253 = vrot.slane %v252, 2
  %v254 = vadd.f32 %v252, %v253
  %v255 = vrot.slane %v254, 1
  %v256 = vadd.f32 %v254, %v255
  %v257 = vadd.f32 %v238, 1e-06
  %v258 = vadd.f32 %v244, 1e-06
  %v259 = vadd.f32 %v250, 1e-06
  %v260 = vadd.f32 %v256, 1e-06
  %v261 = vrcp.pop %v257
  %v262 = vrcp.pop %v258
  %v263 = vrcp.pop %v259
  %v264 = vrcp.pop %v260
  %v265 = vmul.f32 %v182, %v261
  %v266 = vmul.f32 %v184, %v262
  %v267 = vmul.f32 %v223, %v263
  %v268 = vmul.f32 %v225, %v264
  %v269 = vrot.slane %v265, 4
  %v270 = vadd.f32 %v265, %v269
  %v271 = vrot.slane %v270, 2
  %v272 = vadd.f32 %v270, %v271
  %v273 = vrot.slane %v272, 1
  %v274 = vadd.f32 %v272, %v273
  %v275 = vrot.slane %v266, 4
  %v276 = vadd.f32 %v266, %v275
  %v277 = vrot.slane %v276, 2
  %v278 = vadd.f32 %v276, %v277
  %v279 = vrot.slane %v278, 1
  %v280 = vadd.f32 %v278, %v279
  %v281 = vrot.slane %v267, 4
  %v282 = vadd.f32 %v267, %v281
  %v283 = vrot.slane %v282, 2
  %v284 = vadd.f32 %v282, %v283
  %v285 = vrot.slane %v284, 1
  %v286 = vadd.f32 %v284, %v285
  %v287 = vrot.slane %v268, 4
  %v288 = vadd.f32 %v268, %v287
  %v289 = vrot.slane %v288, 2
  %v290 = vadd.f32 %v288, %v289
  %v291 = vrot.slane %v290, 1
  %v292 = vadd.f32 %v290, %v291
  %v293 = vsub.f32 1.0, %v274
  %v294 = vsub.f32 1.0, %v280
  %v295 = vsub.f32 1.0, %v286
  %v296 = vsub.f32 1.0, %v292
  %v301 = vrot.slane %v265, 7
  %v302 = vrot.slane %v266, 7
  %v303 = vrot.slane %v267, 7
  %v304 = vrot.slane %v268, 7
  %v309 = vsel %vm134, %v265, %v293
  %v310 = vsel %vm134, %v266, %v294
  %v311 = vsel %vm134, %v267, %v295
  %v312 = vsel %vm134, %v268, %v296
  %vm313 = vcmask 1044480
  %v314 = vsel %vm313, %v309, %v301
  %v315 = vsel %vm313, %v310, %v302
  %v316 = vsel %vm313, %v311, %v303
  %v317 = vsel %vm313, %v312, %v304
  %v318 = vpack.c.bf16 %v301, %v314
  %v319 = vpack.c.bf16 %v302, %v315
  %v320 = vpack.c.bf16 %v303, %v316
  %v321 = vpack.c.bf16 %v304, %v317
  %v326 = vunpack.c.l.b16 %v318
  %v327 = vunpack.c.l.b16 %v319
  %v328 = vunpack.c.l.b16 %v320
  %v329 = vunpack.c.l.b16 %v321
  %v330 = vunpack.c.h.b16 %v318
  %v331 = vunpack.c.h.b16 %v319
  %v332 = vunpack.c.h.b16 %v320
  %v333 = vunpack.c.h.b16 %v321
  %v334 = vpack.c.b16 %v327, %v326
  %v335 = vpack.c.b16 %v329, %v328
  %v336 = vpack.c.b16 %v331, %v330
  %v337 = vpack.c.b16 %v333, %v332
  %342 = vst [vmem:[%s3] sm:$0xff] %v334
  %343 = vst [vmem:[%s3 + $0x8] sm:$0xff] %v335
  %vm344 = vcmask 1040384
  %vm345 = vsmask.f32 256
  %vm346 = vmand %vm344, %vm345
  %vm347 = vcmask 1044484
  %vm348 = vsmask.f32 4352
  %vm349 = vmand %vm347, %vm348
  %vm350 = vmor %vm349, %vm346
  %v351 = vld [vmem:[%s3 + $0x10] sm:$0x11]
  %v352 = vsel %vm350, %v336, %v351
  %353 = vst [vmem:[%s3 + $0x10] sm:$0x11] %v352
  %v354 = vld [vmem:[%s3 + $0x18] sm:$0x11]
  %v355 = vsel %vm350, %v337, %v354
  %356 = vst [vmem:[%s3 + $0x18] sm:$0x11] %v355
  // Predicated region
  $region14: #{cspn_forward.15} parent=0 // pred_check
    _
  $region15: #{cspn_forward.15} parent=0 // pred_check_branch
    %358 = sbr.rel (0) target = $region17
  $region16: #{cspn_forward.15} parent=0 // pred_region
    _
  $region17: #{cspn_forward.15} parent=0 // pred_fallthru
    _
  // Predicated region
  $region18: #{cspn_forward.15} parent=0 // pred_check
    _
  $region19: #{cspn_forward.15} parent=0 // pred_check_branch
    %360 = sbr.rel (0) target = $region21
  $region20: #{cspn_forward.15} parent=0 // pred_region
    _
  $region21: #{cspn_forward.15} parent=0 // pred_fallthru
    _

// kernel: cspn_forward.19
$region0: #{cspn_forward.19}
  #allocation0 [shape = 'u32[]', space=smem, size = 0x4, offset = 0x4, fixed_abs, tag = 'smem constant byte address 0x4 - core index']
  #allocation1 [shape = 'u32[144,128]{1,0:T(1,128)}', space=vmem, size = 0x12000, scoped, tag = 'internal scratch']
  %s0 = inlined_call_operand.vmem [shape: bf16[72,512], index: 0, kind: input, shape index: {}]
  %s1 = inlined_call_operand.vmem [shape: bf16[3,72], index: 1, kind: input, shape index: {}]
  %s2 = inlined_call_operand.vmem [shape: f32[3,1], index: 2, kind: input, shape index: {}]
  %s3 = inlined_call_operand.vmem [shape: f32[3,512], index: 3, kind: output, shape index: {}]
  %s4 = sld [smem:[#allocation0]]
  $region22: #{cspn_forward.19} parent=0
    _
  %s6 = ssub.s32 1, %s4
  %s7 = scalar_select 0, %s6, %s4
  // Predicated region
  $region2: #{cspn_forward.19} parent=0 // pred_check
    _
  $region3: #{cspn_forward.19} parent=0 // pred_check_branch
    %9 = sbr.rel (0) target = $region5
  $region4: #{cspn_forward.19} parent=0 // pred_region
    _
  $region5: #{cspn_forward.19} parent=0 // pred_fallthru
    _
  // Predicated region
  $region6: #{cspn_forward.19} parent=0 // pred_check
    _
  $region7: #{cspn_forward.19} parent=0 // pred_check_branch
    %11 = sbr.rel (0) target = $region9
  $region8: #{cspn_forward.19} parent=0 // pred_region
    _
  $region9: #{cspn_forward.19} parent=0 // pred_fallthru
    _
  // Predicated region
  $region10: #{cspn_forward.19} parent=0 // pred_check
    _
  $region11: #{cspn_forward.19} parent=0 // pred_check_branch
    %13 = sbr.rel (0) target = $region13
  $region12: #{cspn_forward.19} parent=0 // pred_region
    _
  $region13: #{cspn_forward.19} parent=0 // pred_fallthru
    _
  %v15 = vld [vmem:[%s1] sm:$0x3]
  %v16 = vld [vmem:[%s0] sm:$0xff]
  %v17 = vld [vmem:[%s0 + $0x8] sm:$0xff]
  %v18 = vld [vmem:[%s0 + $0x10] sm:$0xff]
  %v19 = vld [vmem:[%s0 + $0x18] sm:$0xff]
  %v20 = vld [vmem:[%s0 + $0x20] sm:$0xff]
  %v21 = vld [vmem:[%s0 + $0x28] sm:$0xff]
  %v22 = vld [vmem:[%s0 + $0x30] sm:$0xff]
  %v23 = vld [vmem:[%s0 + $0x38] sm:$0xff]
  %v24 = vld [vmem:[%s0 + $0x40] sm:$0xff]
  %v25 = vld [vmem:[%s0 + $0x48] sm:$0xff]
  %v26 = vld [vmem:[%s0 + $0x50] sm:$0xff]
  %v27 = vld [vmem:[%s0 + $0x58] sm:$0xff]
  %v28 = vld [vmem:[%s0 + $0x60] sm:$0xff]
  %v29 = vld [vmem:[%s0 + $0x68] sm:$0xff]
  %v30 = vld [vmem:[%s0 + $0x70] sm:$0xff]
  %v31 = vld [vmem:[%s0 + $0x78] sm:$0xff]
  %v32 = vld [vmem:[%s0 + $0x80] sm:$0xff]
  %v33 = vld [vmem:[%s0 + $0x88] sm:$0xff]
  %v34 = vld [vmem:[%s2] sm:$0x7]
  %36 = vset.pattern.permute.xlu0 0
  %37 = vperm.xlu0 %36, %v34
  %v38 = vpop.permute.xlu0 %37
  %v58 = vunpack.c.l.b16 %v16
  %v59 = vunpack.c.h.b16 %v16
  %v60 = vunpack.c.l.b16 %v17
  %v61 = vunpack.c.h.b16 %v17
  %v62 = vunpack.c.l.b16 %v18
  %v63 = vunpack.c.h.b16 %v18
  %v64 = vunpack.c.l.b16 %v19
  %v65 = vunpack.c.h.b16 %v19
  %v66 = vunpack.c.l.b16 %v20
  %v67 = vunpack.c.h.b16 %v20
  %v68 = vunpack.c.l.b16 %v21
  %v69 = vunpack.c.h.b16 %v21
  %v70 = vunpack.c.l.b16 %v22
  %v71 = vunpack.c.h.b16 %v22
  %v72 = vunpack.c.l.b16 %v23
  %v73 = vunpack.c.h.b16 %v23
  %v74 = vunpack.c.l.b16 %v24
  %v75 = vunpack.c.h.b16 %v24
  %v76 = vunpack.c.l.b16 %v25
  %v77 = vunpack.c.h.b16 %v25
  %v78 = vunpack.c.l.b16 %v26
  %v79 = vunpack.c.h.b16 %v26
  %v80 = vunpack.c.l.b16 %v27
  %v81 = vunpack.c.h.b16 %v27
  %v82 = vunpack.c.l.b16 %v28
  %v83 = vunpack.c.h.b16 %v28
  %v84 = vunpack.c.l.b16 %v29
  %v85 = vunpack.c.h.b16 %v29
  %v86 = vunpack.c.l.b16 %v30
  %v87 = vunpack.c.h.b16 %v30
  %v88 = vunpack.c.l.b16 %v31
  %v89 = vunpack.c.h.b16 %v31
  %v90 = vunpack.c.l.b16 %v32
  %v91 = vunpack.c.h.b16 %v32
  %v92 = vunpack.c.l.b16 %v33
  %v93 = vunpack.c.h.b16 %v33
  %v94 = vpack.c.b16 %v62, %v58
  %v95 = vpack.c.b16 %v63, %v59
  %v96 = vpack.c.b16 %v64, %v60
  %v97 = vpack.c.b16 %v65, %v61
  %v98 = vpack.c.b16 %v70, %v66
  %v99 = vpack.c.b16 %v71, %v67
  %v100 = vpack.c.b16 %v72, %v68
  %v101 = vpack.c.b16 %v73, %v69
  %v102 = vpack.c.b16 %v78, %v74
  %v103 = vpack.c.b16 %v79, %v75
  %v104 = vpack.c.b16 %v80, %v76
  %v105 = vpack.c.b16 %v81, %v77
  %v106 = vpack.c.b16 %v86, %v82
  %v107 = vpack.c.b16 %v87, %v83
  %v108 = vpack.c.b16 %v88, %v84
  %v109 = vpack.c.b16 %v89, %v85
  %v110 = vpack.c.b16 %v90, %v90
  %v111 = vpack.c.b16 %v91, %v91
  %v112 = vpack.c.b16 %v92, %v92
  %v113 = vpack.c.b16 %v93, %v93
  %vm130 = vcmask 588800
  %v132 = vsel %vm130, %v15, 0
  %vm134 = vcmask 1043456
  %v136 = vsel %vm134, %v110, 0
  %v139 = vsel %vm134, %v111, 0
  %v142 = vsel %vm134, %v112, 0
  %v145 = vsel %vm134, %v113, 0
  %147 = vmatprep.subr.bf16.mxu0 %v95
  %148 = vmatpush1.bf16.msra.mxu0 %v94
  %149 = vmatprep.subr.bf16.mxu0 %v99
  %150 = vmatpush1.bf16.msra.mxu0 %v98
  %151 = vmatprep.subr.bf16.mxu0 %v103
  %152 = vmatpush1.bf16.msra.mxu0 %v102
  %153 = vmatprep.subr.bf16.mxu0 %v107
  %154 = vmatpush1.bf16.msra.mxu0 %v106
  %155 = vmatprep.subr.bf16.mxu0 %v139
  %156 = vmatpush1.bf16.msra.mxu0 %v136
  %157 = vmatprep.subr.bf16.mxu0 0
  %158 = vmatpush1.bf16.msra.mxu0 0
  %159 = vmatprep.subr.bf16.mxu0 0
  %160 = vmatpush1.bf16.msra.mxu0 0
  %161 = vmatprep.subr.bf16.mxu0 0
  %162 = vmatpush1.bf16.msra.mxu0 0
  %163 = vmatprep.subr.bf16.mxu0 0
  %164 = vmatpush1.bf16.msra.mxu0 0
  %165 = vmatprep.subr.bf16.mxu0 0
  %166 = vmatpush1.bf16.msra.mxu0 0
  %167 = vmatprep.subr.bf16.mxu0 0
  %168 = vmatpush1.bf16.msra.mxu0 0
  %169 = vmatprep.subr.bf16.mxu0 0
  %170 = vmatpush1.bf16.msra.mxu0 0
  %171 = vmatprep.subr.bf16.mxu0 0
  %172 = vmatpush1.bf16.msra.mxu0 0
  %173 = vmatprep.subr.bf16.mxu0 0
  %174 = vmatpush1.bf16.msra.mxu0 0
  %175 = vmatprep.subr.bf16.mxu0 0
  %176 = vmatpush1.bf16.msra.mxu0 0
  %177 = vmatprep.subr.bf16.mxu0 0
  %178 = vmatpush1.bf16.msra.mxu0 0
  %179 = vmatprep.mubr.bf16.mxu0 0
  %180 = vmatmul.mubr.bf16.gmra.mrb[0].mxu0 %v132
  %v181 = vpop.f32.mrb[0].mxu0
  %v182 = vadd.f32 %v38, %v181
  %v183 = vpop.f32.mrb[0].mxu0
  %v184 = vadd.f32 %v38, %v183
  %v185 = vpop.f32.mrb[0].mxu0
  %v186 = vpop.f32.mrb[0].mxu0
  %187 = vdwg.mxu0
  %188 = vmatprep.subr.bf16.mxu0 %v97
  %189 = vmatpush1.bf16.msra.mxu0 %v96
  %190 = vmatprep.subr.bf16.mxu0 %v101
  %191 = vmatpush1.bf16.msra.mxu0 %v100
  %192 = vmatprep.subr.bf16.mxu0 %v105
  %193 = vmatpush1.bf16.msra.mxu0 %v104
  %194 = vmatprep.subr.bf16.mxu0 %v109
  %195 = vmatpush1.bf16.msra.mxu0 %v108
  %196 = vmatprep.subr.bf16.mxu0 %v145
  %197 = vmatpush1.bf16.msra.mxu0 %v142
  %198 = vmatprep.subr.bf16.mxu0 0
  %199 = vmatpush1.bf16.msra.mxu0 0
  %200 = vmatprep.subr.bf16.mxu0 0
  %201 = vmatpush1.bf16.msra.mxu0 0
  %202 = vmatprep.subr.bf16.mxu0 0
  %203 = vmatpush1.bf16.msra.mxu0 0
  %204 = vmatprep.subr.bf16.mxu0 0
  %205 = vmatpush1.bf16.msra.mxu0 0
  %206 = vmatprep.subr.bf16.mxu0 0
  %207 = vmatpush1.bf16.msra.mxu0 0
  %208 = vmatprep.subr.bf16.mxu0 0
  %209 = vmatpush1.bf16.msra.mxu0 0
  %210 = vmatprep.subr.bf16.mxu0 0
  %211 = vmatpush1.bf16.msra.mxu0 0
  %212 = vmatprep.subr.bf16.mxu0 0
  %213 = vmatpush1.bf16.msra.mxu0 0
  %214 = vmatprep.subr.bf16.mxu0 0
  %215 = vmatpush1.bf16.msra.mxu0 0
  %216 = vmatprep.subr.bf16.mxu0 0
  %217 = vmatpush1.bf16.msra.mxu0 0
  %218 = vmatprep.subr.bf16.mxu0 0
  %219 = vmatpush1.bf16.msra.mxu0 0
  %220 = vmatprep.mubr.bf16.mxu0 0
  %221 = vmatmul.mubr.bf16.gmra.mrb[0].mxu0 %v132
  %v222 = vpop.f32.mrb[0].mxu0
  %v223 = vadd.f32 %v38, %v222
  %v224 = vpop.f32.mrb[0].mxu0
  %v225 = vadd.f32 %v38, %v224
  %v226 = vpop.f32.mrb[0].mxu0
  %v227 = vpop.f32.mrb[0].mxu0
  %228 = vdwg.mxu0
  %vm229 = vcmask 1042432
  %v230 = vsel %vm229, %v182, -inf
  %v231 = vrot.slane %v230, 4
  %v232 = vmax.f32 %v230, %v231
  %v233 = vrot.slane %v232, 2
  %v234 = vmax.f32 %v232, %v233
  %v235 = vrot.slane %v234, 1
  %v236 = vmax.f32 %v234, %v235
  %v237 = vsel %vm229, %v184, -inf
  %v238 = vrot.slane %v237, 4
  %v239 = vmax.f32 %v237, %v238
  %v240 = vrot.slane %v239, 2
  %v241 = vmax.f32 %v239, %v240
  %v242 = vrot.slane %v241, 1
  %v243 = vmax.f32 %v241, %v242
  %v244 = vsel %vm229, %v223, -inf
  %v245 = vrot.slane %v244, 4
  %v246 = vmax.f32 %v244, %v245
  %v247 = vrot.slane %v246, 2
  %v248 = vmax.f32 %v246, %v247
  %v249 = vrot.slane %v248, 1
  %v250 = vmax.f32 %v248, %v249
  %v251 = vsel %vm229, %v225, -inf
  %v252 = vrot.slane %v251, 4
  %v253 = vmax.f32 %v251, %v252
  %v254 = vrot.slane %v253, 2
  %v255 = vmax.f32 %v253, %v254
  %v256 = vrot.slane %v255, 1
  %v257 = vmax.f32 %v255, %v256
  %v258 = vsub.f32 %v182, %v236
  %v259 = vsub.f32 %v184, %v243
  %v260 = vsub.f32 %v223, %v250
  %v261 = vsub.f32 %v225, %v257
  %v262 = vmul.f32 %v258, 1.442695
  %v263 = vpow.pop %v262
  %v264 = vmul.f32 %v259, 1.442695
  %v265 = vpow.pop %v264
  %v266 = vmul.f32 %v260, 1.442695
  %v267 = vpow.pop %v266
  %v268 = vmul.f32 %v261, 1.442695
  %v269 = vpow.pop %v268
  %v270 = vsel %vm229, %v263, 0.0
  %v271 = vrot.slane %v270, 4
  %v272 = vadd.f32 %v270, %v271
  %v273 = vrot.slane %v272, 2
  %v274 = vadd.f32 %v272, %v273
  %v275 = vrot.slane %v274, 1
  %v276 = vadd.f32 %v274, %v275
  %v277 = vsel %vm229, %v265, 0.0
  %v278 = vrot.slane %v277, 4
  %v279 = vadd.f32 %v277, %v278
  %v280 = vrot.slane %v279, 2
  %v281 = vadd.f32 %v279, %v280
  %v282 = vrot.slane %v281, 1
  %v283 = vadd.f32 %v281, %v282
  %v284 = vsel %vm229, %v267, 0.0
  %v285 = vrot.slane %v284, 4
  %v286 = vadd.f32 %v284, %v285
  %v287 = vrot.slane %v286, 2
  %v288 = vadd.f32 %v286, %v287
  %v289 = vrot.slane %v288, 1
  %v290 = vadd.f32 %v288, %v289
  %v291 = vsel %vm229, %v269, 0.0
  %v292 = vrot.slane %v291, 4
  %v293 = vadd.f32 %v291, %v292
  %v294 = vrot.slane %v293, 2
  %v295 = vadd.f32 %v293, %v294
  %v296 = vrot.slane %v295, 1
  %v297 = vadd.f32 %v295, %v296
  %v298 = vrcp.pop %v276
  %v299 = vrcp.pop %v283
  %v300 = vrcp.pop %v290
  %v301 = vrcp.pop %v297
  %v302 = vmul.f32 %v263, %v298
  %v303 = vmul.f32 %v265, %v299
  %v304 = vmul.f32 %v267, %v300
  %v305 = vmul.f32 %v269, %v301
  %v310 = vcombine.low %v302, %v303
  %v311 = vcombine.low %v304, %v305
  %314 = vst [vmem:[%s3] sm:$0x77] %v310
  %315 = vst [vmem:[%s3 + $0x8] sm:$0x77] %v311
  // Predicated region
  $region14: #{cspn_forward.19} parent=0 // pred_check
    _
  $region15: #{cspn_forward.19} parent=0 // pred_check_branch
    %317 = sbr.rel (0) target = $region17
  $region16: #{cspn_forward.19} parent=0 // pred_region
    _
  $region17: #{cspn_forward.19} parent=0 // pred_fallthru
    _
  // Predicated region
  $region18: #{cspn_forward.19} parent=0 // pred_check
    _
  $region19: #{cspn_forward.19} parent=0 // pred_check_branch
    %319 = sbr.rel (0) target = $region21
  $region20: #{cspn_forward.19} parent=0 // pred_region
    _
  $region21: #{cspn_forward.19} parent=0 // pred_fallthru
    _

// kernel: squeeze.1165
$region0: #{squeeze.1165}
  %s0 = inlined_call_operand.vmem [shape: bf16[2,1,16,16], index: 0, kind: input, shape index: {}]
  %s1 = inlined_call_operand.vmem [shape: bf16[1,512], index: 1, kind: output, shape index: {}]
  $region1: #{squeeze.1165} parent=0
    #allocation0 [shape = 'u8[16384]{0}', space=vmem, size = 0x4000, scoped, tag = 'scoped mem for output reshape']
    #allocation1 [shape = 'u8[16384]{0}', space=vmem, size = 0x4000, scoped, tag = 'scoped mem for input reshape']
    %s3 = smul.u32 4, 2
    %s4 = sshllo.u32 0, %s3
    %s5 = smul.addr 4, 3
    %s6 = scalar_lea.vmem %s0, %s5
    %s7 = sshrl.u32 %s4, 1
    %s8 = sor.u32 %s4, %s7
    %s9 = sand.u32 %s8, 85
    %s10 = sshrl.u32 %s9, 1
    %s11 = sor.u32 %s9, %s10
    %s12 = sand.u32 51, %s11
    %s13 = sshrl.u32 %s12, 2
    %s14 = sor.u32 %s12, %s13
    %s15 = sand.u32 15, %s14
    %v16 = vld [vmem:[%s6] sm:%s15]
    %v17 = vunpack.c.l.bf16 %v16
    %v18 = vunpack.c.h.bf16 %v16
    %s19 = scalar_lea.vmem [#allocation1], 24
    %20 = vst [vmem:[%s19] sm:%s4] %v17
    %s21 = smul.addr 4, 2
    %s22 = scalar_lea.vmem %s0, %s21
    %s23 = sshrl.u32 %s4, 1
    %s24 = sor.u32 %s4, %s23
    %s25 = sand.u32 %s24, 85
    %s26 = sshrl.u32 %s25, 1
    %s27 = sor.u32 %s25, %s26
    %s28 = sand.u32 51, %s27
    %s29 = sshrl.u32 %s28, 2
    %s30 = sor.u32 %s28, %s29
    %s31 = sand.u32 15, %s30
    %v32 = vld [vmem:[%s22] sm:%s31]
    %v33 = vunpack.c.l.bf16 %v32
    %v34 = vunpack.c.h.bf16 %v32
    %s35 = scalar_lea.vmem [#allocation1], 16
    %36 = vst [vmem:[%s35] sm:%s4] %v33
    %s37 = scalar_lea.vmem %s0, 4
    %s38 = sshrl.u32 %s4, 1
    %s39 = sor.u32 %s4, %s38
    %s40 = sand.u32 %s39, 85
    %s41 = sshrl.u32 %s40, 1
    %s42 = sor.u32 %s40, %s41
    %s43 = sand.u32 51, %s42
    %s44 = sshrl.u32 %s43, 2
    %s45 = sor.u32 %s43, %s44
    %s46 = sand.u32 15, %s45
    %v47 = vld [vmem:[%s37] sm:%s46]
    %v48 = vunpack.c.l.bf16 %v47
    %v49 = vunpack.c.h.bf16 %v47
    %s50 = scalar_lea.vmem [#allocation1], 8
    %51 = vst [vmem:[%s50] sm:%s4] %v48
    %s52 = sshrl.u32 %s4, 1
    %s53 = sor.u32 %s4, %s52
    %s54 = sand.u32 %s53, 85
    %s55 = sshrl.u32 %s54, 1
    %s56 = sor.u32 %s54, %s55
    %s57 = sand.u32 51, %s56
    %s58 = sshrl.u32 %s57, 2
    %s59 = sor.u32 %s57, %s58
    %s60 = sand.u32 15, %s59
    %v61 = vld [vmem:[%s0] sm:%s60]
    %v62 = vunpack.c.l.bf16 %v61
    %v63 = vunpack.c.h.bf16 %v61
    %64 = vst [vmem:[#allocation1] sm:%s4] %v62
    %v65 = vld [vmem:[#allocation1] ss:$8 sm:$0xf]
    %vm66 = vcmask 130048
    %67 = vst.msk [vmem:[#allocation0] ss:$8 sm:$0xf] %vm66, %v65
    %s68 = scalar_lea.vmem [#allocation1], 7
    %v69 = vld [vmem:[%s68] ss:$8 sm:$0xf]
    %70 = vrot.lane.b32.xlu0 %v69, 112
    %v71 = vpop.permute.xlu0 %70
    %vm72 = vcmask 1048448
    %73 = vst.msk [vmem:[#allocation0] ss:$8 sm:$0xf] %vm72, %v71
    %s74 = scalar_lea.vmem [#allocation1], 6
    %v75 = vld [vmem:[%s74] ss:$8 sm:$0xf]
    %76 = vrot.lane.b32.xlu0 %v75, 96
    %v77 = vpop.permute.xlu0 %76
    %vm78 = vcmask 917248
    %79 = vst.msk [vmem:[#allocation0] ss:$8 sm:$0xf] %vm78, %v77
    %s80 = scalar_lea.vmem [#allocation1], 5
    %v81 = vld [vmem:[%s80] ss:$8 sm:$0xf]
    %82 = vrot.lane.b32.xlu0 %v81, 80
    %v83 = vpop.permute.xlu0 %82
    %vm84 = vcmask 786048
    %85 = vst.msk [vmem:[#allocation0] ss:$8 sm:$0xf] %vm84, %v83
    %s86 = scalar_lea.vmem [#allocation1], 4
    %v87 = vld [vmem:[%s86] ss:$8 sm:$0xf]
    %88 = vrot.lane.b32.xlu0 %v87, 64
    %v89 = vpop.permute.xlu0 %88
    %vm90 = vcmask 654848
    %91 = vst.msk [vmem:[#allocation0] ss:$8 sm:$0xf] %vm90, %v89
    %s92 = scalar_lea.vmem [#allocation1], 3
    %v93 = vld [vmem:[%s92] ss:$8 sm:$0xf]
    %94 = vrot.lane.b32.xlu0 %v93, 48
    %v95 = vpop.permute.xlu0 %94
    %vm96 = vcmask 523648
    %97 = vst.msk [vmem:[#allocation0] ss:$8 sm:$0xf] %vm96, %v95
    %s98 = scalar_lea.vmem [#allocation1], 2
    %v99 = vld [vmem:[%s98] ss:$8 sm:$0xf]
    %100 = vrot.lane.b32.xlu0 %v99, 32
    %v101 = vpop.permute.xlu0 %100
    %vm102 = vcmask 392448
    %103 = vst.msk [vmem:[#allocation0] ss:$8 sm:$0xf] %vm102, %v101
    %s104 = scalar_lea.vmem [#allocation1], 1
    %v105 = vld [vmem:[%s104] ss:$8 sm:$0xf]
    %106 = vrot.lane.b32.xlu0 %v105, 16
    %v107 = vpop.permute.xlu0 %106
    %vm108 = vcmask 261248
    %109 = vst.msk [vmem:[#allocation0] ss:$8 sm:$0xf] %vm108, %v107
    %s111 = smul.u32 1, 2
    %s112 = sshllo.u32 0, %s111
    %s113 = sshrl.u32 %s111, 1
    %v114 = vld [vmem:[#allocation0] sm:%s112]
    %v115 = vpack.c.bf16 0.0, %v114
    %s116 = sshllo.u32 0, %s113
    %117 = vst [vmem:[%s1] sm:%s116] %v115
    %s118 = scalar_lea.vmem [#allocation0], 8
    %v119 = vld [vmem:[%s118] sm:%s112]
    %v120 = vpack.c.bf16 0.0, %v119
    %s121 = sshllo.u32 0, %s113
    %s122 = scalar_lea.vmem %s1, 1
    %123 = vst [vmem:[%s122] sm:%s121] %v120
    %s124 = scalar_lea.vmem [#allocation0], 16
    %v125 = vld [vmem:[%s124] sm:%s112]
    %v126 = vpack.c.bf16 0.0, %v125
    %s127 = sshllo.u32 0, %s113
    %s128 = smul.addr 1, 2
    %s129 = scalar_lea.vmem %s1, %s128
    %130 = vst [vmem:[%s129] sm:%s127] %v126
    %s131 = scalar_lea.vmem [#allocation0], 24
    %v132 = vld [vmem:[%s131] sm:%s112]
    %v133 = vpack.c.bf16 0.0, %v132
    %s134 = sshllo.u32 0, %s113
    %s135 = smul.addr 1, 3
    %s136 = scalar_lea.vmem %s1, %s135
    %137 = vst [vmem:[%s136] sm:%s134] %v133

// kernel: cspn_forward.20
$region0: #{cspn_forward.20}
  #allocation0 [shape = 'u32[]', space=smem, size = 0x4, offset = 0x4, fixed_abs, tag = 'smem constant byte address 0x4 - core index']
  #allocation1 [shape = 'u32[144,128]{1,0:T(1,128)}', space=vmem, size = 0x12000, scoped, tag = 'internal scratch']
  %s0 = inlined_call_operand.vmem [shape: f32[2,18,18], index: 0, kind: input, shape index: {}]
  %s1 = inlined_call_operand.vmem [shape: f32[2,20,20], index: 1, kind: input, shape index: {}]
  %s2 = inlined_call_operand.vmem [shape: f32[2,22,22], index: 2, kind: input, shape index: {}]
  %s3 = inlined_call_operand.vmem [shape: bf16[9,2,16,16], index: 3, kind: input, shape index: {}]
  %s4 = inlined_call_operand.vmem [shape: bf16[25,2,16,16], index: 4, kind: input, shape index: {}]
  %s5 = inlined_call_operand.vmem [shape: bf16[49,2,16,16], index: 5, kind: input, shape index: {}]
  %s6 = inlined_call_operand.vmem [shape: f32[3,2,16,16], index: 6, kind: input, shape index: {}]
  %s7 = inlined_call_operand.vmem [shape: f32[2,16,16], index: 7, kind: input, shape index: {}]
  %s8 = inlined_call_operand.vmem [shape: f32[3,2,16,16], index: 8, kind: output, shape index: {}]
  %s9 = sld [smem:[#allocation0]]
  $region260: #{cspn_forward.20} parent=0
    _
  %s11 = ssub.s32 1, %s9
  %s12 = scalar_select 0, %s11, %s9
  $region1: #{cspn_forward.20} parent=0
    #allocation2 [shape = 'u8[73728]{0}', space=vmem, size = 0x12000, scoped, tag = 'input window, operand 3']
    #allocation3 [shape = 'u8[204800]{0}', space=vmem, size = 0x32000, scoped, tag = 'input window, operand 4']
    #allocation4 [shape = 'u8[401408]{0}', space=vmem, size = 0x62000, scoped, tag = 'input window, operand 5']
    #allocation5 [shape = 'u8[49152]{0}', space=vmem, size = 0xc000, scoped, tag = 'input window, operand 6']
    #allocation6 [shape = 'u8[49152]{0}', space=vmem, size = 0xc000, scoped, tag = 'output window, operand 0']
    loop: start=0, step=1, limit=4
    $region2: #{cspn_forward.20} parent=1 // loop_pre_header
      _
    $region3: #{cspn_forward.20} parent=1 // loop_header
      %s14 = sphi 0, %s18
      %p15 = scmp.ge.s32.totalorder %s14, 4
      %s21 = sphi 0, %s33
      %s22 = sphi 0, %s29
      %s23 = sphi 0, %s21
      %s24 = sphi 0, %s22
      %s25 = sphi 0, %s23
      %s26 = sphi 0, %s24
      %s36 = sphi 0, %s38
      %s39 = sphi 0, %s36
      %s40 = sphi 0, %s39
      %s56 = sphi 0, %s40
      %s62 = sphi 0, %s64
      %s65 = sphi 0, %s62
      %s66 = sphi 0, %s65
      %s82 = sphi 0, %s66
      %s88 = sphi 0, %s90
      %s91 = sphi 0, %s88
      %s92 = sphi 0, %s91
      %s108 = sphi 0, %s92
      %s116 = sphi 0, %s118
      %s119 = sphi 0, %s116
      %s120 = sphi 0, %s119
      %s136 = sphi 0, %s120
      %s144 = sphi 0, %s146
      %s147 = sphi 0, %s144
      %s148 = sphi 0, %s147
      %s164 = sphi 0, %s148
      %s172 = sphi 0, %s174
      %s175 = sphi 0, %s172
      %s176 = sphi 0, %s175
      %s192 = sphi 0, %s176
      %s200 = sphi 0, %s202
      %s203 = sphi 0, %s200
      %s204 = sphi 0, %s203
      %s220 = sphi 0, %s204
      %s228 = sphi 0, %s230
      %s231 = sphi 0, %s228
      %s232 = sphi 0, %s231
      %s248 = sphi 0, %s232
      %s256 = sphi 0, %s258
      %s259 = sphi 0, %s256
      %s260 = sphi 0, %s259
      %s276 = sphi 0, %s260
    $region4: #{cspn_forward.20} parent=1 // loop_header_branch
      %17 = sbr.rel (%p15) target = $region8
    $region5: #{cspn_forward.20} parent=1 // loop_body
      %s19 = ssub.s32 %s14, 1
      %s20 = ssub.s32 %s14, 2
      %s27 = sadd.s32 1, %s22
      %p28 = scmp.ge.s32.totalorder %s27, 1
      %s29 = scalar_select %p28, 0, %s27
      %s30 = sadd.s32 1, %s21
      %s31 = scalar_select %p28, %s30, %s21
      %p32 = scmp.ge.s32.totalorder %s31, 2
      %s33 = scalar_select %p32, 0, %s31
      %s34 = ssub.s32 %s21, %s33
      %p35 = scmp.eq.s32.totalorder %s34, 0
      %s37 = sadd.s32 %s36, 1
      %s38 = scalar_select %p35, %s36, %s37
      %p41 = pneg %p35
      %p42 = scmp.eq.s32.totalorder %s14, 1
      %p43 = por %p41, %p42
      %p44 = scmp.ne.s32.totalorder %s36, %s39
      %p45 = scmp.eq.s32.totalorder %s14, 0
      %p46 = por %p44, %p45
      %p47 = scmp.ne.s32.totalorder %s36, %s39
      %p48 = scmp.eq.s32.totalorder %s19, 1
      %p49 = por %p47, %p48
      %p50 = scmp.ne.s32.totalorder %s39, %s40
      %p51 = scmp.eq.s32.totalorder %s19, 0
      %p52 = por %p50, %p51
      %p53 = scmp.ne.s32.totalorder %s39, %s40
      %p54 = scmp.eq.s32.totalorder %s20, 1
      %p55 = por %p53, %p54
      %p57 = scmp.ne.s32.totalorder %s40, %s56
      %p58 = scmp.eq.s32.totalorder %s20, 0
      %p59 = por %p57, %p58
      %s60 = ssub.s32 %s21, %s33
      %p61 = scmp.eq.s32.totalorder %s60, 0
      %s63 = sadd.s32 %s62, 1
      %s64 = scalar_select %p61, %s62, %s63
      %p67 = pneg %p61
      %p68 = scmp.eq.s32.totalorder %s14, 1
      %p69 = por %p67, %p68
      %p70 = scmp.ne.s32.totalorder %s62, %s65
      %p71 = scmp.eq.s32.totalorder %s14, 0
      %p72 = por %p70, %p71
      %p73 = scmp.ne.s32.totalorder %s62, %s65
      %p74 = scmp.eq.s32.totalorder %s19, 1
      %p75 = por %p73, %p74
      %p76 = scmp.ne.s32.totalorder %s65, %s66
      %p77 = scmp.eq.s32.totalorder %s19, 0
      %p78 = por %p76, %p77
      %p79 = scmp.ne.s32.totalorder %s65, %s66
      %p80 = scmp.eq.s32.totalorder %s20, 1
      %p81 = por %p79, %p80
      %p83 = scmp.ne.s32.totalorder %s66, %s82
      %p84 = scmp.eq.s32.totalorder %s20, 0
      %p85 = por %p83, %p84
      %s86 = ssub.s32 %s21, %s33
      %p87 = scmp.eq.s32.totalorder %s86, 0
      %s89 = sadd.s32 %s88, 1
      %s90 = scalar_select %p87, %s88, %s89
      %p93 = pneg %p87
      %p94 = scmp.eq.s32.totalorder %s14, 1
      %p95 = por %p93, %p94
      %p96 = scmp.ne.s32.totalorder %s88, %s91
      %p97 = scmp.eq.s32.totalorder %s14, 0
      %p98 = por %p96, %p97
      %p99 = scmp.ne.s32.totalorder %s88, %s91
      %p100 = scmp.eq.s32.totalorder %s19, 1
      %p101 = por %p99, %p100
      %p102 = scmp.ne.s32.totalorder %s91, %s92
      %p103 = scmp.eq.s32.totalorder %s19, 0
      %p104 = por %p102, %p103
      %p105 = scmp.ne.s32.totalorder %s91, %s92
      %p106 = scmp.eq.s32.totalorder %s20, 1
      %p107 = por %p105, %p106
      %p109 = scmp.ne.s32.totalorder %s92, %s108
      %p110 = scmp.eq.s32.totalorder %s20, 0
      %p111 = por %p109, %p110
      %s112 = ssub.s32 %s21, %s33
      %s113 = ssub.s32 %s22, %s29
      %s114 = sor.u32 %s112, %s113
      %p115 = scmp.eq.s32.totalorder %s114, 0
      %s117 = sadd.s32 %s116, 1
      %s118 = scalar_select %p115, %s116, %s117
      %p121 = pneg %p115
      %p122 = scmp.eq.s32.totalorder %s14, 1
      %p123 = por %p121, %p122
      %p124 = scmp.ne.s32.totalorder %s116, %s119
      %p125 = scmp.eq.s32.totalorder %s14, 0
      %p126 = por %p124, %p125
      %p127 = scmp.ne.s32.totalorder %s116, %s119
      %p128 = scmp.eq.s32.totalorder %s19, 1
      %p129 = por %p127, %p128
      %p130 = scmp.ne.s32.totalorder %s119, %s120
      %p131 = scmp.eq.s32.totalorder %s19, 0
      %p132 = por %p130, %p131
      %p133 = scmp.ne.s32.totalorder %s119, %s120
      %p134 = scmp.eq.s32.totalorder %s20, 1
      %p135 = por %p133, %p134
      %p137 = scmp.ne.s32.totalorder %s120, %s136
      %p138 = scmp.eq.s32.totalorder %s20, 0
      %p139 = por %p137, %p138
      %s140 = ssub.s32 %s21, %s33
      %s141 = ssub.s32 %s22, %s29
      %s142 = sor.u32 %s140, %s141
      %p143 = scmp.eq.s32.totalorder %s142, 0
      %s145 = sadd.s32 %s144, 1
      %s146 = scalar_select %p143, %s144, %s145
      %p149 = pneg %p143
      %p150 = scmp.eq.s32.totalorder %s14, 1
      %p151 = por %p149, %p150
      %p152 = scmp.ne.s32.totalorder %s144, %s147
      %p153 = scmp.eq.s32.totalorder %s14, 0
      %p154 = por %p152, %p153
      %p155 = scmp.ne.s32.totalorder %s144, %s147
      %p156 = scmp.eq.s32.totalorder %s19, 1
      %p157 = por %p155, %p156
      %p158 = scmp.ne.s32.totalorder %s147, %s148
      %p159 = scmp.eq.s32.totalorder %s19, 0
      %p160 = por %p158, %p159
      %p161 = scmp.ne.s32.totalorder %s147, %s148
      %p162 = scmp.eq.s32.totalorder %s20, 1
      %p163 = por %p161, %p162
      %p165 = scmp.ne.s32.totalorder %s148, %s164
      %p166 = scmp.eq.s32.totalorder %s20, 0
      %p167 = por %p165, %p166
      %s168 = ssub.s32 %s21, %s33
      %s169 = ssub.s32 %s22, %s29
      %s170 = sor.u32 %s168, %s169
      %p171 = scmp.eq.s32.totalorder %s170, 0
      %s173 = sadd.s32 %s172, 1
      %s174 = scalar_select %p171, %s172, %s173
      %p177 = pneg %p171
      %p178 = scmp.eq.s32.totalorder %s14, 1
      %p179 = por %p177, %p178
      %p180 = scmp.ne.s32.totalorder %s172, %s175
      %p181 = scmp.eq.s32.totalorder %s14, 0
      %p182 = por %p180, %p181
      %p183 = scmp.ne.s32.totalorder %s172, %s175
      %p184 = scmp.eq.s32.totalorder %s19, 1
      %p185 = por %p183, %p184
      %p186 = scmp.ne.s32.totalorder %s175, %s176
      %p187 = scmp.eq.s32.totalorder %s19, 0
      %p188 = por %p186, %p187
      %p189 = scmp.ne.s32.totalorder %s175, %s176
      %p190 = scmp.eq.s32.totalorder %s20, 1
      %p191 = por %p189, %p190
      %p193 = scmp.ne.s32.totalorder %s176, %s192
      %p194 = scmp.eq.s32.totalorder %s20, 0
      %p195 = por %p193, %p194
      %s196 = ssub.s32 %s21, %s33
      %s197 = ssub.s32 %s22, %s29
      %s198 = sor.u32 %s196, %s197
      %p199 = scmp.eq.s32.totalorder %s198, 0
      %s201 = sadd.s32 %s200, 1
      %s202 = scalar_select %p199, %s200, %s201
      %p205 = pneg %p199
      %p206 = scmp.eq.s32.totalorder %s14, 1
      %p207 = por %p205, %p206
      %p208 = scmp.ne.s32.totalorder %s200, %s203
      %p209 = scmp.eq.s32.totalorder %s14, 0
      %p210 = por %p208, %p209
      %p211 = scmp.ne.s32.totalorder %s200, %s203
      %p212 = scmp.eq.s32.totalorder %s19, 1
      %p213 = por %p211, %p212
      %p214 = scmp.ne.s32.totalorder %s203, %s204
      %p215 = scmp.eq.s32.totalorder %s19, 0
      %p216 = por %p214, %p215
      %p217 = scmp.ne.s32.totalorder %s203, %s204
      %p218 = scmp.eq.s32.totalorder %s20, 1
      %p219 = por %p217, %p218
      %p221 = scmp.ne.s32.totalorder %s204, %s220
      %p222 = scmp.eq.s32.totalorder %s20, 0
      %p223 = por %p221, %p222
      %s224 = ssub.s32 %s21, %s33
      %s225 = ssub.s32 %s22, %s29
      %s226 = sor.u32 %s224, %s225
      %p227 = scmp.eq.s32.totalorder %s226, 0
      %s229 = sadd.s32 %s228, 1
      %s230 = scalar_select %p227, %s228, %s229
      %p233 = pneg %p227
      %p234 = scmp.eq.s32.totalorder %s14, 1
      %p235 = por %p233, %p234
      %p236 = scmp.ne.s32.totalorder %s228, %s231
      %p237 = scmp.eq.s32.totalorder %s14, 0
      %p238 = por %p236, %p237
      %p239 = scmp.ne.s32.totalorder %s228, %s231
      %p240 = scmp.eq.s32.totalorder %s19, 1
      %p241 = por %p239, %p240
      %p242 = scmp.ne.s32.totalorder %s231, %s232
      %p243 = scmp.eq.s32.totalorder %s19, 0
      %p244 = por %p242, %p243
      %p245 = scmp.ne.s32.totalorder %s231, %s232
      %p246 = scmp.eq.s32.totalorder %s20, 1
      %p247 = por %p245, %p246
      %p249 = scmp.ne.s32.totalorder %s232, %s248
      %p250 = scmp.eq.s32.totalorder %s20, 0
      %p251 = por %p249, %p250
      %s252 = ssub.s32 %s21, %s33
      %s253 = ssub.s32 %s22, %s29
      %s254 = sor.u32 %s252, %s253
      %p255 = scmp.eq.s32.totalorder %s254, 0
      %s257 = sadd.s32 %s256, 1
      %s258 = scalar_select %p255, %s256, %s257
      %p261 = pneg %p255
      %p262 = scmp.eq.s32.totalorder %s14, 1
      %p263 = por %p261, %p262
      %p264 = scmp.ne.s32.totalorder %s256, %s259
      %p265 = scmp.eq.s32.totalorder %s14, 0
      %p266 = por %p264, %p265
      %p267 = scmp.ne.s32.totalorder %s256, %s259
      %p268 = scmp.eq.s32.totalorder %s19, 1
      %p269 = por %p267, %p268
      %p270 = scmp.ne.s32.totalorder %s259, %s260
      %p271 = scmp.eq.s32.totalorder %s19, 0
      %p272 = por %p270, %p271
      %p273 = scmp.ne.s32.totalorder %s259, %s260
      %p274 = scmp.eq.s32.totalorder %s20, 1
      %p275 = por %p273, %p274
      %p277 = scmp.ne.s32.totalorder %s260, %s276
      %p278 = scmp.eq.s32.totalorder %s20, 0
      %p279 = por %p277, %p278
      %p280 = scmp.le.s32.totalorder 1, %s14
      %p281 = scmp.lt.s32.totalorder %s14, 3
      %p282 = pnand %p280, %p281
      %p283 = pneg %p282
      // Predicated region
      $region9: #{cspn_forward.20} parent=5 // pred_check
        _
      $region10: #{cspn_forward.20} parent=5 // pred_check_branch
        %285 = sbr.rel (%p282) target = $region12
      $region11: #{cspn_forward.20} parent=5 // pred_region
        %s286 = ssub.s32 %s14, 1
      $region12: #{cspn_forward.20} parent=5 // pred_fallthru
        _
      %p287 = scmp.lt.s32.totalorder %s14, 2
      // Predicated region
      $region13: #{cspn_forward.20} parent=5 // pred_check
        %p288 = pneg %p287
      $region14: #{cspn_forward.20} parent=5 // pred_check_branch
        %290 = sbr.rel (%p288) target = $region16
      $region15: #{cspn_forward.20} parent=5 // pred_region
        // Predicated region
        $region17: #{cspn_forward.20} parent=15 // pred_check
          %p291 = pneg %p46
        $region18: #{cspn_forward.20} parent=15 // pred_check_branch
          %293 = sbr.rel (%p291) target = $region20
        $region19: #{cspn_forward.20} parent=15 // pred_region
          %p294 = scmp.lt.s32.totalorder %s21, 1
          %s295 = scalar_select %p294, %s21, 1
          %s296 = smul.addr %s295, 3
          %s297 = smul.addr %s296, 8
          %s298 = scalar_lea.vmem %s0, %s297
        $region20: #{cspn_forward.20} parent=15 // pred_fallthru
          _
        // Predicated region
        $region21: #{cspn_forward.20} parent=15 // pred_check
          %p299 = pneg %p72
        $region22: #{cspn_forward.20} parent=15 // pred_check_branch
          %301 = sbr.rel (%p299) target = $region24
        $region23: #{cspn_forward.20} parent=15 // pred_region
          %p302 = scmp.lt.s32.totalorder %s21, 1
          %s303 = scalar_select %p302, %s21, 1
          %s304 = smul.addr %s303, 3
          %s305 = smul.addr %s304, 8
          %s306 = scalar_lea.vmem %s1, %s305
        $region24: #{cspn_forward.20} parent=15 // pred_fallthru
          _
        // Predicated region
        $region25: #{cspn_forward.20} parent=15 // pred_check
          %p307 = pneg %p98
        $region26: #{cspn_forward.20} parent=15 // pred_check_branch
          %309 = sbr.rel (%p307) target = $region28
        $region27: #{cspn_forward.20} parent=15 // pred_region
          %p310 = scmp.lt.s32.totalorder %s21, 1
          %s311 = scalar_select %p310, %s21, 1
          %s312 = smul.addr %s311, 3
          %s313 = smul.addr %s312, 8
          %s314 = scalar_lea.vmem %s2, %s313
        $region28: #{cspn_forward.20} parent=15 // pred_fallthru
          _
        // Predicated region
        $region29: #{cspn_forward.20} parent=15 // pred_check
          %p315 = pneg %p126
        $region30: #{cspn_forward.20} parent=15 // pred_check_branch
          %317 = sbr.rel (%p315) target = $region32
        $region31: #{cspn_forward.20} parent=15 // pred_region
          %s318 = sand.u32 %s116, 1
          %s319 = sand.u32 %s116, 1
          %s320 = smul.addr %s319, 72
          %s321 = scalar_lea.vmem [#allocation2], %s320
          %s322 = smul.u32 2, %s22
          %s323 = smul.addr %s21, 2
          %s324 = sadd.s32 %s322, %s323
          %s325 = smul.addr %s324, 4
          %s326 = scalar_lea.vmem %s3, %s325
          // Predicated region
          $region33: #{cspn_forward.20} parent=31 // pred_check
            _
          $region34: #{cspn_forward.20} parent=31 // pred_check_branch
            %328 = sbr.rel (0) target = $region36
          $region35: #{cspn_forward.20} parent=31 // pred_region
            // Predicated region
            $region37: #{cspn_forward.20} parent=35 // pred_check
              _
            $region38: #{cspn_forward.20} parent=35 // pred_check_branch
              %330 = sbr.rel target = $region40
            $region39: #{cspn_forward.20} parent=35 // pred_region
              // Predicated region
              $region52: #{cspn_forward.20} parent=39 // pred_check
                _
              $region53: #{cspn_forward.20} parent=39 // pred_check_branch
                %379 = sbr.rel (0) target = $region55
              $region54: #{cspn_forward.20} parent=39 // pred_region
                loop: start=0, step=1, limit=1
                $region56: #{cspn_forward.20} parent=54 // loop_pre_header
                  _
                $region57: #{cspn_forward.20} parent=54 // loop_header
                  %s381 = sphi 0, %s385
                  %p382 = scmp.ge.s32.totalorder %s381, 1
                  %s386 = sphi %s326, %s326
                  %s387 = sphi %s321, %s321
                $region58: #{cspn_forward.20} parent=54 // loop_header_branch
                  %384 = sbr.rel (%p382) target = $region62
                $region59: #{cspn_forward.20} parent=54 // loop_body
                  _
                $region60: #{cspn_forward.20} parent=54 // loop_footer
                  %s385 = sadd.s32 1, %s381
                $region61: #{cspn_forward.20} parent=54 // loop_footer_branch
                  %380 = sbr.rel target = $region57
                $region62: #{cspn_forward.20} parent=54 // loop_exit
                  _
                loop: start=0, step=1, limit=1
                $region63: #{cspn_forward.20} parent=54 // loop_pre_header
                  _
                $region64: #{cspn_forward.20} parent=54 // loop_header
                  %s390 = sphi 0, %s394
                  %p391 = scmp.ge.s32.totalorder %s390, 1
                  %s395 = sphi %s326, %s326
                  %s396 = sphi %s321, %s321
                $region65: #{cspn_forward.20} parent=54 // loop_header_branch
                  %393 = sbr.rel (%p391) target = $region69
                $region66: #{cspn_forward.20} parent=54 // loop_body
                  %v397 = vld [vmem:[%s395] sm:$0xf]
                  %398 = vst [vmem:[%s396] sm:$0xf] %v397
                  %v399 = vld [vmem:[%s395 + $0x4] sm:$0xf]
                  %400 = vst [vmem:[%s396 + $0x4] sm:$0xf] %v399
                  %v401 = vld [vmem:[%s395 + $0x10] sm:$0xf]
                  %402 = vst [vmem:[%s396 + $0x8] sm:$0xf] %v401
                  %v403 = vld [vmem:[%s395 + $0x14] sm:$0xf]
                  %404 = vst [vmem:[%s396 + $0xc] sm:$0xf] %v403
                  %v405 = vld [vmem:[%s395 + $0x20] sm:$0xf]
                  %406 = vst [vmem:[%s396 + $0x10] sm:$0xf] %v405
                  %v407 = vld [vmem:[%s395 + $0x24] sm:$0xf]
                  %408 = vst [vmem:[%s396 + $0x14] sm:$0xf] %v407
                  %v409 = vld [vmem:[%s395 + $0x30] sm:$0xf]
                  %410 = vst [vmem:[%s396 + $0x18] sm:$0xf] %v409
                  %v411 = vld [vmem:[%s395 + $0x34] sm:$0xf]
                  %412 = vst [vmem:[%s396 + $0x1c] sm:$0xf] %v411
                  %v413 = vld [vmem:[%s395 + $0x40] sm:$0xf]
                  %414 = vst [vmem:[%s396 + $0x20] sm:$0xf] %v413
                  %v415 = vld [vmem:[%s395 + $0x44] sm:$0xf]
                  %416 = vst [vmem:[%s396 + $0x24] sm:$0xf] %v415
                  %v417 = vld [vmem:[%s395 + $0x50] sm:$0xf]
                  %418 = vst [vmem:[%s396 + $0x28] sm:$0xf] %v417
                  %v419 = vld [vmem:[%s395 + $0x54] sm:$0xf]
                  %420 = vst [vmem:[%s396 + $0x2c] sm:$0xf] %v419
                  %v421 = vld [vmem:[%s395 + $0x60] sm:$0xf]
                  %422 = vst [vmem:[%s396 + $0x30] sm:$0xf] %v421
                  %v423 = vld [vmem:[%s395 + $0x64] sm:$0xf]
                  %424 = vst [vmem:[%s396 + $0x34] sm:$0xf] %v423
                  %v425 = vld [vmem:[%s395 + $0x70] sm:$0xf]
                  %426 = vst [vmem:[%s396 + $0x38] sm:$0xf] %v425
                  %v427 = vld [vmem:[%s395 + $0x74] sm:$0xf]
                  %428 = vst [vmem:[%s396 + $0x3c] sm:$0xf] %v427
                  %v429 = vld [vmem:[%s395 + $0x80] sm:$0xf]
                  %430 = vst [vmem:[%s396 + $0x40] sm:$0xf] %v429
                  %v431 = vld [vmem:[%s395 + $0x84] sm:$0xf]
                  %432 = vst [vmem:[%s396 + $0x44] sm:$0xf] %v431
                $region67: #{cspn_forward.20} parent=54 // loop_footer
                  %s394 = sadd.s32 1, %s390
                $region68: #{cspn_forward.20} parent=54 // loop_footer_branch
                  %389 = sbr.rel target = $region64
                $region69: #{cspn_forward.20} parent=54 // loop_exit
                  _
              $region55: #{cspn_forward.20} parent=39 // pred_fallthru
                _
            $region40: #{cspn_forward.20} parent=35 // pred_fallthru
              _
            // Predicated region
            $region41: #{cspn_forward.20} parent=35 // pred_check
              _
            $region42: #{cspn_forward.20} parent=35 // pred_check_branch
              %332 = sbr.rel (0) target = $region44
            $region43: #{cspn_forward.20} parent=35 // pred_region
              loop: start=0, step=1, limit=1
              $region45: #{cspn_forward.20} parent=43 // loop_pre_header
                _
              $region46: #{cspn_forward.20} parent=43 // loop_header
                %s335 = sphi 0, %s339
                %p336 = scmp.ge.s32.totalorder %s335, 1
                %s340 = sphi %s326, %s326
                %s341 = sphi %s321, %s321
              $region47: #{cspn_forward.20} parent=43 // loop_header_branch
                %338 = sbr.rel (%p336) target = $region51
              $region48: #{cspn_forward.20} parent=43 // loop_body
                %v342 = vld [vmem:[%s340] sm:$0xf]
                %343 = vst [vmem:[%s341] sm:$0xf] %v342
                %v344 = vld [vmem:[%s340 + $0x4] sm:$0xf]
                %345 = vst [vmem:[%s341 + $0x4] sm:$0xf] %v344
                %v346 = vld [vmem:[%s340 + $0x10] sm:$0xf]
                %347 = vst [vmem:[%s341 + $0x8] sm:$0xf] %v346
                %v348 = vld [vmem:[%s340 + $0x14] sm:$0xf]
                %349 = vst [vmem:[%s341 + $0xc] sm:$0xf] %v348
                %v350 = vld [vmem:[%s340 + $0x20] sm:$0xf]
                %351 = vst [vmem:[%s341 + $0x10] sm:$0xf] %v350
                %v352 = vld [vmem:[%s340 + $0x24] sm:$0xf]
                %353 = vst [vmem:[%s341 + $0x14] sm:$0xf] %v352
                %v354 = vld [vmem:[%s340 + $0x30] sm:$0xf]
                %355 = vst [vmem:[%s341 + $0x18] sm:$0xf] %v354
                %v356 = vld [vmem:[%s340 + $0x34] sm:$0xf]
                %357 = vst [vmem:[%s341 + $0x1c] sm:$0xf] %v356
                %v358 = vld [vmem:[%s340 + $0x40] sm:$0xf]
                %359 = vst [vmem:[%s341 + $0x20] sm:$0xf] %v358
                %v360 = vld [vmem:[%s340 + $0x44] sm:$0xf]
                %361 = vst [vmem:[%s341 + $0x24] sm:$0xf] %v360
                %v362 = vld [vmem:[%s340 + $0x50] sm:$0xf]
                %363 = vst [vmem:[%s341 + $0x28] sm:$0xf] %v362
                %v364 = vld [vmem:[%s340 + $0x54] sm:$0xf]
                %365 = vst [vmem:[%s341 + $0x2c] sm:$0xf] %v364
                %v366 = vld [vmem:[%s340 + $0x60] sm:$0xf]
                %367 = vst [vmem:[%s341 + $0x30] sm:$0xf] %v366
                %v368 = vld [vmem:[%s340 + $0x64] sm:$0xf]
                %369 = vst [vmem:[%s341 + $0x34] sm:$0xf] %v368
                %v370 = vld [vmem:[%s340 + $0x70] sm:$0xf]
                %371 = vst [vmem:[%s341 + $0x38] sm:$0xf] %v370
                %v372 = vld [vmem:[%s340 + $0x74] sm:$0xf]
                %373 = vst [vmem:[%s341 + $0x3c] sm:$0xf] %v372
                %v374 = vld [vmem:[%s340 + $0x80] sm:$0xf]
                %375 = vst [vmem:[%s341 + $0x40] sm:$0xf] %v374
                %v376 = vld [vmem:[%s340 + $0x84] sm:$0xf]
                %377 = vst [vmem:[%s341 + $0x44] sm:$0xf] %v376
              $region49: #{cspn_forward.20} parent=43 // loop_footer
                %s339 = sadd.s32 1, %s335
              $region50: #{cspn_forward.20} parent=43 // loop_footer_branch
                %334 = sbr.rel target = $region46
              $region51: #{cspn_forward.20} parent=43 // loop_exit
                _
            $region44: #{cspn_forward.20} parent=35 // pred_fallthru
              _
          $region36: #{cspn_forward.20} parent=31 // pred_fallthru
            _
          %433 = vnop
        $region32: #{cspn_forward.20} parent=15 // pred_fallthru
          _
        // Predicated region
        $region70: #{cspn_forward.20} parent=15 // pred_check
          %p434 = pneg %p154
        $region71: #{cspn_forward.20} parent=15 // pred_check_branch
          %436 = sbr.rel (%p434) target = $region73
        $region72: #{cspn_forward.20} parent=15 // pred_region
          %s437 = sand.u32 %s144, 1
          %s438 = sand.u32 %s144, 1
          %s439 = smul.addr %s438, 200
          %s440 = scalar_lea.vmem [#allocation3], %s439
          %s441 = smul.u32 2, %s22
          %s442 = smul.addr %s21, 2
          %s443 = sadd.s32 %s441, %s442
          %s444 = smul.addr %s443, 4
          %s445 = scalar_lea.vmem %s4, %s444
          // Predicated region
          $region74: #{cspn_forward.20} parent=72 // pred_check
            _
          $region75: #{cspn_forward.20} parent=72 // pred_check_branch
            %447 = sbr.rel (0) target = $region77
          $region76: #{cspn_forward.20} parent=72 // pred_region
            // Predicated region
            $region78: #{cspn_forward.20} parent=76 // pred_check
              _
            $region79: #{cspn_forward.20} parent=76 // pred_check_branch
              %449 = sbr.rel target = $region81
            $region80: #{cspn_forward.20} parent=76 // pred_region
              // Predicated region
              $region93: #{cspn_forward.20} parent=80 // pred_check
                _
              $region94: #{cspn_forward.20} parent=80 // pred_check_branch
                %562 = sbr.rel (0) target = $region96
              $region95: #{cspn_forward.20} parent=80 // pred_region
                loop: start=0, step=1, limit=1
                $region97: #{cspn_forward.20} parent=95 // loop_pre_header
                  _
                $region98: #{cspn_forward.20} parent=95 // loop_header
                  %s564 = sphi 0, %s568
                  %p565 = scmp.ge.s32.totalorder %s564, 1
                  %s569 = sphi %s445, %s445
                  %s570 = sphi %s440, %s440
                $region99: #{cspn_forward.20} parent=95 // loop_header_branch
                  %567 = sbr.rel (%p565) target = $region103
                $region100: #{cspn_forward.20} parent=95 // loop_body
                  _
                $region101: #{cspn_forward.20} parent=95 // loop_footer
                  %s568 = sadd.s32 1, %s564
                $region102: #{cspn_forward.20} parent=95 // loop_footer_branch
                  %563 = sbr.rel target = $region98
                $region103: #{cspn_forward.20} parent=95 // loop_exit
                  _
                loop: start=0, step=1, limit=1
                $region104: #{cspn_forward.20} parent=95 // loop_pre_header
                  _
                $region105: #{cspn_forward.20} parent=95 // loop_header
                  %s573 = sphi 0, %s577
                  %p574 = scmp.ge.s32.totalorder %s573, 1
                  %s578 = sphi %s445, %s445
                  %s579 = sphi %s440, %s440
                $region106: #{cspn_forward.20} parent=95 // loop_header_branch
                  %576 = sbr.rel (%p574) target = $region110
                $region107: #{cspn_forward.20} parent=95 // loop_body
                  %v580 = vld [vmem:[%s578] sm:$0xf]
                  %581 = vst [vmem:[%s579] sm:$0xf] %v580
                  %v582 = vld [vmem:[%s578 + $0x4] sm:$0xf]
                  %583 = vst [vmem:[%s579 + $0x4] sm:$0xf] %v582
                  %v584 = vld [vmem:[%s578 + $0x10] sm:$0xf]
                  %585 = vst [vmem:[%s579 + $0x8] sm:$0xf] %v584
                  %v586 = vld [vmem:[%s578 + $0x14] sm:$0xf]
                  %587 = vst [vmem:[%s579 + $0xc] sm:$0xf] %v586
                  %v588 = vld [vmem:[%s578 + $0x20] sm:$0xf]
                  %589 = vst [vmem:[%s579 + $0x10] sm:$0xf] %v588
                  %v590 = vld [vmem:[%s578 + $0x24] sm:$0xf]
                  %591 = vst [vmem:[%s579 + $0x14] sm:$0xf] %v590
                  %v592 = vld [vmem:[%s578 + $0x30] sm:$0xf]
                  %593 = vst [vmem:[%s579 + $0x18] sm:$0xf] %v592
                  %v594 = vld [vmem:[%s578 + $0x34] sm:$0xf]
                  %595 = vst [vmem:[%s579 + $0x1c] sm:$0xf] %v594
                  %v596 = vld [vmem:[%s578 + $0x40] sm:$0xf]
                  %597 = vst [vmem:[%s579 + $0x20] sm:$0xf] %v596
                  %v598 = vld [vmem:[%s578 + $0x44] sm:$0xf]
                  %599 = vst [vmem:[%s579 + $0x24] sm:$0xf] %v598
                  %v600 = vld [vmem:[%s578 + $0x50] sm:$0xf]
                  %601 = vst [vmem:[%s579 + $0x28] sm:$0xf] %v600
                  %v602 = vld [vmem:[%s578 + $0x54] sm:$0xf]
                  %603 = vst [vmem:[%s579 + $0x2c] sm:$0xf] %v602
                  %v604 = vld [vmem:[%s578 + $0x60] sm:$0xf]
                  %605 = vst [vmem:[%s579 + $0x30] sm:$0xf] %v604
                  %v606 = vld [vmem:[%s578 + $0x64] sm:$0xf]
                  %607 = vst [vmem:[%s579 + $0x34] sm:$0xf] %v606
                  %v608 = vld [vmem:[%s578 + $0x70] sm:$0xf]
                  %609 = vst [vmem:[%s579 + $0x38] sm:$0xf] %v608
                  %v610 = vld [vmem:[%s578 + $0x74] sm:$0xf]
                  %611 = vst [vmem:[%s579 + $0x3c] sm:$0xf] %v610
                  %v612 = vld [vmem:[%s578 + $0x80] sm:$0xf]
                  %613 = vst [vmem:[%s579 + $0x40] sm:$0xf] %v612
                  %v614 = vld [vmem:[%s578 + $0x84] sm:$0xf]
                  %615 = vst [vmem:[%s579 + $0x44] sm:$0xf] %v614
                  %v616 = vld [vmem:[%s578 + $0x90] sm:$0xf]
                  %617 = vst [vmem:[%s579 + $0x48] sm:$0xf] %v616
                  %v618 = vld [vmem:[%s578 + $0x94] sm:$0xf]
                  %619 = vst [vmem:[%s579 + $0x4c] sm:$0xf] %v618
                  %v620 = vld [vmem:[%s578 + $0xa0] sm:$0xf]
                  %621 = vst [vmem:[%s579 + $0x50] sm:$0xf] %v620
                  %v622 = vld [vmem:[%s578 + $0xa4] sm:$0xf]
                  %623 = vst [vmem:[%s579 + $0x54] sm:$0xf] %v622
                  %v624 = vld [vmem:[%s578 + $0xb0] sm:$0xf]
                  %625 = vst [vmem:[%s579 + $0x58] sm:$0xf] %v624
                  %v626 = vld [vmem:[%s578 + $0xb4] sm:$0xf]
                  %627 = vst [vmem:[%s579 + $0x5c] sm:$0xf] %v626
                  %v628 = vld [vmem:[%s578 + $0xc0] sm:$0xf]
                  %629 = vst [vmem:[%s579 + $0x60] sm:$0xf] %v628
                  %v630 = vld [vmem:[%s578 + $0xc4] sm:$0xf]
                  %631 = vst [vmem:[%s579 + $0x64] sm:$0xf] %v630
                  %v632 = vld [vmem:[%s578 + $0xd0] sm:$0xf]
                  %633 = vst [vmem:[%s579 + $0x68] sm:$0xf] %v632
                  %v634 = vld [vmem:[%s578 + $0xd4] sm:$0xf]
                  %635 = vst [vmem:[%s579 + $0x6c] sm:$0xf] %v634
                  %v636 = vld [vmem:[%s578 + $0xe0] sm:$0xf]
                  %637 = vst [vmem:[%s579 + $0x70] sm:$0xf] %v636
                  %v638 = vld [vmem:[%s578 + $0xe4] sm:$0xf]
                  %639 = vst [vmem:[%s579 + $0x74] sm:$0xf] %v638
                  %v640 = vld [vmem:[%s578 + $0xf0] sm:$0xf]
                  %641 = vst [vmem:[%s579 + $0x78] sm:$0xf] %v640
                  %v642 = vld [vmem:[%s578 + $0xf4] sm:$0xf]
                  %643 = vst [vmem:[%s579 + $0x7c] sm:$0xf] %v642
                  %v644 = vld [vmem:[%s578 + $0x100] sm:$0xf]
                  %645 = vst [vmem:[%s579 + $0x80] sm:$0xf] %v644
                  %v646 = vld [vmem:[%s578 + $0x104] sm:$0xf]
                  %647 = vst [vmem:[%s579 + $0x84] sm:$0xf] %v646
                  %v648 = vld [vmem:[%s578 + $0x110] sm:$0xf]
                  %649 = vst [vmem:[%s579 + $0x88] sm:$0xf] %v648
                  %v650 = vld [vmem:[%s578 + $0x114] sm:$0xf]
                  %651 = vst [vmem:[%s579 + $0x8c] sm:$0xf] %v650
                  %v652 = vld [vmem:[%s578 + $0x120] sm:$0xf]
                  %653 = vst [vmem:[%s579 + $0x90] sm:$0xf] %v652
                  %v654 = vld [vmem:[%s578 + $0x124] sm:$0xf]
                  %655 = vst [vmem:[%s579 + $0x94] sm:$0xf] %v654
                  %v656 = vld [vmem:[%s578 + $0x130] sm:$0xf]
                  %657 = vst [vmem:[%s579 + $0x98] sm:$0xf] %v656
                  %v658 = vld [vmem:[%s578 + $0x134] sm:$0xf]
                  %659 = vst [vmem:[%s579 + $0x9c] sm:$0xf] %v658
                  %v660 = vld [vmem:[%s578 + $0x140] sm:$0xf]
                  %661 = vst [vmem:[%s579 + $0xa0] sm:$0xf] %v660
                  %v662 = vld [vmem:[%s578 + $0x144] sm:$0xf]
                  %663 = vst [vmem:[%s579 + $0xa4] sm:$0xf] %v662
                  %v664 = vld [vmem:[%s578 + $0x150] sm:$0xf]
                  %665 = vst [vmem:[%s579 + $0xa8] sm:$0xf] %v664
                  %v666 = vld [vmem:[%s578 + $0x154] sm:$0xf]
                  %667 = vst [vmem:[%s579 + $0xac] sm:$0xf] %v666
                  %v668 = vld [vmem:[%s578 + $0x160] sm:$0xf]
                  %669 = vst [vmem:[%s579 + $0xb0] sm:$0xf] %v668
                  %v670 = vld [vmem:[%s578 + $0x164] sm:$0xf]
                  %671 = vst [vmem:[%s579 + $0xb4] sm:$0xf] %v670
                  %v672 = vld [vmem:[%s578 + $0x170] sm:$0xf]
                  %673 = vst [vmem:[%s579 + $0xb8] sm:$0xf] %v672
                  %v674 = vld [vmem:[%s578 + $0x174] sm:$0xf]
                  %675 = vst [vmem:[%s579 + $0xbc] sm:$0xf] %v674
                  %v676 = vld [vmem:[%s578 + $0x180] sm:$0xf]
                  %677 = vst [vmem:[%s579 + $0xc0] sm:$0xf] %v676
                  %v678 = vld [vmem:[%s578 + $0x184] sm:$0xf]
                  %679 = vst [vmem:[%s579 + $0xc4] sm:$0xf] %v678
                $region108: #{cspn_forward.20} parent=95 // loop_footer
                  %s577 = sadd.s32 1, %s573
                $region109: #{cspn_forward.20} parent=95 // loop_footer_branch
                  %572 = sbr.rel target = $region105
                $region110: #{cspn_forward.20} parent=95 // loop_exit
                  _
              $region96: #{cspn_forward.20} parent=80 // pred_fallthru
                _
            $region81: #{cspn_forward.20} parent=76 // pred_fallthru
              _
            // Predicated region
            $region82: #{cspn_forward.20} parent=76 // pred_check
              _
            $region83: #{cspn_forward.20} parent=76 // pred_check_branch
              %451 = sbr.rel (0) target = $region85
            $region84: #{cspn_forward.20} parent=76 // pred_region
              loop: start=0, step=1, limit=1
              $region86: #{cspn_forward.20} parent=84 // loop_pre_header
                _
              $region87: #{cspn_forward.20} parent=84 // loop_header
                %s454 = sphi 0, %s458
                %p455 = scmp.ge.s32.totalorder %s454, 1
                %s459 = sphi %s445, %s445
                %s460 = sphi %s440, %s440
              $region88: #{cspn_forward.20} parent=84 // loop_header_branch
                %457 = sbr.rel (%p455) target = $region92
              $region89: #{cspn_forward.20} parent=84 // loop_body
                %v461 = vld [vmem:[%s459] sm:$0xf]
                %462 = vst [vmem:[%s460] sm:$0xf] %v461
                %v463 = vld [vmem:[%s459 + $0x4] sm:$0xf]
                %464 = vst [vmem:[%s460 + $0x4] sm:$0xf] %v463
                %v465 = vld [vmem:[%s459 + $0x10] sm:$0xf]
                %466 = vst [vmem:[%s460 + $0x8] sm:$0xf] %v465
                %v467 = vld [vmem:[%s459 + $0x14] sm:$0xf]
                %468 = vst [vmem:[%s460 + $0xc] sm:$0xf] %v467
                %v469 = vld [vmem:[%s459 + $0x20] sm:$0xf]
                %470 = vst [vmem:[%s460 + $0x10] sm:$0xf] %v469
                %v471 = vld [vmem:[%s459 + $0x24] sm:$0xf]
                %472 = vst [vmem:[%s460 + $0x14] sm:$0xf] %v471
                %v473 = vld [vmem:[%s459 + $0x30] sm:$0xf]
                %474 = vst [vmem:[%s460 + $0x18] sm:$0xf] %v473
                %v475 = vld [vmem:[%s459 + $0x34] sm:$0xf]
                %476 = vst [vmem:[%s460 + $0x1c] sm:$0xf] %v475
                %v477 = vld [vmem:[%s459 + $0x40] sm:$0xf]
                %478 = vst [vmem:[%s460 + $0x20] sm:$0xf] %v477
                %v479 = vld [vmem:[%s459 + $0x44] sm:$0xf]
                %480 = vst [vmem:[%s460 + $0x24] sm:$0xf] %v479
                %v481 = vld [vmem:[%s459 + $0x50] sm:$0xf]
                %482 = vst [vmem:[%s460 + $0x28] sm:$0xf] %v481
                %v483 = vld [vmem:[%s459 + $0x54] sm:$0xf]
                %484 = vst [vmem:[%s460 + $0x2c] sm:$0xf] %v483
                %v485 = vld [vmem:[%s459 + $0x60] sm:$0xf]
                %486 = vst [vmem:[%s460 + $0x30] sm:$0xf] %v485
                %v487 = vld [vmem:[%s459 + $0x64] sm:$0xf]
                %488 = vst [vmem:[%s460 + $0x34] sm:$0xf] %v487
                %v489 = vld [vmem:[%s459 + $0x70] sm:$0xf]
                %490 = vst [vmem:[%s460 + $0x38] sm:$0xf] %v489
                %v491 = vld [vmem:[%s459 + $0x74] sm:$0xf]
                %492 = vst [vmem:[%s460 + $0x3c] sm:$0xf] %v491
                %v493 = vld [vmem:[%s459 + $0x80] sm:$0xf]
                %494 = vst [vmem:[%s460 + $0x40] sm:$0xf] %v493
                %v495 = vld [vmem:[%s459 + $0x84] sm:$0xf]
                %496 = vst [vmem:[%s460 + $0x44] sm:$0xf] %v495
                %v497 = vld [vmem:[%s459 + $0x90] sm:$0xf]
                %498 = vst [vmem:[%s460 + $0x48] sm:$0xf] %v497
                %v499 = vld [vmem:[%s459 + $0x94] sm:$0xf]
                %500 = vst [vmem:[%s460 + $0x4c] sm:$0xf] %v499
                %v501 = vld [vmem:[%s459 + $0xa0] sm:$0xf]
                %502 = vst [vmem:[%s460 + $0x50] sm:$0xf] %v501
                %v503 = vld [vmem:[%s459 + $0xa4] sm:$0xf]
                %504 = vst [vmem:[%s460 + $0x54] sm:$0xf] %v503
                %v505 = vld [vmem:[%s459 + $0xb0] sm:$0xf]
                %506 = vst [vmem:[%s460 + $0x58] sm:$0xf] %v505
                %v507 = vld [vmem:[%s459 + $0xb4] sm:$0xf]
                %508 = vst [vmem:[%s460 + $0x5c] sm:$0xf] %v507
                %v509 = vld [vmem:[%s459 + $0xc0] sm:$0xf]
                %510 = vst [vmem:[%s460 + $0x60] sm:$0xf] %v509
                %v511 = vld [vmem:[%s459 + $0xc4] sm:$0xf]
                %512 = vst [vmem:[%s460 + $0x64] sm:$0xf] %v511
                %v513 = vld [vmem:[%s459 + $0xd0] sm:$0xf]
                %514 = vst [vmem:[%s460 + $0x68] sm:$0xf] %v513
                %v515 = vld [vmem:[%s459 + $0xd4] sm:$0xf]
                %516 = vst [vmem:[%s460 + $0x6c] sm:$0xf] %v515
                %v517 = vld [vmem:[%s459 + $0xe0] sm:$0xf]
                %518 = vst [vmem:[%s460 + $0x70] sm:$0xf] %v517
                %v519 = vld [vmem:[%s459 + $0xe4] sm:$0xf]
                %520 = vst [vmem:[%s460 + $0x74] sm:$0xf] %v519
                %v521 = vld [vmem:[%s459 + $0xf0] sm:$0xf]
                %522 = vst [vmem:[%s460 + $0x78] sm:$0xf] %v521
                %v523 = vld [vmem:[%s459 + $0xf4] sm:$0xf]
                %524 = vst [vmem:[%s460 + $0x7c] sm:$0xf] %v523
                %v525 = vld [vmem:[%s459 + $0x100] sm:$0xf]
                %526 = vst [vmem:[%s460 + $0x80] sm:$0xf] %v525
                %v527 = vld [vmem:[%s459 + $0x104] sm:$0xf]
                %528 = vst [vmem:[%s460 + $0x84] sm:$0xf] %v527
                %v529 = vld [vmem:[%s459 + $0x110] sm:$0xf]
                %530 = vst [vmem:[%s460 + $0x88] sm:$0xf] %v529
                %v531 = vld [vmem:[%s459 + $0x114] sm:$0xf]
                %532 = vst [vmem:[%s460 + $0x8c] sm:$0xf] %v531
                %v533 = vld [vmem:[%s459 + $0x120] sm:$0xf]
                %534 = vst [vmem:[%s460 + $0x90] sm:$0xf] %v533
                %v535 = vld [vmem:[%s459 + $0x124] sm:$0xf]
                %536 = vst [vmem:[%s460 + $0x94] sm:$0xf] %v535
                %v537 = vld [vmem:[%s459 + $0x130] sm:$0xf]
                %538 = vst [vmem:[%s460 + $0x98] sm:$0xf] %v537
                %v539 = vld [vmem:[%s459 + $0x134] sm:$0xf]
                %540 = vst [vmem:[%s460 + $0x9c] sm:$0xf] %v539
                %v541 = vld [vmem:[%s459 + $0x140] sm:$0xf]
                %542 = vst [vmem:[%s460 + $0xa0] sm:$0xf] %v541
                %v543 = vld [vmem:[%s459 + $0x144] sm:$0xf]
                %544 = vst [vmem:[%s460 + $0xa4] sm:$0xf] %v543
                %v545 = vld [vmem:[%s459 + $0x150] sm:$0xf]
                %546 = vst [vmem:[%s460 + $0xa8] sm:$0xf] %v545
                %v547 = vld [vmem:[%s459 + $0x154] sm:$0xf]
                %548 = vst [vmem:[%s460 + $0xac] sm:$0xf] %v547
                %v549 = vld [vmem:[%s459 + $0x160] sm:$0xf]
                %550 = vst [vmem:[%s460 + $0xb0] sm:$0xf] %v549
                %v551 = vld [vmem:[%s459 + $0x164] sm:$0xf]
                %552 = vst [vmem:[%s460 + $0xb4] sm:$0xf] %v551
                %v553 = vld [vmem:[%s459 + $0x170] sm:$0xf]
                %554 = vst [vmem:[%s460 + $0xb8] sm:$0xf] %v553
                %v555 = vld [vmem:[%s459 + $0x174] sm:$0xf]
                %556 = vst [vmem:[%s460 + $0xbc] sm:$0xf] %v555
                %v557 = vld [vmem:[%s459 + $0x180] sm:$0xf]
                %558 = vst [vmem:[%s460 + $0xc0] sm:$0xf] %v557
                %v559 = vld [vmem:[%s459 + $0x184] sm:$0xf]
                %560 = vst [vmem:[%s460 + $0xc4] sm:$0xf] %v559
              $region90: #{cspn_forward.20} parent=84 // loop_footer
                %s458 = sadd.s32 1, %s454
              $region91: #{cspn_forward.20} parent=84 // loop_footer_branch
                %453 = sbr.rel target = $region87
              $region92: #{cspn_forward.20} parent=84 // loop_exit
                _
            $region85: #{cspn_forward.20} parent=76 // pred_fallthru
              _
          $region77: #{cspn_forward.20} parent=72 // pred_fallthru
            _
          %680 = vnop
        $region73: #{cspn_forward.20} parent=15 // pred_fallthru
          _
        // Predicated region
        $region111: #{cspn_forward.20} parent=15 // pred_check
          %p681 = pneg %p182
        $region112: #{cspn_forward.20} parent=15 // pred_check_branch
          %683 = sbr.rel (%p681) target = $region114
        $region113: #{cspn_forward.20} parent=15 // pred_region
          %s684 = sand.u32 %s172, 1
          %s685 = sand.u32 %s172, 1
          %s686 = smul.addr %s685, 392
          %s687 = scalar_lea.vmem [#allocation4], %s686
          %s688 = smul.u32 2, %s22
          %s689 = smul.addr %s21, 2
          %s690 = sadd.s32 %s688, %s689
          %s691 = smul.addr %s690, 4
          %s692 = scalar_lea.vmem %s5, %s691
          // Predicated region
          $region115: #{cspn_forward.20} parent=113 // pred_check
            _
          $region116: #{cspn_forward.20} parent=113 // pred_check_branch
            %694 = sbr.rel (0) target = $region118
          $region117: #{cspn_forward.20} parent=113 // pred_region
            // Predicated region
            $region119: #{cspn_forward.20} parent=117 // pred_check
              _
            $region120: #{cspn_forward.20} parent=117 // pred_check_branch
              %696 = sbr.rel target = $region122
            $region121: #{cspn_forward.20} parent=117 // pred_region
              // Predicated region
              $region134: #{cspn_forward.20} parent=121 // pred_check
                _
              $region135: #{cspn_forward.20} parent=121 // pred_check_branch
                %905 = sbr.rel (0) target = $region137
              $region136: #{cspn_forward.20} parent=121 // pred_region
                loop: start=0, step=1, limit=1
                $region138: #{cspn_forward.20} parent=136 // loop_pre_header
                  _
                $region139: #{cspn_forward.20} parent=136 // loop_header
                  %s907 = sphi 0, %s911
                  %p908 = scmp.ge.s32.totalorder %s907, 1
                  %s912 = sphi %s692, %s692
                  %s913 = sphi %s687, %s687
                $region140: #{cspn_forward.20} parent=136 // loop_header_branch
                  %910 = sbr.rel (%p908) target = $region144
                $region141: #{cspn_forward.20} parent=136 // loop_body
                  _
                $region142: #{cspn_forward.20} parent=136 // loop_footer
                  %s911 = sadd.s32 1, %s907
                $region143: #{cspn_forward.20} parent=136 // loop_footer_branch
                  %906 = sbr.rel target = $region139
                $region144: #{cspn_forward.20} parent=136 // loop_exit
                  _
                loop: start=0, step=1, limit=1
                $region145: #{cspn_forward.20} parent=136 // loop_pre_header
                  _
                $region146: #{cspn_forward.20} parent=136 // loop_header
                  %s916 = sphi 0, %s920
                  %p917 = scmp.ge.s32.totalorder %s916, 1
                  %s921 = sphi %s692, %s692
                  %s922 = sphi %s687, %s687
                $region147: #{cspn_forward.20} parent=136 // loop_header_branch
                  %919 = sbr.rel (%p917) target = $region151
                $region148: #{cspn_forward.20} parent=136 // loop_body
                  %v923 = vld [vmem:[%s921] sm:$0xf]
                  %924 = vst [vmem:[%s922] sm:$0xf] %v923
                  %v925 = vld [vmem:[%s921 + $0x4] sm:$0xf]
                  %926 = vst [vmem:[%s922 + $0x4] sm:$0xf] %v925
                  %v927 = vld [vmem:[%s921 + $0x10] sm:$0xf]
                  %928 = vst [vmem:[%s922 + $0x8] sm:$0xf] %v927
                  %v929 = vld [vmem:[%s921 + $0x14] sm:$0xf]
                  %930 = vst [vmem:[%s922 + $0xc] sm:$0xf] %v929
                  %v931 = vld [vmem:[%s921 + $0x20] sm:$0xf]
                  %932 = vst [vmem:[%s922 + $0x10] sm:$0xf] %v931
                  %v933 = vld [vmem:[%s921 + $0x24] sm:$0xf]
                  %934 = vst [vmem:[%s922 + $0x14] sm:$0xf] %v933
                  %v935 = vld [vmem:[%s921 + $0x30] sm:$0xf]
                  %936 = vst [vmem:[%s922 + $0x18] sm:$0xf] %v935
                  %v937 = vld [vmem:[%s921 + $0x34] sm:$0xf]
                  %938 = vst [vmem:[%s922 + $0x1c] sm:$0xf] %v937
                  %v939 = vld [vmem:[%s921 + $0x40] sm:$0xf]
                  %940 = vst [vmem:[%s922 + $0x20] sm:$0xf] %v939
                  %v941 = vld [vmem:[%s921 + $0x44] sm:$0xf]
                  %942 = vst [vmem:[%s922 + $0x24] sm:$0xf] %v941
                  %v943 = vld [vmem:[%s921 + $0x50] sm:$0xf]
                  %944 = vst [vmem:[%s922 + $0x28] sm:$0xf] %v943
                  %v945 = vld [vmem:[%s921 + $0x54] sm:$0xf]
                  %946 = vst [vmem:[%s922 + $0x2c] sm:$0xf] %v945
                  %v947 = vld [vmem:[%s921 + $0x60] sm:$0xf]
                  %948 = vst [vmem:[%s922 + $0x30] sm:$0xf] %v947
                  %v949 = vld [vmem:[%s921 + $0x64] sm:$0xf]
                  %950 = vst [vmem:[%s922 + $0x34] sm:$0xf] %v949
                  %v951 = vld [vmem:[%s921 + $0x70] sm:$0xf]
                  %952 = vst [vmem:[%s922 + $0x38] sm:$0xf] %v951
                  %v953 = vld [vmem:[%s921 + $0x74] sm:$0xf]
                  %954 = vst [vmem:[%s922 + $0x3c] sm:$0xf] %v953
                  %v955 = vld [vmem:[%s921 + $0x80] sm:$0xf]
                  %956 = vst [vmem:[%s922 + $0x40] sm:$0xf] %v955
                  %v957 = vld [vmem:[%s921 + $0x84] sm:$0xf]
                  %958 = vst [vmem:[%s922 + $0x44] sm:$0xf] %v957
                  %v959 = vld [vmem:[%s921 + $0x90] sm:$0xf]
                  %960 = vst [vmem:[%s922 + $0x48] sm:$0xf] %v959
                  %v961 = vld [vmem:[%s921 + $0x94] sm:$0xf]
                  %962 = vst [vmem:[%s922 + $0x4c] sm:$0xf] %v961
                  %v963 = vld [vmem:[%s921 + $0xa0] sm:$0xf]
                  %964 = vst [vmem:[%s922 + $0x50] sm:$0xf] %v963
                  %v965 = vld [vmem:[%s921 + $0xa4] sm:$0xf]
                  %966 = vst [vmem:[%s922 + $0x54] sm:$0xf] %v965
                  %v967 = vld [vmem:[%s921 + $0xb0] sm:$0xf]
                  %968 = vst [vmem:[%s922 + $0x58] sm:$0xf] %v967
                  %v969 = vld [vmem:[%s921 + $0xb4] sm:$0xf]
                  %970 = vst [vmem:[%s922 + $0x5c] sm:$0xf] %v969
                  %v971 = vld [vmem:[%s921 + $0xc0] sm:$0xf]
                  %972 = vst [vmem:[%s922 + $0x60] sm:$0xf] %v971
                  %v973 = vld [vmem:[%s921 + $0xc4] sm:$0xf]
                  %974 = vst [vmem:[%s922 + $0x64] sm:$0xf] %v973
                  %v975 = vld [vmem:[%s921 + $0xd0] sm:$0xf]
                  %976 = vst [vmem:[%s922 + $0x68] sm:$0xf] %v975
                  %v977 = vld [vmem:[%s921 + $0xd4] sm:$0xf]
                  %978 = vst [vmem:[%s922 + $0x6c] sm:$0xf] %v977
                  %v979 = vld [vmem:[%s921 + $0xe0] sm:$0xf]
                  %980 = vst [vmem:[%s922 + $0x70] sm:$0xf] %v979
                  %v981 = vld [vmem:[%s921 + $0xe4] sm:$0xf]
                  %982 = vst [vmem:[%s922 + $0x74] sm:$0xf] %v981
                  %v983 = vld [vmem:[%s921 + $0xf0] sm:$0xf]
                  %984 = vst [vmem:[%s922 + $0x78] sm:$0xf] %v983
                  %v985 = vld [vmem:[%s921 + $0xf4] sm:$0xf]
                  %986 = vst [vmem:[%s922 + $0x7c] sm:$0xf] %v985
                  %v987 = vld [vmem:[%s921 + $0x100] sm:$0xf]
                  %988 = vst [vmem:[%s922 + $0x80] sm:$0xf] %v987
                  %v989 = vld [vmem:[%s921 + $0x104] sm:$0xf]
                  %990 = vst [vmem:[%s922 + $0x84] sm:$0xf] %v989
                  %v991 = vld [vmem:[%s921 + $0x110] sm:$0xf]
                  %992 = vst [vmem:[%s922 + $0x88] sm:$0xf] %v991
                  %v993 = vld [vmem:[%s921 + $0x114] sm:$0xf]
                  %994 = vst [vmem:[%s922 + $0x8c] sm:$0xf] %v993
                  %v995 = vld [vmem:[%s921 + $0x120] sm:$0xf]
                  %996 = vst [vmem:[%s922 + $0x90] sm:$0xf] %v995
                  %v997 = vld [vmem:[%s921 + $0x124] sm:$0xf]
                  %998 = vst [vmem:[%s922 + $0x94] sm:$0xf] %v997
                  %v999 = vld [vmem:[%s921 + $0x130] sm:$0xf]
                  %1000 = vst [vmem:[%s922 + $0x98] sm:$0xf] %v999
                  %v1001 = vld [vmem:[%s921 + $0x134] sm:$0xf]
                  %1002 = vst [vmem:[%s922 + $0x9c] sm:$0xf] %v1001
                  %v1003 = vld [vmem:[%s921 + $0x140] sm:$0xf]
                  %1004 = vst [vmem:[%s922 + $0xa0] sm:$0xf] %v1003
                  %v1005 = vld [vmem:[%s921 + $0x144] sm:$0xf]
                  %1006 = vst [vmem:[%s922 + $0xa4] sm:$0xf] %v1005
                  %v1007 = vld [vmem:[%s921 + $0x150] sm:$0xf]
                  %1008 = vst [vmem:[%s922 + $0xa8] sm:$0xf] %v1007
                  %v1009 = vld [vmem:[%s921 + $0x154] sm:$0xf]
                  %1010 = vst [vmem:[%s922 + $0xac] sm:$0xf] %v1009
                  %v1011 = vld [vmem:[%s921 + $0x160] sm:$0xf]
                  %1012 = vst [vmem:[%s922 + $0xb0] sm:$0xf] %v1011
                  %v1013 = vld [vmem:[%s921 + $0x164] sm:$0xf]
                  %1014 = vst [vmem:[%s922 + $0xb4] sm:$0xf] %v1013
                  %v1015 = vld [vmem:[%s921 + $0x170] sm:$0xf]
                  %1016 = vst [vmem:[%s922 + $0xb8] sm:$0xf] %v1015
                  %v1017 = vld [vmem:[%s921 + $0x174] sm:$0xf]
                  %1018 = vst [vmem:[%s922 + $0xbc] sm:$0xf] %v1017
                  %v1019 = vld [vmem:[%s921 + $0x180] sm:$0xf]
                  %1020 = vst [vmem:[%s922 + $0xc0] sm:$0xf] %v1019
                  %v1021 = vld [vmem:[%s921 + $0x184] sm:$0xf]
                  %1022 = vst [vmem:[%s922 + $0xc4] sm:$0xf] %v1021
                  %v1023 = vld [vmem:[%s921 + $0x190] sm:$0xf]
                  %1024 = vst [vmem:[%s922 + $0xc8] sm:$0xf] %v1023
                  %v1025 = vld [vmem:[%s921 + $0x194] sm:$0xf]
                  %1026 = vst [vmem:[%s922 + $0xcc] sm:$0xf] %v1025
                  %v1027 = vld [vmem:[%s921 + $0x1a0] sm:$0xf]
                  %1028 = vst [vmem:[%s922 + $0xd0] sm:$0xf] %v1027
                  %v1029 = vld [vmem:[%s921 + $0x1a4] sm:$0xf]
                  %1030 = vst [vmem:[%s922 + $0xd4] sm:$0xf] %v1029
                  %v1031 = vld [vmem:[%s921 + $0x1b0] sm:$0xf]
                  %1032 = vst [vmem:[%s922 + $0xd8] sm:$0xf] %v1031
                  %v1033 = vld [vmem:[%s921 + $0x1b4] sm:$0xf]
                  %1034 = vst [vmem:[%s922 + $0xdc] sm:$0xf] %v1033
                  %v1035 = vld [vmem:[%s921 + $0x1c0] sm:$0xf]
                  %1036 = vst [vmem:[%s922 + $0xe0] sm:$0xf] %v1035
                  %v1037 = vld [vmem:[%s921 + $0x1c4] sm:$0xf]
                  %1038 = vst [vmem:[%s922 + $0xe4] sm:$0xf] %v1037
                  %v1039 = vld [vmem:[%s921 + $0x1d0] sm:$0xf]
                  %1040 = vst [vmem:[%s922 + $0xe8] sm:$0xf] %v1039
                  %v1041 = vld [vmem:[%s921 + $0x1d4] sm:$0xf]
                  %1042 = vst [vmem:[%s922 + $0xec] sm:$0xf] %v1041
                  %v1043 = vld [vmem:[%s921 + $0x1e0] sm:$0xf]
                  %1044 = vst [vmem:[%s922 + $0xf0] sm:$0xf] %v1043
                  %v1045 = vld [vmem:[%s921 + $0x1e4] sm:$0xf]
                  %1046 = vst [vmem:[%s922 + $0xf4] sm:$0xf] %v1045
                  %v1047 = vld [vmem:[%s921 + $0x1f0] sm:$0xf]
                  %1048 = vst [vmem:[%s922 + $0xf8] sm:$0xf] %v1047
                  %v1049 = vld [vmem:[%s921 + $0x1f4] sm:$0xf]
                  %1050 = vst [vmem:[%s922 + $0xfc] sm:$0xf] %v1049
                  %v1051 = vld [vmem:[%s921 + $0x200] sm:$0xf]
                  %1052 = vst [vmem:[%s922 + $0x100] sm:$0xf] %v1051
                  %v1053 = vld [vmem:[%s921 + $0x204] sm:$0xf]
                  %1054 = vst [vmem:[%s922 + $0x104] sm:$0xf] %v1053
                  %v1055 = vld [vmem:[%s921 + $0x210] sm:$0xf]
                  %1056 = vst [vmem:[%s922 + $0x108] sm:$0xf] %v1055
                  %v1057 = vld [vmem:[%s921 + $0x214] sm:$0xf]
                  %1058 = vst [vmem:[%s922 + $0x10c] sm:$0xf] %v1057
                  %v1059 = vld [vmem:[%s921 + $0x220] sm:$0xf]
                  %1060 = vst [vmem:[%s922 + $0x110] sm:$0xf] %v1059
                  %v1061 = vld [vmem:[%s921 + $0x224] sm:$0xf]
                  %1062 = vst [vmem:[%s922 + $0x114] sm:$0xf] %v1061
                  %v1063 = vld [vmem:[%s921 + $0x230] sm:$0xf]
                  %1064 = vst [vmem:[%s922 + $0x118] sm:$0xf] %v1063
                  %v1065 = vld [vmem:[%s921 + $0x234] sm:$0xf]
                  %1066 = vst [vmem:[%s922 + $0x11c] sm:$0xf] %v1065
                  %v1067 = vld [vmem:[%s921 + $0x240] sm:$0xf]
                  %1068 = vst [vmem:[%s922 + $0x120] sm:$0xf] %v1067
                  %v1069 = vld [vmem:[%s921 + $0x244] sm:$0xf]
                  %1070 = vst [vmem:[%s922 + $0x124] sm:$0xf] %v1069
                  %v1071 = vld [vmem:[%s921 + $0x250] sm:$0xf]
                  %1072 = vst [vmem:[%s922 + $0x128] sm:$0xf] %v1071
                  %v1073 = vld [vmem:[%s921 + $0x254] sm:$0xf]
                  %1074 = vst [vmem:[%s922 + $0x12c] sm:$0xf] %v1073
                  %v1075 = vld [vmem:[%s921 + $0x260] sm:$0xf]
                  %1076 = vst [vmem:[%s922 + $0x130] sm:$0xf] %v1075
                  %v1077 = vld [vmem:[%s921 + $0x264] sm:$0xf]
                  %1078 = vst [vmem:[%s922 + $0x134] sm:$0xf] %v1077
                  %v1079 = vld [vmem:[%s921 + $0x270] sm:$0xf]
                  %1080 = vst [vmem:[%s922 + $0x138] sm:$0xf] %v1079
                  %v1081 = vld [vmem:[%s921 + $0x274] sm:$0xf]
                  %1082 = vst [vmem:[%s922 + $0x13c] sm:$0xf] %v1081
                  %v1083 = vld [vmem:[%s921 + $0x280] sm:$0xf]
                  %1084 = vst [vmem:[%s922 + $0x140] sm:$0xf] %v1083
                  %v1085 = vld [vmem:[%s921 + $0x284] sm:$0xf]
                  %1086 = vst [vmem:[%s922 + $0x144] sm:$0xf] %v1085
                  %v1087 = vld [vmem:[%s921 + $0x290] sm:$0xf]
                  %1088 = vst [vmem:[%s922 + $0x148] sm:$0xf] %v1087
                  %v1089 = vld [vmem:[%s921 + $0x294] sm:$0xf]
                  %1090 = vst [vmem:[%s922 + $0x14c] sm:$0xf] %v1089
                  %v1091 = vld [vmem:[%s921 + $0x2a0] sm:$0xf]
                  %1092 = vst [vmem:[%s922 + $0x150] sm:$0xf] %v1091
                  %v1093 = vld [vmem:[%s921 + $0x2a4] sm:$0xf]
                  %1094 = vst [vmem:[%s922 + $0x154] sm:$0xf] %v1093
                  %v1095 = vld [vmem:[%s921 + $0x2b0] sm:$0xf]
                  %1096 = vst [vmem:[%s922 + $0x158] sm:$0xf] %v1095
                  %v1097 = vld [vmem:[%s921 + $0x2b4] sm:$0xf]
                  %1098 = vst [vmem:[%s922 + $0x15c] sm:$0xf] %v1097
                  %v1099 = vld [vmem:[%s921 + $0x2c0] sm:$0xf]
                  %1100 = vst [vmem:[%s922 + $0x160] sm:$0xf] %v1099
                  %v1101 = vld [vmem:[%s921 + $0x2c4] sm:$0xf]
                  %1102 = vst [vmem:[%s922 + $0x164] sm:$0xf] %v1101
                  %v1103 = vld [vmem:[%s921 + $0x2d0] sm:$0xf]
                  %1104 = vst [vmem:[%s922 + $0x168] sm:$0xf] %v1103
                  %v1105 = vld [vmem:[%s921 + $0x2d4] sm:$0xf]
                  %1106 = vst [vmem:[%s922 + $0x16c] sm:$0xf] %v1105
                  %v1107 = vld [vmem:[%s921 + $0x2e0] sm:$0xf]
                  %1108 = vst [vmem:[%s922 + $0x170] sm:$0xf] %v1107
                  %v1109 = vld [vmem:[%s921 + $0x2e4] sm:$0xf]
                  %1110 = vst [vmem:[%s922 + $0x174] sm:$0xf] %v1109
                  %v1111 = vld [vmem:[%s921 + $0x2f0] sm:$0xf]
                  %1112 = vst [vmem:[%s922 + $0x178] sm:$0xf] %v1111
                  %v1113 = vld [vmem:[%s921 + $0x2f4] sm:$0xf]
                  %1114 = vst [vmem:[%s922 + $0x17c] sm:$0xf] %v1113
                  %v1115 = vld [vmem:[%s921 + $0x300] sm:$0xf]
                  %1116 = vst [vmem:[%s922 + $0x180] sm:$0xf] %v1115
                  %v1117 = vld [vmem:[%s921 + $0x304] sm:$0xf]
                  %1118 = vst [vmem:[%s922 + $0x184] sm:$0xf] %v1117
                $region149: #{cspn_forward.20} parent=136 // loop_footer
                  %s920 = sadd.s32 1, %s916
                $region150: #{cspn_forward.20} parent=136 // loop_footer_branch
                  %915 = sbr.rel target = $region146
                $region151: #{cspn_forward.20} parent=136 // loop_exit
                  _
              $region137: #{cspn_forward.20} parent=121 // pred_fallthru
                _
            $region122: #{cspn_forward.20} parent=117 // pred_fallthru
              _
            // Predicated region
            $region123: #{cspn_forward.20} parent=117 // pred_check
              _
            $region124: #{cspn_forward.20} parent=117 // pred_check_branch
              %698 = sbr.rel (0) target = $region126
            $region125: #{cspn_forward.20} parent=117 // pred_region
              loop: start=0, step=1, limit=1
              $region127: #{cspn_forward.20} parent=125 // loop_pre_header
                _
              $region128: #{cspn_forward.20} parent=125 // loop_header
                %s701 = sphi 0, %s705
                %p702 = scmp.ge.s32.totalorder %s701, 1
                %s706 = sphi %s692, %s692
                %s707 = sphi %s687, %s687
              $region129: #{cspn_forward.20} parent=125 // loop_header_branch
                %704 = sbr.rel (%p702) target = $region133
              $region130: #{cspn_forward.20} parent=125 // loop_body
                %v708 = vld [vmem:[%s706] sm:$0xf]
                %709 = vst [vmem:[%s707] sm:$0xf] %v708
                %v710 = vld [vmem:[%s706 + $0x4] sm:$0xf]
                %711 = vst [vmem:[%s707 + $0x4] sm:$0xf] %v710
                %v712 = vld [vmem:[%s706 + $0x10] sm:$0xf]
                %713 = vst [vmem:[%s707 + $0x8] sm:$0xf] %v712
                %v714 = vld [vmem:[%s706 + $0x14] sm:$0xf]
                %715 = vst [vmem:[%s707 + $0xc] sm:$0xf] %v714
                %v716 = vld [vmem:[%s706 + $0x20] sm:$0xf]
                %717 = vst [vmem:[%s707 + $0x10] sm:$0xf] %v716
                %v718 = vld [vmem:[%s706 + $0x24] sm:$0xf]
                %719 = vst [vmem:[%s707 + $0x14] sm:$0xf] %v718
                %v720 = vld [vmem:[%s706 + $0x30] sm:$0xf]
                %721 = vst [vmem:[%s707 + $0x18] sm:$0xf] %v720
                %v722 = vld [vmem:[%s706 + $0x34] sm:$0xf]
                %723 = vst [vmem:[%s707 + $0x1c] sm:$0xf] %v722
                %v724 = vld [vmem:[%s706 + $0x40] sm:$0xf]
                %725 = vst [vmem:[%s707 + $0x20] sm:$0xf] %v724
                %v726 = vld [vmem:[%s706 + $0x44] sm:$0xf]
                %727 = vst [vmem:[%s707 + $0x24] sm:$0xf] %v726
                %v728 = vld [vmem:[%s706 + $0x50] sm:$0xf]
                %729 = vst [vmem:[%s707 + $0x28] sm:$0xf] %v728
                %v730 = vld [vmem:[%s706 + $0x54] sm:$0xf]
                %731 = vst [vmem:[%s707 + $0x2c] sm:$0xf] %v730
                %v732 = vld [vmem:[%s706 + $0x60] sm:$0xf]
                %733 = vst [vmem:[%s707 + $0x30] sm:$0xf] %v732
                %v734 = vld [vmem:[%s706 + $0x64] sm:$0xf]
                %735 = vst [vmem:[%s707 + $0x34] sm:$0xf] %v734
                %v736 = vld [vmem:[%s706 + $0x70] sm:$0xf]
                %737 = vst [vmem:[%s707 + $0x38] sm:$0xf] %v736
                %v738 = vld [vmem:[%s706 + $0x74] sm:$0xf]
                %739 = vst [vmem:[%s707 + $0x3c] sm:$0xf] %v738
                %v740 = vld [vmem:[%s706 + $0x80] sm:$0xf]
                %741 = vst [vmem:[%s707 + $0x40] sm:$0xf] %v740
                %v742 = vld [vmem:[%s706 + $0x84] sm:$0xf]
                %743 = vst [vmem:[%s707 + $0x44] sm:$0xf] %v742
                %v744 = vld [vmem:[%s706 + $0x90] sm:$0xf]
                %745 = vst [vmem:[%s707 + $0x48] sm:$0xf] %v744
                %v746 = vld [vmem:[%s706 + $0x94] sm:$0xf]
                %747 = vst [vmem:[%s707 + $0x4c] sm:$0xf] %v746
                %v748 = vld [vmem:[%s706 + $0xa0] sm:$0xf]
                %749 = vst [vmem:[%s707 + $0x50] sm:$0xf] %v748
                %v750 = vld [vmem:[%s706 + $0xa4] sm:$0xf]
                %751 = vst [vmem:[%s707 + $0x54] sm:$0xf] %v750
                %v752 = vld [vmem:[%s706 + $0xb0] sm:$0xf]
                %753 = vst [vmem:[%s707 + $0x58] sm:$0xf] %v752
                %v754 = vld [vmem:[%s706 + $0xb4] sm:$0xf]
                %755 = vst [vmem:[%s707 + $0x5c] sm:$0xf] %v754
                %v756 = vld [vmem:[%s706 + $0xc0] sm:$0xf]
                %757 = vst [vmem:[%s707 + $0x60] sm:$0xf] %v756
                %v758 = vld [vmem:[%s706 + $0xc4] sm:$0xf]
                %759 = vst [vmem:[%s707 + $0x64] sm:$0xf] %v758
                %v760 = vld [vmem:[%s706 + $0xd0] sm:$0xf]
                %761 = vst [vmem:[%s707 + $0x68] sm:$0xf] %v760
                %v762 = vld [vmem:[%s706 + $0xd4] sm:$0xf]
                %763 = vst [vmem:[%s707 + $0x6c] sm:$0xf] %v762
                %v764 = vld [vmem:[%s706 + $0xe0] sm:$0xf]
                %765 = vst [vmem:[%s707 + $0x70] sm:$0xf] %v764
                %v766 = vld [vmem:[%s706 + $0xe4] sm:$0xf]
                %767 = vst [vmem:[%s707 + $0x74] sm:$0xf] %v766
                %v768 = vld [vmem:[%s706 + $0xf0] sm:$0xf]
                %769 = vst [vmem:[%s707 + $0x78] sm:$0xf] %v768
                %v770 = vld [vmem:[%s706 + $0xf4] sm:$0xf]
                %771 = vst [vmem:[%s707 + $0x7c] sm:$0xf] %v770
                %v772 = vld [vmem:[%s706 + $0x100] sm:$0xf]
                %773 = vst [vmem:[%s707 + $0x80] sm:$0xf] %v772
                %v774 = vld [vmem:[%s706 + $0x104] sm:$0xf]
                %775 = vst [vmem:[%s707 + $0x84] sm:$0xf] %v774
                %v776 = vld [vmem:[%s706 + $0x110] sm:$0xf]
                %777 = vst [vmem:[%s707 + $0x88] sm:$0xf] %v776
                %v778 = vld [vmem:[%s706 + $0x114] sm:$0xf]
                %779 = vst [vmem:[%s707 + $0x8c] sm:$0xf] %v778
                %v780 = vld [vmem:[%s706 + $0x120] sm:$0xf]
                %781 = vst [vmem:[%s707 + $0x90] sm:$0xf] %v780
                %v782 = vld [vmem:[%s706 + $0x124] sm:$0xf]
                %783 = vst [vmem:[%s707 + $0x94] sm:$0xf] %v782
                %v784 = vld [vmem:[%s706 + $0x130] sm:$0xf]
                %785 = vst [vmem:[%s707 + $0x98] sm:$0xf] %v784
                %v786 = vld [vmem:[%s706 + $0x134] sm:$0xf]
                %787 = vst [vmem:[%s707 + $0x9c] sm:$0xf] %v786
                %v788 = vld [vmem:[%s706 + $0x140] sm:$0xf]
                %789 = vst [vmem:[%s707 + $0xa0] sm:$0xf] %v788
                %v790 = vld [vmem:[%s706 + $0x144] sm:$0xf]
                %791 = vst [vmem:[%s707 + $0xa4] sm:$0xf] %v790
                %v792 = vld [vmem:[%s706 + $0x150] sm:$0xf]
                %793 = vst [vmem:[%s707 + $0xa8] sm:$0xf] %v792
                %v794 = vld [vmem:[%s706 + $0x154] sm:$0xf]
                %795 = vst [vmem:[%s707 + $0xac] sm:$0xf] %v794
                %v796 = vld [vmem:[%s706 + $0x160] sm:$0xf]
                %797 = vst [vmem:[%s707 + $0xb0] sm:$0xf] %v796
                %v798 = vld [vmem:[%s706 + $0x164] sm:$0xf]
                %799 = vst [vmem:[%s707 + $0xb4] sm:$0xf] %v798
                %v800 = vld [vmem:[%s706 + $0x170] sm:$0xf]
                %801 = vst [vmem:[%s707 + $0xb8] sm:$0xf] %v800
                %v802 = vld [vmem:[%s706 + $0x174] sm:$0xf]
                %803 = vst [vmem:[%s707 + $0xbc] sm:$0xf] %v802
                %v804 = vld [vmem:[%s706 + $0x180] sm:$0xf]
                %805 = vst [vmem:[%s707 + $0xc0] sm:$0xf] %v804
                %v806 = vld [vmem:[%s706 + $0x184] sm:$0xf]
                %807 = vst [vmem:[%s707 + $0xc4] sm:$0xf] %v806
                %v808 = vld [vmem:[%s706 + $0x190] sm:$0xf]
                %809 = vst [vmem:[%s707 + $0xc8] sm:$0xf] %v808
                %v810 = vld [vmem:[%s706 + $0x194] sm:$0xf]
                %811 = vst [vmem:[%s707 + $0xcc] sm:$0xf] %v810
                %v812 = vld [vmem:[%s706 + $0x1a0] sm:$0xf]
                %813 = vst [vmem:[%s707 + $0xd0] sm:$0xf] %v812
                %v814 = vld [vmem:[%s706 + $0x1a4] sm:$0xf]
                %815 = vst [vmem:[%s707 + $0xd4] sm:$0xf] %v814
                %v816 = vld [vmem:[%s706 + $0x1b0] sm:$0xf]
                %817 = vst [vmem:[%s707 + $0xd8] sm:$0xf] %v816
                %v818 = vld [vmem:[%s706 + $0x1b4] sm:$0xf]
                %819 = vst [vmem:[%s707 + $0xdc] sm:$0xf] %v818
                %v820 = vld [vmem:[%s706 + $0x1c0] sm:$0xf]
                %821 = vst [vmem:[%s707 + $0xe0] sm:$0xf] %v820
                %v822 = vld [vmem:[%s706 + $0x1c4] sm:$0xf]
                %823 = vst [vmem:[%s707 + $0xe4] sm:$0xf] %v822
                %v824 = vld [vmem:[%s706 + $0x1d0] sm:$0xf]
                %825 = vst [vmem:[%s707 + $0xe8] sm:$0xf] %v824
                %v826 = vld [vmem:[%s706 + $0x1d4] sm:$0xf]
                %827 = vst [vmem:[%s707 + $0xec] sm:$0xf] %v826
                %v828 = vld [vmem:[%s706 + $0x1e0] sm:$0xf]
                %829 = vst [vmem:[%s707 + $0xf0] sm:$0xf] %v828
                %v830 = vld [vmem:[%s706 + $0x1e4] sm:$0xf]
                %831 = vst [vmem:[%s707 + $0xf4] sm:$0xf] %v830
                %v832 = vld [vmem:[%s706 + $0x1f0] sm:$0xf]
                %833 = vst [vmem:[%s707 + $0xf8] sm:$0xf] %v832
                %v834 = vld [vmem:[%s706 + $0x1f4] sm:$0xf]
                %835 = vst [vmem:[%s707 + $0xfc] sm:$0xf] %v834
                %v836 = vld [vmem:[%s706 + $0x200] sm:$0xf]
                %837 = vst [vmem:[%s707 + $0x100] sm:$0xf] %v836
                %v838 = vld [vmem:[%s706 + $0x204] sm:$0xf]
                %839 = vst [vmem:[%s707 + $0x104] sm:$0xf] %v838
                %v840 = vld [vmem:[%s706 + $0x210] sm:$0xf]
                %841 = vst [vmem:[%s707 + $0x108] sm:$0xf] %v840
                %v842 = vld [vmem:[%s706 + $0x214] sm:$0xf]
                %843 = vst [vmem:[%s707 + $0x10c] sm:$0xf] %v842
                %v844 = vld [vmem:[%s706 + $0x220] sm:$0xf]
                %845 = vst [vmem:[%s707 + $0x110] sm:$0xf] %v844
                %v846 = vld [vmem:[%s706 + $0x224] sm:$0xf]
                %847 = vst [vmem:[%s707 + $0x114] sm:$0xf] %v846
                %v848 = vld [vmem:[%s706 + $0x230] sm:$0xf]
                %849 = vst [vmem:[%s707 + $0x118] sm:$0xf] %v848
                %v850 = vld [vmem:[%s706 + $0x234] sm:$0xf]
                %851 = vst [vmem:[%s707 + $0x11c] sm:$0xf] %v850
                %v852 = vld [vmem:[%s706 + $0x240] sm:$0xf]
                %853 = vst [vmem:[%s707 + $0x120] sm:$0xf] %v852
                %v854 = vld [vmem:[%s706 + $0x244] sm:$0xf]
                %855 = vst [vmem:[%s707 + $0x124] sm:$0xf] %v854
                %v856 = vld [vmem:[%s706 + $0x250] sm:$0xf]
                %857 = vst [vmem:[%s707 + $0x128] sm:$0xf] %v856
                %v858 = vld [vmem:[%s706 + $0x254] sm:$0xf]
                %859 = vst [vmem:[%s707 + $0x12c] sm:$0xf] %v858
                %v860 = vld [vmem:[%s706 + $0x260] sm:$0xf]
                %861 = vst [vmem:[%s707 + $0x130] sm:$0xf] %v860
                %v862 = vld [vmem:[%s706 + $0x264] sm:$0xf]
                %863 = vst [vmem:[%s707 + $0x134] sm:$0xf] %v862
                %v864 = vld [vmem:[%s706 + $0x270] sm:$0xf]
                %865 = vst [vmem:[%s707 + $0x138] sm:$0xf] %v864
                %v866 = vld [vmem:[%s706 + $0x274] sm:$0xf]
                %867 = vst [vmem:[%s707 + $0x13c] sm:$0xf] %v866
                %v868 = vld [vmem:[%s706 + $0x280] sm:$0xf]
                %869 = vst [vmem:[%s707 + $0x140] sm:$0xf] %v868
                %v870 = vld [vmem:[%s706 + $0x284] sm:$0xf]
                %871 = vst [vmem:[%s707 + $0x144] sm:$0xf] %v870
                %v872 = vld [vmem:[%s706 + $0x290] sm:$0xf]
                %873 = vst [vmem:[%s707 + $0x148] sm:$0xf] %v872
                %v874 = vld [vmem:[%s706 + $0x294] sm:$0xf]
                %875 = vst [vmem:[%s707 + $0x14c] sm:$0xf] %v874
                %v876 = vld [vmem:[%s706 + $0x2a0] sm:$0xf]
                %877 = vst [vmem:[%s707 + $0x150] sm:$0xf] %v876
                %v878 = vld [vmem:[%s706 + $0x2a4] sm:$0xf]
                %879 = vst [vmem:[%s707 + $0x154] sm:$0xf] %v878
                %v880 = vld [vmem:[%s706 + $0x2b0] sm:$0xf]
                %881 = vst [vmem:[%s707 + $0x158] sm:$0xf] %v880
                %v882 = vld [vmem:[%s706 + $0x2b4] sm:$0xf]
                %883 = vst [vmem:[%s707 + $0x15c] sm:$0xf] %v882
                %v884 = vld [vmem:[%s706 + $0x2c0] sm:$0xf]
                %885 = vst [vmem:[%s707 + $0x160] sm:$0xf] %v884
                %v886 = vld [vmem:[%s706 + $0x2c4] sm:$0xf]
                %887 = vst [vmem:[%s707 + $0x164] sm:$0xf] %v886
                %v888 = vld [vmem:[%s706 + $0x2d0] sm:$0xf]
                %889 = vst [vmem:[%s707 + $0x168] sm:$0xf] %v888
                %v890 = vld [vmem:[%s706 + $0x2d4] sm:$0xf]
                %891 = vst [vmem:[%s707 + $0x16c] sm:$0xf] %v890
                %v892 = vld [vmem:[%s706 + $0x2e0] sm:$0xf]
                %893 = vst [vmem:[%s707 + $0x170] sm:$0xf] %v892
                %v894 = vld [vmem:[%s706 + $0x2e4] sm:$0xf]
                %895 = vst [vmem:[%s707 + $0x174] sm:$0xf] %v894
                %v896 = vld [vmem:[%s706 + $0x2f0] sm:$0xf]
                %897 = vst [vmem:[%s707 + $0x178] sm:$0xf] %v896
                %v898 = vld [vmem:[%s706 + $0x2f4] sm:$0xf]
                %899 = vst [vmem:[%s707 + $0x17c] sm:$0xf] %v898
                %v900 = vld [vmem:[%s706 + $0x300] sm:$0xf]
                %901 = vst [vmem:[%s707 + $0x180] sm:$0xf] %v900
                %v902 = vld [vmem:[%s706 + $0x304] sm:$0xf]
                %903 = vst [vmem:[%s707 + $0x184] sm:$0xf] %v902
              $region131: #{cspn_forward.20} parent=125 // loop_footer
                %s705 = sadd.s32 1, %s701
              $region132: #{cspn_forward.20} parent=125 // loop_footer_branch
                %700 = sbr.rel target = $region128
              $region133: #{cspn_forward.20} parent=125 // loop_exit
                _
            $region126: #{cspn_forward.20} parent=117 // pred_fallthru
              _
          $region118: #{cspn_forward.20} parent=113 // pred_fallthru
            _
          %1119 = vnop
        $region114: #{cspn_forward.20} parent=15 // pred_fallthru
          _
        // Predicated region
        $region152: #{cspn_forward.20} parent=15 // pred_check
          %p1120 = pneg %p210
        $region153: #{cspn_forward.20} parent=15 // pred_check_branch
          %1122 = sbr.rel (%p1120) target = $region155
        $region154: #{cspn_forward.20} parent=15 // pred_region
          %s1123 = sand.u32 %s200, 1
          %s1124 = sand.u32 %s200, 1
          %s1125 = smul.addr %s1124, 48
          %s1126 = scalar_lea.vmem [#allocation5], %s1125
          %s1127 = smul.u32 2, %s22
          %s1128 = smul.addr %s21, 2
          %s1129 = sadd.s32 %s1127, %s1128
          %s1130 = smul.addr %s1129, 8
          %s1131 = scalar_lea.vmem %s6, %s1130
          // Predicated region
          $region156: #{cspn_forward.20} parent=154 // pred_check
            _
          $region157: #{cspn_forward.20} parent=154 // pred_check_branch
            %1133 = sbr.rel (0) target = $region159
          $region158: #{cspn_forward.20} parent=154 // pred_region
            // Predicated region
            $region160: #{cspn_forward.20} parent=158 // pred_check
              _
            $region161: #{cspn_forward.20} parent=158 // pred_check_branch
              %1135 = sbr.rel (0) target = $region163
            $region162: #{cspn_forward.20} parent=158 // pred_region
              // Predicated region
              $region175: #{cspn_forward.20} parent=162 // pred_check
                _
              $region176: #{cspn_forward.20} parent=162 // pred_check_branch
                %1160 = sbr.rel (0) target = $region178
              $region177: #{cspn_forward.20} parent=162 // pred_region
                loop: start=0, step=1, limit=1
                $region179: #{cspn_forward.20} parent=177 // loop_pre_header
                  _
                $region180: #{cspn_forward.20} parent=177 // loop_header
                  %s1162 = sphi 0, %s1166
                  %p1163 = scmp.ge.s32.totalorder %s1162, 1
                  %s1167 = sphi %s1131, %s1131
                  %s1168 = sphi %s1126, %s1126
                $region181: #{cspn_forward.20} parent=177 // loop_header_branch
                  %1165 = sbr.rel (%p1163) target = $region185
                $region182: #{cspn_forward.20} parent=177 // loop_body
                  %v1169 = vld [vmem:[%s1167] sm:$0xff]
                  %1170 = vst [vmem:[%s1168] sm:$0xff] %v1169
                  %v1171 = vld [vmem:[%s1167 + $0x8] sm:$0xff]
                  %1172 = vst [vmem:[%s1168 + $0x8] sm:$0xff] %v1171
                  %v1173 = vld [vmem:[%s1167 + $0x20] sm:$0xff]
                  %1174 = vst [vmem:[%s1168 + $0x10] sm:$0xff] %v1173
                  %v1175 = vld [vmem:[%s1167 + $0x28] sm:$0xff]
                  %1176 = vst [vmem:[%s1168 + $0x18] sm:$0xff] %v1175
                  %v1177 = vld [vmem:[%s1167 + $0x40] sm:$0xff]
                  %1178 = vst [vmem:[%s1168 + $0x20] sm:$0xff] %v1177
                  %v1179 = vld [vmem:[%s1167 + $0x48] sm:$0xff]
                  %1180 = vst [vmem:[%s1168 + $0x28] sm:$0xff] %v1179
                $region183: #{cspn_forward.20} parent=177 // loop_footer
                  %s1166 = sadd.s32 1, %s1162
                $region184: #{cspn_forward.20} parent=177 // loop_footer_branch
                  %1161 = sbr.rel target = $region180
                $region185: #{cspn_forward.20} parent=177 // loop_exit
                  _
              $region178: #{cspn_forward.20} parent=162 // pred_fallthru
                _
              // Predicated region
              $region186: #{cspn_forward.20} parent=162 // pred_check
                _
              $region187: #{cspn_forward.20} parent=162 // pred_check_branch
                %1182 = sbr.rel target = $region189
              $region188: #{cspn_forward.20} parent=162 // pred_region
                _
              $region189: #{cspn_forward.20} parent=162 // pred_fallthru
                _
            $region163: #{cspn_forward.20} parent=158 // pred_fallthru
              _
            // Predicated region
            $region164: #{cspn_forward.20} parent=158 // pred_check
              _
            $region165: #{cspn_forward.20} parent=158 // pred_check_branch
              %1137 = sbr.rel target = $region167
            $region166: #{cspn_forward.20} parent=158 // pred_region
              loop: start=0, step=1, limit=1
              $region168: #{cspn_forward.20} parent=166 // loop_pre_header
                _
              $region169: #{cspn_forward.20} parent=166 // loop_header
                %s1140 = sphi 0, %s1144
                %p1141 = scmp.ge.s32.totalorder %s1140, 1
                %s1145 = sphi %s1131, %s1131
                %s1146 = sphi %s1126, %s1126
              $region170: #{cspn_forward.20} parent=166 // loop_header_branch
                %1143 = sbr.rel (%p1141) target = $region174
              $region171: #{cspn_forward.20} parent=166 // loop_body
                %v1147 = vld [vmem:[%s1145] sm:$0xff]
                %1148 = vst [vmem:[%s1146] sm:$0xff] %v1147
                %v1149 = vld [vmem:[%s1145 + $0x8] sm:$0xff]
                %1150 = vst [vmem:[%s1146 + $0x8] sm:$0xff] %v1149
                %v1151 = vld [vmem:[%s1145 + $0x20] sm:$0xff]
                %1152 = vst [vmem:[%s1146 + $0x10] sm:$0xff] %v1151
                %v1153 = vld [vmem:[%s1145 + $0x28] sm:$0xff]
                %1154 = vst [vmem:[%s1146 + $0x18] sm:$0xff] %v1153
                %v1155 = vld [vmem:[%s1145 + $0x40] sm:$0xff]
                %1156 = vst [vmem:[%s1146 + $0x20] sm:$0xff] %v1155
                %v1157 = vld [vmem:[%s1145 + $0x48] sm:$0xff]
                %1158 = vst [vmem:[%s1146 + $0x28] sm:$0xff] %v1157
              $region172: #{cspn_forward.20} parent=166 // loop_footer
                %s1144 = sadd.s32 1, %s1140
              $region173: #{cspn_forward.20} parent=166 // loop_footer_branch
                %1139 = sbr.rel target = $region169
              $region174: #{cspn_forward.20} parent=166 // loop_exit
                _
            $region167: #{cspn_forward.20} parent=158 // pred_fallthru
              _
          $region159: #{cspn_forward.20} parent=154 // pred_fallthru
            _
          %1183 = vnop
        $region155: #{cspn_forward.20} parent=15 // pred_fallthru
          _
        // Predicated region
        $region190: #{cspn_forward.20} parent=15 // pred_check
          %p1184 = pneg %p238
        $region191: #{cspn_forward.20} parent=15 // pred_check_branch
          %1186 = sbr.rel (%p1184) target = $region193
        $region192: #{cspn_forward.20} parent=15 // pred_region
          %s1187 = smul.u32 2, %s22
          %p1188 = scmp.lt.s32.totalorder %s21, 1
          %s1189 = scalar_select %p1188, %s21, 1
          %p1190 = scmp.lt.s32.totalorder %s1187, 1
          %s1191 = scalar_select %p1190, %s1187, 1
          %s1192 = smul.addr %s1189, 2
          %s1193 = sadd.s32 %s1191, %s1192
          %s1194 = smul.addr %s1193, 8
          %s1195 = scalar_lea.vmem %s7, %s1194
          %s1196 = smul.u32 2, %s22
        $region193: #{cspn_forward.20} parent=15 // pred_fallthru
          _
      $region16: #{cspn_forward.20} parent=5 // pred_fallthru
        _
      %p1197 = scmp.le.s32.totalorder 1, %s14
      %p1198 = scmp.lt.s32.totalorder %s14, 3
      %p1199 = pnand %p1197, %p1198
      %p1200 = pneg %p1199
      // Predicated region
      $region194: #{cspn_forward.20} parent=5 // pred_check
        _
      $region195: #{cspn_forward.20} parent=5 // pred_check_branch
        %1202 = sbr.rel (%p1199) target = $region197
      $region196: #{cspn_forward.20} parent=5 // pred_region
        %s1203 = ssub.s32 %s14, 1
        %s1204 = sand.u32 %s119, 1
        %s1205 = sand.u32 %s119, 1
        %s1206 = smul.addr %s1205, 72
        %s1207 = scalar_lea.vmem [#allocation2], %s1206
        // Predicated region
        $region198: #{cspn_forward.20} parent=196 // pred_check
          %p1208 = pneg %p132
        $region199: #{cspn_forward.20} parent=196 // pred_check_branch
          %1210 = sbr.rel (%p1208) target = $region201
        $region200: #{cspn_forward.20} parent=196 // pred_region
          _
        $region201: #{cspn_forward.20} parent=196 // pred_fallthru
          _
        %s1211 = sand.u32 %s147, 1
        %s1212 = sand.u32 %s147, 1
        %s1213 = smul.addr %s1212, 200
        %s1214 = scalar_lea.vmem [#allocation3], %s1213
        // Predicated region
        $region202: #{cspn_forward.20} parent=196 // pred_check
          %p1215 = pneg %p160
        $region203: #{cspn_forward.20} parent=196 // pred_check_branch
          %1217 = sbr.rel (%p1215) target = $region205
        $region204: #{cspn_forward.20} parent=196 // pred_region
          _
        $region205: #{cspn_forward.20} parent=196 // pred_fallthru
          _
        %s1218 = sand.u32 %s175, 1
        %s1219 = sand.u32 %s175, 1
        %s1220 = smul.addr %s1219, 392
        %s1221 = scalar_lea.vmem [#allocation4], %s1220
        // Predicated region
        $region206: #{cspn_forward.20} parent=196 // pred_check
          %p1222 = pneg %p188
        $region207: #{cspn_forward.20} parent=196 // pred_check_branch
          %1224 = sbr.rel (%p1222) target = $region209
        $region208: #{cspn_forward.20} parent=196 // pred_region
          _
        $region209: #{cspn_forward.20} parent=196 // pred_fallthru
          _
        %s1225 = sand.u32 %s203, 1
        %s1226 = sand.u32 %s203, 1
        %s1227 = smul.addr %s1226, 48
        %s1228 = scalar_lea.vmem [#allocation5], %s1227
        // Predicated region
        $region210: #{cspn_forward.20} parent=196 // pred_check
          %p1229 = pneg %p216
        $region211: #{cspn_forward.20} parent=196 // pred_check_branch
          %1231 = sbr.rel (%p1229) target = $region213
        $region212: #{cspn_forward.20} parent=196 // pred_region
          _
        $region213: #{cspn_forward.20} parent=196 // pred_fallthru
          _
        %p1232 = scmp.lt.s32.totalorder %s23, 1
        %s1233 = scalar_select %p1232, %s23, 1
        %s1234 = smul.addr %s1233, 3
        %s1235 = smul.addr %s1234, 8
        %s1236 = scalar_lea.vmem %s0, %s1235
        %p1237 = pneg %p52
        %p1238 = pneg %p49
        %p1239 = scmp.lt.s32.totalorder %s23, 1
        %s1240 = scalar_select %p1239, %s23, 1
        %s1241 = smul.addr %s1240, 3
        %s1242 = smul.addr %s1241, 8
        %s1243 = scalar_lea.vmem %s1, %s1242
        %p1244 = pneg %p78
        %p1245 = pneg %p75
        %p1246 = scmp.lt.s32.totalorder %s23, 1
        %s1247 = scalar_select %p1246, %s23, 1
        %s1248 = smul.addr %s1247, 3
        %s1249 = smul.addr %s1248, 8
        %s1250 = scalar_lea.vmem %s2, %s1249
        %p1251 = pneg %p104
        %p1252 = pneg %p101
        %s1253 = sand.u32 %s119, 1
        %s1254 = sand.u32 %s119, 1
        %s1255 = smul.addr %s1254, 72
        %s1256 = scalar_lea.vmem [#allocation2], %s1255
        %p1257 = pneg %p132
        %p1258 = pneg %p129
        %s1259 = sand.u32 %s147, 1
        %s1260 = sand.u32 %s147, 1
        %s1261 = smul.addr %s1260, 200
        %s1262 = scalar_lea.vmem [#allocation3], %s1261
        %p1263 = pneg %p160
        %p1264 = pneg %p157
        %s1265 = sand.u32 %s175, 1
        %s1266 = sand.u32 %s175, 1
        %s1267 = smul.addr %s1266, 392
        %s1268 = scalar_lea.vmem [#allocation4], %s1267
        %p1269 = pneg %p188
        %p1270 = pneg %p185
        %s1271 = sand.u32 %s203, 1
        %s1272 = sand.u32 %s203, 1
        %s1273 = smul.addr %s1272, 48
        %s1274 = scalar_lea.vmem [#allocation5], %s1273
        %p1275 = pneg %p216
        %p1276 = pneg %p213
        %s1277 = smul.u32 2, %s24
        %p1278 = scmp.lt.s32.totalorder %s23, 1
        %s1279 = scalar_select %p1278, %s23, 1
        %p1280 = scmp.lt.s32.totalorder %s1277, 1
        %s1281 = scalar_select %p1280, %s1277, 1
        %s1282 = smul.addr %s1279, 2
        %s1283 = sadd.s32 %s1281, %s1282
        %s1284 = smul.addr %s1283, 8
        %s1285 = scalar_lea.vmem %s7, %s1284
        %p1286 = pneg %p244
        %p1287 = pneg %p241
        %p1288 = pneg %p272
        %p1289 = pneg %p269
        %s1290 = sand.u32 %s259, 1
        %s1291 = sand.u32 %s259, 1
        %s1292 = smul.addr %s1291, 48
        %s1293 = scalar_lea.vmem [#allocation6], %s1292
        %p1294 = scmp.lt.s32.totalorder %s23, 1
        %s1295 = scalar_select %p1294, %s23, 1
        %s1296 = smul.addr %s1295, 3
        %s1297 = smul.addr %s1296, 8
        %s1298 = scalar_lea.vmem %s0, %s1297
        %p1299 = scmp.lt.s32.totalorder %s23, 1
        %s1300 = scalar_select %p1299, %s23, 1
        %s1301 = smul.addr %s1300, 3
        %s1302 = smul.addr %s1301, 8
        %s1303 = scalar_lea.vmem %s1, %s1302
        %p1304 = scmp.lt.s32.totalorder %s23, 1
        %s1305 = scalar_select %p1304, %s23, 1
        %s1306 = smul.addr %s1305, 3
        %s1307 = smul.addr %s1306, 8
        %s1308 = scalar_lea.vmem %s2, %s1307
        %s1309 = smul.u32 2, %s24
        %s1310 = smul.u32 2, %s24
        %s1311 = smul.u32 2, %s24
        %s1312 = smul.u32 2, %s24
        %s1313 = smul.u32 2, %s24
        %p1314 = scmp.lt.s32.totalorder %s23, 1
        %s1315 = scalar_select %p1314, %s23, 1
        %p1316 = scmp.lt.s32.totalorder %s1313, 1
        %s1317 = scalar_select %p1316, %s1313, 1
        %s1318 = smul.addr %s1315, 2
        %s1319 = sadd.s32 %s1317, %s1318
        %s1320 = smul.addr %s1319, 8
        %s1321 = scalar_lea.vmem %s7, %s1320
        %s1322 = smul.u32 2, %s24
        %s1323 = smul.u32 2, %s24
        %s1324 = smul.u32 %s24, 16
        %v1325 = vld [vmem:[%s1321] sm:$0xff]
        %v1326 = vld [vmem:[%s1321 + $0x8] sm:$0xff]
        %s1327 = scalar_lea.vmem %s1298, %s1324
        %v1328 = vld [vmem:[%s1327] sm:$0xff]
        %v1329 = vld [vmem:[%s1327 + $0x8] sm:$0xff]
        %v1330 = vld [vmem:[%s1207] sm:$0xf]
        %v1331 = vld [vmem:[%s1207 + $0x4] sm:$0xf]
        %v1332 = vunpack.c.l.bf16 %v1330
        %v1333 = vunpack.c.l.bf16 %v1331
        %v1334 = vmul.f32 %v1332, %v1328
        %v1335 = vmul.f32 %v1333, %v1329
        %s1336 = scalar_lea.vmem %s1207, 8 [#allocation2]
        %v1337 = vld [vmem:[%s1336] sm:$0xf]
        %v1338 = vld [vmem:[%s1336 + $0x4] sm:$0xf]
        %v1339 = vunpack.c.l.bf16 %v1337
        %v1340 = vunpack.c.l.bf16 %v1338
        %1343 = vrot.lane.b32.xlu0 %v1328, 127
        %v1344 = vpop.permute.xlu0 %1343
        %1345 = vrot.lane.b32.xlu0 %v1329, 127
        %v1346 = vpop.permute.xlu0 %1345
        %v1349 = vmul.f32 %v1339, %v1344
        %v1350 = vmul.f32 %v1340, %v1346
        %v1351 = vadd.f32 %v1334, %v1349
        %v1352 = vadd.f32 %v1335, %v1350
        %s1353 = scalar_lea.vmem %s1207, 16 [#allocation2]
        %v1354 = vld [vmem:[%s1353] sm:$0xf]
        %v1355 = vld [vmem:[%s1353 + $0x4] sm:$0xf]
        %v1356 = vunpack.c.l.bf16 %v1354
        %v1357 = vunpack.c.l.bf16 %v1355
        %1358 = vrot.lane.b32.xlu0 %v1328, 126
        %v1359 = vpop.permute.xlu0 %1358
        %1360 = vrot.lane.b32.xlu0 %v1329, 126
        %v1361 = vpop.permute.xlu0 %1360
        %v1364 = vmul.f32 %v1356, %v1359
        %v1365 = vmul.f32 %v1357, %v1361
        %v1366 = vadd.f32 %v1351, %v1364
        %v1367 = vadd.f32 %v1352, %v1365
        %s1368 = sadd.s32 %s1324, 1
        %s1369 = scalar_lea.vmem %s1298, %s1368
        %v1370 = vld [vmem:[%s1369] sm:$0xff]
        %v1371 = vld [vmem:[%s1369 + $0x8] sm:$0xff]
        %s1372 = scalar_lea.vmem %s1207, 24 [#allocation2]
        %v1373 = vld [vmem:[%s1372] sm:$0xf]
        %v1374 = vld [vmem:[%s1372 + $0x4] sm:$0xf]
        %v1375 = vunpack.c.l.bf16 %v1373
        %v1376 = vunpack.c.l.bf16 %v1374
        %v1377 = vmul.f32 %v1375, %v1370
        %v1378 = vmul.f32 %v1376, %v1371
        %v1379 = vadd.f32 %v1366, %v1377
        %v1380 = vadd.f32 %v1367, %v1378
        %s1381 = scalar_lea.vmem %s1207, 32 [#allocation2]
        %v1382 = vld [vmem:[%s1381] sm:$0xf]
        %v1383 = vld [vmem:[%s1381 + $0x4] sm:$0xf]
        %v1384 = vunpack.c.l.bf16 %v1382
        %v1385 = vunpack.c.l.bf16 %v1383
        %1388 = vrot.lane.b32.xlu0 %v1370, 127
        %v1389 = vpop.permute.xlu0 %1388
        %1390 = vrot.lane.b32.xlu0 %v1371, 127
        %v1391 = vpop.permute.xlu0 %1390
        %v1394 = vmul.f32 %v1384, %v1389
        %v1395 = vmul.f32 %v1385, %v1391
        %v1396 = vadd.f32 %v1379, %v1394
        %v1397 = vadd.f32 %v1380, %v1395
        %s1398 = scalar_lea.vmem %s1207, 40 [#allocation2]
        %v1399 = vld [vmem:[%s1398] sm:$0xf]
        %v1400 = vld [vmem:[%s1398 + $0x4] sm:$0xf]
        %v1401 = vunpack.c.l.bf16 %v1399
        %v1402 = vunpack.c.l.bf16 %v1400
        %1403 = vrot.lane.b32.xlu0 %v1370, 126
        %v1404 = vpop.permute.xlu0 %1403
        %1405 = vrot.lane.b32.xlu0 %v1371, 126
        %v1406 = vpop.permute.xlu0 %1405
        %v1409 = vmul.f32 %v1401, %v1404
        %v1410 = vmul.f32 %v1402, %v1406
        %v1411 = vadd.f32 %v1396, %v1409
        %v1412 = vadd.f32 %v1397, %v1410
        %s1413 = sadd.s32 %s1324, 2
        %s1414 = scalar_lea.vmem %s1298, %s1413
        %v1415 = vld [vmem:[%s1414] sm:$0xff]
        %v1416 = vld [vmem:[%s1414 + $0x8] sm:$0xff]
        %s1417 = scalar_lea.vmem %s1207, 48 [#allocation2]
        %v1418 = vld [vmem:[%s1417] sm:$0xf]
        %v1419 = vld [vmem:[%s1417 + $0x4] sm:$0xf]
        %v1420 = vunpack.c.l.bf16 %v1418
        %v1421 = vunpack.c.l.bf16 %v1419
        %v1422 = vmul.f32 %v1420, %v1415
        %v1423 = vmul.f32 %v1421, %v1416
        %v1424 = vadd.f32 %v1411, %v1422
        %v1425 = vadd.f32 %v1412, %v1423
        %s1426 = scalar_lea.vmem %s1207, 56 [#allocation2]
        %v1427 = vld [vmem:[%s1426] sm:$0xf]
        %v1428 = vld [vmem:[%s1426 + $0x4] sm:$0xf]
        %v1429 = vunpack.c.l.bf16 %v1427
        %v1430 = vunpack.c.l.bf16 %v1428
        %1433 = vrot.lane.b32.xlu0 %v1415, 127
        %v1434 = vpop.permute.xlu0 %1433
        %1435 = vrot.lane.b32.xlu0 %v1416, 127
        %v1436 = vpop.permute.xlu0 %1435
        %v1439 = vmul.f32 %v1429, %v1434
        %v1440 = vmul.f32 %v1430, %v1436
        %v1441 = vadd.f32 %v1424, %v1439
        %v1442 = vadd.f32 %v1425, %v1440
        %s1443 = scalar_lea.vmem %s1207, 64 [#allocation2]
        %v1444 = vld [vmem:[%s1443] sm:$0xf]
        %v1445 = vld [vmem:[%s1443 + $0x4] sm:$0xf]
        %v1446 = vunpack.c.l.bf16 %v1444
        %v1447 = vunpack.c.l.bf16 %v1445
        %1448 = vrot.lane.b32.xlu0 %v1415, 126
        %v1449 = vpop.permute.xlu0 %1448
        %1450 = vrot.lane.b32.xlu0 %v1416, 126
        %v1451 = vpop.permute.xlu0 %1450
        %v1454 = vmul.f32 %v1446, %v1449
        %v1455 = vmul.f32 %v1447, %v1451
        %v1456 = vadd.f32 %v1441, %v1454
        %v1457 = vadd.f32 %v1442, %v1455
        %s1458 = scalar_lea.vmem %s1303, %s1324
        %v1459 = vld [vmem:[%s1458] sm:$0xff]
        %v1460 = vld [vmem:[%s1458 + $0x8] sm:$0xff]
        %v1461 = vld [vmem:[%s1214] sm:$0xf]
        %v1462 = vld [vmem:[%s1214 + $0x4] sm:$0xf]
        %v1463 = vunpack.c.l.bf16 %v1461
        %v1464 = vunpack.c.l.bf16 %v1462
        %v1465 = vmul.f32 %v1463, %v1459
        %v1466 = vmul.f32 %v1464, %v1460
        %s1467 = scalar_lea.vmem %s1214, 8 [#allocation3]
        %v1468 = vld [vmem:[%s1467] sm:$0xf]
        %v1469 = vld [vmem:[%s1467 + $0x4] sm:$0xf]
        %v1470 = vunpack.c.l.bf16 %v1468
        %v1471 = vunpack.c.l.bf16 %v1469
        %1474 = vrot.lane.b32.xlu0 %v1459, 127
        %v1475 = vpop.permute.xlu0 %1474
        %1476 = vrot.lane.b32.xlu0 %v1460, 127
        %v1477 = vpop.permute.xlu0 %1476
        %v1480 = vmul.f32 %v1470, %v1475
        %v1481 = vmul.f32 %v1471, %v1477
        %v1482 = vadd.f32 %v1465, %v1480
        %v1483 = vadd.f32 %v1466, %v1481
        %s1484 = scalar_lea.vmem %s1214, 16 [#allocation3]
        %v1485 = vld [vmem:[%s1484] sm:$0xf]
        %v1486 = vld [vmem:[%s1484 + $0x4] sm:$0xf]
        %v1487 = vunpack.c.l.bf16 %v1485
        %v1488 = vunpack.c.l.bf16 %v1486
        %1489 = vrot.lane.b32.xlu0 %v1459, 126
        %v1490 = vpop.permute.xlu0 %1489
        %1491 = vrot.lane.b32.xlu0 %v1460, 126
        %v1492 = vpop.permute.xlu0 %1491
        %v1495 = vmul.f32 %v1487, %v1490
        %v1496 = vmul.f32 %v1488, %v1492
        %v1497 = vadd.f32 %v1482, %v1495
        %v1498 = vadd.f32 %v1483, %v1496
        %s1499 = scalar_lea.vmem %s1214, 24 [#allocation3]
        %v1500 = vld [vmem:[%s1499] sm:$0xf]
        %v1501 = vld [vmem:[%s1499 + $0x4] sm:$0xf]
        %v1502 = vunpack.c.l.bf16 %v1500
        %v1503 = vunpack.c.l.bf16 %v1501
        %1504 = vrot.lane.b32.xlu0 %v1459, 125
        %v1505 = vpop.permute.xlu0 %1504
        %1506 = vrot.lane.b32.xlu0 %v1460, 125
        %v1507 = vpop.permute.xlu0 %1506
        %v1510 = vmul.f32 %v1502, %v1505
        %v1511 = vmul.f32 %v1503, %v1507
        %v1512 = vadd.f32 %v1497, %v1510
        %v1513 = vadd.f32 %v1498, %v1511
        %s1514 = scalar_lea.vmem %s1214, 32 [#allocation3]
        %v1515 = vld [vmem:[%s1514] sm:$0xf]
        %v1516 = vld [vmem:[%s1514 + $0x4] sm:$0xf]
        %v1517 = vunpack.c.l.bf16 %v1515
        %v1518 = vunpack.c.l.bf16 %v1516
        %1519 = vrot.lane.b32.xlu0 %v1459, 124
        %v1520 = vpop.permute.xlu0 %1519
        %1521 = vrot.lane.b32.xlu0 %v1460, 124
        %v1522 = vpop.permute.xlu0 %1521
        %v1525 = vmul.f32 %v1517, %v1520
        %v1526 = vmul.f32 %v1518, %v1522
        %v1527 = vadd.f32 %v1512, %v1525
        %v1528 = vadd.f32 %v1513, %v1526
        %s1529 = scalar_lea.vmem %s1303, %s1368
        %v1530 = vld [vmem:[%s1529] sm:$0xff]
        %v1531 = vld [vmem:[%s1529 + $0x8] sm:$0xff]
        %s1532 = scalar_lea.vmem %s1214, 40 [#allocation3]
        %v1533 = vld [vmem:[%s1532] sm:$0xf]
        %v1534 = vld [vmem:[%s1532 + $0x4] sm:$0xf]
        %v1535 = vunpack.c.l.bf16 %v1533
        %v1536 = vunpack.c.l.bf16 %v1534
        %v1537 = vmul.f32 %v1535, %v1530
        %v1538 = vmul.f32 %v1536, %v1531
        %v1539 = vadd.f32 %v1527, %v1537
        %v1540 = vadd.f32 %v1528, %v1538
        %s1541 = scalar_lea.vmem %s1214, 48 [#allocation3]
        %v1542 = vld [vmem:[%s1541] sm:$0xf]
        %v1543 = vld [vmem:[%s1541 + $0x4] sm:$0xf]
        %v1544 = vunpack.c.l.bf16 %v1542
        %v1545 = vunpack.c.l.bf16 %v1543
        %1548 = vrot.lane.b32.xlu0 %v1530, 127
        %v1549 = vpop.permute.xlu0 %1548
        %1550 = vrot.lane.b32.xlu0 %v1531, 127
        %v1551 = vpop.permute.xlu0 %1550
        %v1554 = vmul.f32 %v1544, %v1549
        %v1555 = vmul.f32 %v1545, %v1551
        %v1556 = vadd.f32 %v1539, %v1554
        %v1557 = vadd.f32 %v1540, %v1555
        %s1558 = scalar_lea.vmem %s1214, 56 [#allocation3]
        %v1559 = vld [vmem:[%s1558] sm:$0xf]
        %v1560 = vld [vmem:[%s1558 + $0x4] sm:$0xf]
        %v1561 = vunpack.c.l.bf16 %v1559
        %v1562 = vunpack.c.l.bf16 %v1560
        %1563 = vrot.lane.b32.xlu0 %v1530, 126
        %v1564 = vpop.permute.xlu0 %1563
        %1565 = vrot.lane.b32.xlu0 %v1531, 126
        %v1566 = vpop.permute.xlu0 %1565
        %v1569 = vmul.f32 %v1561, %v1564
        %v1570 = vmul.f32 %v1562, %v1566
        %v1571 = vadd.f32 %v1556, %v1569
        %v1572 = vadd.f32 %v1557, %v1570
        %s1573 = scalar_lea.vmem %s1214, 64 [#allocation3]
        %v1574 = vld [vmem:[%s1573] sm:$0xf]
        %v1575 = vld [vmem:[%s1573 + $0x4] sm:$0xf]
        %v1576 = vunpack.c.l.bf16 %v1574
        %v1577 = vunpack.c.l.bf16 %v1575
        %1578 = vrot.lane.b32.xlu0 %v1530, 125
        %v1579 = vpop.permute.xlu0 %1578
        %1580 = vrot.lane.b32.xlu0 %v1531, 125
        %v1581 = vpop.permute.xlu0 %1580
        %v1584 = vmul.f32 %v1576, %v1579
        %v1585 = vmul.f32 %v1577, %v1581
        %v1586 = vadd.f32 %v1571, %v1584
        %v1587 = vadd.f32 %v1572, %v1585
        %s1588 = scalar_lea.vmem %s1214, 72 [#allocation3]
        %v1589 = vld [vmem:[%s1588] sm:$0xf]
        %v1590 = vld [vmem:[%s1588 + $0x4] sm:$0xf]
        %v1591 = vunpack.c.l.bf16 %v1589
        %v1592 = vunpack.c.l.bf16 %v1590
        %1593 = vrot.lane.b32.xlu0 %v1530, 124
        %v1594 = vpop.permute.xlu0 %1593
        %1595 = vrot.lane.b32.xlu0 %v1531, 124
        %v1596 = vpop.permute.xlu0 %1595
        %v1599 = vmul.f32 %v1591, %v1594
        %v1600 = vmul.f32 %v1592, %v1596
        %v1601 = vadd.f32 %v1586, %v1599
        %v1602 = vadd.f32 %v1587, %v1600
        %s1603 = scalar_lea.vmem %s1303, %s1413
        %v1604 = vld [vmem:[%s1603] sm:$0xff]
        %v1605 = vld [vmem:[%s1603 + $0x8] sm:$0xff]
        %s1606 = scalar_lea.vmem %s1214, 80 [#allocation3]
        %v1607 = vld [vmem:[%s1606] sm:$0xf]
        %v1608 = vld [vmem:[%s1606 + $0x4] sm:$0xf]
        %v1609 = vunpack.c.l.bf16 %v1607
        %v1610 = vunpack.c.l.bf16 %v1608
        %v1611 = vmul.f32 %v1609, %v1604
        %v1612 = vmul.f32 %v1610, %v1605
        %v1613 = vadd.f32 %v1601, %v1611
        %v1614 = vadd.f32 %v1602, %v1612
        %s1615 = scalar_lea.vmem %s1214, 88 [#allocation3]
        %v1616 = vld [vmem:[%s1615] sm:$0xf]
        %v1617 = vld [vmem:[%s1615 + $0x4] sm:$0xf]
        %v1618 = vunpack.c.l.bf16 %v1616
        %v1619 = vunpack.c.l.bf16 %v1617
        %1622 = vrot.lane.b32.xlu0 %v1604, 127
        %v1623 = vpop.permute.xlu0 %1622
        %1624 = vrot.lane.b32.xlu0 %v1605, 127
        %v1625 = vpop.permute.xlu0 %1624
        %v1628 = vmul.f32 %v1618, %v1623
        %v1629 = vmul.f32 %v1619, %v1625
        %v1630 = vadd.f32 %v1613, %v1628
        %v1631 = vadd.f32 %v1614, %v1629
        %s1632 = scalar_lea.vmem %s1214, 96 [#allocation3]
        %v1633 = vld [vmem:[%s1632] sm:$0xf]
        %v1634 = vld [vmem:[%s1632 + $0x4] sm:$0xf]
        %v1635 = vunpack.c.l.bf16 %v1633
        %v1636 = vunpack.c.l.bf16 %v1634
        %1637 = vrot.lane.b32.xlu0 %v1604, 126
        %v1638 = vpop.permute.xlu0 %1637
        %1639 = vrot.lane.b32.xlu0 %v1605, 126
        %v1640 = vpop.permute.xlu0 %1639
        %v1643 = vmul.f32 %v1635, %v1638
        %v1644 = vmul.f32 %v1636, %v1640
        %v1645 = vadd.f32 %v1630, %v1643
        %v1646 = vadd.f32 %v1631, %v1644
        %s1647 = scalar_lea.vmem %s1214, 104 [#allocation3]
        %v1648 = vld [vmem:[%s1647] sm:$0xf]
        %v1649 = vld [vmem:[%s1647 + $0x4] sm:$0xf]
        %v1650 = vunpack.c.l.bf16 %v1648
        %v1651 = vunpack.c.l.bf16 %v1649
        %1652 = vrot.lane.b32.xlu0 %v1604, 125
        %v1653 = vpop.permute.xlu0 %1652
        %1654 = vrot.lane.b32.xlu0 %v1605, 125
        %v1655 = vpop.permute.xlu0 %1654
        %v1658 = vmul.f32 %v1650, %v1653
        %v1659 = vmul.f32 %v1651, %v1655
        %v1660 = vadd.f32 %v1645, %v1658
        %v1661 = vadd.f32 %v1646, %v1659
        %s1662 = scalar_lea.vmem %s1214, 112 [#allocation3]
        %v1663 = vld [vmem:[%s1662] sm:$0xf]
        %v1664 = vld [vmem:[%s1662 + $0x4] sm:$0xf]
        %v1665 = vunpack.c.l.bf16 %v1663
        %v1666 = vunpack.c.l.bf16 %v1664
        %1667 = vrot.lane.b32.xlu0 %v1604, 124
        %v1668 = vpop.permute.xlu0 %1667
        %1669 = vrot.lane.b32.xlu0 %v1605, 124
        %v1670 = vpop.permute.xlu0 %1669
        %v1673 = vmul.f32 %v1665, %v1668
        %v1674 = vmul.f32 %v1666, %v1670
        %v1675 = vadd.f32 %v1660, %v1673
        %v1676 = vadd.f32 %v1661, %v1674
        %s1677 = sadd.s32 %s1324, 3
        %s1678 = scalar_lea.vmem %s1303, %s1677
        %v1679 = vld [vmem:[%s1678] sm:$0xff]
        %v1680 = vld [vmem:[%s1678 + $0x8] sm:$0xff]
        %s1681 = scalar_lea.vmem %s1214, 120 [#allocation3]
        %v1682 = vld [vmem:[%s1681] sm:$0xf]
        %v1683 = vld [vmem:[%s1681 + $0x4] sm:$0xf]
        %v1684 = vunpack.c.l.bf16 %v1682
        %v1685 = vunpack.c.l.bf16 %v1683
        %v1686 = vmul.f32 %v1684, %v1679
        %v1687 = vmul.f32 %v1685, %v1680
        %v1688 = vadd.f32 %v1675, %v1686
        %v1689 = vadd.f32 %v1676, %v1687
        %s1690 = scalar_lea.vmem %s1214, 128 [#allocation3]
        %v1691 = vld [vmem:[%s1690] sm:$0xf]
        %v1692 = vld [vmem:[%s1690 + $0x4] sm:$0xf]
        %v1693 = vunpack.c.l.bf16 %v1691
        %v1694 = vunpack.c.l.bf16 %v1692
        %1697 = vrot.lane.b32.xlu0 %v1679, 127
        %v1698 = vpop.permute.xlu0 %1697
        %1699 = vrot.lane.b32.xlu0 %v1680, 127
        %v1700 = vpop.permute.xlu0 %1699
        %v1703 = vmul.f32 %v1693, %v1698
        %v1704 = vmul.f32 %v1694, %v1700
        %v1705 = vadd.f32 %v1688, %v1703
        %v1706 = vadd.f32 %v1689, %v1704
        %s1707 = scalar_lea.vmem %s1214, 136 [#allocation3]
        %v1708 = vld [vmem:[%s1707] sm:$0xf]
        %v1709 = vld [vmem:[%s1707 + $0x4] sm:$0xf]
        %v1710 = vunpack.c.l.bf16 %v1708
        %v1711 = vunpack.c.l.bf16 %v1709
        %1712 = vrot.lane.b32.xlu0 %v1679, 126
        %v1713 = vpop.permute.xlu0 %1712
        %1714 = vrot.lane.b32.xlu0 %v1680, 126
        %v1715 = vpop.permute.xlu0 %1714
        %v1718 = vmul.f32 %v1710, %v1713
        %v1719 = vmul.f32 %v1711, %v1715
        %v1720 = vadd.f32 %v1705, %v1718
        %v1721 = vadd.f32 %v1706, %v1719
        %s1722 = scalar_lea.vmem %s1214, 144 [#allocation3]
        %v1723 = vld [vmem:[%s1722] sm:$0xf]
        %v1724 = vld [vmem:[%s1722 + $0x4] sm:$0xf]
        %v1725 = vunpack.c.l.bf16 %v1723
        %v1726 = vunpack.c.l.bf16 %v1724
        %1727 = vrot.lane.b32.xlu0 %v1679, 125
        %v1728 = vpop.permute.xlu0 %1727
        %1729 = vrot.lane.b32.xlu0 %v1680, 125
        %v1730 = vpop.permute.xlu0 %1729
        %v1733 = vmul.f32 %v1725, %v1728
        %v1734 = vmul.f32 %v1726, %v1730
        %v1735 = vadd.f32 %v1720, %v1733
        %v1736 = vadd.f32 %v1721, %v1734
        %s1737 = scalar_lea.vmem %s1214, 152 [#allocation3]
        %v1738 = vld [vmem:[%s1737] sm:$0xf]
        %v1739 = vld [vmem:[%s1737 + $0x4] sm:$0xf]
        %v1740 = vunpack.c.l.bf16 %v1738
        %v1741 = vunpack.c.l.bf16 %v1739
        %1742 = vrot.lane.b32.xlu0 %v1679, 124
        %v1743 = vpop.permute.xlu0 %1742
        %1744 = vrot.lane.b32.xlu0 %v1680, 124
        %v1745 = vpop.permute.xlu0 %1744
        %v1748 = vmul.f32 %v1740, %v1743
        %v1749 = vmul.f32 %v1741, %v1745
        %v1750 = vadd.f32 %v1735, %v1748
        %v1751 = vadd.f32 %v1736, %v1749
        %s1752 = sadd.s32 %s1324, 4
        %s1753 = scalar_lea.vmem %s1303, %s1752
        %v1754 = vld [vmem:[%s1753] sm:$0xff]
        %v1755 = vld [vmem:[%s1753 + $0x8] sm:$0xff]
        %s1756 = scalar_lea.vmem %s1214, 160 [#allocation3]
        %v1757 = vld [vmem:[%s1756] sm:$0xf]
        %v1758 = vld [vmem:[%s1756 + $0x4] sm:$0xf]
        %v1759 = vunpack.c.l.bf16 %v1757
        %v1760 = vunpack.c.l.bf16 %v1758
        %v1761 = vmul.f32 %v1759, %v1754
        %v1762 = vmul.f32 %v1760, %v1755
        %v1763 = vadd.f32 %v1750, %v1761
        %v1764 = vadd.f32 %v1751, %v1762
        %s1765 = scalar_lea.vmem %s1214, 168 [#allocation3]
        %v1766 = vld [vmem:[%s1765] sm:$0xf]
        %v1767 = vld [vmem:[%s1765 + $0x4] sm:$0xf]
        %v1768 = vunpack.c.l.bf16 %v1766
        %v1769 = vunpack.c.l.bf16 %v1767
        %1772 = vrot.lane.b32.xlu0 %v1754, 127
        %v1773 = vpop.permute.xlu0 %1772
        %1774 = vrot.lane.b32.xlu0 %v1755, 127
        %v1775 = vpop.permute.xlu0 %1774
        %v1778 = vmul.f32 %v1768, %v1773
        %v1779 = vmul.f32 %v1769, %v1775
        %v1780 = vadd.f32 %v1763, %v1778
        %v1781 = vadd.f32 %v1764, %v1779
        %s1782 = scalar_lea.vmem %s1214, 176 [#allocation3]
        %v1783 = vld [vmem:[%s1782] sm:$0xf]
        %v1784 = vld [vmem:[%s1782 + $0x4] sm:$0xf]
        %v1785 = vunpack.c.l.bf16 %v1783
        %v1786 = vunpack.c.l.bf16 %v1784
        %1787 = vrot.lane.b32.xlu0 %v1754, 126
        %v1788 = vpop.permute.xlu0 %1787
        %1789 = vrot.lane.b32.xlu0 %v1755, 126
        %v1790 = vpop.permute.xlu0 %1789
        %v1793 = vmul.f32 %v1785, %v1788
        %v1794 = vmul.f32 %v1786, %v1790
        %v1795 = vadd.f32 %v1780, %v1793
        %v1796 = vadd.f32 %v1781, %v1794
        %s1797 = scalar_lea.vmem %s1214, 184 [#allocation3]
        %v1798 = vld [vmem:[%s1797] sm:$0xf]
        %v1799 = vld [vmem:[%s1797 + $0x4] sm:$0xf]
        %v1800 = vunpack.c.l.bf16 %v1798
        %v1801 = vunpack.c.l.bf16 %v1799
        %1802 = vrot.lane.b32.xlu0 %v1754, 125
        %v1803 = vpop.permute.xlu0 %1802
        %1804 = vrot.lane.b32.xlu0 %v1755, 125
        %v1805 = vpop.permute.xlu0 %1804
        %v1808 = vmul.f32 %v1800, %v1803
        %v1809 = vmul.f32 %v1801, %v1805
        %v1810 = vadd.f32 %v1795, %v1808
        %v1811 = vadd.f32 %v1796, %v1809
        %s1812 = scalar_lea.vmem %s1214, 192 [#allocation3]
        %v1813 = vld [vmem:[%s1812] sm:$0xf]
        %v1814 = vld [vmem:[%s1812 + $0x4] sm:$0xf]
        %v1815 = vunpack.c.l.bf16 %v1813
        %v1816 = vunpack.c.l.bf16 %v1814
        %1817 = vrot.lane.b32.xlu0 %v1754, 124
        %v1818 = vpop.permute.xlu0 %1817
        %1819 = vrot.lane.b32.xlu0 %v1755, 124
        %v1820 = vpop.permute.xlu0 %1819
        %v1823 = vmul.f32 %v1815, %v1818
        %v1824 = vmul.f32 %v1816, %v1820
        %v1825 = vadd.f32 %v1810, %v1823
        %v1826 = vadd.f32 %v1811, %v1824
        %s1827 = scalar_lea.vmem %s1308, %s1324
        %v1828 = vld [vmem:[%s1827] sm:$0xff]
        %v1829 = vld [vmem:[%s1827 + $0x8] sm:$0xff]
        %v1830 = vld [vmem:[%s1221] sm:$0xf]
        %v1831 = vld [vmem:[%s1221 + $0x4] sm:$0xf]
        %v1832 = vunpack.c.l.bf16 %v1830
        %v1833 = vunpack.c.l.bf16 %v1831
        %v1834 = vmul.f32 %v1832, %v1828
        %v1835 = vmul.f32 %v1833, %v1829
        %s1836 = scalar_lea.vmem %s1221, 8 [#allocation4]
        %v1837 = vld [vmem:[%s1836] sm:$0xf]
        %v1838 = vld [vmem:[%s1836 + $0x4] sm:$0xf]
        %v1839 = vunpack.c.l.bf16 %v1837
        %v1840 = vunpack.c.l.bf16 %v1838
        %1843 = vrot.lane.b32.xlu0 %v1828, 127
        %v1844 = vpop.permute.xlu0 %1843
        %1845 = vrot.lane.b32.xlu0 %v1829, 127
        %v1846 = vpop.permute.xlu0 %1845
        %v1849 = vmul.f32 %v1839, %v1844
        %v1850 = vmul.f32 %v1840, %v1846
        %v1851 = vadd.f32 %v1834, %v1849
        %v1852 = vadd.f32 %v1835, %v1850
        %s1853 = scalar_lea.vmem %s1221, 16 [#allocation4]
        %v1854 = vld [vmem:[%s1853] sm:$0xf]
        %v1855 = vld [vmem:[%s1853 + $0x4] sm:$0xf]
        %v1856 = vunpack.c.l.bf16 %v1854
        %v1857 = vunpack.c.l.bf16 %v1855
        %1858 = vrot.lane.b32.xlu0 %v1828, 126
        %v1859 = vpop.permute.xlu0 %1858
        %1860 = vrot.lane.b32.xlu0 %v1829, 126
        %v1861 = vpop.permute.xlu0 %1860
        %v1864 = vmul.f32 %v1856, %v1859
        %v1865 = vmul.f32 %v1857, %v1861
        %v1866 = vadd.f32 %v1851, %v1864
        %v1867 = vadd.f32 %v1852, %v1865
        %s1868 = scalar_lea.vmem %s1221, 24 [#allocation4]
        %v1869 = vld [vmem:[%s1868] sm:$0xf]
        %v1870 = vld [vmem:[%s1868 + $0x4] sm:$0xf]
        %v1871 = vunpack.c.l.bf16 %v1869
        %v1872 = vunpack.c.l.bf16 %v1870
        %1873 = vrot.lane.b32.xlu0 %v1828, 125
        %v1874 = vpop.permute.xlu0 %1873
        %1875 = vrot.lane.b32.xlu0 %v1829, 125
        %v1876 = vpop.permute.xlu0 %1875
        %v1879 = vmul.f32 %v1871, %v1874
        %v1880 = vmul.f32 %v1872, %v1876
        %v1881 = vadd.f32 %v1866, %v1879
        %v1882 = vadd.f32 %v1867, %v1880
        %s1883 = scalar_lea.vmem %s1221, 32 [#allocation4]
        %v1884 = vld [vmem:[%s1883] sm:$0xf]
        %v1885 = vld [vmem:[%s1883 + $0x4] sm:$0xf]
        %v1886 = vunpack.c.l.bf16 %v1884
        %v1887 = vunpack.c.l.bf16 %v1885
        %1888 = vrot.lane.b32.xlu0 %v1828, 124
        %v1889 = vpop.permute.xlu0 %1888
        %1890 = vrot.lane.b32.xlu0 %v1829, 124
        %v1891 = vpop.permute.xlu0 %1890
        %v1894 = vmul.f32 %v1886, %v1889
        %v1895 = vmul.f32 %v1887, %v1891
        %v1896 = vadd.f32 %v1881, %v1894
        %v1897 = vadd.f32 %v1882, %v1895
        %s1898 = scalar_lea.vmem %s1221, 40 [#allocation4]
        %v1899 = vld [vmem:[%s1898] sm:$0xf]
        %v1900 = vld [vmem:[%s1898 + $0x4] sm:$0xf]
        %v1901 = vunpack.c.l.bf16 %v1899
        %v1902 = vunpack.c.l.bf16 %v1900
        %1903 = vrot.lane.b32.xlu0 %v1828, 123
        %v1904 = vpop.permute.xlu0 %1903
        %1905 = vrot.lane.b32.xlu0 %v1829, 123
        %v1906 = vpop.permute.xlu0 %1905
        %v1909 = vmul.f32 %v1901, %v1904
        %v1910 = vmul.f32 %v1902, %v1906
        %v1911 = vadd.f32 %v1896, %v1909
        %v1912 = vadd.f32 %v1897, %v1910
        %s1913 = scalar_lea.vmem %s1221, 48 [#allocation4]
        %v1914 = vld [vmem:[%s1913] sm:$0xf]
        %v1915 = vld [vmem:[%s1913 + $0x4] sm:$0xf]
        %v1916 = vunpack.c.l.bf16 %v1914
        %v1917 = vunpack.c.l.bf16 %v1915
        %1918 = vrot.lane.b32.xlu0 %v1828, 122
        %v1919 = vpop.permute.xlu0 %1918
        %1920 = vrot.lane.b32.xlu0 %v1829, 122
        %v1921 = vpop.permute.xlu0 %1920
        %v1924 = vmul.f32 %v1916, %v1919
        %v1925 = vmul.f32 %v1917, %v1921
        %v1926 = vadd.f32 %v1911, %v1924
        %v1927 = vadd.f32 %v1912, %v1925
        %s1928 = scalar_lea.vmem %s1308, %s1368
        %v1929 = vld [vmem:[%s1928] sm:$0xff]
        %v1930 = vld [vmem:[%s1928 + $0x8] sm:$0xff]
        %s1931 = scalar_lea.vmem %s1221, 56 [#allocation4]
        %v1932 = vld [vmem:[%s1931] sm:$0xf]
        %v1933 = vld [vmem:[%s1931 + $0x4] sm:$0xf]
        %v1934 = vunpack.c.l.bf16 %v1932
        %v1935 = vunpack.c.l.bf16 %v1933
        %v1936 = vmul.f32 %v1934, %v1929
        %v1937 = vmul.f32 %v1935, %v1930
        %v1938 = vadd.f32 %v1926, %v1936
        %v1939 = vadd.f32 %v1927, %v1937
        %s1940 = scalar_lea.vmem %s1221, 64 [#allocation4]
        %v1941 = vld [vmem:[%s1940] sm:$0xf]
        %v1942 = vld [vmem:[%s1940 + $0x4] sm:$0xf]
        %v1943 = vunpack.c.l.bf16 %v1941
        %v1944 = vunpack.c.l.bf16 %v1942
        %1947 = vrot.lane.b32.xlu0 %v1929, 127
        %v1948 = vpop.permute.xlu0 %1947
        %1949 = vrot.lane.b32.xlu0 %v1930, 127
        %v1950 = vpop.permute.xlu0 %1949
        %v1953 = vmul.f32 %v1943, %v1948
        %v1954 = vmul.f32 %v1944, %v1950
        %v1955 = vadd.f32 %v1938, %v1953
        %v1956 = vadd.f32 %v1939, %v1954
        %s1957 = scalar_lea.vmem %s1221, 72 [#allocation4]
        %v1958 = vld [vmem:[%s1957] sm:$0xf]
        %v1959 = vld [vmem:[%s1957 + $0x4] sm:$0xf]
        %v1960 = vunpack.c.l.bf16 %v1958
        %v1961 = vunpack.c.l.bf16 %v1959
        %1962 = vrot.lane.b32.xlu0 %v1929, 126
        %v1963 = vpop.permute.xlu0 %1962
        %1964 = vrot.lane.b32.xlu0 %v1930, 126
        %v1965 = vpop.permute.xlu0 %1964
        %v1968 = vmul.f32 %v1960, %v1963
        %v1969 = vmul.f32 %v1961, %v1965
        %v1970 = vadd.f32 %v1955, %v1968
        %v1971 = vadd.f32 %v1956, %v1969
        %s1972 = scalar_lea.vmem %s1221, 80 [#allocation4]
        %v1973 = vld [vmem:[%s1972] sm:$0xf]
        %v1974 = vld [vmem:[%s1972 + $0x4] sm:$0xf]
        %v1975 = vunpack.c.l.bf16 %v1973
        %v1976 = vunpack.c.l.bf16 %v1974
        %1977 = vrot.lane.b32.xlu0 %v1929, 125
        %v1978 = vpop.permute.xlu0 %1977
        %1979 = vrot.lane.b32.xlu0 %v1930, 125
        %v1980 = vpop.permute.xlu0 %1979
        %v1983 = vmul.f32 %v1975, %v1978
        %v1984 = vmul.f32 %v1976, %v1980
        %v1985 = vadd.f32 %v1970, %v1983
        %v1986 = vadd.f32 %v1971, %v1984
        %s1987 = scalar_lea.vmem %s1221, 88 [#allocation4]
        %v1988 = vld [vmem:[%s1987] sm:$0xf]
        %v1989 = vld [vmem:[%s1987 + $0x4] sm:$0xf]
        %v1990 = vunpack.c.l.bf16 %v1988
        %v1991 = vunpack.c.l.bf16 %v1989
        %1992 = vrot.lane.b32.xlu0 %v1929, 124
        %v1993 = vpop.permute.xlu0 %1992
        %1994 = vrot.lane.b32.xlu0 %v1930, 124
        %v1995 = vpop.permute.xlu0 %1994
        %v1998 = vmul.f32 %v1990, %v1993
        %v1999 = vmul.f32 %v1991, %v1995
        %v2000 = vadd.f32 %v1985, %v1998
        %v2001 = vadd.f32 %v1986, %v1999
        %s2002 = scalar_lea.vmem %s1221, 96 [#allocation4]
        %v2003 = vld [vmem:[%s2002] sm:$0xf]
        %v2004 = vld [vmem:[%s2002 + $0x4] sm:$0xf]
        %v2005 = vunpack.c.l.bf16 %v2003
        %v2006 = vunpack.c.l.bf16 %v2004
        %2007 = vrot.lane.b32.xlu0 %v1929, 123
        %v2008 = vpop.permute.xlu0 %2007
        %2009 = vrot.lane.b32.xlu0 %v1930, 123
        %v2010 = vpop.permute.xlu0 %2009
        %v2013 = vmul.f32 %v2005, %v2008
        %v2014 = vmul.f32 %v2006, %v2010
        %v2015 = vadd.f32 %v2000, %v2013
        %v2016 = vadd.f32 %v2001, %v2014
        %s2017 = scalar_lea.vmem %s1221, 104 [#allocation4]
        %v2018 = vld [vmem:[%s2017] sm:$0xf]
        %v2019 = vld [vmem:[%s2017 + $0x4] sm:$0xf]
        %v2020 = vunpack.c.l.bf16 %v2018
        %v2021 = vunpack.c.l.bf16 %v2019
        %2022 = vrot.lane.b32.xlu0 %v1929, 122
        %v2023 = vpop.permute.xlu0 %2022
        %2024 = vrot.lane.b32.xlu0 %v1930, 122
        %v2025 = vpop.permute.xlu0 %2024
        %v2028 = vmul.f32 %v2020, %v2023
        %v2029 = vmul.f32 %v2021, %v2025
        %v2030 = vadd.f32 %v2015, %v2028
        %v2031 = vadd.f32 %v2016, %v2029
        %s2032 = scalar_lea.vmem %s1308, %s1413
        %v2033 = vld [vmem:[%s2032] sm:$0xff]
        %v2034 = vld [vmem:[%s2032 + $0x8] sm:$0xff]
        %s2035 = scalar_lea.vmem %s1221, 112 [#allocation4]
        %v2036 = vld [vmem:[%s2035] sm:$0xf]
        %v2037 = vld [vmem:[%s2035 + $0x4] sm:$0xf]
        %v2038 = vunpack.c.l.bf16 %v2036
        %v2039 = vunpack.c.l.bf16 %v2037
        %v2040 = vmul.f32 %v2038, %v2033
        %v2041 = vmul.f32 %v2039, %v2034
        %v2042 = vadd.f32 %v2030, %v2040
        %v2043 = vadd.f32 %v2031, %v2041
        %s2044 = scalar_lea.vmem %s1221, 120 [#allocation4]
        %v2045 = vld [vmem:[%s2044] sm:$0xf]
        %v2046 = vld [vmem:[%s2044 + $0x4] sm:$0xf]
        %v2047 = vunpack.c.l.bf16 %v2045
        %v2048 = vunpack.c.l.bf16 %v2046
        %2051 = vrot.lane.b32.xlu0 %v2033, 127
        %v2052 = vpop.permute.xlu0 %2051
        %2053 = vrot.lane.b32.xlu0 %v2034, 127
        %v2054 = vpop.permute.xlu0 %2053
        %v2057 = vmul.f32 %v2047, %v2052
        %v2058 = vmul.f32 %v2048, %v2054
        %v2059 = vadd.f32 %v2042, %v2057
        %v2060 = vadd.f32 %v2043, %v2058
        %s2061 = scalar_lea.vmem %s1221, 128 [#allocation4]
        %v2062 = vld [vmem:[%s2061] sm:$0xf]
        %v2063 = vld [vmem:[%s2061 + $0x4] sm:$0xf]
        %v2064 = vunpack.c.l.bf16 %v2062
        %v2065 = vunpack.c.l.bf16 %v2063
        %2066 = vrot.lane.b32.xlu0 %v2033, 126
        %v2067 = vpop.permute.xlu0 %2066
        %2068 = vrot.lane.b32.xlu0 %v2034, 126
        %v2069 = vpop.permute.xlu0 %2068
        %v2072 = vmul.f32 %v2064, %v2067
        %v2073 = vmul.f32 %v2065, %v2069
        %v2074 = vadd.f32 %v2059, %v2072
        %v2075 = vadd.f32 %v2060, %v2073
        %s2076 = scalar_lea.vmem %s1221, 136 [#allocation4]
        %v2077 = vld [vmem:[%s2076] sm:$0xf]
        %v2078 = vld [vmem:[%s2076 + $0x4] sm:$0xf]
        %v2079 = vunpack.c.l.bf16 %v2077
        %v2080 = vunpack.c.l.bf16 %v2078
        %2081 = vrot.lane.b32.xlu0 %v2033, 125
        %v2082 = vpop.permute.xlu0 %2081
        %2083 = vrot.lane.b32.xlu0 %v2034, 125
        %v2084 = vpop.permute.xlu0 %2083
        %v2087 = vmul.f32 %v2079, %v2082
        %v2088 = vmul.f32 %v2080, %v2084
        %v2089 = vadd.f32 %v2074, %v2087
        %v2090 = vadd.f32 %v2075, %v2088
        %s2091 = scalar_lea.vmem %s1221, 144 [#allocation4]
        %v2092 = vld [vmem:[%s2091] sm:$0xf]
        %v2093 = vld [vmem:[%s2091 + $0x4] sm:$0xf]
        %v2094 = vunpack.c.l.bf16 %v2092
        %v2095 = vunpack.c.l.bf16 %v2093
        %2096 = vrot.lane.b32.xlu0 %v2033, 124
        %v2097 = vpop.permute.xlu0 %2096
        %2098 = vrot.lane.b32.xlu0 %v2034, 124
        %v2099 = vpop.permute.xlu0 %2098
        %v2102 = vmul.f32 %v2094, %v2097
        %v2103 = vmul.f32 %v2095, %v2099
        %v2104 = vadd.f32 %v2089, %v2102
        %v2105 = vadd.f32 %v2090, %v2103
        %s2106 = scalar_lea.vmem %s1221, 152 [#allocation4]
        %v2107 = vld [vmem:[%s2106] sm:$0xf]
        %v2108 = vld [vmem:[%s2106 + $0x4] sm:$0xf]
        %v2109 = vunpack.c.l.bf16 %v2107
        %v2110 = vunpack.c.l.bf16 %v2108
        %2111 = vrot.lane.b32.xlu0 %v2033, 123
        %v2112 = vpop.permute.xlu0 %2111
        %2113 = vrot.lane.b32.xlu0 %v2034, 123
        %v2114 = vpop.permute.xlu0 %2113
        %v2117 = vmul.f32 %v2109, %v2112
        %v2118 = vmul.f32 %v2110, %v2114
        %v2119 = vadd.f32 %v2104, %v2117
        %v2120 = vadd.f32 %v2105, %v2118
        %s2121 = scalar_lea.vmem %s1221, 160 [#allocation4]
        %v2122 = vld [vmem:[%s2121] sm:$0xf]
        %v2123 = vld [vmem:[%s2121 + $0x4] sm:$0xf]
        %v2124 = vunpack.c.l.bf16 %v2122
        %v2125 = vunpack.c.l.bf16 %v2123
        %2126 = vrot.lane.b32.xlu0 %v2033, 122
        %v2127 = vpop.permute.xlu0 %2126
        %2128 = vrot.lane.b32.xlu0 %v2034, 122
        %v2129 = vpop.permute.xlu0 %2128
        %v2132 = vmul.f32 %v2124, %v2127
        %v2133 = vmul.f32 %v2125, %v2129
        %v2134 = vadd.f32 %v2119, %v2132
        %v2135 = vadd.f32 %v2120, %v2133
        %s2136 = scalar_lea.vmem %s1308, %s1677
        %v2137 = vld [vmem:[%s2136] sm:$0xff]
        %v2138 = vld [vmem:[%s2136 + $0x8] sm:$0xff]
        %s2139 = scalar_lea.vmem %s1221, 168 [#allocation4]
        %v2140 = vld [vmem:[%s2139] sm:$0xf]
        %v2141 = vld [vmem:[%s2139 + $0x4] sm:$0xf]
        %v2142 = vunpack.c.l.bf16 %v2140
        %v2143 = vunpack.c.l.bf16 %v2141
        %v2144 = vmul.f32 %v2142, %v2137
        %v2145 = vmul.f32 %v2143, %v2138
        %v2146 = vadd.f32 %v2134, %v2144
        %v2147 = vadd.f32 %v2135, %v2145
        %s2148 = scalar_lea.vmem %s1221, 176 [#allocation4]
        %v2149 = vld [vmem:[%s2148] sm:$0xf]
        %v2150 = vld [vmem:[%s2148 + $0x4] sm:$0xf]
        %v2151 = vunpack.c.l.bf16 %v2149
        %v2152 = vunpack.c.l.bf16 %v2150
        %2155 = vrot.lane.b32.xlu0 %v2137, 127
        %v2156 = vpop.permute.xlu0 %2155
        %2157 = vrot.lane.b32.xlu0 %v2138, 127
        %v2158 = vpop.permute.xlu0 %2157
        %v2161 = vmul.f32 %v2151, %v2156
        %v2162 = vmul.f32 %v2152, %v2158
        %v2163 = vadd.f32 %v2146, %v2161
        %v2164 = vadd.f32 %v2147, %v2162
        %s2165 = scalar_lea.vmem %s1221, 184 [#allocation4]
        %v2166 = vld [vmem:[%s2165] sm:$0xf]
        %v2167 = vld [vmem:[%s2165 + $0x4] sm:$0xf]
        %v2168 = vunpack.c.l.bf16 %v2166
        %v2169 = vunpack.c.l.bf16 %v2167
        %2170 = vrot.lane.b32.xlu0 %v2137, 126
        %v2171 = vpop.permute.xlu0 %2170
        %2172 = vrot.lane.b32.xlu0 %v2138, 126
        %v2173 = vpop.permute.xlu0 %2172
        %v2176 = vmul.f32 %v2168, %v2171
        %v2177 = vmul.f32 %v2169, %v2173
        %v2178 = vadd.f32 %v2163, %v2176
        %v2179 = vadd.f32 %v2164, %v2177
        %s2180 = scalar_lea.vmem %s1221, 192 [#allocation4]
        %v2181 = vld [vmem:[%s2180] sm:$0xf]
        %v2182 = vld [vmem:[%s2180 + $0x4] sm:$0xf]
        %v2183 = vunpack.c.l.bf16 %v2181
        %v2184 = vunpack.c.l.bf16 %v2182
        %2185 = vrot.lane.b32.xlu0 %v2137, 125
        %v2186 = vpop.permute.xlu0 %2185
        %2187 = vrot.lane.b32.xlu0 %v2138, 125
        %v2188 = vpop.permute.xlu0 %2187
        %v2191 = vmul.f32 %v2183, %v2186
        %v2192 = vmul.f32 %v2184, %v2188
        %v2193 = vadd.f32 %v2178, %v2191
        %v2194 = vadd.f32 %v2179, %v2192
        %s2195 = scalar_lea.vmem %s1221, 200 [#allocation4]
        %v2196 = vld [vmem:[%s2195] sm:$0xf]
        %v2197 = vld [vmem:[%s2195 + $0x4] sm:$0xf]
        %v2198 = vunpack.c.l.bf16 %v2196
        %v2199 = vunpack.c.l.bf16 %v2197
        %2200 = vrot.lane.b32.xlu0 %v2137, 124
        %v2201 = vpop.permute.xlu0 %2200
        %2202 = vrot.lane.b32.xlu0 %v2138, 124
        %v2203 = vpop.permute.xlu0 %2202
        %v2206 = vmul.f32 %v2198, %v2201
        %v2207 = vmul.f32 %v2199, %v2203
        %v2208 = vadd.f32 %v2193, %v2206
        %v2209 = vadd.f32 %v2194, %v2207
        %s2210 = scalar_lea.vmem %s1221, 208 [#allocation4]
        %v2211 = vld [vmem:[%s2210] sm:$0xf]
        %v2212 = vld [vmem:[%s2210 + $0x4] sm:$0xf]
        %v2213 = vunpack.c.l.bf16 %v2211
        %v2214 = vunpack.c.l.bf16 %v2212
        %2215 = vrot.lane.b32.xlu0 %v2137, 123
        %v2216 = vpop.permute.xlu0 %2215
        %2217 = vrot.lane.b32.xlu0 %v2138, 123
        %v2218 = vpop.permute.xlu0 %2217
        %v2221 = vmul.f32 %v2213, %v2216
        %v2222 = vmul.f32 %v2214, %v2218
        %v2223 = vadd.f32 %v2208, %v2221
        %v2224 = vadd.f32 %v2209, %v2222
        %s2225 = scalar_lea.vmem %s1221, 216 [#allocation4]
        %v2226 = vld [vmem:[%s2225] sm:$0xf]
        %v2227 = vld [vmem:[%s2225 + $0x4] sm:$0xf]
        %v2228 = vunpack.c.l.bf16 %v2226
        %v2229 = vunpack.c.l.bf16 %v2227
        %2230 = vrot.lane.b32.xlu0 %v2137, 122
        %v2231 = vpop.permute.xlu0 %2230
        %2232 = vrot.lane.b32.xlu0 %v2138, 122
        %v2233 = vpop.permute.xlu0 %2232
        %v2236 = vmul.f32 %v2228, %v2231
        %v2237 = vmul.f32 %v2229, %v2233
        %v2238 = vadd.f32 %v2223, %v2236
        %v2239 = vadd.f32 %v2224, %v2237
        %s2240 = scalar_lea.vmem %s1308, %s1752
        %v2241 = vld [vmem:[%s2240] sm:$0xff]
        %v2242 = vld [vmem:[%s2240 + $0x8] sm:$0xff]
        %s2243 = scalar_lea.vmem %s1221, 224 [#allocation4]
        %v2244 = vld [vmem:[%s2243] sm:$0xf]
        %v2245 = vld [vmem:[%s2243 + $0x4] sm:$0xf]
        %v2246 = vunpack.c.l.bf16 %v2244
        %v2247 = vunpack.c.l.bf16 %v2245
        %v2248 = vmul.f32 %v2246, %v2241
        %v2249 = vmul.f32 %v2247, %v2242
        %v2250 = vadd.f32 %v2238, %v2248
        %v2251 = vadd.f32 %v2239, %v2249
        %s2252 = scalar_lea.vmem %s1221, 232 [#allocation4]
        %v2253 = vld [vmem:[%s2252] sm:$0xf]
        %v2254 = vld [vmem:[%s2252 + $0x4] sm:$0xf]
        %v2255 = vunpack.c.l.bf16 %v2253
        %v2256 = vunpack.c.l.bf16 %v2254
        %2259 = vrot.lane.b32.xlu0 %v2241, 127
        %v2260 = vpop.permute.xlu0 %2259
        %2261 = vrot.lane.b32.xlu0 %v2242, 127
        %v2262 = vpop.permute.xlu0 %2261
        %v2265 = vmul.f32 %v2255, %v2260
        %v2266 = vmul.f32 %v2256, %v2262
        %v2267 = vadd.f32 %v2250, %v2265
        %v2268 = vadd.f32 %v2251, %v2266
        %s2269 = scalar_lea.vmem %s1221, 240 [#allocation4]
        %v2270 = vld [vmem:[%s2269] sm:$0xf]
        %v2271 = vld [vmem:[%s2269 + $0x4] sm:$0xf]
        %v2272 = vunpack.c.l.bf16 %v2270
        %v2273 = vunpack.c.l.bf16 %v2271
        %2274 = vrot.lane.b32.xlu0 %v2241, 126
        %v2275 = vpop.permute.xlu0 %2274
        %2276 = vrot.lane.b32.xlu0 %v2242, 126
        %v2277 = vpop.permute.xlu0 %2276
        %v2280 = vmul.f32 %v2272, %v2275
        %v2281 = vmul.f32 %v2273, %v2277
        %v2282 = vadd.f32 %v2267, %v2280
        %v2283 = vadd.f32 %v2268, %v2281
        %s2284 = scalar_lea.vmem %s1221, 248 [#allocation4]
        %v2285 = vld [vmem:[%s2284] sm:$0xf]
        %v2286 = vld [vmem:[%s2284 + $0x4] sm:$0xf]
        %v2287 = vunpack.c.l.bf16 %v2285
        %v2288 = vunpack.c.l.bf16 %v2286
        %2289 = vrot.lane.b32.xlu0 %v2241, 125
        %v2290 = vpop.permute.xlu0 %2289
        %2291 = vrot.lane.b32.xlu0 %v2242, 125
        %v2292 = vpop.permute.xlu0 %2291
        %v2295 = vmul.f32 %v2287, %v2290
        %v2296 = vmul.f32 %v2288, %v2292
        %v2297 = vadd.f32 %v2282, %v2295
        %v2298 = vadd.f32 %v2283, %v2296
        %s2299 = scalar_lea.vmem %s1221, 256 [#allocation4]
        %v2300 = vld [vmem:[%s2299] sm:$0xf]
        %v2301 = vld [vmem:[%s2299 + $0x4] sm:$0xf]
        %v2302 = vunpack.c.l.bf16 %v2300
        %v2303 = vunpack.c.l.bf16 %v2301
        %2304 = vrot.lane.b32.xlu0 %v2241, 124
        %v2305 = vpop.permute.xlu0 %2304
        %2306 = vrot.lane.b32.xlu0 %v2242, 124
        %v2307 = vpop.permute.xlu0 %2306
        %v2310 = vmul.f32 %v2302, %v2305
        %v2311 = vmul.f32 %v2303, %v2307
        %v2312 = vadd.f32 %v2297, %v2310
        %v2313 = vadd.f32 %v2298, %v2311
        %s2314 = scalar_lea.vmem %s1221, 264 [#allocation4]
        %v2315 = vld [vmem:[%s2314] sm:$0xf]
        %v2316 = vld [vmem:[%s2314 + $0x4] sm:$0xf]
        %v2317 = vunpack.c.l.bf16 %v2315
        %v2318 = vunpack.c.l.bf16 %v2316
        %2319 = vrot.lane.b32.xlu0 %v2241, 123
        %v2320 = vpop.permute.xlu0 %2319
        %2321 = vrot.lane.b32.xlu0 %v2242, 123
        %v2322 = vpop.permute.xlu0 %2321
        %v2325 = vmul.f32 %v2317, %v2320
        %v2326 = vmul.f32 %v2318, %v2322
        %v2327 = vadd.f32 %v2312, %v2325
        %v2328 = vadd.f32 %v2313, %v2326
        %s2329 = scalar_lea.vmem %s1221, 272 [#allocation4]
        %v2330 = vld [vmem:[%s2329] sm:$0xf]
        %v2331 = vld [vmem:[%s2329 + $0x4] sm:$0xf]
        %v2332 = vunpack.c.l.bf16 %v2330
        %v2333 = vunpack.c.l.bf16 %v2331
        %2334 = vrot.lane.b32.xlu0 %v2241, 122
        %v2335 = vpop.permute.xlu0 %2334
        %2336 = vrot.lane.b32.xlu0 %v2242, 122
        %v2337 = vpop.permute.xlu0 %2336
        %v2340 = vmul.f32 %v2332, %v2335
        %v2341 = vmul.f32 %v2333, %v2337
        %v2342 = vadd.f32 %v2327, %v2340
        %v2343 = vadd.f32 %v2328, %v2341
        %s2344 = sadd.s32 %s1324, 5
        %s2345 = scalar_lea.vmem %s1308, %s2344
        %v2346 = vld [vmem:[%s2345] sm:$0xff]
        %v2347 = vld [vmem:[%s2345 + $0x8] sm:$0xff]
        %s2348 = scalar_lea.vmem %s1221, 280 [#allocation4]
        %v2349 = vld [vmem:[%s2348] sm:$0xf]
        %v2350 = vld [vmem:[%s2348 + $0x4] sm:$0xf]
        %v2351 = vunpack.c.l.bf16 %v2349
        %v2352 = vunpack.c.l.bf16 %v2350
        %v2353 = vmul.f32 %v2351, %v2346
        %v2354 = vmul.f32 %v2352, %v2347
        %v2355 = vadd.f32 %v2342, %v2353
        %v2356 = vadd.f32 %v2343, %v2354
        %s2357 = scalar_lea.vmem %s1221, 288 [#allocation4]
        %v2358 = vld [vmem:[%s2357] sm:$0xf]
        %v2359 = vld [vmem:[%s2357 + $0x4] sm:$0xf]
        %v2360 = vunpack.c.l.bf16 %v2358
        %v2361 = vunpack.c.l.bf16 %v2359
        %2364 = vrot.lane.b32.xlu0 %v2346, 127
        %v2365 = vpop.permute.xlu0 %2364
        %2366 = vrot.lane.b32.xlu0 %v2347, 127
        %v2367 = vpop.permute.xlu0 %2366
        %v2370 = vmul.f32 %v2360, %v2365
        %v2371 = vmul.f32 %v2361, %v2367
        %v2372 = vadd.f32 %v2355, %v2370
        %v2373 = vadd.f32 %v2356, %v2371
        %s2374 = scalar_lea.vmem %s1221, 296 [#allocation4]
        %v2375 = vld [vmem:[%s2374] sm:$0xf]
        %v2376 = vld [vmem:[%s2374 + $0x4] sm:$0xf]
        %v2377 = vunpack.c.l.bf16 %v2375
        %v2378 = vunpack.c.l.bf16 %v2376
        %2379 = vrot.lane.b32.xlu0 %v2346, 126
        %v2380 = vpop.permute.xlu0 %2379
        %2381 = vrot.lane.b32.xlu0 %v2347, 126
        %v2382 = vpop.permute.xlu0 %2381
        %v2385 = vmul.f32 %v2377, %v2380
        %v2386 = vmul.f32 %v2378, %v2382
        %v2387 = vadd.f32 %v2372, %v2385
        %v2388 = vadd.f32 %v2373, %v2386
        %s2389 = scalar_lea.vmem %s1221, 304 [#allocation4]
        %v2390 = vld [vmem:[%s2389] sm:$0xf]
        %v2391 = vld [vmem:[%s2389 + $0x4] sm:$0xf]
        %v2392 = vunpack.c.l.bf16 %v2390
        %v2393 = vunpack.c.l.bf16 %v2391
        %2394 = vrot.lane.b32.xlu0 %v2346, 125
        %v2395 = vpop.permute.xlu0 %2394
        %2396 = vrot.lane.b32.xlu0 %v2347, 125
        %v2397 = vpop.permute.xlu0 %2396
        %v2400 = vmul.f32 %v2392, %v2395
        %v2401 = vmul.f32 %v2393, %v2397
        %v2402 = vadd.f32 %v2387, %v2400
        %v2403 = vadd.f32 %v2388, %v2401
        %s2404 = scalar_lea.vmem %s1221, 312 [#allocation4]
        %v2405 = vld [vmem:[%s2404] sm:$0xf]
        %v2406 = vld [vmem:[%s2404 + $0x4] sm:$0xf]
        %v2407 = vunpack.c.l.bf16 %v2405
        %v2408 = vunpack.c.l.bf16 %v2406
        %2409 = vrot.lane.b32.xlu0 %v2346, 124
        %v2410 = vpop.permute.xlu0 %2409
        %2411 = vrot.lane.b32.xlu0 %v2347, 124
        %v2412 = vpop.permute.xlu0 %2411
        %v2415 = vmul.f32 %v2407, %v2410
        %v2416 = vmul.f32 %v2408, %v2412
        %v2417 = vadd.f32 %v2402, %v2415
        %v2418 = vadd.f32 %v2403, %v2416
        %s2419 = scalar_lea.vmem %s1221, 320 [#allocation4]
        %v2420 = vld [vmem:[%s2419] sm:$0xf]
        %v2421 = vld [vmem:[%s2419 + $0x4] sm:$0xf]
        %v2422 = vunpack.c.l.bf16 %v2420
        %v2423 = vunpack.c.l.bf16 %v2421
        %2424 = vrot.lane.b32.xlu0 %v2346, 123
        %v2425 = vpop.permute.xlu0 %2424
        %2426 = vrot.lane.b32.xlu0 %v2347, 123
        %v2427 = vpop.permute.xlu0 %2426
        %v2430 = vmul.f32 %v2422, %v2425
        %v2431 = vmul.f32 %v2423, %v2427
        %v2432 = vadd.f32 %v2417, %v2430
        %v2433 = vadd.f32 %v2418, %v2431
        %s2434 = scalar_lea.vmem %s1221, 328 [#allocation4]
        %v2435 = vld [vmem:[%s2434] sm:$0xf]
        %v2436 = vld [vmem:[%s2434 + $0x4] sm:$0xf]
        %v2437 = vunpack.c.l.bf16 %v2435
        %v2438 = vunpack.c.l.bf16 %v2436
        %2439 = vrot.lane.b32.xlu0 %v2346, 122
        %v2440 = vpop.permute.xlu0 %2439
        %2441 = vrot.lane.b32.xlu0 %v2347, 122
        %v2442 = vpop.permute.xlu0 %2441
        %v2445 = vmul.f32 %v2437, %v2440
        %v2446 = vmul.f32 %v2438, %v2442
        %v2447 = vadd.f32 %v2432, %v2445
        %v2448 = vadd.f32 %v2433, %v2446
        %s2449 = sadd.s32 %s1324, 6
        %s2450 = scalar_lea.vmem %s1308, %s2449
        %v2451 = vld [vmem:[%s2450] sm:$0xff]
        %v2452 = vld [vmem:[%s2450 + $0x8] sm:$0xff]
        %s2453 = scalar_lea.vmem %s1221, 336 [#allocation4]
        %v2454 = vld [vmem:[%s2453] sm:$0xf]
        %v2455 = vld [vmem:[%s2453 + $0x4] sm:$0xf]
        %v2456 = vunpack.c.l.bf16 %v2454
        %v2457 = vunpack.c.l.bf16 %v2455
        %v2458 = vmul.f32 %v2456, %v2451
        %v2459 = vmul.f32 %v2457, %v2452
        %v2460 = vadd.f32 %v2447, %v2458
        %v2461 = vadd.f32 %v2448, %v2459
        %s2462 = scalar_lea.vmem %s1221, 344 [#allocation4]
        %v2463 = vld [vmem:[%s2462] sm:$0xf]
        %v2464 = vld [vmem:[%s2462 + $0x4] sm:$0xf]
        %v2465 = vunpack.c.l.bf16 %v2463
        %v2466 = vunpack.c.l.bf16 %v2464
        %2469 = vrot.lane.b32.xlu0 %v2451, 127
        %v2470 = vpop.permute.xlu0 %2469
        %2471 = vrot.lane.b32.xlu0 %v2452, 127
        %v2472 = vpop.permute.xlu0 %2471
        %v2475 = vmul.f32 %v2465, %v2470
        %v2476 = vmul.f32 %v2466, %v2472
        %v2477 = vadd.f32 %v2460, %v2475
        %v2478 = vadd.f32 %v2461, %v2476
        %s2479 = scalar_lea.vmem %s1221, 352 [#allocation4]
        %v2480 = vld [vmem:[%s2479] sm:$0xf]
        %v2481 = vld [vmem:[%s2479 + $0x4] sm:$0xf]
        %v2482 = vunpack.c.l.bf16 %v2480
        %v2483 = vunpack.c.l.bf16 %v2481
        %2484 = vrot.lane.b32.xlu0 %v2451, 126
        %v2485 = vpop.permute.xlu0 %2484
        %2486 = vrot.lane.b32.xlu0 %v2452, 126
        %v2487 = vpop.permute.xlu0 %2486
        %v2490 = vmul.f32 %v2482, %v2485
        %v2491 = vmul.f32 %v2483, %v2487
        %v2492 = vadd.f32 %v2477, %v2490
        %v2493 = vadd.f32 %v2478, %v2491
        %s2494 = scalar_lea.vmem %s1221, 360 [#allocation4]
        %v2495 = vld [vmem:[%s2494] sm:$0xf]
        %v2496 = vld [vmem:[%s2494 + $0x4] sm:$0xf]
        %v2497 = vunpack.c.l.bf16 %v2495
        %v2498 = vunpack.c.l.bf16 %v2496
        %2499 = vrot.lane.b32.xlu0 %v2451, 125
        %v2500 = vpop.permute.xlu0 %2499
        %2501 = vrot.lane.b32.xlu0 %v2452, 125
        %v2502 = vpop.permute.xlu0 %2501
        %v2505 = vmul.f32 %v2497, %v2500
        %v2506 = vmul.f32 %v2498, %v2502
        %v2507 = vadd.f32 %v2492, %v2505
        %v2508 = vadd.f32 %v2493, %v2506
        %s2509 = scalar_lea.vmem %s1221, 368 [#allocation4]
        %v2510 = vld [vmem:[%s2509] sm:$0xf]
        %v2511 = vld [vmem:[%s2509 + $0x4] sm:$0xf]
        %v2512 = vunpack.c.l.bf16 %v2510
        %v2513 = vunpack.c.l.bf16 %v2511
        %2514 = vrot.lane.b32.xlu0 %v2451, 124
        %v2515 = vpop.permute.xlu0 %2514
        %2516 = vrot.lane.b32.xlu0 %v2452, 124
        %v2517 = vpop.permute.xlu0 %2516
        %v2520 = vmul.f32 %v2512, %v2515
        %v2521 = vmul.f32 %v2513, %v2517
        %v2522 = vadd.f32 %v2507, %v2520
        %v2523 = vadd.f32 %v2508, %v2521
        %s2524 = scalar_lea.vmem %s1221, 376 [#allocation4]
        %v2525 = vld [vmem:[%s2524] sm:$0xf]
        %v2526 = vld [vmem:[%s2524 + $0x4] sm:$0xf]
        %v2527 = vunpack.c.l.bf16 %v2525
        %v2528 = vunpack.c.l.bf16 %v2526
        %2529 = vrot.lane.b32.xlu0 %v2451, 123
        %v2530 = vpop.permute.xlu0 %2529
        %2531 = vrot.lane.b32.xlu0 %v2452, 123
        %v2532 = vpop.permute.xlu0 %2531
        %v2535 = vmul.f32 %v2527, %v2530
        %v2536 = vmul.f32 %v2528, %v2532
        %v2537 = vadd.f32 %v2522, %v2535
        %v2538 = vadd.f32 %v2523, %v2536
        %s2539 = scalar_lea.vmem %s1221, 384 [#allocation4]
        %v2540 = vld [vmem:[%s2539] sm:$0xf]
        %v2541 = vld [vmem:[%s2539 + $0x4] sm:$0xf]
        %v2542 = vunpack.c.l.bf16 %v2540
        %v2543 = vunpack.c.l.bf16 %v2541
        %2544 = vrot.lane.b32.xlu0 %v2451, 122
        %v2545 = vpop.permute.xlu0 %2544
        %2546 = vrot.lane.b32.xlu0 %v2452, 122
        %v2547 = vpop.permute.xlu0 %2546
        %v2550 = vmul.f32 %v2542, %v2545
        %v2551 = vmul.f32 %v2543, %v2547
        %v2552 = vadd.f32 %v2537, %v2550
        %v2553 = vadd.f32 %v2538, %v2551
        %v2554 = vld [vmem:[%s1228] sm:$0xff]
        %v2555 = vld [vmem:[%s1228 + $0x8] sm:$0xff]
        %s2556 = scalar_lea.vmem %s1228, 16 [#allocation5]
        %v2557 = vld [vmem:[%s2556] sm:$0xff]
        %v2558 = vld [vmem:[%s2556 + $0x8] sm:$0xff]
        %s2559 = scalar_lea.vmem %s1228, 32 [#allocation5]
        %v2560 = vld [vmem:[%s2559] sm:$0xff]
        %v2561 = vld [vmem:[%s2559 + $0x8] sm:$0xff]
        %v2562 = vsub.f32 1.0, %v2554
        %v2563 = vsub.f32 1.0, %v2555
        %v2564 = vmul.f32 %v2562, %v1456
        %v2565 = vmul.f32 %v2563, %v1457
        %v2566 = vmul.f32 %v2554, %v1325
        %v2567 = vmul.f32 %v2555, %v1326
        %v2568 = vadd.f32 %v2564, %v2566
        %v2569 = vadd.f32 %v2565, %v2567
        %vm2570 = vcmask 130048
        %2571 = vst.msk [vmem:[%s1293] sm:$0xff] %vm2570, %v2568
        %2572 = vst.msk [vmem:[%s1293 + $0x8] sm:$0xff] %vm2570, %v2569
        %v2573 = vsub.f32 1.0, %v2557
        %v2574 = vsub.f32 1.0, %v2558
        %v2575 = vmul.f32 %v2573, %v1825
        %v2576 = vmul.f32 %v2574, %v1826
        %v2577 = vmul.f32 %v2557, %v1325
        %v2578 = vmul.f32 %v2558, %v1326
        %v2579 = vadd.f32 %v2575, %v2577
        %v2580 = vadd.f32 %v2576, %v2578
        %s2581 = scalar_lea.vmem %s1293, 16 [#allocation6]
        %2582 = vst.msk [vmem:[%s2581] sm:$0xff] %vm2570, %v2579
        %2583 = vst.msk [vmem:[%s2581 + $0x8] sm:$0xff] %vm2570, %v2580
        %v2584 = vsub.f32 1.0, %v2560
        %v2585 = vsub.f32 1.0, %v2561
        %v2586 = vmul.f32 %v2584, %v2552
        %v2587 = vmul.f32 %v2585, %v2553
        %v2588 = vmul.f32 %v2560, %v1325
        %v2589 = vmul.f32 %v2561, %v1326
        %v2590 = vadd.f32 %v2586, %v2588
        %v2591 = vadd.f32 %v2587, %v2589
        %s2592 = scalar_lea.vmem %s1293, 32 [#allocation6]
        %2593 = vst.msk [vmem:[%s2592] sm:$0xff] %vm2570, %v2590
        %2594 = vst.msk [vmem:[%s2592 + $0x8] sm:$0xff] %vm2570, %v2591
        %s2595 = sand.u32 %s259, 1
        %s2596 = sand.u32 %s259, 1
        %s2597 = smul.addr %s2596, 48
        %s2598 = scalar_lea.vmem [#allocation6], %s2597
        // Predicated region
        $region214: #{cspn_forward.20} parent=196 // pred_check
          %p2599 = pneg %p269
        $region215: #{cspn_forward.20} parent=196 // pred_check_branch
          %2601 = sbr.rel (%p2599) target = $region217
        $region216: #{cspn_forward.20} parent=196 // pred_region
          %s2602 = smul.u32 2, %s24
          %s2603 = smul.addr %s23, 2
          %s2604 = sadd.s32 %s2602, %s2603
          %s2605 = smul.addr %s2604, 8
          %s2606 = scalar_lea.vmem %s8, %s2605
          // Predicated region
          $region218: #{cspn_forward.20} parent=216 // pred_check
            _
          $region219: #{cspn_forward.20} parent=216 // pred_check_branch
            %2608 = sbr.rel (0) target = $region221
          $region220: #{cspn_forward.20} parent=216 // pred_region
            // Predicated region
            $region222: #{cspn_forward.20} parent=220 // pred_check
              _
            $region223: #{cspn_forward.20} parent=220 // pred_check_branch
              %2610 = sbr.rel (0) target = $region225
            $region224: #{cspn_forward.20} parent=220 // pred_region
              // Predicated region
              $region237: #{cspn_forward.20} parent=224 // pred_check
                _
              $region238: #{cspn_forward.20} parent=224 // pred_check_branch
                %2635 = sbr.rel (0) target = $region240
              $region239: #{cspn_forward.20} parent=224 // pred_region
                loop: start=0, step=1, limit=1
                $region241: #{cspn_forward.20} parent=239 // loop_pre_header
                  _
                $region242: #{cspn_forward.20} parent=239 // loop_header
                  %s2637 = sphi 0, %s2641
                  %p2638 = scmp.ge.s32.totalorder %s2637, 1
                  %s2642 = sphi %s2598, %s2598
                  %s2643 = sphi %s2606, %s2606
                $region243: #{cspn_forward.20} parent=239 // loop_header_branch
                  %2640 = sbr.rel (%p2638) target = $region247
                $region244: #{cspn_forward.20} parent=239 // loop_body
                  %v2644 = vld [vmem:[%s2642] sm:$0xff]
                  %2645 = vst [vmem:[%s2643] sm:$0xff] %v2644
                  %v2646 = vld [vmem:[%s2642 + $0x8] sm:$0xff]
                  %2647 = vst [vmem:[%s2643 + $0x8] sm:$0xff] %v2646
                  %v2648 = vld [vmem:[%s2642 + $0x10] sm:$0xff]
                  %2649 = vst [vmem:[%s2643 + $0x20] sm:$0xff] %v2648
                  %v2650 = vld [vmem:[%s2642 + $0x18] sm:$0xff]
                  %2651 = vst [vmem:[%s2643 + $0x28] sm:$0xff] %v2650
                  %v2652 = vld [vmem:[%s2642 + $0x20] sm:$0xff]
                  %2653 = vst [vmem:[%s2643 + $0x40] sm:$0xff] %v2652
                  %v2654 = vld [vmem:[%s2642 + $0x28] sm:$0xff]
                  %2655 = vst [vmem:[%s2643 + $0x48] sm:$0xff] %v2654
                $region245: #{cspn_forward.20} parent=239 // loop_footer
                  %s2641 = sadd.s32 1, %s2637
                $region246: #{cspn_forward.20} parent=239 // loop_footer_branch
                  %2636 = sbr.rel target = $region242
                $region247: #{cspn_forward.20} parent=239 // loop_exit
                  _
              $region240: #{cspn_forward.20} parent=224 // pred_fallthru
                _
              // Predicated region
              $region248: #{cspn_forward.20} parent=224 // pred_check
                _
              $region249: #{cspn_forward.20} parent=224 // pred_check_branch
                %2657 = sbr.rel target = $region251
              $region250: #{cspn_forward.20} parent=224 // pred_region
                _
              $region251: #{cspn_forward.20} parent=224 // pred_fallthru
                _
            $region225: #{cspn_forward.20} parent=220 // pred_fallthru
              _
            // Predicated region
            $region226: #{cspn_forward.20} parent=220 // pred_check
              _
            $region227: #{cspn_forward.20} parent=220 // pred_check_branch
              %2612 = sbr.rel target = $region229
            $region228: #{cspn_forward.20} parent=220 // pred_region
              loop: start=0, step=1, limit=1
              $region230: #{cspn_forward.20} parent=228 // loop_pre_header
                _
              $region231: #{cspn_forward.20} parent=228 // loop_header
                %s2615 = sphi 0, %s2619
                %p2616 = scmp.ge.s32.totalorder %s2615, 1
                %s2620 = sphi %s2598, %s2598
                %s2621 = sphi %s2606, %s2606
              $region232: #{cspn_forward.20} parent=228 // loop_header_branch
                %2618 = sbr.rel (%p2616) target = $region236
              $region233: #{cspn_forward.20} parent=228 // loop_body
                %v2622 = vld [vmem:[%s2620] sm:$0xff]
                %2623 = vst [vmem:[%s2621] sm:$0xff] %v2622
                %v2624 = vld [vmem:[%s2620 + $0x8] sm:$0xff]
                %2625 = vst [vmem:[%s2621 + $0x8] sm:$0xff] %v2624
                %v2626 = vld [vmem:[%s2620 + $0x10] sm:$0xff]
                %2627 = vst [vmem:[%s2621 + $0x20] sm:$0xff] %v2626
                %v2628 = vld [vmem:[%s2620 + $0x18] sm:$0xff]
                %2629 = vst [vmem:[%s2621 + $0x28] sm:$0xff] %v2628
                %v2630 = vld [vmem:[%s2620 + $0x20] sm:$0xff]
                %2631 = vst [vmem:[%s2621 + $0x40] sm:$0xff] %v2630
                %v2632 = vld [vmem:[%s2620 + $0x28] sm:$0xff]
                %2633 = vst [vmem:[%s2621 + $0x48] sm:$0xff] %v2632
              $region234: #{cspn_forward.20} parent=228 // loop_footer
                %s2619 = sadd.s32 1, %s2615
              $region235: #{cspn_forward.20} parent=228 // loop_footer_branch
                %2614 = sbr.rel target = $region231
              $region236: #{cspn_forward.20} parent=228 // loop_exit
                _
            $region229: #{cspn_forward.20} parent=220 // pred_fallthru
              _
          $region221: #{cspn_forward.20} parent=216 // pred_fallthru
            _
          %2658 = vnop
        $region217: #{cspn_forward.20} parent=196 // pred_fallthru
          _
      $region197: #{cspn_forward.20} parent=5 // pred_fallthru
        _
      %p2659 = scmp.le.s32.totalorder 2, %s14
      // Predicated region
      $region252: #{cspn_forward.20} parent=5 // pred_check
        %p2660 = pneg %p2659
      $region253: #{cspn_forward.20} parent=5 // pred_check_branch
        %2662 = sbr.rel (%p2660) target = $region255
      $region254: #{cspn_forward.20} parent=5 // pred_region
        %s2663 = ssub.s32 %s14, 2
        // Predicated region
        $region256: #{cspn_forward.20} parent=254 // pred_check
          %p2664 = pneg %p275
        $region257: #{cspn_forward.20} parent=254 // pred_check_branch
          %2666 = sbr.rel (%p2664) target = $region259
        $region258: #{cspn_forward.20} parent=254 // pred_region
          %s2667 = sand.u32 %s260, 1
          %s2668 = sand.u32 %s260, 1
          %s2669 = smul.addr %s2668, 48
          %s2670 = scalar_lea.vmem [#allocation6], %s2669
        $region259: #{cspn_forward.20} parent=254 // pred_fallthru
          _
      $region255: #{cspn_forward.20} parent=5 // pred_fallthru
        _
    $region6: #{cspn_forward.20} parent=1 // loop_footer
      %s18 = sadd.s32 1, %s14
    $region7: #{cspn_forward.20} parent=1 // loop_footer_branch
      %13 = sbr.rel target = $region3
    $region8: #{cspn_forward.20} parent=1 // loop_exit
      _

// kernel: cspn_forward.26
$region0: #{cspn_forward.26}
  #allocation0 [shape = 'u32[]', space=smem, size = 0x4, offset = 0x4, fixed_abs, tag = 'smem constant byte address 0x4 - core index']
  #allocation1 [shape = 'u32[144,128]{1,0:T(1,128)}', space=vmem, size = 0x12000, scoped, tag = 'internal scratch']
  %s0 = inlined_call_operand.vmem [shape: bf16[99,512], index: 0, kind: input, shape index: {}]
  %s1 = inlined_call_operand.vmem [shape: bf16[8,99], index: 1, kind: input, shape index: {}]
  %s2 = inlined_call_operand.vmem [shape: f32[8,1], index: 2, kind: input, shape index: {}]
  %s3 = inlined_call_operand.vmem [shape: bf16[8,512], index: 3, kind: output, shape index: {}]
  %s4 = sld [smem:[#allocation0]]
  $region22: #{cspn_forward.26} parent=0
    _
  %s6 = ssub.s32 1, %s4
  %s7 = scalar_select 0, %s6, %s4
  // Predicated region
  $region2: #{cspn_forward.26} parent=0 // pred_check
    _
  $region3: #{cspn_forward.26} parent=0 // pred_check_branch
    %9 = sbr.rel (0) target = $region5
  $region4: #{cspn_forward.26} parent=0 // pred_region
    _
  $region5: #{cspn_forward.26} parent=0 // pred_fallthru
    _
  // Predicated region
  $region6: #{cspn_forward.26} parent=0 // pred_check
    _
  $region7: #{cspn_forward.26} parent=0 // pred_check_branch
    %11 = sbr.rel (0) target = $region9
  $region8: #{cspn_forward.26} parent=0 // pred_region
    _
  $region9: #{cspn_forward.26} parent=0 // pred_fallthru
    _
  // Predicated region
  $region10: #{cspn_forward.26} parent=0 // pred_check
    _
  $region11: #{cspn_forward.26} parent=0 // pred_check_branch
    %13 = sbr.rel (0) target = $region13
  $region12: #{cspn_forward.26} parent=0 // pred_region
    _
  $region13: #{cspn_forward.26} parent=0 // pred_fallthru
    _
  %v15 = vld [vmem:[%s1] sm:$0xf]
  %v16 = vld [vmem:[%s0] sm:$0xff]
  %v17 = vld [vmem:[%s0 + $0x8] sm:$0xff]
  %v18 = vld [vmem:[%s0 + $0x10] sm:$0xff]
  %v19 = vld [vmem:[%s0 + $0x18] sm:$0xff]
  %v20 = vld [vmem:[%s0 + $0x20] sm:$0xff]
  %v21 = vld [vmem:[%s0 + $0x28] sm:$0xff]
  %v22 = vld [vmem:[%s0 + $0x30] sm:$0xff]
  %v23 = vld [vmem:[%s0 + $0x38] sm:$0xff]
  %v24 = vld [vmem:[%s0 + $0x40] sm:$0xff]
  %v25 = vld [vmem:[%s0 + $0x48] sm:$0xff]
  %v26 = vld [vmem:[%s0 + $0x50] sm:$0xff]
  %v27 = vld [vmem:[%s0 + $0x58] sm:$0xff]
  %v28 = vld [vmem:[%s0 + $0x60] sm:$0xff]
  %v29 = vld [vmem:[%s0 + $0x68] sm:$0xff]
  %v30 = vld [vmem:[%s0 + $0x70] sm:$0xff]
  %v31 = vld [vmem:[%s0 + $0x78] sm:$0xff]
  %v32 = vld [vmem:[%s0 + $0x80] sm:$0xff]
  %v33 = vld [vmem:[%s0 + $0x88] sm:$0xff]
  %v34 = vld [vmem:[%s0 + $0x90] sm:$0xff]
  %v35 = vld [vmem:[%s0 + $0x98] sm:$0xff]
  %v36 = vld [vmem:[%s0 + $0xa0] sm:$0xff]
  %v37 = vld [vmem:[%s0 + $0xa8] sm:$0xff]
  %v38 = vld [vmem:[%s0 + $0xb0] sm:$0xff]
  %v39 = vld [vmem:[%s0 + $0xb8] sm:$0xff]
  %v40 = vld [vmem:[%s0 + $0xc0] sm:$0x33]
  %v41 = vld [vmem:[%s0 + $0xc8] sm:$0x33]
  %v42 = vld [vmem:[%s2] sm:$0xff]
  %44 = vset.pattern.permute.xlu0 0
  %45 = vperm.xlu0 %44, %v42
  %v46 = vpop.permute.xlu0 %45
  %v74 = vunpack.c.l.b16 %v16
  %v75 = vunpack.c.h.b16 %v16
  %v76 = vunpack.c.l.b16 %v17
  %v77 = vunpack.c.h.b16 %v17
  %v78 = vunpack.c.l.b16 %v18
  %v79 = vunpack.c.h.b16 %v18
  %v80 = vunpack.c.l.b16 %v19
  %v81 = vunpack.c.h.b16 %v19
  %v82 = vunpack.c.l.b16 %v20
  %v83 = vunpack.c.h.b16 %v20
  %v84 = vunpack.c.l.b16 %v21
  %v85 = vunpack.c.h.b16 %v21
  %v86 = vunpack.c.l.b16 %v22
  %v87 = vunpack.c.h.b16 %v22
  %v88 = vunpack.c.l.b16 %v23
  %v89 = vunpack.c.h.b16 %v23
  %v90 = vunpack.c.l.b16 %v24
  %v91 = vunpack.c.h.b16 %v24
  %v92 = vunpack.c.l.b16 %v25
  %v93 = vunpack.c.h.b16 %v25
  %v94 = vunpack.c.l.b16 %v26
  %v95 = vunpack.c.h.b16 %v26
  %v96 = vunpack.c.l.b16 %v27
  %v97 = vunpack.c.h.b16 %v27
  %v98 = vunpack.c.l.b16 %v28
  %v99 = vunpack.c.h.b16 %v28
  %v100 = vunpack.c.l.b16 %v29
  %v101 = vunpack.c.h.b16 %v29
  %v102 = vunpack.c.l.b16 %v30
  %v103 = vunpack.c.h.b16 %v30
  %v104 = vunpack.c.l.b16 %v31
  %v105 = vunpack.c.h.b16 %v31
  %v106 = vunpack.c.l.b16 %v32
  %v107 = vunpack.c.h.b16 %v32
  %v108 = vunpack.c.l.b16 %v33
  %v109 = vunpack.c.h.b16 %v33
  %v110 = vunpack.c.l.b16 %v34
  %v111 = vunpack.c.h.b16 %v34
  %v112 = vunpack.c.l.b16 %v35
  %v113 = vunpack.c.h.b16 %v35
  %v114 = vunpack.c.l.b16 %v36
  %v115 = vunpack.c.h.b16 %v36
  %v116 = vunpack.c.l.b16 %v37
  %v117 = vunpack.c.h.b16 %v37
  %v118 = vunpack.c.l.b16 %v38
  %v119 = vunpack.c.h.b16 %v38
  %v120 = vunpack.c.l.b16 %v39
  %v121 = vunpack.c.h.b16 %v39
  %v122 = vunpack.c.l.b16 %v40
  %v123 = vunpack.c.h.b16 %v40
  %v124 = vunpack.c.l.b16 %v41
  %v125 = vunpack.c.h.b16 %v41
  %v126 = vpack.c.b16 %v78, %v74
  %v127 = vpack.c.b16 %v79, %v75
  %v128 = vpack.c.b16 %v80, %v76
  %v129 = vpack.c.b16 %v81, %v77
  %v130 = vpack.c.b16 %v86, %v82
  %v131 = vpack.c.b16 %v87, %v83
  %v132 = vpack.c.b16 %v88, %v84
  %v133 = vpack.c.b16 %v89, %v85
  %v134 = vpack.c.b16 %v94, %v90
  %v135 = vpack.c.b16 %v95, %v91
  %v136 = vpack.c.b16 %v96, %v92
  %v137 = vpack.c.b16 %v97, %v93
  %v138 = vpack.c.b16 %v102, %v98
  %v139 = vpack.c.b16 %v103, %v99
  %v140 = vpack.c.b16 %v104, %v100
  %v141 = vpack.c.b16 %v105, %v101
  %v142 = vpack.c.b16 %v110, %v106
  %v143 = vpack.c.b16 %v111, %v107
  %v144 = vpack.c.b16 %v112, %v108
  %v145 = vpack.c.b16 %v113, %v109
  %v146 = vpack.c.b16 %v118, %v114
  %v147 = vpack.c.b16 %v119, %v115
  %v148 = vpack.c.b16 %v120, %v116
  %v149 = vpack.c.b16 %v121, %v117
  %v150 = vpack.c.b16 %v122, %v122
  %v151 = vpack.c.b16 %v123, %v123
  %v152 = vpack.c.b16 %v124, %v124
  %v153 = vpack.c.b16 %v125, %v125
  %vm178 = vcmask 809984
  %v180 = vsel %vm178, %v15, 0
  %vm182 = vcmask 1040384
  %vm183 = vcmask 1041408
  %v184 = vsel %vm182, 4294967295, 65535
  %v185 = vsel %vm183, %v184, 0
  %v187 = vand.u32 %v150, %v185
  %v190 = vand.u32 %v151, %v185
  %v193 = vand.u32 %v152, %v185
  %v196 = vand.u32 %v153, %v185
  %198 = vmatprep.subr.bf16.mxu0 %v127
  %199 = vmatpush1.bf16.msra.mxu0 %v126
  %200 = vmatprep.subr.bf16.mxu0 %v131
  %201 = vmatpush1.bf16.msra.mxu0 %v130
  %202 = vmatprep.subr.bf16.mxu0 %v135
  %203 = vmatpush1.bf16.msra.mxu0 %v134
  %204 = vmatprep.subr.bf16.mxu0 %v139
  %205 = vmatpush1.bf16.msra.mxu0 %v138
  %206 = vmatprep.subr.bf16.mxu0 %v143
  %207 = vmatpush1.bf16.msra.mxu0 %v142
  %208 = vmatprep.subr.bf16.mxu0 %v147
  %209 = vmatpush1.bf16.msra.mxu0 %v146
  %210 = vmatprep.subr.bf16.mxu0 %v190
  %211 = vmatpush1.bf16.msra.mxu0 %v187
  %212 = vmatprep.subr.bf16.mxu0 0
  %213 = vmatpush1.bf16.msra.mxu0 0
  %214 = vmatprep.subr.bf16.mxu0 0
  %215 = vmatpush1.bf16.msra.mxu0 0
  %216 = vmatprep.subr.bf16.mxu0 0
  %217 = vmatpush1.bf16.msra.mxu0 0
  %218 = vmatprep.subr.bf16.mxu0 0
  %219 = vmatpush1.bf16.msra.mxu0 0
  %220 = vmatprep.subr.bf16.mxu0 0
  %221 = vmatpush1.bf16.msra.mxu0 0
  %222 = vmatprep.subr.bf16.mxu0 0
  %223 = vmatpush1.bf16.msra.mxu0 0
  %224 = vmatprep.subr.bf16.mxu0 0
  %225 = vmatpush1.bf16.msra.mxu0 0
  %226 = vmatprep.subr.bf16.mxu0 0
  %227 = vmatpush1.bf16.msra.mxu0 0
  %228 = vmatprep.subr.bf16.mxu0 0
  %229 = vmatpush1.bf16.msra.mxu0 0
  %230 = vmatprep.mubr.bf16.mxu0 0
  %231 = vmatmul.mubr.bf16.gmra.mrb[0].mxu0 %v180
  %v232 = vpop.f32.mrb[0].mxu0
  %v233 = vadd.f32 %v46, %v232
  %v234 = vpop.f32.mrb[0].mxu0
  %v235 = vadd.f32 %v46, %v234
  %v236 = vpop.f32.mrb[0].mxu0
  %v237 = vpop.f32.mrb[0].mxu0
  %238 = vdwg.mxu0
  %239 = vmatprep.subr.bf16.mxu0 %v129
  %240 = vmatpush1.bf16.msra.mxu0 %v128
  %241 = vmatprep.subr.bf16.mxu0 %v133
  %242 = vmatpush1.bf16.msra.mxu0 %v132
  %243 = vmatprep.subr.bf16.mxu0 %v137
  %244 = vmatpush1.bf16.msra.mxu0 %v136
  %245 = vmatprep.subr.bf16.mxu0 %v141
  %246 = vmatpush1.bf16.msra.mxu0 %v140
  %247 = vmatprep.subr.bf16.mxu0 %v145
  %248 = vmatpush1.bf16.msra.mxu0 %v144
  %249 = vmatprep.subr.bf16.mxu0 %v149
  %250 = vmatpush1.bf16.msra.mxu0 %v148
  %251 = vmatprep.subr.bf16.mxu0 %v196
  %252 = vmatpush1.bf16.msra.mxu0 %v193
  %253 = vmatprep.subr.bf16.mxu0 0
  %254 = vmatpush1.bf16.msra.mxu0 0
  %255 = vmatprep.subr.bf16.mxu0 0
  %256 = vmatpush1.bf16.msra.mxu0 0
  %257 = vmatprep.subr.bf16.mxu0 0
  %258 = vmatpush1.bf16.msra.mxu0 0
  %259 = vmatprep.subr.bf16.mxu0 0
  %260 = vmatpush1.bf16.msra.mxu0 0
  %261 = vmatprep.subr.bf16.mxu0 0
  %262 = vmatpush1.bf16.msra.mxu0 0
  %263 = vmatprep.subr.bf16.mxu0 0
  %264 = vmatpush1.bf16.msra.mxu0 0
  %265 = vmatprep.subr.bf16.mxu0 0
  %266 = vmatpush1.bf16.msra.mxu0 0
  %267 = vmatprep.subr.bf16.mxu0 0
  %268 = vmatpush1.bf16.msra.mxu0 0
  %269 = vmatprep.subr.bf16.mxu0 0
  %270 = vmatpush1.bf16.msra.mxu0 0
  %271 = vmatprep.mubr.bf16.mxu0 0
  %272 = vmatmul.mubr.bf16.gmra.mrb[0].mxu0 %v180
  %v273 = vpop.f32.mrb[0].mxu0
  %v274 = vadd.f32 %v46, %v273
  %v275 = vpop.f32.mrb[0].mxu0
  %v276 = vadd.f32 %v46, %v275
  %v277 = vpop.f32.mrb[0].mxu0
  %v278 = vpop.f32.mrb[0].mxu0
  %279 = vdwg.mxu0
  %v280 = vmax.f32 %v233, 0.0
  %v281 = vmax.f32 %v235, 0.0
  %v282 = vmax.f32 %v274, 0.0
  %v283 = vmax.f32 %v276, 0.0
  %v284 = vpack.c.bf16 %v280, %v280
  %v285 = vpack.c.bf16 %v281, %v281
  %v286 = vpack.c.bf16 %v282, %v282
  %v287 = vpack.c.bf16 %v283, %v283
  %v292 = vunpack.c.l.b16 %v284
  %v293 = vunpack.c.l.b16 %v285
  %v294 = vunpack.c.l.b16 %v286
  %v295 = vunpack.c.l.b16 %v287
  %v296 = vpack.c.b16 %v293, %v292
  %v297 = vpack.c.b16 %v295, %v294
  %300 = vst [vmem:[%s3] sm:$0xff] %v296
  %301 = vst [vmem:[%s3 + $0x8] sm:$0xff] %v297
  // Predicated region
  $region14: #{cspn_forward.26} parent=0 // pred_check
    _
  $region15: #{cspn_forward.26} parent=0 // pred_check_branch
    %303 = sbr.rel (0) target = $region17
  $region16: #{cspn_forward.26} parent=0 // pred_region
    _
  $region17: #{cspn_forward.26} parent=0 // pred_fallthru
    _
  // Predicated region
  $region18: #{cspn_forward.26} parent=0 // pred_check
    _
  $region19: #{cspn_forward.26} parent=0 // pred_check_branch
    %305 = sbr.rel (0) target = $region21
  $region20: #{cspn_forward.26} parent=0 // pred_region
    _
  $region21: #{cspn_forward.26} parent=0 // pred_fallthru
    _

</llo_original>
